<compile_context>
chip_gen: v7x
topology: tpu7x:2x2x1
jax: 0.10.0
libtpu: 0.0.40
codegen_flags: <defaults>
</compile_context>

<pallas_src>
from functools import partial

import jax
import jax.numpy as jnp
from jax import lax
from jax.experimental import pallas as pl
from jax.experimental.pallas import tpu as pltpu


def _ceil_to(x, m):
    return -(-x // m) * m


def _vmem_capacity_bytes():
    try:
        return int(pltpu.get_tpu_info().vmem_capacity_bytes)
    except Exception:
        return 64 << 20            # conservative default (v7x per-core VMEM)


def _pick_dblk(Do, Ho, Wo, Dp, Hp, Wp, Cin, Cout, itemsize, target_rows=1024):
    """Largest depth-block (divisor of Do) whose output tile fits the VMEM budget."""
    budget = _vmem_capacity_bytes() // 4
    # padded-to-(8,128) VMEM footprints
    slab = 2 * Dp * Hp * _ceil_to(Wp, 8) * _ceil_to(Cin, 128) * itemsize   # dbl-buffered input slab
    per_row = 3 * 4 * _ceil_to(Cout, 128)                                  # dbl-buffered y tile + f32 acc
    rows_budget = max(Ho * Wo, (budget - slab) // max(per_row, 1))
    best = 1
    for d in range(1, Do + 1):
        rows = d * Ho * Wo
        if Do % d == 0 and rows % 8 == 0 and rows <= rows_budget:
            best = d
            if rows >= target_rows:
                break
    return best


def _pick_row_block(R, max_rows=4096):
    """Largest row tile (divisor of R, multiple of 8 or == R) for the elementwise pass."""
    if R <= max_rows:
        return R
    for d in range(max_rows, 7, -1):
        if R % d == 0 and d % 8 == 0:
            return d
    return R    # TODO(synk): masked/ragged row tiling for awkward (e.g. prime) R


def _conv_stats_kernel(x_ref, w_ref, y_ref, st_ref, *, dblk, Ho, Wo, KT, KH, KW, rate):
    """Atrous conv as a sum over taps (MXU) + per-block BN partial sums, one depth block."""
    # x_ref : [Dp, Hp, Wp, Cin]   padded input slab of this batch element (auto-pipelined VMEM)
    # w_ref : [KT*KH*KW, Cin, Cout]
    # y_ref : [dblk*Ho*Wo, Cout]  conv output tile (f32)
    # st_ref: [1, 2, Cout]        per-block (sum, sum-of-squares) partials
    do0 = pl.program_id(1) * dblk
    cin = x_ref.shape[-1]
    cout = w_ref.shape[-1]
    mt = dblk * Ho * Wo

    acc = jnp.zeros((mt, cout), jnp.float32)
    for kt in range(KT):
        for kh in range(KH):
            for kw in range(KW):
                t = (kt * KH + kh) * KW + kw
                tap = x_ref[pl.ds(do0 + kt, dblk),
                            kh * rate:kh * rate + Ho,
                            kw * rate:kw * rate + Wo, :]
                acc = acc + jnp.dot(tap.reshape(mt, cin), w_ref[t],
                                    preferred_element_type=jnp.float32)

    y_ref[...] = acc
    s = jnp.sum(acc, axis=0, keepdims=True)             # [1, Cout]
    q = jnp.sum(acc * acc, axis=0, keepdims=True)       # [1, Cout]
    st_ref[...] = jnp.concatenate([s, q], axis=0)[None]


def _bn_relu_kernel(y_ref, sc_ref, sh_ref, o_ref):
    """Lane-dense elementwise pass: y * scale + shift, ReLU (scale/shift precomputed)."""
    o_ref[...] = jnp.maximum(
        y_ref[...].astype(jnp.float32) * sc_ref[...] + sh_ref[...], 0.0)


def aspp_forward(x, weight, gamma, beta, *, t_size, rate, eps=1e-5,
                 compute_dtype=jnp.float32):
    """x: [N, Cin, D, H, W] (PyTorch NCDHW), weight: [Cout, Cin, KT, KH, KW]."""
    N, Cin, D, H, W = x.shape
    Cout = weight.shape[0]
    KT, KH, KW = weight.shape[2:]
    if rate == 1:
        pd = ph = pw = 0
    else:
        pd, ph, pw = t_size // 2, rate, rate
    Dp, Hp, Wp = D + 2 * pd, H + 2 * ph, W + 2 * pw
    Do = Dp - (KT - 1)                    # depth dilation is 1
    Ho = Hp - rate * (KH - 1)
    Wo = Wp - rate * (KW - 1)
    T = KT * KH * KW
    M = N * Do * Ho * Wo

    # ---- glue: channels-last + explicit zero padding (O(input) traffic, no im2col) ----
    x_cl = jnp.transpose(x, (0, 2, 3, 4, 1))                                  # NDHWC
    x_pad = jnp.pad(x_cl, ((0, 0), (pd, pd), (ph, ph), (pw, pw), (0, 0))).astype(compute_dtype)
    # weight (Cout,Cin,KT,KH,KW) -> (T, Cin, Cout), tap-major (same order as the kernel loop)
    w_taps = jnp.transpose(weight, (2, 3, 4, 1, 0)).reshape(T, Cin, Cout).astype(compute_dtype)

    itemsize = jnp.dtype(compute_dtype).itemsize
    dblk = _pick_dblk(Do, Ho, Wo, Dp, Hp, Wp, Cin, Cout, itemsize)
    ndb = Do // dblk
    Mt = dblk * Ho * Wo
    if Mt % 8 != 0:
        # TODO(synk): ragged row tiling when Ho*Wo is not a multiple of 8.
        raise NotImplementedError("dblk*Ho*Wo must be a multiple of 8")
    G = N * ndb

    slab_bytes = 2 * Dp * Hp * _ceil_to(Wp, 8) * _ceil_to(Cin, 128) * itemsize
    tile_bytes = 3 * Mt * _ceil_to(Cout, 128) * 4
    vmem_limit = int(min(_vmem_capacity_bytes() * 3 // 4,
                         max(2 * (slab_bytes + tile_bytes), 32 << 20)))

    conv_flat, stats = pl.pallas_call(
        partial(_conv_stats_kernel, dblk=dblk, Ho=Ho, Wo=Wo,
                KT=KT, KH=KH, KW=KW, rate=rate),
        grid=(N, ndb),
        in_specs=[
            pl.BlockSpec((None, Dp, Hp, Wp, Cin), lambda n, d: (n, 0, 0, 0, 0)),
            pl.BlockSpec((T, Cin, Cout), lambda n, d: (0, 0, 0)),
        ],
        out_specs=[
            pl.BlockSpec((Mt, Cout), lambda n, d: (n * ndb + d, 0)),
            pl.BlockSpec((1, 2, Cout), lambda n, d: (n * ndb + d, 0, 0)),
        ],
        out_shape=[
            jax.ShapeDtypeStruct((M, Cout), jnp.float32),
            jax.ShapeDtypeStruct((G, 2, Cout), jnp.float32),
        ],
        compiler_params=pltpu.CompilerParams(
            dimension_semantics=("parallel", "parallel"),
            vmem_limit_bytes=vmem_limit),
    )(x_pad, w_taps)

    # ---- BN scale/shift from the tiny per-block partials (hoisted out of the kernel) ----
    csum = jnp.sum(stats[:, 0, :], axis=0)
    csq = jnp.sum(stats[:, 1, :], axis=0)
    mean = csum / M
    var = jnp.maximum(csq / M - mean * mean, 0.0)       # biased var (PyTorch norm), clamped
    scale = gamma.astype(jnp.float32) * lax.rsqrt(var + eps)
    shift = beta.astype(jnp.float32) - mean * scale

    # ---- lane-dense elementwise BN + ReLU ----
    if 128 % Cout == 0 and (M * Cout) % 128 == 0:
        rep = 128 // Cout
        y2 = conv_flat.reshape(M * Cout // 128, 128)    # contiguous row-major view: free
        sc = jnp.tile(scale, rep)[None, :]
        sh = jnp.tile(shift, rep)[None, :]
    else:
        y2 = conv_flat                                  # Cout >= 128-wide case is lane-dense already
        sc = scale[None, :]
        sh = shift[None, :]
    R, L = y2.shape
    TB = _pick_row_block(R)

    out2 = pl.pallas_call(
        _bn_relu_kernel,
        grid=(R // TB,),
        in_specs=[
            pl.BlockSpec((TB, L), lambda i: (i, 0)),
            pl.BlockSpec((1, L), lambda i: (0, 0)),
            pl.BlockSpec((1, L), lambda i: (0, 0)),
        ],
        out_specs=pl.BlockSpec((TB, L), lambda i: (i, 0)),
        out_shape=jax.ShapeDtypeStruct((R, L), jnp.float32),
        compiler_params=pltpu.CompilerParams(dimension_semantics=("parallel",)),
    )(y2, sc, sh)

    out = out2.reshape(M, Cout).reshape(N, Do, Ho, Wo, Cout)
    return jnp.transpose(out, (0, 4, 1, 2, 3))          # back to NCDHW


if __name__ == "__main__":
    key = jax.random.PRNGKey(0)
    k1, k2 = jax.random.split(key)

    # ASPP_module(inplanes=4, planes=8, t_size=3, rate=2)
    N, Cin, D, H, W = 2, 4, 4, 8, 8
    Cout, t_size, rate = 8, 3, 2
    KT, KH, KW = (1, 1, 1) if rate == 1 else (t_size, 3, 3)

    x = jax.random.normal(k1, (N, Cin, D, H, W), dtype=jnp.float32)
    fan_in = Cin * KT * KH * KW
    # deterministic stand-in for kaiming_normal_ (fan_in, gain=sqrt(2))
    weight = jax.random.normal(k2, (Cout, Cin, KT, KH, KW), dtype=jnp.float32) * jnp.sqrt(2.0 / fan_in)
    gamma = jnp.ones((Cout,), jnp.float32)   # BN weight init = 1
    beta = jnp.zeros((Cout,), jnp.float32)   # BN bias init = 0

    out = aspp_forward(x, weight, gamma, beta, t_size=t_size, rate=rate)
    out = jax.block_until_ready(out)

    # pure-JAX reference of the PyTorch forward (Conv3d -> train-mode BN -> ReLU)
    pad = [(0, 0)] * 3 if rate == 1 else [(t_size // 2,) * 2, (rate, rate), (rate, rate)]
    dil = (1, 1, 1) if rate == 1 else (1, rate, rate)
    y = lax.conv_general_dilated(x, weight, window_strides=(1, 1, 1), padding=pad,
                                 rhs_dilation=dil,
                                 dimension_numbers=("NCDHW", "OIDHW", "NCDHW"))
    mean = y.mean(axis=(0, 2, 3, 4), keepdims=True)
    var = y.var(axis=(0, 2, 3, 4), keepdims=True)
    ref = jnp.maximum((y - mean) / jnp.sqrt(var + 1e-5) * gamma.reshape(1, -1, 1, 1, 1)
                      + beta.reshape(1, -1, 1, 1, 1), 0.0)

    assert out.shape == ref.shape, (out.shape, ref.shape)
    max_err = float(jnp.max(jnp.abs(out - ref)))
    if not jnp.allclose(out, ref, atol=5e-4, rtol=5e-4):
        raise SystemExit(f"mismatch: max abs err {max_err}")
    print("KERNEL_OK")
</pallas_src>

<mosaic_0001>
module attributes {stable_mosaic.version = 11 : i64} {
  func.func @_conv_stats_kernel(%arg0: i32, %arg1: i32, %arg2: memref<1x6x12x12x4xf32, #tpu.memory_space<vmem>>, %arg3: memref<27x4x8xf32, #tpu.memory_space<vmem>>, %arg4: memref<256x8xf32, #tpu.memory_space<vmem>>, %arg5: memref<1x2x8xf32, #tpu.memory_space<vmem>>) attributes {dimension_semantics = [#tpu.dimension_semantics<parallel>, #tpu.dimension_semantics<parallel>], iteration_bounds = array<i64: 2, 1>, scalar_prefetch = 0 : i64, scratch_operands = 0 : i64, tpu.core_type = #tpu.core_type<tc>, window_params = [{transform_indices = @transform_0, window_bounds = array<i64: 1, 6, 12, 12, 4>}, {pipeline_mode = #tpu.pipeline_mode<synchronous>, transform_indices = @transform_1, window_bounds = array<i64: 27, 4, 8>}, {transform_indices = @transform_2, window_bounds = array<i64: 256, 8>}, {transform_indices = @transform_3, window_bounds = array<i64: 1, 2, 8>}]} {
    %c4_i32 = arith.constant 4 : i32
    %0 = arith.muli %arg1, %c4_i32 : i32
    %cst = arith.constant 0.000000e+00 : f32
    %1 = vector.broadcast %cst : f32 to vector<256x8xf32>
    %c0_i32 = arith.constant 0 : i32
    %2 = arith.addi %0, %c0_i32 : i32
    %c0 = arith.constant 0 : index
    %3 = arith.index_cast %2 : i32 to index
    %c0_0 = arith.constant 0 : index
    %c0_1 = arith.constant 0 : index
    %c0_2 = arith.constant 0 : index
    %4 = vector.load %arg2[%c0, %3, %c0_0, %c0_1, %c0_2] : memref<1x6x12x12x4xf32, #tpu.memory_space<vmem>>, vector<1x4x8x8x4xf32>
    %5 = vector.shape_cast %4 : vector<1x4x8x8x4xf32> to vector<4x8x8x4xf32>
    %6 = vector.shape_cast %5 : vector<4x8x8x4xf32> to vector<256x4xf32>
    %c0_3 = arith.constant 0 : index
    %c0_4 = arith.constant 0 : index
    %c0_5 = arith.constant 0 : index
    %7 = vector.load %arg3[%c0_3, %c0_4, %c0_5] : memref<27x4x8xf32, #tpu.memory_space<vmem>>, vector<1x4x8xf32>
    %8 = vector.shape_cast %7 : vector<1x4x8xf32> to vector<4x8xf32>
    %cst_6 = arith.constant dense<0.000000e+00> : vector<256x8xf32>
    %9 = tpu.matmul %6, %8, %cst_6 {dimension_numbers = #tpu.dot_dimension_numbers<[1], [0], [0], [1], [0, 0, 1, 1], [], []>} : vector<256x4xf32>, vector<4x8xf32>, vector<256x8xf32> -> vector<256x8xf32>
    %10 = arith.addf %1, %9 : vector<256x8xf32>
    %c0_i32_7 = arith.constant 0 : i32
    %11 = arith.addi %0, %c0_i32_7 : i32
    %c0_8 = arith.constant 0 : index
    %12 = arith.index_cast %11 : i32 to index
    %c0_9 = arith.constant 0 : index
    %c2 = arith.constant 2 : index
    %c0_10 = arith.constant 0 : index
    %13 = vector.load %arg2[%c0_8, %12, %c0_9, %c2, %c0_10] : memref<1x6x12x12x4xf32, #tpu.memory_space<vmem>>, vector<1x4x8x8x4xf32>
    %14 = vector.shape_cast %13 : vector<1x4x8x8x4xf32> to vector<4x8x8x4xf32>
    %15 = vector.shape_cast %14 : vector<4x8x8x4xf32> to vector<256x4xf32>
    %c1 = arith.constant 1 : index
    %c0_11 = arith.constant 0 : index
    %c0_12 = arith.constant 0 : index
    %16 = vector.load %arg3[%c1, %c0_11, %c0_12] : memref<27x4x8xf32, #tpu.memory_space<vmem>>, vector<1x4x8xf32>
    %17 = vector.shape_cast %16 : vector<1x4x8xf32> to vector<4x8xf32>
    %cst_13 = arith.constant dense<0.000000e+00> : vector<256x8xf32>
    %18 = tpu.matmul %15, %17, %cst_13 {dimension_numbers = #tpu.dot_dimension_numbers<[1], [0], [0], [1], [0, 0, 1, 1], [], []>} : vector<256x4xf32>, vector<4x8xf32>, vector<256x8xf32> -> vector<256x8xf32>
    %19 = arith.addf %10, %18 : vector<256x8xf32>
    %c0_i32_14 = arith.constant 0 : i32
    %20 = arith.addi %0, %c0_i32_14 : i32
    %c0_15 = arith.constant 0 : index
    %21 = arith.index_cast %20 : i32 to index
    %c0_16 = arith.constant 0 : index
    %c4 = arith.constant 4 : index
    %c0_17 = arith.constant 0 : index
    %22 = vector.load %arg2[%c0_15, %21, %c0_16, %c4, %c0_17] : memref<1x6x12x12x4xf32, #tpu.memory_space<vmem>>, vector<1x4x8x8x4xf32>
    %23 = vector.shape_cast %22 : vector<1x4x8x8x4xf32> to vector<4x8x8x4xf32>
    %24 = vector.shape_cast %23 : vector<4x8x8x4xf32> to vector<256x4xf32>
    %c2_18 = arith.constant 2 : index
    %c0_19 = arith.constant 0 : index
    %c0_20 = arith.constant 0 : index
    %25 = vector.load %arg3[%c2_18, %c0_19, %c0_20] : memref<27x4x8xf32, #tpu.memory_space<vmem>>, vector<1x4x8xf32>
    %26 = vector.shape_cast %25 : vector<1x4x8xf32> to vector<4x8xf32>
    %cst_21 = arith.constant dense<0.000000e+00> : vector<256x8xf32>
    %27 = tpu.matmul %24, %26, %cst_21 {dimension_numbers = #tpu.dot_dimension_numbers<[1], [0], [0], [1], [0, 0, 1, 1], [], []>} : vector<256x4xf32>, vector<4x8xf32>, vector<256x8xf32> -> vector<256x8xf32>
    %28 = arith.addf %19, %27 : vector<256x8xf32>
    %c0_i32_22 = arith.constant 0 : i32
    %29 = arith.addi %0, %c0_i32_22 : i32
    %c0_23 = arith.constant 0 : index
    %30 = arith.index_cast %29 : i32 to index
    %c2_24 = arith.constant 2 : index
    %c0_25 = arith.constant 0 : index
    %c0_26 = arith.constant 0 : index
    %31 = vector.load %arg2[%c0_23, %30, %c2_24, %c0_25, %c0_26] : memref<1x6x12x12x4xf32, #tpu.memory_space<vmem>>, vector<1x4x8x8x4xf32>
    %32 = vector.shape_cast %31 : vector<1x4x8x8x4xf32> to vector<4x8x8x4xf32>
    %33 = vector.shape_cast %32 : vector<4x8x8x4xf32> to vector<256x4xf32>
    %c3 = arith.constant 3 : index
    %c0_27 = arith.constant 0 : index
    %c0_28 = arith.constant 0 : index
    %34 = vector.load %arg3[%c3, %c0_27, %c0_28] : memref<27x4x8xf32, #tpu.memory_space<vmem>>, vector<1x4x8xf32>
    %35 = vector.shape_cast %34 : vector<1x4x8xf32> to vector<4x8xf32>
    %cst_29 = arith.constant dense<0.000000e+00> : vector<256x8xf32>
    %36 = tpu.matmul %33, %35, %cst_29 {dimension_numbers = #tpu.dot_dimension_numbers<[1], [0], [0], [1], [0, 0, 1, 1], [], []>} : vector<256x4xf32>, vector<4x8xf32>, vector<256x8xf32> -> vector<256x8xf32>
    %37 = arith.addf %28, %36 : vector<256x8xf32>
    %c0_i32_30 = arith.constant 0 : i32
    %38 = arith.addi %0, %c0_i32_30 : i32
    %c0_31 = arith.constant 0 : index
    %39 = arith.index_cast %38 : i32 to index
    %c2_32 = arith.constant 2 : index
    %c2_33 = arith.constant 2 : index
    %c0_34 = arith.constant 0 : index
    %40 = vector.load %arg2[%c0_31, %39, %c2_32, %c2_33, %c0_34] : memref<1x6x12x12x4xf32, #tpu.memory_space<vmem>>, vector<1x4x8x8x4xf32>
    %41 = vector.shape_cast %40 : vector<1x4x8x8x4xf32> to vector<4x8x8x4xf32>
    %42 = vector.shape_cast %41 : vector<4x8x8x4xf32> to vector<256x4xf32>
    %c4_35 = arith.constant 4 : index
    %c0_36 = arith.constant 0 : index
    %c0_37 = arith.constant 0 : index
    %43 = vector.load %arg3[%c4_35, %c0_36, %c0_37] : memref<27x4x8xf32, #tpu.memory_space<vmem>>, vector<1x4x8xf32>
    %44 = vector.shape_cast %43 : vector<1x4x8xf32> to vector<4x8xf32>
    %cst_38 = arith.constant dense<0.000000e+00> : vector<256x8xf32>
    %45 = tpu.matmul %42, %44, %cst_38 {dimension_numbers = #tpu.dot_dimension_numbers<[1], [0], [0], [1], [0, 0, 1, 1], [], []>} : vector<256x4xf32>, vector<4x8xf32>, vector<256x8xf32> -> vector<256x8xf32>
    %46 = arith.addf %37, %45 : vector<256x8xf32>
    %c0_i32_39 = arith.constant 0 : i32
    %47 = arith.addi %0, %c0_i32_39 : i32
    %c0_40 = arith.constant 0 : index
    %48 = arith.index_cast %47 : i32 to index
    %c2_41 = arith.constant 2 : index
    %c4_42 = arith.constant 4 : index
    %c0_43 = arith.constant 0 : index
    %49 = vector.load %arg2[%c0_40, %48, %c2_41, %c4_42, %c0_43] : memref<1x6x12x12x4xf32, #tpu.memory_space<vmem>>, vector<1x4x8x8x4xf32>
    %50 = vector.shape_cast %49 : vector<1x4x8x8x4xf32> to vector<4x8x8x4xf32>
    %51 = vector.shape_cast %50 : vector<4x8x8x4xf32> to vector<256x4xf32>
    %c5 = arith.constant 5 : index
    %c0_44 = arith.constant 0 : index
    %c0_45 = arith.constant 0 : index
    %52 = vector.load %arg3[%c5, %c0_44, %c0_45] : memref<27x4x8xf32, #tpu.memory_space<vmem>>, vector<1x4x8xf32>
    %53 = vector.shape_cast %52 : vector<1x4x8xf32> to vector<4x8xf32>
    %cst_46 = arith.constant dense<0.000000e+00> : vector<256x8xf32>
    %54 = tpu.matmul %51, %53, %cst_46 {dimension_numbers = #tpu.dot_dimension_numbers<[1], [0], [0], [1], [0, 0, 1, 1], [], []>} : vector<256x4xf32>, vector<4x8xf32>, vector<256x8xf32> -> vector<256x8xf32>
    %55 = arith.addf %46, %54 : vector<256x8xf32>
    %c0_i32_47 = arith.constant 0 : i32
    %56 = arith.addi %0, %c0_i32_47 : i32
    %c0_48 = arith.constant 0 : index
    %57 = arith.index_cast %56 : i32 to index
    %c4_49 = arith.constant 4 : index
    %c0_50 = arith.constant 0 : index
    %c0_51 = arith.constant 0 : index
    %58 = vector.load %arg2[%c0_48, %57, %c4_49, %c0_50, %c0_51] : memref<1x6x12x12x4xf32, #tpu.memory_space<vmem>>, vector<1x4x8x8x4xf32>
    %59 = vector.shape_cast %58 : vector<1x4x8x8x4xf32> to vector<4x8x8x4xf32>
    %60 = vector.shape_cast %59 : vector<4x8x8x4xf32> to vector<256x4xf32>
    %c6 = arith.constant 6 : index
    %c0_52 = arith.constant 0 : index
    %c0_53 = arith.constant 0 : index
    %61 = vector.load %arg3[%c6, %c0_52, %c0_53] : memref<27x4x8xf32, #tpu.memory_space<vmem>>, vector<1x4x8xf32>
    %62 = vector.shape_cast %61 : vector<1x4x8xf32> to vector<4x8xf32>
    %cst_54 = arith.constant dense<0.000000e+00> : vector<256x8xf32>
    %63 = tpu.matmul %60, %62, %cst_54 {dimension_numbers = #tpu.dot_dimension_numbers<[1], [0], [0], [1], [0, 0, 1, 1], [], []>} : vector<256x4xf32>, vector<4x8xf32>, vector<256x8xf32> -> vector<256x8xf32>
    %64 = arith.addf %55, %63 : vector<256x8xf32>
    %c0_i32_55 = arith.constant 0 : i32
    %65 = arith.addi %0, %c0_i32_55 : i32
    %c0_56 = arith.constant 0 : index
    %66 = arith.index_cast %65 : i32 to index
    %c4_57 = arith.constant 4 : index
    %c2_58 = arith.constant 2 : index
    %c0_59 = arith.constant 0 : index
    %67 = vector.load %arg2[%c0_56, %66, %c4_57, %c2_58, %c0_59] : memref<1x6x12x12x4xf32, #tpu.memory_space<vmem>>, vector<1x4x8x8x4xf32>
    %68 = vector.shape_cast %67 : vector<1x4x8x8x4xf32> to vector<4x8x8x4xf32>
    %69 = vector.shape_cast %68 : vector<4x8x8x4xf32> to vector<256x4xf32>
    %c7 = arith.constant 7 : index
    %c0_60 = arith.constant 0 : index
    %c0_61 = arith.constant 0 : index
    %70 = vector.load %arg3[%c7, %c0_60, %c0_61] : memref<27x4x8xf32, #tpu.memory_space<vmem>>, vector<1x4x8xf32>
    %71 = vector.shape_cast %70 : vector<1x4x8xf32> to vector<4x8xf32>
    %cst_62 = arith.constant dense<0.000000e+00> : vector<256x8xf32>
    %72 = tpu.matmul %69, %71, %cst_62 {dimension_numbers = #tpu.dot_dimension_numbers<[1], [0], [0], [1], [0, 0, 1, 1], [], []>} : vector<256x4xf32>, vector<4x8xf32>, vector<256x8xf32> -> vector<256x8xf32>
    %73 = arith.addf %64, %72 : vector<256x8xf32>
    %c0_i32_63 = arith.constant 0 : i32
    %74 = arith.addi %0, %c0_i32_63 : i32
    %c0_64 = arith.constant 0 : index
    %75 = arith.index_cast %74 : i32 to index
    %c4_65 = arith.constant 4 : index
    %c4_66 = arith.constant 4 : index
    %c0_67 = arith.constant 0 : index
    %76 = vector.load %arg2[%c0_64, %75, %c4_65, %c4_66, %c0_67] : memref<1x6x12x12x4xf32, #tpu.memory_space<vmem>>, vector<1x4x8x8x4xf32>
    %77 = vector.shape_cast %76 : vector<1x4x8x8x4xf32> to vector<4x8x8x4xf32>
    %78 = vector.shape_cast %77 : vector<4x8x8x4xf32> to vector<256x4xf32>
    %c8 = arith.constant 8 : index
    %c0_68 = arith.constant 0 : index
    %c0_69 = arith.constant 0 : index
    %79 = vector.load %arg3[%c8, %c0_68, %c0_69] : memref<27x4x8xf32, #tpu.memory_space<vmem>>, vector<1x4x8xf32>
    %80 = vector.shape_cast %79 : vector<1x4x8xf32> to vector<4x8xf32>
    %cst_70 = arith.constant dense<0.000000e+00> : vector<256x8xf32>
    %81 = tpu.matmul %78, %80, %cst_70 {dimension_numbers = #tpu.dot_dimension_numbers<[1], [0], [0], [1], [0, 0, 1, 1], [], []>} : vector<256x4xf32>, vector<4x8xf32>, vector<256x8xf32> -> vector<256x8xf32>
    %82 = arith.addf %73, %81 : vector<256x8xf32>
    %c1_i32 = arith.constant 1 : i32
    %83 = arith.addi %0, %c1_i32 : i32
    %c0_71 = arith.constant 0 : index
    %84 = arith.index_cast %83 : i32 to index
    %c0_72 = arith.constant 0 : index
    %c0_73 = arith.constant 0 : index
    %c0_74 = arith.constant 0 : index
    %85 = vector.load %arg2[%c0_71, %84, %c0_72, %c0_73, %c0_74] : memref<1x6x12x12x4xf32, #tpu.memory_space<vmem>>, vector<1x4x8x8x4xf32>
    %86 = vector.shape_cast %85 : vector<1x4x8x8x4xf32> to vector<4x8x8x4xf32>
    %87 = vector.shape_cast %86 : vector<4x8x8x4xf32> to vector<256x4xf32>
    %c9 = arith.constant 9 : index
    %c0_75 = arith.constant 0 : index
    %c0_76 = arith.constant 0 : index
    %88 = vector.load %arg3[%c9, %c0_75, %c0_76] : memref<27x4x8xf32, #tpu.memory_space<vmem>>, vector<1x4x8xf32>
    %89 = vector.shape_cast %88 : vector<1x4x8xf32> to vector<4x8xf32>
    %cst_77 = arith.constant dense<0.000000e+00> : vector<256x8xf32>
    %90 = tpu.matmul %87, %89, %cst_77 {dimension_numbers = #tpu.dot_dimension_numbers<[1], [0], [0], [1], [0, 0, 1, 1], [], []>} : vector<256x4xf32>, vector<4x8xf32>, vector<256x8xf32> -> vector<256x8xf32>
    %91 = arith.addf %82, %90 : vector<256x8xf32>
    %c1_i32_78 = arith.constant 1 : i32
    %92 = arith.addi %0, %c1_i32_78 : i32
    %c0_79 = arith.constant 0 : index
    %93 = arith.index_cast %92 : i32 to index
    %c0_80 = arith.constant 0 : index
    %c2_81 = arith.constant 2 : index
    %c0_82 = arith.constant 0 : index
    %94 = vector.load %arg2[%c0_79, %93, %c0_80, %c2_81, %c0_82] : memref<1x6x12x12x4xf32, #tpu.memory_space<vmem>>, vector<1x4x8x8x4xf32>
    %95 = vector.shape_cast %94 : vector<1x4x8x8x4xf32> to vector<4x8x8x4xf32>
    %96 = vector.shape_cast %95 : vector<4x8x8x4xf32> to vector<256x4xf32>
    %c10 = arith.constant 10 : index
    %c0_83 = arith.constant 0 : index
    %c0_84 = arith.constant 0 : index
    %97 = vector.load %arg3[%c10, %c0_83, %c0_84] : memref<27x4x8xf32, #tpu.memory_space<vmem>>, vector<1x4x8xf32>
    %98 = vector.shape_cast %97 : vector<1x4x8xf32> to vector<4x8xf32>
    %cst_85 = arith.constant dense<0.000000e+00> : vector<256x8xf32>
    %99 = tpu.matmul %96, %98, %cst_85 {dimension_numbers = #tpu.dot_dimension_numbers<[1], [0], [0], [1], [0, 0, 1, 1], [], []>} : vector<256x4xf32>, vector<4x8xf32>, vector<256x8xf32> -> vector<256x8xf32>
    %100 = arith.addf %91, %99 : vector<256x8xf32>
    %c1_i32_86 = arith.constant 1 : i32
    %101 = arith.addi %0, %c1_i32_86 : i32
    %c0_87 = arith.constant 0 : index
    %102 = arith.index_cast %101 : i32 to index
    %c0_88 = arith.constant 0 : index
    %c4_89 = arith.constant 4 : index
    %c0_90 = arith.constant 0 : index
    %103 = vector.load %arg2[%c0_87, %102, %c0_88, %c4_89, %c0_90] : memref<1x6x12x12x4xf32, #tpu.memory_space<vmem>>, vector<1x4x8x8x4xf32>
    %104 = vector.shape_cast %103 : vector<1x4x8x8x4xf32> to vector<4x8x8x4xf32>
    %105 = vector.shape_cast %104 : vector<4x8x8x4xf32> to vector<256x4xf32>
    %c11 = arith.constant 11 : index
    %c0_91 = arith.constant 0 : index
    %c0_92 = arith.constant 0 : index
    %106 = vector.load %arg3[%c11, %c0_91, %c0_92] : memref<27x4x8xf32, #tpu.memory_space<vmem>>, vector<1x4x8xf32>
    %107 = vector.shape_cast %106 : vector<1x4x8xf32> to vector<4x8xf32>
    %cst_93 = arith.constant dense<0.000000e+00> : vector<256x8xf32>
    %108 = tpu.matmul %105, %107, %cst_93 {dimension_numbers = #tpu.dot_dimension_numbers<[1], [0], [0], [1], [0, 0, 1, 1], [], []>} : vector<256x4xf32>, vector<4x8xf32>, vector<256x8xf32> -> vector<256x8xf32>
    %109 = arith.addf %100, %108 : vector<256x8xf32>
    %c1_i32_94 = arith.constant 1 : i32
    %110 = arith.addi %0, %c1_i32_94 : i32
    %c0_95 = arith.constant 0 : index
    %111 = arith.index_cast %110 : i32 to index
    %c2_96 = arith.constant 2 : index
    %c0_97 = arith.constant 0 : index
    %c0_98 = arith.constant 0 : index
    %112 = vector.load %arg2[%c0_95, %111, %c2_96, %c0_97, %c0_98] : memref<1x6x12x12x4xf32, #tpu.memory_space<vmem>>, vector<1x4x8x8x4xf32>
    %113 = vector.shape_cast %112 : vector<1x4x8x8x4xf32> to vector<4x8x8x4xf32>
    %114 = vector.shape_cast %113 : vector<4x8x8x4xf32> to vector<256x4xf32>
    %c12 = arith.constant 12 : index
    %c0_99 = arith.constant 0 : index
    %c0_100 = arith.constant 0 : index
    %115 = vector.load %arg3[%c12, %c0_99, %c0_100] : memref<27x4x8xf32, #tpu.memory_space<vmem>>, vector<1x4x8xf32>
    %116 = vector.shape_cast %115 : vector<1x4x8xf32> to vector<4x8xf32>
    %cst_101 = arith.constant dense<0.000000e+00> : vector<256x8xf32>
    %117 = tpu.matmul %114, %116, %cst_101 {dimension_numbers = #tpu.dot_dimension_numbers<[1], [0], [0], [1], [0, 0, 1, 1], [], []>} : vector<256x4xf32>, vector<4x8xf32>, vector<256x8xf32> -> vector<256x8xf32>
    %118 = arith.addf %109, %117 : vector<256x8xf32>
    %c1_i32_102 = arith.constant 1 : i32
    %119 = arith.addi %0, %c1_i32_102 : i32
    %c0_103 = arith.constant 0 : index
    %120 = arith.index_cast %119 : i32 to index
    %c2_104 = arith.constant 2 : index
    %c2_105 = arith.constant 2 : index
    %c0_106 = arith.constant 0 : index
    %121 = vector.load %arg2[%c0_103, %120, %c2_104, %c2_105, %c0_106] : memref<1x6x12x12x4xf32, #tpu.memory_space<vmem>>, vector<1x4x8x8x4xf32>
    %122 = vector.shape_cast %121 : vector<1x4x8x8x4xf32> to vector<4x8x8x4xf32>
    %123 = vector.shape_cast %122 : vector<4x8x8x4xf32> to vector<256x4xf32>
    %c13 = arith.constant 13 : index
    %c0_107 = arith.constant 0 : index
    %c0_108 = arith.constant 0 : index
    %124 = vector.load %arg3[%c13, %c0_107, %c0_108] : memref<27x4x8xf32, #tpu.memory_space<vmem>>, vector<1x4x8xf32>
    %125 = vector.shape_cast %124 : vector<1x4x8xf32> to vector<4x8xf32>
    %cst_109 = arith.constant dense<0.000000e+00> : vector<256x8xf32>
    %126 = tpu.matmul %123, %125, %cst_109 {dimension_numbers = #tpu.dot_dimension_numbers<[1], [0], [0], [1], [0, 0, 1, 1], [], []>} : vector<256x4xf32>, vector<4x8xf32>, vector<256x8xf32> -> vector<256x8xf32>
    %127 = arith.addf %118, %126 : vector<256x8xf32>
    %c1_i32_110 = arith.constant 1 : i32
    %128 = arith.addi %0, %c1_i32_110 : i32
    %c0_111 = arith.constant 0 : index
    %129 = arith.index_cast %128 : i32 to index
    %c2_112 = arith.constant 2 : index
    %c4_113 = arith.constant 4 : index
    %c0_114 = arith.constant 0 : index
    %130 = vector.load %arg2[%c0_111, %129, %c2_112, %c4_113, %c0_114] : memref<1x6x12x12x4xf32, #tpu.memory_space<vmem>>, vector<1x4x8x8x4xf32>
    %131 = vector.shape_cast %130 : vector<1x4x8x8x4xf32> to vector<4x8x8x4xf32>
    %132 = vector.shape_cast %131 : vector<4x8x8x4xf32> to vector<256x4xf32>
    %c14 = arith.constant 14 : index
    %c0_115 = arith.constant 0 : index
    %c0_116 = arith.constant 0 : index
    %133 = vector.load %arg3[%c14, %c0_115, %c0_116] : memref<27x4x8xf32, #tpu.memory_space<vmem>>, vector<1x4x8xf32>
    %134 = vector.shape_cast %133 : vector<1x4x8xf32> to vector<4x8xf32>
    %cst_117 = arith.constant dense<0.000000e+00> : vector<256x8xf32>
    %135 = tpu.matmul %132, %134, %cst_117 {dimension_numbers = #tpu.dot_dimension_numbers<[1], [0], [0], [1], [0, 0, 1, 1], [], []>} : vector<256x4xf32>, vector<4x8xf32>, vector<256x8xf32> -> vector<256x8xf32>
    %136 = arith.addf %127, %135 : vector<256x8xf32>
    %c1_i32_118 = arith.constant 1 : i32
    %137 = arith.addi %0, %c1_i32_118 : i32
    %c0_119 = arith.constant 0 : index
    %138 = arith.index_cast %137 : i32 to index
    %c4_120 = arith.constant 4 : index
    %c0_121 = arith.constant 0 : index
    %c0_122 = arith.constant 0 : index
    %139 = vector.load %arg2[%c0_119, %138, %c4_120, %c0_121, %c0_122] : memref<1x6x12x12x4xf32, #tpu.memory_space<vmem>>, vector<1x4x8x8x4xf32>
    %140 = vector.shape_cast %139 : vector<1x4x8x8x4xf32> to vector<4x8x8x4xf32>
    %141 = vector.shape_cast %140 : vector<4x8x8x4xf32> to vector<256x4xf32>
    %c15 = arith.constant 15 : index
    %c0_123 = arith.constant 0 : index
    %c0_124 = arith.constant 0 : index
    %142 = vector.load %arg3[%c15, %c0_123, %c0_124] : memref<27x4x8xf32, #tpu.memory_space<vmem>>, vector<1x4x8xf32>
    %143 = vector.shape_cast %142 : vector<1x4x8xf32> to vector<4x8xf32>
    %cst_125 = arith.constant dense<0.000000e+00> : vector<256x8xf32>
    %144 = tpu.matmul %141, %143, %cst_125 {dimension_numbers = #tpu.dot_dimension_numbers<[1], [0], [0], [1], [0, 0, 1, 1], [], []>} : vector<256x4xf32>, vector<4x8xf32>, vector<256x8xf32> -> vector<256x8xf32>
    %145 = arith.addf %136, %144 : vector<256x8xf32>
    %c1_i32_126 = arith.constant 1 : i32
    %146 = arith.addi %0, %c1_i32_126 : i32
    %c0_127 = arith.constant 0 : index
    %147 = arith.index_cast %146 : i32 to index
    %c4_128 = arith.constant 4 : index
    %c2_129 = arith.constant 2 : index
    %c0_130 = arith.constant 0 : index
    %148 = vector.load %arg2[%c0_127, %147, %c4_128, %c2_129, %c0_130] : memref<1x6x12x12x4xf32, #tpu.memory_space<vmem>>, vector<1x4x8x8x4xf32>
    %149 = vector.shape_cast %148 : vector<1x4x8x8x4xf32> to vector<4x8x8x4xf32>
    %150 = vector.shape_cast %149 : vector<4x8x8x4xf32> to vector<256x4xf32>
    %c16 = arith.constant 16 : index
    %c0_131 = arith.constant 0 : index
    %c0_132 = arith.constant 0 : index
    %151 = vector.load %arg3[%c16, %c0_131, %c0_132] : memref<27x4x8xf32, #tpu.memory_space<vmem>>, vector<1x4x8xf32>
    %152 = vector.shape_cast %151 : vector<1x4x8xf32> to vector<4x8xf32>
    %cst_133 = arith.constant dense<0.000000e+00> : vector<256x8xf32>
    %153 = tpu.matmul %150, %152, %cst_133 {dimension_numbers = #tpu.dot_dimension_numbers<[1], [0], [0], [1], [0, 0, 1, 1], [], []>} : vector<256x4xf32>, vector<4x8xf32>, vector<256x8xf32> -> vector<256x8xf32>
    %154 = arith.addf %145, %153 : vector<256x8xf32>
    %c1_i32_134 = arith.constant 1 : i32
    %155 = arith.addi %0, %c1_i32_134 : i32
    %c0_135 = arith.constant 0 : index
    %156 = arith.index_cast %155 : i32 to index
    %c4_136 = arith.constant 4 : index
    %c4_137 = arith.constant 4 : index
    %c0_138 = arith.constant 0 : index
    %157 = vector.load %arg2[%c0_135, %156, %c4_136, %c4_137, %c0_138] : memref<1x6x12x12x4xf32, #tpu.memory_space<vmem>>, vector<1x4x8x8x4xf32>
    %158 = vector.shape_cast %157 : vector<1x4x8x8x4xf32> to vector<4x8x8x4xf32>
    %159 = vector.shape_cast %158 : vector<4x8x8x4xf32> to vector<256x4xf32>
    %c17 = arith.constant 17 : index
    %c0_139 = arith.constant 0 : index
    %c0_140 = arith.constant 0 : index
    %160 = vector.load %arg3[%c17, %c0_139, %c0_140] : memref<27x4x8xf32, #tpu.memory_space<vmem>>, vector<1x4x8xf32>
    %161 = vector.shape_cast %160 : vector<1x4x8xf32> to vector<4x8xf32>
    %cst_141 = arith.constant dense<0.000000e+00> : vector<256x8xf32>
    %162 = tpu.matmul %159, %161, %cst_141 {dimension_numbers = #tpu.dot_dimension_numbers<[1], [0], [0], [1], [0, 0, 1, 1], [], []>} : vector<256x4xf32>, vector<4x8xf32>, vector<256x8xf32> -> vector<256x8xf32>
    %163 = arith.addf %154, %162 : vector<256x8xf32>
    %c2_i32 = arith.constant 2 : i32
    %164 = arith.addi %0, %c2_i32 : i32
    %c0_142 = arith.constant 0 : index
    %165 = arith.index_cast %164 : i32 to index
    %c0_143 = arith.constant 0 : index
    %c0_144 = arith.constant 0 : index
    %c0_145 = arith.constant 0 : index
    %166 = vector.load %arg2[%c0_142, %165, %c0_143, %c0_144, %c0_145] : memref<1x6x12x12x4xf32, #tpu.memory_space<vmem>>, vector<1x4x8x8x4xf32>
    %167 = vector.shape_cast %166 : vector<1x4x8x8x4xf32> to vector<4x8x8x4xf32>
    %168 = vector.shape_cast %167 : vector<4x8x8x4xf32> to vector<256x4xf32>
    %c18 = arith.constant 18 : index
    %c0_146 = arith.constant 0 : index
    %c0_147 = arith.constant 0 : index
    %169 = vector.load %arg3[%c18, %c0_146, %c0_147] : memref<27x4x8xf32, #tpu.memory_space<vmem>>, vector<1x4x8xf32>
    %170 = vector.shape_cast %169 : vector<1x4x8xf32> to vector<4x8xf32>
    %cst_148 = arith.constant dense<0.000000e+00> : vector<256x8xf32>
    %171 = tpu.matmul %168, %170, %cst_148 {dimension_numbers = #tpu.dot_dimension_numbers<[1], [0], [0], [1], [0, 0, 1, 1], [], []>} : vector<256x4xf32>, vector<4x8xf32>, vector<256x8xf32> -> vector<256x8xf32>
    %172 = arith.addf %163, %171 : vector<256x8xf32>
    %c2_i32_149 = arith.constant 2 : i32
    %173 = arith.addi %0, %c2_i32_149 : i32
    %c0_150 = arith.constant 0 : index
    %174 = arith.index_cast %173 : i32 to index
    %c0_151 = arith.constant 0 : index
    %c2_152 = arith.constant 2 : index
    %c0_153 = arith.constant 0 : index
    %175 = vector.load %arg2[%c0_150, %174, %c0_151, %c2_152, %c0_153] : memref<1x6x12x12x4xf32, #tpu.memory_space<vmem>>, vector<1x4x8x8x4xf32>
    %176 = vector.shape_cast %175 : vector<1x4x8x8x4xf32> to vector<4x8x8x4xf32>
    %177 = vector.shape_cast %176 : vector<4x8x8x4xf32> to vector<256x4xf32>
    %c19 = arith.constant 19 : index
    %c0_154 = arith.constant 0 : index
    %c0_155 = arith.constant 0 : index
    %178 = vector.load %arg3[%c19, %c0_154, %c0_155] : memref<27x4x8xf32, #tpu.memory_space<vmem>>, vector<1x4x8xf32>
    %179 = vector.shape_cast %178 : vector<1x4x8xf32> to vector<4x8xf32>
    %cst_156 = arith.constant dense<0.000000e+00> : vector<256x8xf32>
    %180 = tpu.matmul %177, %179, %cst_156 {dimension_numbers = #tpu.dot_dimension_numbers<[1], [0], [0], [1], [0, 0, 1, 1], [], []>} : vector<256x4xf32>, vector<4x8xf32>, vector<256x8xf32> -> vector<256x8xf32>
    %181 = arith.addf %172, %180 : vector<256x8xf32>
    %c2_i32_157 = arith.constant 2 : i32
    %182 = arith.addi %0, %c2_i32_157 : i32
    %c0_158 = arith.constant 0 : index
    %183 = arith.index_cast %182 : i32 to index
    %c0_159 = arith.constant 0 : index
    %c4_160 = arith.constant 4 : index
    %c0_161 = arith.constant 0 : index
    %184 = vector.load %arg2[%c0_158, %183, %c0_159, %c4_160, %c0_161] : memref<1x6x12x12x4xf32, #tpu.memory_space<vmem>>, vector<1x4x8x8x4xf32>
    %185 = vector.shape_cast %184 : vector<1x4x8x8x4xf32> to vector<4x8x8x4xf32>
    %186 = vector.shape_cast %185 : vector<4x8x8x4xf32> to vector<256x4xf32>
    %c20 = arith.constant 20 : index
    %c0_162 = arith.constant 0 : index
    %c0_163 = arith.constant 0 : index
    %187 = vector.load %arg3[%c20, %c0_162, %c0_163] : memref<27x4x8xf32, #tpu.memory_space<vmem>>, vector<1x4x8xf32>
    %188 = vector.shape_cast %187 : vector<1x4x8xf32> to vector<4x8xf32>
    %cst_164 = arith.constant dense<0.000000e+00> : vector<256x8xf32>
    %189 = tpu.matmul %186, %188, %cst_164 {dimension_numbers = #tpu.dot_dimension_numbers<[1], [0], [0], [1], [0, 0, 1, 1], [], []>} : vector<256x4xf32>, vector<4x8xf32>, vector<256x8xf32> -> vector<256x8xf32>
    %190 = arith.addf %181, %189 : vector<256x8xf32>
    %c2_i32_165 = arith.constant 2 : i32
    %191 = arith.addi %0, %c2_i32_165 : i32
    %c0_166 = arith.constant 0 : index
    %192 = arith.index_cast %191 : i32 to index
    %c2_167 = arith.constant 2 : index
    %c0_168 = arith.constant 0 : index
    %c0_169 = arith.constant 0 : index
    %193 = vector.load %arg2[%c0_166, %192, %c2_167, %c0_168, %c0_169] : memref<1x6x12x12x4xf32, #tpu.memory_space<vmem>>, vector<1x4x8x8x4xf32>
    %194 = vector.shape_cast %193 : vector<1x4x8x8x4xf32> to vector<4x8x8x4xf32>
    %195 = vector.shape_cast %194 : vector<4x8x8x4xf32> to vector<256x4xf32>
    %c21 = arith.constant 21 : index
    %c0_170 = arith.constant 0 : index
    %c0_171 = arith.constant 0 : index
    %196 = vector.load %arg3[%c21, %c0_170, %c0_171] : memref<27x4x8xf32, #tpu.memory_space<vmem>>, vector<1x4x8xf32>
    %197 = vector.shape_cast %196 : vector<1x4x8xf32> to vector<4x8xf32>
    %cst_172 = arith.constant dense<0.000000e+00> : vector<256x8xf32>
    %198 = tpu.matmul %195, %197, %cst_172 {dimension_numbers = #tpu.dot_dimension_numbers<[1], [0], [0], [1], [0, 0, 1, 1], [], []>} : vector<256x4xf32>, vector<4x8xf32>, vector<256x8xf32> -> vector<256x8xf32>
    %199 = arith.addf %190, %198 : vector<256x8xf32>
    %c2_i32_173 = arith.constant 2 : i32
    %200 = arith.addi %0, %c2_i32_173 : i32
    %c0_174 = arith.constant 0 : index
    %201 = arith.index_cast %200 : i32 to index
    %c2_175 = arith.constant 2 : index
    %c2_176 = arith.constant 2 : index
    %c0_177 = arith.constant 0 : index
    %202 = vector.load %arg2[%c0_174, %201, %c2_175, %c2_176, %c0_177] : memref<1x6x12x12x4xf32, #tpu.memory_space<vmem>>, vector<1x4x8x8x4xf32>
    %203 = vector.shape_cast %202 : vector<1x4x8x8x4xf32> to vector<4x8x8x4xf32>
    %204 = vector.shape_cast %203 : vector<4x8x8x4xf32> to vector<256x4xf32>
    %c22 = arith.constant 22 : index
    %c0_178 = arith.constant 0 : index
    %c0_179 = arith.constant 0 : index
    %205 = vector.load %arg3[%c22, %c0_178, %c0_179] : memref<27x4x8xf32, #tpu.memory_space<vmem>>, vector<1x4x8xf32>
    %206 = vector.shape_cast %205 : vector<1x4x8xf32> to vector<4x8xf32>
    %cst_180 = arith.constant dense<0.000000e+00> : vector<256x8xf32>
    %207 = tpu.matmul %204, %206, %cst_180 {dimension_numbers = #tpu.dot_dimension_numbers<[1], [0], [0], [1], [0, 0, 1, 1], [], []>} : vector<256x4xf32>, vector<4x8xf32>, vector<256x8xf32> -> vector<256x8xf32>
    %208 = arith.addf %199, %207 : vector<256x8xf32>
    %c2_i32_181 = arith.constant 2 : i32
    %209 = arith.addi %0, %c2_i32_181 : i32
    %c0_182 = arith.constant 0 : index
    %210 = arith.index_cast %209 : i32 to index
    %c2_183 = arith.constant 2 : index
    %c4_184 = arith.constant 4 : index
    %c0_185 = arith.constant 0 : index
    %211 = vector.load %arg2[%c0_182, %210, %c2_183, %c4_184, %c0_185] : memref<1x6x12x12x4xf32, #tpu.memory_space<vmem>>, vector<1x4x8x8x4xf32>
    %212 = vector.shape_cast %211 : vector<1x4x8x8x4xf32> to vector<4x8x8x4xf32>
    %213 = vector.shape_cast %212 : vector<4x8x8x4xf32> to vector<256x4xf32>
    %c23 = arith.constant 23 : index
    %c0_186 = arith.constant 0 : index
    %c0_187 = arith.constant 0 : index
    %214 = vector.load %arg3[%c23, %c0_186, %c0_187] : memref<27x4x8xf32, #tpu.memory_space<vmem>>, vector<1x4x8xf32>
    %215 = vector.shape_cast %214 : vector<1x4x8xf32> to vector<4x8xf32>
    %cst_188 = arith.constant dense<0.000000e+00> : vector<256x8xf32>
    %216 = tpu.matmul %213, %215, %cst_188 {dimension_numbers = #tpu.dot_dimension_numbers<[1], [0], [0], [1], [0, 0, 1, 1], [], []>} : vector<256x4xf32>, vector<4x8xf32>, vector<256x8xf32> -> vector<256x8xf32>
    %217 = arith.addf %208, %216 : vector<256x8xf32>
    %c2_i32_189 = arith.constant 2 : i32
    %218 = arith.addi %0, %c2_i32_189 : i32
    %c0_190 = arith.constant 0 : index
    %219 = arith.index_cast %218 : i32 to index
    %c4_191 = arith.constant 4 : index
    %c0_192 = arith.constant 0 : index
    %c0_193 = arith.constant 0 : index
    %220 = vector.load %arg2[%c0_190, %219, %c4_191, %c0_192, %c0_193] : memref<1x6x12x12x4xf32, #tpu.memory_space<vmem>>, vector<1x4x8x8x4xf32>
    %221 = vector.shape_cast %220 : vector<1x4x8x8x4xf32> to vector<4x8x8x4xf32>
    %222 = vector.shape_cast %221 : vector<4x8x8x4xf32> to vector<256x4xf32>
    %c24 = arith.constant 24 : index
    %c0_194 = arith.constant 0 : index
    %c0_195 = arith.constant 0 : index
    %223 = vector.load %arg3[%c24, %c0_194, %c0_195] : memref<27x4x8xf32, #tpu.memory_space<vmem>>, vector<1x4x8xf32>
    %224 = vector.shape_cast %223 : vector<1x4x8xf32> to vector<4x8xf32>
    %cst_196 = arith.constant dense<0.000000e+00> : vector<256x8xf32>
    %225 = tpu.matmul %222, %224, %cst_196 {dimension_numbers = #tpu.dot_dimension_numbers<[1], [0], [0], [1], [0, 0, 1, 1], [], []>} : vector<256x4xf32>, vector<4x8xf32>, vector<256x8xf32> -> vector<256x8xf32>
    %226 = arith.addf %217, %225 : vector<256x8xf32>
    %c2_i32_197 = arith.constant 2 : i32
    %227 = arith.addi %0, %c2_i32_197 : i32
    %c0_198 = arith.constant 0 : index
    %228 = arith.index_cast %227 : i32 to index
    %c4_199 = arith.constant 4 : index
    %c2_200 = arith.constant 2 : index
    %c0_201 = arith.constant 0 : index
    %229 = vector.load %arg2[%c0_198, %228, %c4_199, %c2_200, %c0_201] : memref<1x6x12x12x4xf32, #tpu.memory_space<vmem>>, vector<1x4x8x8x4xf32>
    %230 = vector.shape_cast %229 : vector<1x4x8x8x4xf32> to vector<4x8x8x4xf32>
    %231 = vector.shape_cast %230 : vector<4x8x8x4xf32> to vector<256x4xf32>
    %c25 = arith.constant 25 : index
    %c0_202 = arith.constant 0 : index
    %c0_203 = arith.constant 0 : index
    %232 = vector.load %arg3[%c25, %c0_202, %c0_203] : memref<27x4x8xf32, #tpu.memory_space<vmem>>, vector<1x4x8xf32>
    %233 = vector.shape_cast %232 : vector<1x4x8xf32> to vector<4x8xf32>
    %cst_204 = arith.constant dense<0.000000e+00> : vector<256x8xf32>
    %234 = tpu.matmul %231, %233, %cst_204 {dimension_numbers = #tpu.dot_dimension_numbers<[1], [0], [0], [1], [0, 0, 1, 1], [], []>} : vector<256x4xf32>, vector<4x8xf32>, vector<256x8xf32> -> vector<256x8xf32>
    %235 = arith.addf %226, %234 : vector<256x8xf32>
    %c2_i32_205 = arith.constant 2 : i32
    %236 = arith.addi %0, %c2_i32_205 : i32
    %c0_206 = arith.constant 0 : index
    %237 = arith.index_cast %236 : i32 to index
    %c4_207 = arith.constant 4 : index
    %c4_208 = arith.constant 4 : index
    %c0_209 = arith.constant 0 : index
    %238 = vector.load %arg2[%c0_206, %237, %c4_207, %c4_208, %c0_209] : memref<1x6x12x12x4xf32, #tpu.memory_space<vmem>>, vector<1x4x8x8x4xf32>
    %239 = vector.shape_cast %238 : vector<1x4x8x8x4xf32> to vector<4x8x8x4xf32>
    %240 = vector.shape_cast %239 : vector<4x8x8x4xf32> to vector<256x4xf32>
    %c26 = arith.constant 26 : index
    %c0_210 = arith.constant 0 : index
    %c0_211 = arith.constant 0 : index
    %241 = vector.load %arg3[%c26, %c0_210, %c0_211] : memref<27x4x8xf32, #tpu.memory_space<vmem>>, vector<1x4x8xf32>
    %242 = vector.shape_cast %241 : vector<1x4x8xf32> to vector<4x8xf32>
    %cst_212 = arith.constant dense<0.000000e+00> : vector<256x8xf32>
    %243 = tpu.matmul %240, %242, %cst_212 {dimension_numbers = #tpu.dot_dimension_numbers<[1], [0], [0], [1], [0, 0, 1, 1], [], []>} : vector<256x4xf32>, vector<4x8xf32>, vector<256x8xf32> -> vector<256x8xf32>
    %244 = arith.addf %235, %243 : vector<256x8xf32>
    %c0_213 = arith.constant 0 : index
    %c0_214 = arith.constant 0 : index
    %245 = vector.load %arg4[%c0_213, %c0_214] : memref<256x8xf32, #tpu.memory_space<vmem>>, vector<256x8xf32>
    tpu.vector_store %arg4[%c0_213, %c0_214], %244 {strides = array<i32>} : memref<256x8xf32, #tpu.memory_space<vmem>>, vector<256x8xf32>,
    %cst_215 = arith.constant dense<0.000000e+00> : vector<8xf32>
    %246 = vector.multi_reduction <add>, %244, %cst_215 [0] : vector<256x8xf32> to vector<8xf32>
    %247 = vector.shape_cast %246 : vector<8xf32> to vector<1x8xf32>
    %248 = arith.mulf %244, %244 : vector<256x8xf32>
    %cst_216 = arith.constant dense<0.000000e+00> : vector<8xf32>
    %249 = vector.multi_reduction <add>, %248, %cst_216 [0] : vector<256x8xf32> to vector<8xf32>
    %250 = vector.shape_cast %249 : vector<8xf32> to vector<1x8xf32>
    %251 = tpu.concatenate %247, %250 in 0 : vector<1x8xf32>, vector<1x8xf32> -> vector<2x8xf32>
    %252 = vector.shape_cast %251 : vector<2x8xf32> to vector<1x2x8xf32>
    %c0_217 = arith.constant 0 : index
    %c0_218 = arith.constant 0 : index
    %c0_219 = arith.constant 0 : index
    %253 = vector.load %arg5[%c0_217, %c0_218, %c0_219] : memref<1x2x8xf32, #tpu.memory_space<vmem>>, vector<1x2x8xf32>
    tpu.vector_store %arg5[%c0_217, %c0_218, %c0_219], %252 {strides = array<i32>} : memref<1x2x8xf32, #tpu.memory_space<vmem>>, vector<1x2x8xf32>,
    return
  }
  func.func @transform_0(%arg0: i32, %arg1: i32) -> (i32, i32, i32, i32, i32) {
    %c0_i32 = arith.constant 0 : i32
    %c0_i32_0 = arith.constant 0 : i32
    %c0_i32_1 = arith.constant 0 : i32
    %c0_i32_2 = arith.constant 0 : i32
    %c0_i32_3 = arith.constant 0 : i32
    return %arg0, %c0_i32, %c0_i32_0, %c0_i32_1, %c0_i32_2 : i32, i32, i32, i32, i32
  }
  func.func @transform_1(%arg0: i32, %arg1: i32) -> (i32, i32, i32) {
    %c0_i32 = arith.constant 0 : i32
    %c0_i32_0 = arith.constant 0 : i32
    %c0_i32_1 = arith.constant 0 : i32
    %c0_i32_2 = arith.constant 0 : i32
    return %c0_i32, %c0_i32_0, %c0_i32_1 : i32, i32, i32
  }
  func.func @transform_2(%arg0: i32, %arg1: i32) -> (i32, i32) {
    %c1_i32 = arith.constant 1 : i32
    %0 = arith.muli %arg0, %c1_i32 : i32
    %1 = arith.addi %0, %arg1 : i32
    %c0_i32 = arith.constant 0 : i32
    %c0_i32_0 = arith.constant 0 : i32
    return %1, %c0_i32 : i32, i32
  }
  func.func @transform_3(%arg0: i32, %arg1: i32) -> (i32, i32, i32) {
    %c1_i32 = arith.constant 1 : i32
    %0 = arith.muli %arg0, %c1_i32 : i32
    %1 = arith.addi %0, %arg1 : i32
    %c0_i32 = arith.constant 0 : i32
    %c0_i32_0 = arith.constant 0 : i32
    %c0_i32_1 = arith.constant 0 : i32
    return %1, %c0_i32, %c0_i32_0 : i32, i32, i32
  }
}

</mosaic_0001>

<llo_original>
// kernel: tpu_custom_call.1
$region0: #{tpu_custom_call.1}
  #allocation0 [shape = 'u32[]', space=smem, size = 0x4, offset = 0x4, fixed_abs, tag = 'smem constant byte address 0x4 - core index']
  #allocation1 [shape = 'u32[144,128]{1,0:T(1,128)}', space=vmem, size = 0x12000, scoped, tag = 'internal scratch']
  %s0 = inlined_call_operand.vmem [shape: f32[2,6,12,12,4], index: 0, kind: input, shape index: {}]
  %s1 = inlined_call_operand.vmem [shape: f32[27,4,8], index: 1, kind: input, shape index: {}]
  %s2 = inlined_call_operand.vmem [shape: f32[512,8], index: 2, kind: output, shape index: {0}]
  %s3 = inlined_call_operand.hbm [shape: f32[2,2,8], index: 3, kind: output, shape index: {1}]
  %4 = xla_tuple %s2, %s3
  %s5 = sld [smem:[#allocation0]]
  $region49: #{tpu_custom_call.1} parent=0
    _
  %s7 = ssub.s32 1, %s5
  %s8 = scalar_select 0, %s7, %s5
  $region1: #{tpu_custom_call.1} parent=0
    #allocation2 [shape = 'u8[2048]{0}', space=vmem, size = 0x800, scoped, tag = 'output window, operand 1']
    #allocation3 [shape = 's32[2]{0}', space=sflag, size = 0x8, scoped, tag = 'scoped memory for tpu_custom_call.1']
    %9 = vsyncpa [#allocation3], 0
    %s10 = scalar_lea.sflag [#allocation3], 1
    %11 = vsyncpa %s10, 0
    loop: start=0, step=1, limit=4
    $region2: #{tpu_custom_call.1} parent=1 // loop_pre_header
      _
    $region3: #{tpu_custom_call.1} parent=1 // loop_header
      %s13 = sphi 0, %s17
      %p14 = scmp.ge.s32.totalorder %s13, 4
      %s20 = sphi 0, %s32
      %s21 = sphi 0, %s28
      %s22 = sphi 0, %s20
      %s23 = sphi 0, %s21
      %s24 = sphi 0, %s22
      %s25 = sphi 0, %s23
      %s35 = sphi 0, %s37
      %s38 = sphi 0, %s35
      %s39 = sphi 0, %s38
      %s55 = sphi 0, %s39
      %s59 = sphi 0, %s59
      %s61 = sphi 0, %s59
      %s62 = sphi 0, %s61
      %s76 = sphi 0, %s62
      %s84 = sphi 0, %s86
      %s87 = sphi 0, %s84
      %s88 = sphi 0, %s87
      %s104 = sphi 0, %s88
      %s112 = sphi 0, %s114
      %s115 = sphi 0, %s112
      %s116 = sphi 0, %s115
      %s132 = sphi 0, %s116
    $region4: #{tpu_custom_call.1} parent=1 // loop_header_branch
      %16 = sbr.rel (%p14) target = $region8
    $region5: #{tpu_custom_call.1} parent=1 // loop_body
      %s18 = ssub.s32 %s13, 1
      %s19 = ssub.s32 %s13, 2
      %s26 = sadd.s32 1, %s21
      %p27 = scmp.ge.s32.totalorder %s26, 1
      %s28 = scalar_select %p27, 0, %s26
      %s29 = sadd.s32 1, %s20
      %s30 = scalar_select %p27, %s29, %s20
      %p31 = scmp.ge.s32.totalorder %s30, 2
      %s32 = scalar_select %p31, 0, %s30
      %s33 = ssub.s32 %s20, %s32
      %p34 = scmp.eq.s32.totalorder %s33, 0
      %s36 = sadd.s32 %s35, 1
      %s37 = scalar_select %p34, %s35, %s36
      %p40 = pneg %p34
      %p41 = scmp.eq.s32.totalorder %s13, 1
      %p42 = por %p40, %p41
      %p43 = scmp.ne.s32.totalorder %s35, %s38
      %p44 = scmp.eq.s32.totalorder %s13, 0
      %p45 = por %p43, %p44
      %p46 = scmp.ne.s32.totalorder %s35, %s38
      %p47 = scmp.eq.s32.totalorder %s18, 1
      %p48 = por %p46, %p47
      %p49 = scmp.ne.s32.totalorder %s38, %s39
      %p50 = scmp.eq.s32.totalorder %s18, 0
      %p51 = por %p49, %p50
      %p52 = scmp.ne.s32.totalorder %s38, %s39
      %p53 = scmp.eq.s32.totalorder %s19, 1
      %p54 = por %p52, %p53
      %p56 = scmp.ne.s32.totalorder %s39, %s55
      %p57 = scmp.eq.s32.totalorder %s19, 0
      %p58 = por %p56, %p57
      %s60 = sadd.s32 %s59, 1
      %p63 = scmp.eq.s32.totalorder %s13, 1
      %p64 = scmp.ne.s32.totalorder %s59, %s61
      %p65 = scmp.eq.s32.totalorder %s13, 0
      %p66 = por %p64, %p65
      %p67 = scmp.ne.s32.totalorder %s59, %s61
      %p68 = scmp.eq.s32.totalorder %s18, 1
      %p69 = por %p67, %p68
      %p70 = scmp.ne.s32.totalorder %s61, %s62
      %p71 = scmp.eq.s32.totalorder %s18, 0
      %p72 = por %p70, %p71
      %p73 = scmp.ne.s32.totalorder %s61, %s62
      %p74 = scmp.eq.s32.totalorder %s19, 1
      %p75 = por %p73, %p74
      %p77 = scmp.ne.s32.totalorder %s62, %s76
      %p78 = scmp.eq.s32.totalorder %s19, 0
      %p79 = por %p77, %p78
      %s80 = sadd.s32 %s20, %s21
      %s81 = sadd.s32 %s32, %s28
      %s82 = ssub.s32 %s80, %s81
      %p83 = scmp.eq.s32.totalorder %s82, 0
      %s85 = sadd.s32 %s84, 1
      %s86 = scalar_select %p83, %s84, %s85
      %p89 = pneg %p83
      %p90 = scmp.eq.s32.totalorder %s13, 1
      %p91 = por %p89, %p90
      %p92 = scmp.ne.s32.totalorder %s84, %s87
      %p93 = scmp.eq.s32.totalorder %s13, 0
      %p94 = por %p92, %p93
      %p95 = scmp.ne.s32.totalorder %s84, %s87
      %p96 = scmp.eq.s32.totalorder %s18, 1
      %p97 = por %p95, %p96
      %p98 = scmp.ne.s32.totalorder %s87, %s88
      %p99 = scmp.eq.s32.totalorder %s18, 0
      %p100 = por %p98, %p99
      %p101 = scmp.ne.s32.totalorder %s87, %s88
      %p102 = scmp.eq.s32.totalorder %s19, 1
      %p103 = por %p101, %p102
      %p105 = scmp.ne.s32.totalorder %s88, %s104
      %p106 = scmp.eq.s32.totalorder %s19, 0
      %p107 = por %p105, %p106
      %s108 = sadd.s32 %s20, %s21
      %s109 = sadd.s32 %s32, %s28
      %s110 = ssub.s32 %s108, %s109
      %p111 = scmp.eq.s32.totalorder %s110, 0
      %s113 = sadd.s32 %s112, 1
      %s114 = scalar_select %p111, %s112, %s113
      %p117 = pneg %p111
      %p118 = scmp.eq.s32.totalorder %s13, 1
      %p119 = por %p117, %p118
      %p120 = scmp.ne.s32.totalorder %s112, %s115
      %p121 = scmp.eq.s32.totalorder %s13, 0
      %p122 = por %p120, %p121
      %p123 = scmp.ne.s32.totalorder %s112, %s115
      %p124 = scmp.eq.s32.totalorder %s18, 1
      %p125 = por %p123, %p124
      %p126 = scmp.ne.s32.totalorder %s115, %s116
      %p127 = scmp.eq.s32.totalorder %s18, 0
      %p128 = por %p126, %p127
      %p129 = scmp.ne.s32.totalorder %s115, %s116
      %p130 = scmp.eq.s32.totalorder %s19, 1
      %p131 = por %p129, %p130
      %p133 = scmp.ne.s32.totalorder %s116, %s132
      %p134 = scmp.eq.s32.totalorder %s19, 0
      %p135 = por %p133, %p134
      %p136 = scmp.le.s32.totalorder 1, %s13
      %p137 = scmp.lt.s32.totalorder %s13, 3
      %p138 = pnand %p136, %p137
      %p139 = pneg %p138
      // Predicated region
      $region9: #{tpu_custom_call.1} parent=5 // pred_check
        _
      $region10: #{tpu_custom_call.1} parent=5 // pred_check_branch
        %141 = sbr.rel (%p138) target = $region12
      $region11: #{tpu_custom_call.1} parent=5 // pred_region
        %s142 = ssub.s32 %s13, 1
        // Predicated region
        $region13: #{tpu_custom_call.1} parent=11 // pred_check
          %p143 = pneg %p72
        $region14: #{tpu_custom_call.1} parent=11 // pred_check_branch
          %145 = sbr.rel (%p143) target = $region16
        $region15: #{tpu_custom_call.1} parent=11 // pred_region
          _
        $region16: #{tpu_custom_call.1} parent=11 // pred_fallthru
          _
      $region12: #{tpu_custom_call.1} parent=5 // pred_fallthru
        _
      %p146 = scmp.lt.s32.totalorder %s13, 2
      // Predicated region
      $region17: #{tpu_custom_call.1} parent=5 // pred_check
        %p147 = pneg %p146
      $region18: #{tpu_custom_call.1} parent=5 // pred_check_branch
        %149 = sbr.rel (%p147) target = $region20
      $region19: #{tpu_custom_call.1} parent=5 // pred_region
        // Predicated region
        $region21: #{tpu_custom_call.1} parent=19 // pred_check
          %p150 = pneg %p45
        $region22: #{tpu_custom_call.1} parent=19 // pred_check_branch
          %152 = sbr.rel (%p150) target = $region24
        $region23: #{tpu_custom_call.1} parent=19 // pred_region
          %p153 = scmp.lt.s32.totalorder %s20, 1
          %s154 = scalar_select %p153, %s20, 1
          %s155 = smul.addr %s154, 144
          %s156 = smul.addr %s155, 8
          %s157 = scalar_lea.vmem %s0, %s156
        $region24: #{tpu_custom_call.1} parent=19 // pred_fallthru
          _
      $region20: #{tpu_custom_call.1} parent=5 // pred_fallthru
        _
      %p158 = scmp.le.s32.totalorder 1, %s13
      %p159 = scmp.lt.s32.totalorder %s13, 3
      %p160 = pnand %p158, %p159
      %p161 = pneg %p160
      // Predicated region
      $region25: #{tpu_custom_call.1} parent=5 // pred_check
        _
      $region26: #{tpu_custom_call.1} parent=5 // pred_check_branch
        %163 = sbr.rel (%p160) target = $region28
      $region27: #{tpu_custom_call.1} parent=5 // pred_region
        %s164 = ssub.s32 %s13, 1
        %p165 = scmp.lt.s32.totalorder %s22, 1
        %s166 = scalar_select %p165, %s22, 1
        %s167 = smul.addr %s166, 144
        %s168 = smul.addr %s167, 8
        %s169 = scalar_lea.vmem %s0, %s168
        %p170 = pneg %p51
        %p171 = pneg %p48
        %p172 = pneg %p72
        %p173 = pneg %p69
        %p174 = pneg %p100
        %p175 = pneg %p97
        %s176 = sadd.s32 %s22, %s23
        %s177 = smul.u32 32, %s176
        %p178 = scmp.lt.s32.totalorder %s177, 63
        %s179 = scalar_select %p178, %s177, 63
        %s180 = smul.addr %s179, 8
        %s181 = scalar_lea.vmem %s2, %s180
        %p182 = pneg %p128
        %p183 = pneg %p125
        %s184 = sand.u32 %s115, 1
        %s185 = scalar_lea.sflag [#allocation3], %s184
        %s186 = sand.u32 %s115, 1
        %s187 = smul.addr %s186, 2
        %s188 = scalar_lea.vmem [#allocation2], %s187
        %p189 = scmp.lt.s32.totalorder %s22, 1
        %s190 = scalar_select %p189, %s22, 1
        %s191 = smul.addr %s190, 144
        %s192 = smul.addr %s191, 8
        %s193 = scalar_lea.vmem %s0, %s192
        %s194 = sadd.s32 %s22, %s23
        %s195 = smul.u32 32, %s194
        %p196 = scmp.lt.s32.totalorder %s195, 63
        %s197 = scalar_select %p196, %s195, 63
        %s198 = smul.addr %s197, 8
        %s199 = scalar_lea.vmem %s2, %s198
        %s200 = sadd.s32 %s22, %s23
        %s201 = smul.u32 32, %s200
        %s202 = sadd.s32 %s22, %s23
        %s203 = smul.u32 %s23, 4
        %s204 = smul.u32 %s203, 192
        %s205 = scalar_lea.vmem %s193, %s204
        %v206 = vld [vmem:[%s205] sm:$0xff]
        %v207 = vld [vmem:[%s205 + $0x10] sm:$0xff]
        %v208 = vld [vmem:[%s205 + $0x20] sm:$0xff]
        %v209 = vld [vmem:[%s205 + $0x30] sm:$0xff]
        %v210 = vld [vmem:[%s205 + $0x40] sm:$0xff]
        %v211 = vld [vmem:[%s205 + $0x50] sm:$0xff]
        %v212 = vld [vmem:[%s205 + $0x60] sm:$0xff]
        %v213 = vld [vmem:[%s205 + $0x70] sm:$0xff]
        %v214 = vld [vmem:[%s205 + $0xc0] sm:$0xff]
        %v215 = vld [vmem:[%s205 + $0xd0] sm:$0xff]
        %v216 = vld [vmem:[%s205 + $0xe0] sm:$0xff]
        %v217 = vld [vmem:[%s205 + $0xf0] sm:$0xff]
        %v218 = vld [vmem:[%s205 + $0x100] sm:$0xff]
        %v219 = vld [vmem:[%s205 + $0x110] sm:$0xff]
        %v220 = vld [vmem:[%s205 + $0x120] sm:$0xff]
        %v221 = vld [vmem:[%s205 + $0x130] sm:$0xff]
        %v222 = vld [vmem:[%s205 + $0x180] sm:$0xff]
        %v223 = vld [vmem:[%s205 + $0x190] sm:$0xff]
        %v224 = vld [vmem:[%s205 + $0x1a0] sm:$0xff]
        %v225 = vld [vmem:[%s205 + $0x1b0] sm:$0xff]
        %v226 = vld [vmem:[%s205 + $0x1c0] sm:$0xff]
        %v227 = vld [vmem:[%s205 + $0x1d0] sm:$0xff]
        %v228 = vld [vmem:[%s205 + $0x1e0] sm:$0xff]
        %v229 = vld [vmem:[%s205 + $0x1f0] sm:$0xff]
        %v230 = vld [vmem:[%s205 + $0x240] sm:$0xff]
        %v231 = vld [vmem:[%s205 + $0x250] sm:$0xff]
        %v232 = vld [vmem:[%s205 + $0x260] sm:$0xff]
        %v233 = vld [vmem:[%s205 + $0x270] sm:$0xff]
        %v234 = vld [vmem:[%s205 + $0x280] sm:$0xff]
        %v235 = vld [vmem:[%s205 + $0x290] sm:$0xff]
        %v236 = vld [vmem:[%s205 + $0x2a0] sm:$0xff]
        %v237 = vld [vmem:[%s205 + $0x2b0] sm:$0xff]
        %v238 = vld [vmem:[%s1] sm:$0xf]
        %v239 = vld [vmem:[%s205 + $0x2] sm:$0xff]
        %v240 = vld [vmem:[%s205 + $0x12] sm:$0xff]
        %v241 = vld [vmem:[%s205 + $0x22] sm:$0xff]
        %v242 = vld [vmem:[%s205 + $0x32] sm:$0xff]
        %v243 = vld [vmem:[%s205 + $0x42] sm:$0xff]
        %v244 = vld [vmem:[%s205 + $0x52] sm:$0xff]
        %v245 = vld [vmem:[%s205 + $0x62] sm:$0xff]
        %v246 = vld [vmem:[%s205 + $0x72] sm:$0xff]
        %v247 = vld [vmem:[%s205 + $0xc2] sm:$0xff]
        %v248 = vld [vmem:[%s205 + $0xd2] sm:$0xff]
        %v249 = vld [vmem:[%s205 + $0xe2] sm:$0xff]
        %v250 = vld [vmem:[%s205 + $0xf2] sm:$0xff]
        %v251 = vld [vmem:[%s205 + $0x102] sm:$0xff]
        %v252 = vld [vmem:[%s205 + $0x112] sm:$0xff]
        %v253 = vld [vmem:[%s205 + $0x122] sm:$0xff]
        %v254 = vld [vmem:[%s205 + $0x132] sm:$0xff]
        %v255 = vld [vmem:[%s205 + $0x182] sm:$0xff]
        %v256 = vld [vmem:[%s205 + $0x192] sm:$0xff]
        %v257 = vld [vmem:[%s205 + $0x1a2] sm:$0xff]
        %v258 = vld [vmem:[%s205 + $0x1b2] sm:$0xff]
        %v259 = vld [vmem:[%s205 + $0x1c2] sm:$0xff]
        %v260 = vld [vmem:[%s205 + $0x1d2] sm:$0xff]
        %v261 = vld [vmem:[%s205 + $0x1e2] sm:$0xff]
        %v262 = vld [vmem:[%s205 + $0x1f2] sm:$0xff]
        %v263 = vld [vmem:[%s205 + $0x242] sm:$0xff]
        %v264 = vld [vmem:[%s205 + $0x252] sm:$0xff]
        %v265 = vld [vmem:[%s205 + $0x262] sm:$0xff]
        %v266 = vld [vmem:[%s205 + $0x272] sm:$0xff]
        %v267 = vld [vmem:[%s205 + $0x282] sm:$0xff]
        %v268 = vld [vmem:[%s205 + $0x292] sm:$0xff]
        %v269 = vld [vmem:[%s205 + $0x2a2] sm:$0xff]
        %v270 = vld [vmem:[%s205 + $0x2b2] sm:$0xff]
        %s271 = scalar_lea.vmem %s1, 4
        %v272 = vld [vmem:[%s271] sm:$0xf]
        %vm273 = vcmask 31744
        %v275 = vsel %vm273, %v239, 0
        %v278 = vsel %vm273, %v240, 0
        %v281 = vsel %vm273, %v241, 0
        %v284 = vsel %vm273, %v242, 0
        %v287 = vsel %vm273, %v243, 0
        %v290 = vsel %vm273, %v244, 0
        %v293 = vsel %vm273, %v245, 0
        %v296 = vsel %vm273, %v246, 0
        %v299 = vsel %vm273, %v247, 0
        %v302 = vsel %vm273, %v248, 0
        %v305 = vsel %vm273, %v249, 0
        %v308 = vsel %vm273, %v250, 0
        %v311 = vsel %vm273, %v251, 0
        %v314 = vsel %vm273, %v252, 0
        %v317 = vsel %vm273, %v253, 0
        %v320 = vsel %vm273, %v254, 0
        %v323 = vsel %vm273, %v255, 0
        %v326 = vsel %vm273, %v256, 0
        %v329 = vsel %vm273, %v257, 0
        %v332 = vsel %vm273, %v258, 0
        %v335 = vsel %vm273, %v259, 0
        %v338 = vsel %vm273, %v260, 0
        %v341 = vsel %vm273, %v261, 0
        %v344 = vsel %vm273, %v262, 0
        %v347 = vsel %vm273, %v263, 0
        %v350 = vsel %vm273, %v264, 0
        %v353 = vsel %vm273, %v265, 0
        %v356 = vsel %vm273, %v266, 0
        %v359 = vsel %vm273, %v267, 0
        %v362 = vsel %vm273, %v268, 0
        %v365 = vsel %vm273, %v269, 0
        %v368 = vsel %vm273, %v270, 0
        %vm370 = vcmask 1043456
        %v372 = vsel %vm370, %v272, 0
        %374 = vmatprep.subr.mxu0 0.0
        %375 = vmatpush1.msra.mxu0 %v372
        %376 = vmatprep.subr.mxu0 0.0
        %377 = vmatpush1.msra.mxu0 0.0
        %378 = vmatprep.subr.mxu0 0.0
        %379 = vmatpush1.msra.mxu0 0.0
        %380 = vmatprep.subr.mxu0 0.0
        %381 = vmatpush1.msra.mxu0 0.0
        %382 = vmatprep.subr.mxu0 0.0
        %383 = vmatpush1.msra.mxu0 0.0
        %384 = vmatprep.subr.mxu0 0.0
        %385 = vmatpush1.msra.mxu0 0.0
        %386 = vmatprep.subr.mxu0 0.0
        %387 = vmatpush1.msra.mxu0 0.0
        %388 = vmatprep.subr.mxu0 0.0
        %389 = vmatpush1.msra.mxu0 0.0
        %390 = vmatprep.subr.mxu0 0.0
        %391 = vmatpush1.msra.mxu0 0.0
        %392 = vmatprep.subr.mxu0 0.0
        %393 = vmatpush1.msra.mxu0 0.0
        %394 = vmatprep.subr.mxu0 0.0
        %395 = vmatpush1.msra.mxu0 0.0
        %396 = vmatprep.subr.mxu0 0.0
        %397 = vmatpush1.msra.mxu0 0.0
        %398 = vmatprep.subr.mxu0 0.0
        %399 = vmatpush1.msra.mxu0 0.0
        %400 = vmatprep.subr.mxu0 0.0
        %401 = vmatpush1.msra.mxu0 0.0
        %402 = vmatprep.subr.mxu0 0.0
        %403 = vmatpush1.msra.mxu0 0.0
        %404 = vmatprep.subr.mxu0 0.0
        %405 = vmatpush1.msra.mxu0 0.0
        %406 = vmatprep.subr.mxu0 0.0
        %407 = vmatpush1.msra.mxu0 0.0
        %408 = vmatprep.subr.mxu0 0.0
        %409 = vmatpush1.msra.mxu0 0.0
        %410 = vmatprep.subr.mxu0 0.0
        %411 = vmatpush1.msra.mxu0 0.0
        %412 = vmatprep.subr.mxu0 0.0
        %413 = vmatpush1.msra.mxu0 0.0
        %414 = vmatprep.subr.mxu0 0.0
        %415 = vmatpush1.msra.mxu0 0.0
        %416 = vmatprep.subr.mxu0 0.0
        %417 = vmatpush1.msra.mxu0 0.0
        %418 = vmatprep.subr.mxu0 0.0
        %419 = vmatpush1.msra.mxu0 0.0
        %420 = vmatprep.subr.mxu0 0.0
        %421 = vmatpush1.msra.mxu0 0.0
        %422 = vmatprep.subr.mxu0 0.0
        %423 = vmatpush1.msra.mxu0 0.0
        %424 = vmatprep.subr.mxu0 0.0
        %425 = vmatpush1.msra.mxu0 0.0
        %426 = vmatprep.subr.mxu0 0.0
        %427 = vmatpush1.msra.mxu0 0.0
        %428 = vmatprep.subr.mxu0 0.0
        %429 = vmatpush1.msra.mxu0 0.0
        %430 = vmatprep.subr.mxu0 0.0
        %431 = vmatpush1.msra.mxu0 0.0
        %432 = vmatprep.subr.mxu0 0.0
        %433 = vmatpush1.msra.mxu0 0.0
        %434 = vmatprep.subr.mxu0 0.0
        %435 = vmatpush1.msra.mxu0 0.0
        %436 = vmatprep.subr.mxu0 0.0
        %437 = vmatpush1.msra.mxu0 0.0
        %438 = vmatprep.mubr.f32.mxu0 0.0
        %439 = vmatmul.mubr.f32.gmra.mrb[0].mxu0 %v275
        %v440 = vpop.f32.mrb[0].mxu0
        %v441 = vadd.f32 0.0, %v440
        %v442 = vpop.f32.mrb[0].mxu0
        %443 = vmatprep.mubr.f32.mxu0 0.0
        %444 = vmatmul.mubr.f32.gmra.mrb[0].mxu0 %v278
        %v445 = vpop.f32.mrb[0].mxu0
        %v446 = vadd.f32 0.0, %v445
        %v447 = vpop.f32.mrb[0].mxu0
        %448 = vmatprep.mubr.f32.mxu0 0.0
        %449 = vmatmul.mubr.f32.gmra.mrb[0].mxu0 %v281
        %v450 = vpop.f32.mrb[0].mxu0
        %v451 = vadd.f32 0.0, %v450
        %v452 = vpop.f32.mrb[0].mxu0
        %453 = vmatprep.mubr.f32.mxu0 0.0
        %454 = vmatmul.mubr.f32.gmra.mrb[0].mxu0 %v284
        %v455 = vpop.f32.mrb[0].mxu0
        %v456 = vadd.f32 0.0, %v455
        %v457 = vpop.f32.mrb[0].mxu0
        %458 = vmatprep.mubr.f32.mxu0 0.0
        %459 = vmatmul.mubr.f32.gmra.mrb[0].mxu0 %v287
        %v460 = vpop.f32.mrb[0].mxu0
        %v461 = vadd.f32 0.0, %v460
        %v462 = vpop.f32.mrb[0].mxu0
        %463 = vmatprep.mubr.f32.mxu0 0.0
        %464 = vmatmul.mubr.f32.gmra.mrb[0].mxu0 %v290
        %v465 = vpop.f32.mrb[0].mxu0
        %v466 = vadd.f32 0.0, %v465
        %v467 = vpop.f32.mrb[0].mxu0
        %468 = vmatprep.mubr.f32.mxu0 0.0
        %469 = vmatmul.mubr.f32.gmra.mrb[0].mxu0 %v293
        %v470 = vpop.f32.mrb[0].mxu0
        %v471 = vadd.f32 0.0, %v470
        %v472 = vpop.f32.mrb[0].mxu0
        %473 = vmatprep.mubr.f32.mxu0 0.0
        %474 = vmatmul.mubr.f32.gmra.mrb[0].mxu0 %v296
        %v475 = vpop.f32.mrb[0].mxu0
        %v476 = vadd.f32 0.0, %v475
        %v477 = vpop.f32.mrb[0].mxu0
        %478 = vmatprep.mubr.f32.mxu0 0.0
        %479 = vmatmul.mubr.f32.gmra.mrb[0].mxu0 %v299
        %v480 = vpop.f32.mrb[0].mxu0
        %v481 = vadd.f32 0.0, %v480
        %v482 = vpop.f32.mrb[0].mxu0
        %483 = vmatprep.mubr.f32.mxu0 0.0
        %484 = vmatmul.mubr.f32.gmra.mrb[0].mxu0 %v302
        %v485 = vpop.f32.mrb[0].mxu0
        %v486 = vadd.f32 0.0, %v485
        %v487 = vpop.f32.mrb[0].mxu0
        %488 = vmatprep.mubr.f32.mxu0 0.0
        %489 = vmatmul.mubr.f32.gmra.mrb[0].mxu0 %v305
        %v490 = vpop.f32.mrb[0].mxu0
        %v491 = vadd.f32 0.0, %v490
        %v492 = vpop.f32.mrb[0].mxu0
        %493 = vmatprep.mubr.f32.mxu0 0.0
        %494 = vmatmul.mubr.f32.gmra.mrb[0].mxu0 %v308
        %v495 = vpop.f32.mrb[0].mxu0
        %v496 = vadd.f32 0.0, %v495
        %v497 = vpop.f32.mrb[0].mxu0
        %498 = vmatprep.mubr.f32.mxu0 0.0
        %499 = vmatmul.mubr.f32.gmra.mrb[0].mxu0 %v311
        %v500 = vpop.f32.mrb[0].mxu0
        %v501 = vadd.f32 0.0, %v500
        %v502 = vpop.f32.mrb[0].mxu0
        %503 = vmatprep.mubr.f32.mxu0 0.0
        %504 = vmatmul.mubr.f32.gmra.mrb[0].mxu0 %v314
        %v505 = vpop.f32.mrb[0].mxu0
        %v506 = vadd.f32 0.0, %v505
        %v507 = vpop.f32.mrb[0].mxu0
        %508 = vmatprep.mubr.f32.mxu0 0.0
        %509 = vmatmul.mubr.f32.gmra.mrb[0].mxu0 %v317
        %v510 = vpop.f32.mrb[0].mxu0
        %v511 = vadd.f32 0.0, %v510
        %v512 = vpop.f32.mrb[0].mxu0
        %513 = vmatprep.mubr.f32.mxu0 0.0
        %514 = vmatmul.mubr.f32.gmra.mrb[0].mxu0 %v320
        %v515 = vpop.f32.mrb[0].mxu0
        %v516 = vadd.f32 0.0, %v515
        %v517 = vpop.f32.mrb[0].mxu0
        %518 = vmatprep.mubr.f32.mxu0 0.0
        %519 = vmatmul.mubr.f32.gmra.mrb[0].mxu0 %v323
        %v520 = vpop.f32.mrb[0].mxu0
        %v521 = vadd.f32 0.0, %v520
        %v522 = vpop.f32.mrb[0].mxu0
        %523 = vmatprep.mubr.f32.mxu0 0.0
        %524 = vmatmul.mubr.f32.gmra.mrb[0].mxu0 %v326
        %v525 = vpop.f32.mrb[0].mxu0
        %v526 = vadd.f32 0.0, %v525
        %v527 = vpop.f32.mrb[0].mxu0
        %528 = vmatprep.mubr.f32.mxu0 0.0
        %529 = vmatmul.mubr.f32.gmra.mrb[0].mxu0 %v329
        %v530 = vpop.f32.mrb[0].mxu0
        %v531 = vadd.f32 0.0, %v530
        %v532 = vpop.f32.mrb[0].mxu0
        %533 = vmatprep.mubr.f32.mxu0 0.0
        %534 = vmatmul.mubr.f32.gmra.mrb[0].mxu0 %v332
        %v535 = vpop.f32.mrb[0].mxu0
        %v536 = vadd.f32 0.0, %v535
        %v537 = vpop.f32.mrb[0].mxu0
        %538 = vmatprep.mubr.f32.mxu0 0.0
        %539 = vmatmul.mubr.f32.gmra.mrb[0].mxu0 %v335
        %v540 = vpop.f32.mrb[0].mxu0
        %v541 = vadd.f32 0.0, %v540
        %v542 = vpop.f32.mrb[0].mxu0
        %543 = vmatprep.mubr.f32.mxu0 0.0
        %544 = vmatmul.mubr.f32.gmra.mrb[0].mxu0 %v338
        %v545 = vpop.f32.mrb[0].mxu0
        %v546 = vadd.f32 0.0, %v545
        %v547 = vpop.f32.mrb[0].mxu0
        %548 = vmatprep.mubr.f32.mxu0 0.0
        %549 = vmatmul.mubr.f32.gmra.mrb[0].mxu0 %v341
        %v550 = vpop.f32.mrb[0].mxu0
        %v551 = vadd.f32 0.0, %v550
        %v552 = vpop.f32.mrb[0].mxu0
        %553 = vmatprep.mubr.f32.mxu0 0.0
        %554 = vmatmul.mubr.f32.gmra.mrb[0].mxu0 %v344
        %v555 = vpop.f32.mrb[0].mxu0
        %v556 = vadd.f32 0.0, %v555
        %v557 = vpop.f32.mrb[0].mxu0
        %558 = vmatprep.mubr.f32.mxu0 0.0
        %559 = vmatmul.mubr.f32.gmra.mrb[0].mxu0 %v347
        %v560 = vpop.f32.mrb[0].mxu0
        %v561 = vadd.f32 0.0, %v560
        %v562 = vpop.f32.mrb[0].mxu0
        %563 = vmatprep.mubr.f32.mxu0 0.0
        %564 = vmatmul.mubr.f32.gmra.mrb[0].mxu0 %v350
        %v565 = vpop.f32.mrb[0].mxu0
        %v566 = vadd.f32 0.0, %v565
        %v567 = vpop.f32.mrb[0].mxu0
        %568 = vmatprep.mubr.f32.mxu0 0.0
        %569 = vmatmul.mubr.f32.gmra.mrb[0].mxu0 %v353
        %v570 = vpop.f32.mrb[0].mxu0
        %v571 = vadd.f32 0.0, %v570
        %v572 = vpop.f32.mrb[0].mxu0
        %573 = vmatprep.mubr.f32.mxu0 0.0
        %574 = vmatmul.mubr.f32.gmra.mrb[0].mxu0 %v356
        %v575 = vpop.f32.mrb[0].mxu0
        %v576 = vadd.f32 0.0, %v575
        %v577 = vpop.f32.mrb[0].mxu0
        %578 = vmatprep.mubr.f32.mxu0 0.0
        %579 = vmatmul.mubr.f32.gmra.mrb[0].mxu0 %v359
        %v580 = vpop.f32.mrb[0].mxu0
        %v581 = vadd.f32 0.0, %v580
        %v582 = vpop.f32.mrb[0].mxu0
        %583 = vmatprep.mubr.f32.mxu0 0.0
        %584 = vmatmul.mubr.f32.gmra.mrb[0].mxu0 %v362
        %v585 = vpop.f32.mrb[0].mxu0
        %v586 = vadd.f32 0.0, %v585
        %v587 = vpop.f32.mrb[0].mxu0
        %588 = vmatprep.mubr.f32.mxu0 0.0
        %589 = vmatmul.mubr.f32.gmra.mrb[0].mxu0 %v365
        %v590 = vpop.f32.mrb[0].mxu0
        %v591 = vadd.f32 0.0, %v590
        %v592 = vpop.f32.mrb[0].mxu0
        %593 = vmatprep.mubr.f32.mxu0 0.0
        %594 = vmatmul.mubr.f32.gmra.mrb[0].mxu0 %v368
        %v595 = vpop.f32.mrb[0].mxu0
        %v596 = vadd.f32 0.0, %v595
        %v597 = vpop.f32.mrb[0].mxu0
        %598 = vdwg.mxu0
        %v600 = vsel %vm273, %v206, 0
        %v603 = vsel %vm273, %v207, 0
        %v606 = vsel %vm273, %v208, 0
        %v609 = vsel %vm273, %v209, 0
        %v612 = vsel %vm273, %v210, 0
        %v615 = vsel %vm273, %v211, 0
        %v618 = vsel %vm273, %v212, 0
        %v621 = vsel %vm273, %v213, 0
        %v624 = vsel %vm273, %v214, 0
        %v627 = vsel %vm273, %v215, 0
        %v630 = vsel %vm273, %v216, 0
        %v633 = vsel %vm273, %v217, 0
        %v636 = vsel %vm273, %v218, 0
        %v639 = vsel %vm273, %v219, 0
        %v642 = vsel %vm273, %v220, 0
        %v645 = vsel %vm273, %v221, 0
        %v648 = vsel %vm273, %v222, 0
        %v651 = vsel %vm273, %v223, 0
        %v654 = vsel %vm273, %v224, 0
        %v657 = vsel %vm273, %v225, 0
        %v660 = vsel %vm273, %v226, 0
        %v663 = vsel %vm273, %v227, 0
        %v666 = vsel %vm273, %v228, 0
        %v669 = vsel %vm273, %v229, 0
        %v672 = vsel %vm273, %v230, 0
        %v675 = vsel %vm273, %v231, 0
        %v678 = vsel %vm273, %v232, 0
        %v681 = vsel %vm273, %v233, 0
        %v684 = vsel %vm273, %v234, 0
        %v687 = vsel %vm273, %v235, 0
        %v690 = vsel %vm273, %v236, 0
        %v693 = vsel %vm273, %v237, 0
        %v696 = vsel %vm370, %v238, 0
        %698 = vmatprep.subr.mxu0 0.0
        %699 = vmatpush1.msra.mxu0 %v696
        %700 = vmatprep.subr.mxu0 0.0
        %701 = vmatpush1.msra.mxu0 0.0
        %702 = vmatprep.subr.mxu0 0.0
        %703 = vmatpush1.msra.mxu0 0.0
        %704 = vmatprep.subr.mxu0 0.0
        %705 = vmatpush1.msra.mxu0 0.0
        %706 = vmatprep.subr.mxu0 0.0
        %707 = vmatpush1.msra.mxu0 0.0
        %708 = vmatprep.subr.mxu0 0.0
        %709 = vmatpush1.msra.mxu0 0.0
        %710 = vmatprep.subr.mxu0 0.0
        %711 = vmatpush1.msra.mxu0 0.0
        %712 = vmatprep.subr.mxu0 0.0
        %713 = vmatpush1.msra.mxu0 0.0
        %714 = vmatprep.subr.mxu0 0.0
        %715 = vmatpush1.msra.mxu0 0.0
        %716 = vmatprep.subr.mxu0 0.0
        %717 = vmatpush1.msra.mxu0 0.0
        %718 = vmatprep.subr.mxu0 0.0
        %719 = vmatpush1.msra.mxu0 0.0
        %720 = vmatprep.subr.mxu0 0.0
        %721 = vmatpush1.msra.mxu0 0.0
        %722 = vmatprep.subr.mxu0 0.0
        %723 = vmatpush1.msra.mxu0 0.0
        %724 = vmatprep.subr.mxu0 0.0
        %725 = vmatpush1.msra.mxu0 0.0
        %726 = vmatprep.subr.mxu0 0.0
        %727 = vmatpush1.msra.mxu0 0.0
        %728 = vmatprep.subr.mxu0 0.0
        %729 = vmatpush1.msra.mxu0 0.0
        %730 = vmatprep.subr.mxu0 0.0
        %731 = vmatpush1.msra.mxu0 0.0
        %732 = vmatprep.subr.mxu0 0.0
        %733 = vmatpush1.msra.mxu0 0.0
        %734 = vmatprep.subr.mxu0 0.0
        %735 = vmatpush1.msra.mxu0 0.0
        %736 = vmatprep.subr.mxu0 0.0
        %737 = vmatpush1.msra.mxu0 0.0
        %738 = vmatprep.subr.mxu0 0.0
        %739 = vmatpush1.msra.mxu0 0.0
        %740 = vmatprep.subr.mxu0 0.0
        %741 = vmatpush1.msra.mxu0 0.0
        %742 = vmatprep.subr.mxu0 0.0
        %743 = vmatpush1.msra.mxu0 0.0
        %744 = vmatprep.subr.mxu0 0.0
        %745 = vmatpush1.msra.mxu0 0.0
        %746 = vmatprep.subr.mxu0 0.0
        %747 = vmatpush1.msra.mxu0 0.0
        %748 = vmatprep.subr.mxu0 0.0
        %749 = vmatpush1.msra.mxu0 0.0
        %750 = vmatprep.subr.mxu0 0.0
        %751 = vmatpush1.msra.mxu0 0.0
        %752 = vmatprep.subr.mxu0 0.0
        %753 = vmatpush1.msra.mxu0 0.0
        %754 = vmatprep.subr.mxu0 0.0
        %755 = vmatpush1.msra.mxu0 0.0
        %756 = vmatprep.subr.mxu0 0.0
        %757 = vmatpush1.msra.mxu0 0.0
        %758 = vmatprep.subr.mxu0 0.0
        %759 = vmatpush1.msra.mxu0 0.0
        %760 = vmatprep.subr.mxu0 0.0
        %761 = vmatpush1.msra.mxu0 0.0
        %762 = vmatprep.mubr.f32.mxu0 0.0
        %763 = vmatmul.mubr.f32.gmra.mrb[0].mxu0 %v600
        %v764 = vpop.f32.mrb[0].mxu0
        %v765 = vadd.f32 %v441, %v764
        %v766 = vpop.f32.mrb[0].mxu0
        %767 = vmatprep.mubr.f32.mxu0 0.0
        %768 = vmatmul.mubr.f32.gmra.mrb[0].mxu0 %v603
        %v769 = vpop.f32.mrb[0].mxu0
        %v770 = vadd.f32 %v446, %v769
        %v771 = vpop.f32.mrb[0].mxu0
        %772 = vmatprep.mubr.f32.mxu0 0.0
        %773 = vmatmul.mubr.f32.gmra.mrb[0].mxu0 %v606
        %v774 = vpop.f32.mrb[0].mxu0
        %v775 = vadd.f32 %v451, %v774
        %v776 = vpop.f32.mrb[0].mxu0
        %777 = vmatprep.mubr.f32.mxu0 0.0
        %778 = vmatmul.mubr.f32.gmra.mrb[0].mxu0 %v609
        %v779 = vpop.f32.mrb[0].mxu0
        %v780 = vadd.f32 %v456, %v779
        %v781 = vpop.f32.mrb[0].mxu0
        %782 = vmatprep.mubr.f32.mxu0 0.0
        %783 = vmatmul.mubr.f32.gmra.mrb[0].mxu0 %v612
        %v784 = vpop.f32.mrb[0].mxu0
        %v785 = vadd.f32 %v461, %v784
        %v786 = vpop.f32.mrb[0].mxu0
        %787 = vmatprep.mubr.f32.mxu0 0.0
        %788 = vmatmul.mubr.f32.gmra.mrb[0].mxu0 %v615
        %v789 = vpop.f32.mrb[0].mxu0
        %v790 = vadd.f32 %v466, %v789
        %v791 = vpop.f32.mrb[0].mxu0
        %792 = vmatprep.mubr.f32.mxu0 0.0
        %793 = vmatmul.mubr.f32.gmra.mrb[0].mxu0 %v618
        %v794 = vpop.f32.mrb[0].mxu0
        %v795 = vadd.f32 %v471, %v794
        %v796 = vpop.f32.mrb[0].mxu0
        %797 = vmatprep.mubr.f32.mxu0 0.0
        %798 = vmatmul.mubr.f32.gmra.mrb[0].mxu0 %v621
        %v799 = vpop.f32.mrb[0].mxu0
        %v800 = vadd.f32 %v476, %v799
        %v801 = vpop.f32.mrb[0].mxu0
        %802 = vmatprep.mubr.f32.mxu0 0.0
        %803 = vmatmul.mubr.f32.gmra.mrb[0].mxu0 %v624
        %v804 = vpop.f32.mrb[0].mxu0
        %v805 = vadd.f32 %v481, %v804
        %v806 = vpop.f32.mrb[0].mxu0
        %807 = vmatprep.mubr.f32.mxu0 0.0
        %808 = vmatmul.mubr.f32.gmra.mrb[0].mxu0 %v627
        %v809 = vpop.f32.mrb[0].mxu0
        %v810 = vadd.f32 %v486, %v809
        %v811 = vpop.f32.mrb[0].mxu0
        %812 = vmatprep.mubr.f32.mxu0 0.0
        %813 = vmatmul.mubr.f32.gmra.mrb[0].mxu0 %v630
        %v814 = vpop.f32.mrb[0].mxu0
        %v815 = vadd.f32 %v491, %v814
        %v816 = vpop.f32.mrb[0].mxu0
        %817 = vmatprep.mubr.f32.mxu0 0.0
        %818 = vmatmul.mubr.f32.gmra.mrb[0].mxu0 %v633
        %v819 = vpop.f32.mrb[0].mxu0
        %v820 = vadd.f32 %v496, %v819
        %v821 = vpop.f32.mrb[0].mxu0
        %822 = vmatprep.mubr.f32.mxu0 0.0
        %823 = vmatmul.mubr.f32.gmra.mrb[0].mxu0 %v636
        %v824 = vpop.f32.mrb[0].mxu0
        %v825 = vadd.f32 %v501, %v824
        %v826 = vpop.f32.mrb[0].mxu0
        %827 = vmatprep.mubr.f32.mxu0 0.0
        %828 = vmatmul.mubr.f32.gmra.mrb[0].mxu0 %v639
        %v829 = vpop.f32.mrb[0].mxu0
        %v830 = vadd.f32 %v506, %v829
        %v831 = vpop.f32.mrb[0].mxu0
        %832 = vmatprep.mubr.f32.mxu0 0.0
        %833 = vmatmul.mubr.f32.gmra.mrb[0].mxu0 %v642
        %v834 = vpop.f32.mrb[0].mxu0
        %v835 = vadd.f32 %v511, %v834
        %v836 = vpop.f32.mrb[0].mxu0
        %837 = vmatprep.mubr.f32.mxu0 0.0
        %838 = vmatmul.mubr.f32.gmra.mrb[0].mxu0 %v645
        %v839 = vpop.f32.mrb[0].mxu0
        %v840 = vadd.f32 %v516, %v839
        %v841 = vpop.f32.mrb[0].mxu0
        %842 = vmatprep.mubr.f32.mxu0 0.0
        %843 = vmatmul.mubr.f32.gmra.mrb[0].mxu0 %v648
        %v844 = vpop.f32.mrb[0].mxu0
        %v845 = vadd.f32 %v521, %v844
        %v846 = vpop.f32.mrb[0].mxu0
        %847 = vmatprep.mubr.f32.mxu0 0.0
        %848 = vmatmul.mubr.f32.gmra.mrb[0].mxu0 %v651
        %v849 = vpop.f32.mrb[0].mxu0
        %v850 = vadd.f32 %v526, %v849
        %v851 = vpop.f32.mrb[0].mxu0
        %852 = vmatprep.mubr.f32.mxu0 0.0
        %853 = vmatmul.mubr.f32.gmra.mrb[0].mxu0 %v654
        %v854 = vpop.f32.mrb[0].mxu0
        %v855 = vadd.f32 %v531, %v854
        %v856 = vpop.f32.mrb[0].mxu0
        %857 = vmatprep.mubr.f32.mxu0 0.0
        %858 = vmatmul.mubr.f32.gmra.mrb[0].mxu0 %v657
        %v859 = vpop.f32.mrb[0].mxu0
        %v860 = vadd.f32 %v536, %v859
        %v861 = vpop.f32.mrb[0].mxu0
        %862 = vmatprep.mubr.f32.mxu0 0.0
        %863 = vmatmul.mubr.f32.gmra.mrb[0].mxu0 %v660
        %v864 = vpop.f32.mrb[0].mxu0
        %v865 = vadd.f32 %v541, %v864
        %v866 = vpop.f32.mrb[0].mxu0
        %867 = vmatprep.mubr.f32.mxu0 0.0
        %868 = vmatmul.mubr.f32.gmra.mrb[0].mxu0 %v663
        %v869 = vpop.f32.mrb[0].mxu0
        %v870 = vadd.f32 %v546, %v869
        %v871 = vpop.f32.mrb[0].mxu0
        %872 = vmatprep.mubr.f32.mxu0 0.0
        %873 = vmatmul.mubr.f32.gmra.mrb[0].mxu0 %v666
        %v874 = vpop.f32.mrb[0].mxu0
        %v875 = vadd.f32 %v551, %v874
        %v876 = vpop.f32.mrb[0].mxu0
        %877 = vmatprep.mubr.f32.mxu0 0.0
        %878 = vmatmul.mubr.f32.gmra.mrb[0].mxu0 %v669
        %v879 = vpop.f32.mrb[0].mxu0
        %v880 = vadd.f32 %v556, %v879
        %v881 = vpop.f32.mrb[0].mxu0
        %882 = vmatprep.mubr.f32.mxu0 0.0
        %883 = vmatmul.mubr.f32.gmra.mrb[0].mxu0 %v672
        %v884 = vpop.f32.mrb[0].mxu0
        %v885 = vadd.f32 %v561, %v884
        %v886 = vpop.f32.mrb[0].mxu0
        %887 = vmatprep.mubr.f32.mxu0 0.0
        %888 = vmatmul.mubr.f32.gmra.mrb[0].mxu0 %v675
        %v889 = vpop.f32.mrb[0].mxu0
        %v890 = vadd.f32 %v566, %v889
        %v891 = vpop.f32.mrb[0].mxu0
        %892 = vmatprep.mubr.f32.mxu0 0.0
        %893 = vmatmul.mubr.f32.gmra.mrb[0].mxu0 %v678
        %v894 = vpop.f32.mrb[0].mxu0
        %v895 = vadd.f32 %v571, %v894
        %v896 = vpop.f32.mrb[0].mxu0
        %897 = vmatprep.mubr.f32.mxu0 0.0
        %898 = vmatmul.mubr.f32.gmra.mrb[0].mxu0 %v681
        %v899 = vpop.f32.mrb[0].mxu0
        %v900 = vadd.f32 %v576, %v899
        %v901 = vpop.f32.mrb[0].mxu0
        %902 = vmatprep.mubr.f32.mxu0 0.0
        %903 = vmatmul.mubr.f32.gmra.mrb[0].mxu0 %v684
        %v904 = vpop.f32.mrb[0].mxu0
        %v905 = vadd.f32 %v581, %v904
        %v906 = vpop.f32.mrb[0].mxu0
        %907 = vmatprep.mubr.f32.mxu0 0.0
        %908 = vmatmul.mubr.f32.gmra.mrb[0].mxu0 %v687
        %v909 = vpop.f32.mrb[0].mxu0
        %v910 = vadd.f32 %v586, %v909
        %v911 = vpop.f32.mrb[0].mxu0
        %912 = vmatprep.mubr.f32.mxu0 0.0
        %913 = vmatmul.mubr.f32.gmra.mrb[0].mxu0 %v690
        %v914 = vpop.f32.mrb[0].mxu0
        %v915 = vadd.f32 %v591, %v914
        %v916 = vpop.f32.mrb[0].mxu0
        %917 = vmatprep.mubr.f32.mxu0 0.0
        %918 = vmatmul.mubr.f32.gmra.mrb[0].mxu0 %v693
        %v919 = vpop.f32.mrb[0].mxu0
        %v920 = vadd.f32 %v596, %v919
        %v921 = vpop.f32.mrb[0].mxu0
        %922 = vdwg.mxu0
        %v923 = vld [vmem:[%s205 + $0x4] sm:$0xff]
        %v924 = vld [vmem:[%s205 + $0x14] sm:$0xff]
        %v925 = vld [vmem:[%s205 + $0x24] sm:$0xff]
        %v926 = vld [vmem:[%s205 + $0x34] sm:$0xff]
        %v927 = vld [vmem:[%s205 + $0x44] sm:$0xff]
        %v928 = vld [vmem:[%s205 + $0x54] sm:$0xff]
        %v929 = vld [vmem:[%s205 + $0x64] sm:$0xff]
        %v930 = vld [vmem:[%s205 + $0x74] sm:$0xff]
        %v931 = vld [vmem:[%s205 + $0xc4] sm:$0xff]
        %v932 = vld [vmem:[%s205 + $0xd4] sm:$0xff]
        %v933 = vld [vmem:[%s205 + $0xe4] sm:$0xff]
        %v934 = vld [vmem:[%s205 + $0xf4] sm:$0xff]
        %v935 = vld [vmem:[%s205 + $0x104] sm:$0xff]
        %v936 = vld [vmem:[%s205 + $0x114] sm:$0xff]
        %v937 = vld [vmem:[%s205 + $0x124] sm:$0xff]
        %v938 = vld [vmem:[%s205 + $0x134] sm:$0xff]
        %v939 = vld [vmem:[%s205 + $0x184] sm:$0xff]
        %v940 = vld [vmem:[%s205 + $0x194] sm:$0xff]
        %v941 = vld [vmem:[%s205 + $0x1a4] sm:$0xff]
        %v942 = vld [vmem:[%s205 + $0x1b4] sm:$0xff]
        %v943 = vld [vmem:[%s205 + $0x1c4] sm:$0xff]
        %v944 = vld [vmem:[%s205 + $0x1d4] sm:$0xff]
        %v945 = vld [vmem:[%s205 + $0x1e4] sm:$0xff]
        %v946 = vld [vmem:[%s205 + $0x1f4] sm:$0xff]
        %v947 = vld [vmem:[%s205 + $0x244] sm:$0xff]
        %v948 = vld [vmem:[%s205 + $0x254] sm:$0xff]
        %v949 = vld [vmem:[%s205 + $0x264] sm:$0xff]
        %v950 = vld [vmem:[%s205 + $0x274] sm:$0xff]
        %v951 = vld [vmem:[%s205 + $0x284] sm:$0xff]
        %v952 = vld [vmem:[%s205 + $0x294] sm:$0xff]
        %v953 = vld [vmem:[%s205 + $0x2a4] sm:$0xff]
        %v954 = vld [vmem:[%s205 + $0x2b4] sm:$0xff]
        %s955 = scalar_lea.vmem %s1, 8
        %v956 = vld [vmem:[%s955] sm:$0xf]
        %v958 = vsel %vm273, %v923, 0
        %v961 = vsel %vm273, %v924, 0
        %v964 = vsel %vm273, %v925, 0
        %v967 = vsel %vm273, %v926, 0
        %v970 = vsel %vm273, %v927, 0
        %v973 = vsel %vm273, %v928, 0
        %v976 = vsel %vm273, %v929, 0
        %v979 = vsel %vm273, %v930, 0
        %v982 = vsel %vm273, %v931, 0
        %v985 = vsel %vm273, %v932, 0
        %v988 = vsel %vm273, %v933, 0
        %v991 = vsel %vm273, %v934, 0
        %v994 = vsel %vm273, %v935, 0
        %v997 = vsel %vm273, %v936, 0
        %v1000 = vsel %vm273, %v937, 0
        %v1003 = vsel %vm273, %v938, 0
        %v1006 = vsel %vm273, %v939, 0
        %v1009 = vsel %vm273, %v940, 0
        %v1012 = vsel %vm273, %v941, 0
        %v1015 = vsel %vm273, %v942, 0
        %v1018 = vsel %vm273, %v943, 0
        %v1021 = vsel %vm273, %v944, 0
        %v1024 = vsel %vm273, %v945, 0
        %v1027 = vsel %vm273, %v946, 0
        %v1030 = vsel %vm273, %v947, 0
        %v1033 = vsel %vm273, %v948, 0
        %v1036 = vsel %vm273, %v949, 0
        %v1039 = vsel %vm273, %v950, 0
        %v1042 = vsel %vm273, %v951, 0
        %v1045 = vsel %vm273, %v952, 0
        %v1048 = vsel %vm273, %v953, 0
        %v1051 = vsel %vm273, %v954, 0
        %v1054 = vsel %vm370, %v956, 0
        %1056 = vmatprep.subr.mxu0 0.0
        %1057 = vmatpush1.msra.mxu0 %v1054
        %1058 = vmatprep.subr.mxu0 0.0
        %1059 = vmatpush1.msra.mxu0 0.0
        %1060 = vmatprep.subr.mxu0 0.0
        %1061 = vmatpush1.msra.mxu0 0.0
        %1062 = vmatprep.subr.mxu0 0.0
        %1063 = vmatpush1.msra.mxu0 0.0
        %1064 = vmatprep.subr.mxu0 0.0
        %1065 = vmatpush1.msra.mxu0 0.0
        %1066 = vmatprep.subr.mxu0 0.0
        %1067 = vmatpush1.msra.mxu0 0.0
        %1068 = vmatprep.subr.mxu0 0.0
        %1069 = vmatpush1.msra.mxu0 0.0
        %1070 = vmatprep.subr.mxu0 0.0
        %1071 = vmatpush1.msra.mxu0 0.0
        %1072 = vmatprep.subr.mxu0 0.0
        %1073 = vmatpush1.msra.mxu0 0.0
        %1074 = vmatprep.subr.mxu0 0.0
        %1075 = vmatpush1.msra.mxu0 0.0
        %1076 = vmatprep.subr.mxu0 0.0
        %1077 = vmatpush1.msra.mxu0 0.0
        %1078 = vmatprep.subr.mxu0 0.0
        %1079 = vmatpush1.msra.mxu0 0.0
        %1080 = vmatprep.subr.mxu0 0.0
        %1081 = vmatpush1.msra.mxu0 0.0
        %1082 = vmatprep.subr.mxu0 0.0
        %1083 = vmatpush1.msra.mxu0 0.0
        %1084 = vmatprep.subr.mxu0 0.0
        %1085 = vmatpush1.msra.mxu0 0.0
        %1086 = vmatprep.subr.mxu0 0.0
        %1087 = vmatpush1.msra.mxu0 0.0
        %1088 = vmatprep.subr.mxu0 0.0
        %1089 = vmatpush1.msra.mxu0 0.0
        %1090 = vmatprep.subr.mxu0 0.0
        %1091 = vmatpush1.msra.mxu0 0.0
        %1092 = vmatprep.subr.mxu0 0.0
        %1093 = vmatpush1.msra.mxu0 0.0
        %1094 = vmatprep.subr.mxu0 0.0
        %1095 = vmatpush1.msra.mxu0 0.0
        %1096 = vmatprep.subr.mxu0 0.0
        %1097 = vmatpush1.msra.mxu0 0.0
        %1098 = vmatprep.subr.mxu0 0.0
        %1099 = vmatpush1.msra.mxu0 0.0
        %1100 = vmatprep.subr.mxu0 0.0
        %1101 = vmatpush1.msra.mxu0 0.0
        %1102 = vmatprep.subr.mxu0 0.0
        %1103 = vmatpush1.msra.mxu0 0.0
        %1104 = vmatprep.subr.mxu0 0.0
        %1105 = vmatpush1.msra.mxu0 0.0
        %1106 = vmatprep.subr.mxu0 0.0
        %1107 = vmatpush1.msra.mxu0 0.0
        %1108 = vmatprep.subr.mxu0 0.0
        %1109 = vmatpush1.msra.mxu0 0.0
        %1110 = vmatprep.subr.mxu0 0.0
        %1111 = vmatpush1.msra.mxu0 0.0
        %1112 = vmatprep.subr.mxu0 0.0
        %1113 = vmatpush1.msra.mxu0 0.0
        %1114 = vmatprep.subr.mxu0 0.0
        %1115 = vmatpush1.msra.mxu0 0.0
        %1116 = vmatprep.subr.mxu0 0.0
        %1117 = vmatpush1.msra.mxu0 0.0
        %1118 = vmatprep.subr.mxu0 0.0
        %1119 = vmatpush1.msra.mxu0 0.0
        %1120 = vmatprep.mubr.f32.mxu0 0.0
        %1121 = vmatmul.mubr.f32.gmra.mrb[0].mxu0 %v958
        %v1122 = vpop.f32.mrb[0].mxu0
        %v1123 = vadd.f32 0.0, %v1122
        %v1124 = vpop.f32.mrb[0].mxu0
        %1125 = vmatprep.mubr.f32.mxu0 0.0
        %1126 = vmatmul.mubr.f32.gmra.mrb[0].mxu0 %v961
        %v1127 = vpop.f32.mrb[0].mxu0
        %v1128 = vadd.f32 0.0, %v1127
        %v1129 = vpop.f32.mrb[0].mxu0
        %1130 = vmatprep.mubr.f32.mxu0 0.0
        %1131 = vmatmul.mubr.f32.gmra.mrb[0].mxu0 %v964
        %v1132 = vpop.f32.mrb[0].mxu0
        %v1133 = vadd.f32 0.0, %v1132
        %v1134 = vpop.f32.mrb[0].mxu0
        %1135 = vmatprep.mubr.f32.mxu0 0.0
        %1136 = vmatmul.mubr.f32.gmra.mrb[0].mxu0 %v967
        %v1137 = vpop.f32.mrb[0].mxu0
        %v1138 = vadd.f32 0.0, %v1137
        %v1139 = vpop.f32.mrb[0].mxu0
        %1140 = vmatprep.mubr.f32.mxu0 0.0
        %1141 = vmatmul.mubr.f32.gmra.mrb[0].mxu0 %v970
        %v1142 = vpop.f32.mrb[0].mxu0
        %v1143 = vadd.f32 0.0, %v1142
        %v1144 = vpop.f32.mrb[0].mxu0
        %1145 = vmatprep.mubr.f32.mxu0 0.0
        %1146 = vmatmul.mubr.f32.gmra.mrb[0].mxu0 %v973
        %v1147 = vpop.f32.mrb[0].mxu0
        %v1148 = vadd.f32 0.0, %v1147
        %v1149 = vpop.f32.mrb[0].mxu0
        %1150 = vmatprep.mubr.f32.mxu0 0.0
        %1151 = vmatmul.mubr.f32.gmra.mrb[0].mxu0 %v976
        %v1152 = vpop.f32.mrb[0].mxu0
        %v1153 = vadd.f32 0.0, %v1152
        %v1154 = vpop.f32.mrb[0].mxu0
        %1155 = vmatprep.mubr.f32.mxu0 0.0
        %1156 = vmatmul.mubr.f32.gmra.mrb[0].mxu0 %v979
        %v1157 = vpop.f32.mrb[0].mxu0
        %v1158 = vadd.f32 0.0, %v1157
        %v1159 = vpop.f32.mrb[0].mxu0
        %1160 = vmatprep.mubr.f32.mxu0 0.0
        %1161 = vmatmul.mubr.f32.gmra.mrb[0].mxu0 %v982
        %v1162 = vpop.f32.mrb[0].mxu0
        %v1163 = vadd.f32 0.0, %v1162
        %v1164 = vpop.f32.mrb[0].mxu0
        %1165 = vmatprep.mubr.f32.mxu0 0.0
        %1166 = vmatmul.mubr.f32.gmra.mrb[0].mxu0 %v985
        %v1167 = vpop.f32.mrb[0].mxu0
        %v1168 = vadd.f32 0.0, %v1167
        %v1169 = vpop.f32.mrb[0].mxu0
        %1170 = vmatprep.mubr.f32.mxu0 0.0
        %1171 = vmatmul.mubr.f32.gmra.mrb[0].mxu0 %v988
        %v1172 = vpop.f32.mrb[0].mxu0
        %v1173 = vadd.f32 0.0, %v1172
        %v1174 = vpop.f32.mrb[0].mxu0
        %1175 = vmatprep.mubr.f32.mxu0 0.0
        %1176 = vmatmul.mubr.f32.gmra.mrb[0].mxu0 %v991
        %v1177 = vpop.f32.mrb[0].mxu0
        %v1178 = vadd.f32 0.0, %v1177
        %v1179 = vpop.f32.mrb[0].mxu0
        %1180 = vmatprep.mubr.f32.mxu0 0.0
        %1181 = vmatmul.mubr.f32.gmra.mrb[0].mxu0 %v994
        %v1182 = vpop.f32.mrb[0].mxu0
        %v1183 = vadd.f32 0.0, %v1182
        %v1184 = vpop.f32.mrb[0].mxu0
        %1185 = vmatprep.mubr.f32.mxu0 0.0
        %1186 = vmatmul.mubr.f32.gmra.mrb[0].mxu0 %v997
        %v1187 = vpop.f32.mrb[0].mxu0
        %v1188 = vadd.f32 0.0, %v1187
        %v1189 = vpop.f32.mrb[0].mxu0
        %1190 = vmatprep.mubr.f32.mxu0 0.0
        %1191 = vmatmul.mubr.f32.gmra.mrb[0].mxu0 %v1000
        %v1192 = vpop.f32.mrb[0].mxu0
        %v1193 = vadd.f32 0.0, %v1192
        %v1194 = vpop.f32.mrb[0].mxu0
        %1195 = vmatprep.mubr.f32.mxu0 0.0
        %1196 = vmatmul.mubr.f32.gmra.mrb[0].mxu0 %v1003
        %v1197 = vpop.f32.mrb[0].mxu0
        %v1198 = vadd.f32 0.0, %v1197
        %v1199 = vpop.f32.mrb[0].mxu0
        %1200 = vmatprep.mubr.f32.mxu0 0.0
        %1201 = vmatmul.mubr.f32.gmra.mrb[0].mxu0 %v1006
        %v1202 = vpop.f32.mrb[0].mxu0
        %v1203 = vadd.f32 0.0, %v1202
        %v1204 = vpop.f32.mrb[0].mxu0
        %1205 = vmatprep.mubr.f32.mxu0 0.0
        %1206 = vmatmul.mubr.f32.gmra.mrb[0].mxu0 %v1009
        %v1207 = vpop.f32.mrb[0].mxu0
        %v1208 = vadd.f32 0.0, %v1207
        %v1209 = vpop.f32.mrb[0].mxu0
        %1210 = vmatprep.mubr.f32.mxu0 0.0
        %1211 = vmatmul.mubr.f32.gmra.mrb[0].mxu0 %v1012
        %v1212 = vpop.f32.mrb[0].mxu0
        %v1213 = vadd.f32 0.0, %v1212
        %v1214 = vpop.f32.mrb[0].mxu0
        %1215 = vmatprep.mubr.f32.mxu0 0.0
        %1216 = vmatmul.mubr.f32.gmra.mrb[0].mxu0 %v1015
        %v1217 = vpop.f32.mrb[0].mxu0
        %v1218 = vadd.f32 0.0, %v1217
        %v1219 = vpop.f32.mrb[0].mxu0
        %1220 = vmatprep.mubr.f32.mxu0 0.0
        %1221 = vmatmul.mubr.f32.gmra.mrb[0].mxu0 %v1018
        %v1222 = vpop.f32.mrb[0].mxu0
        %v1223 = vadd.f32 0.0, %v1222
        %v1224 = vpop.f32.mrb[0].mxu0
        %1225 = vmatprep.mubr.f32.mxu0 0.0
        %1226 = vmatmul.mubr.f32.gmra.mrb[0].mxu0 %v1021
        %v1227 = vpop.f32.mrb[0].mxu0
        %v1228 = vadd.f32 0.0, %v1227
        %v1229 = vpop.f32.mrb[0].mxu0
        %1230 = vmatprep.mubr.f32.mxu0 0.0
        %1231 = vmatmul.mubr.f32.gmra.mrb[0].mxu0 %v1024
        %v1232 = vpop.f32.mrb[0].mxu0
        %v1233 = vadd.f32 0.0, %v1232
        %v1234 = vpop.f32.mrb[0].mxu0
        %1235 = vmatprep.mubr.f32.mxu0 0.0
        %1236 = vmatmul.mubr.f32.gmra.mrb[0].mxu0 %v1027
        %v1237 = vpop.f32.mrb[0].mxu0
        %v1238 = vadd.f32 0.0, %v1237
        %v1239 = vpop.f32.mrb[0].mxu0
        %1240 = vmatprep.mubr.f32.mxu0 0.0
        %1241 = vmatmul.mubr.f32.gmra.mrb[0].mxu0 %v1030
        %v1242 = vpop.f32.mrb[0].mxu0
        %v1243 = vadd.f32 0.0, %v1242
        %v1244 = vpop.f32.mrb[0].mxu0
        %1245 = vmatprep.mubr.f32.mxu0 0.0
        %1246 = vmatmul.mubr.f32.gmra.mrb[0].mxu0 %v1033
        %v1247 = vpop.f32.mrb[0].mxu0
        %v1248 = vadd.f32 0.0, %v1247
        %v1249 = vpop.f32.mrb[0].mxu0
        %1250 = vmatprep.mubr.f32.mxu0 0.0
        %1251 = vmatmul.mubr.f32.gmra.mrb[0].mxu0 %v1036
        %v1252 = vpop.f32.mrb[0].mxu0
        %v1253 = vadd.f32 0.0, %v1252
        %v1254 = vpop.f32.mrb[0].mxu0
        %1255 = vmatprep.mubr.f32.mxu0 0.0
        %1256 = vmatmul.mubr.f32.gmra.mrb[0].mxu0 %v1039
        %v1257 = vpop.f32.mrb[0].mxu0
        %v1258 = vadd.f32 0.0, %v1257
        %v1259 = vpop.f32.mrb[0].mxu0
        %1260 = vmatprep.mubr.f32.mxu0 0.0
        %1261 = vmatmul.mubr.f32.gmra.mrb[0].mxu0 %v1042
        %v1262 = vpop.f32.mrb[0].mxu0
        %v1263 = vadd.f32 0.0, %v1262
        %v1264 = vpop.f32.mrb[0].mxu0
        %1265 = vmatprep.mubr.f32.mxu0 0.0
        %1266 = vmatmul.mubr.f32.gmra.mrb[0].mxu0 %v1045
        %v1267 = vpop.f32.mrb[0].mxu0
        %v1268 = vadd.f32 0.0, %v1267
        %v1269 = vpop.f32.mrb[0].mxu0
        %1270 = vmatprep.mubr.f32.mxu0 0.0
        %1271 = vmatmul.mubr.f32.gmra.mrb[0].mxu0 %v1048
        %v1272 = vpop.f32.mrb[0].mxu0
        %v1273 = vadd.f32 0.0, %v1272
        %v1274 = vpop.f32.mrb[0].mxu0
        %1275 = vmatprep.mubr.f32.mxu0 0.0
        %1276 = vmatmul.mubr.f32.gmra.mrb[0].mxu0 %v1051
        %v1277 = vpop.f32.mrb[0].mxu0
        %v1278 = vadd.f32 0.0, %v1277
        %v1279 = vpop.f32.mrb[0].mxu0
        %1280 = vdwg.mxu0
        %v1281 = vadd.f32 %v765, %v1123
        %v1282 = vadd.f32 %v770, %v1128
        %v1283 = vadd.f32 %v775, %v1133
        %v1284 = vadd.f32 %v780, %v1138
        %v1285 = vadd.f32 %v785, %v1143
        %v1286 = vadd.f32 %v790, %v1148
        %v1287 = vadd.f32 %v795, %v1153
        %v1288 = vadd.f32 %v800, %v1158
        %v1289 = vadd.f32 %v805, %v1163
        %v1290 = vadd.f32 %v810, %v1168
        %v1291 = vadd.f32 %v815, %v1173
        %v1292 = vadd.f32 %v820, %v1178
        %v1293 = vadd.f32 %v825, %v1183
        %v1294 = vadd.f32 %v830, %v1188
        %v1295 = vadd.f32 %v835, %v1193
        %v1296 = vadd.f32 %v840, %v1198
        %v1297 = vadd.f32 %v845, %v1203
        %v1298 = vadd.f32 %v850, %v1208
        %v1299 = vadd.f32 %v855, %v1213
        %v1300 = vadd.f32 %v860, %v1218
        %v1301 = vadd.f32 %v865, %v1223
        %v1302 = vadd.f32 %v870, %v1228
        %v1303 = vadd.f32 %v875, %v1233
        %v1304 = vadd.f32 %v880, %v1238
        %v1305 = vadd.f32 %v885, %v1243
        %v1306 = vadd.f32 %v890, %v1248
        %v1307 = vadd.f32 %v895, %v1253
        %v1308 = vadd.f32 %v900, %v1258
        %v1309 = vadd.f32 %v905, %v1263
        %v1310 = vadd.f32 %v910, %v1268
        %v1311 = vadd.f32 %v915, %v1273
        %v1312 = vadd.f32 %v920, %v1278
        %s1313 = sadd.s32 32, %s204
        %s1314 = scalar_lea.vmem %s193, %s1313
        %v1315 = vld [vmem:[%s1314] sm:$0xff]
        %v1316 = vld [vmem:[%s1314 + $0x10] sm:$0xff]
        %v1317 = vld [vmem:[%s1314 + $0x20] sm:$0xff]
        %v1318 = vld [vmem:[%s1314 + $0x30] sm:$0xff]
        %v1319 = vld [vmem:[%s1314 + $0x40] sm:$0xff]
        %v1320 = vld [vmem:[%s1314 + $0x50] sm:$0xff]
        %v1321 = vld [vmem:[%s1314 + $0x60] sm:$0xff]
        %v1322 = vld [vmem:[%s1314 + $0x70] sm:$0xff]
        %v1323 = vld [vmem:[%s1314 + $0xc0] sm:$0xff]
        %v1324 = vld [vmem:[%s1314 + $0xd0] sm:$0xff]
        %v1325 = vld [vmem:[%s1314 + $0xe0] sm:$0xff]
        %v1326 = vld [vmem:[%s1314 + $0xf0] sm:$0xff]
        %v1327 = vld [vmem:[%s1314 + $0x100] sm:$0xff]
        %v1328 = vld [vmem:[%s1314 + $0x110] sm:$0xff]
        %v1329 = vld [vmem:[%s1314 + $0x120] sm:$0xff]
        %v1330 = vld [vmem:[%s1314 + $0x130] sm:$0xff]
        %v1331 = vld [vmem:[%s1314 + $0x180] sm:$0xff]
        %v1332 = vld [vmem:[%s1314 + $0x190] sm:$0xff]
        %v1333 = vld [vmem:[%s1314 + $0x1a0] sm:$0xff]
        %v1334 = vld [vmem:[%s1314 + $0x1b0] sm:$0xff]
        %v1335 = vld [vmem:[%s1314 + $0x1c0] sm:$0xff]
        %v1336 = vld [vmem:[%s1314 + $0x1d0] sm:$0xff]
        %v1337 = vld [vmem:[%s1314 + $0x1e0] sm:$0xff]
        %v1338 = vld [vmem:[%s1314 + $0x1f0] sm:$0xff]
        %v1339 = vld [vmem:[%s1314 + $0x240] sm:$0xff]
        %v1340 = vld [vmem:[%s1314 + $0x250] sm:$0xff]
        %v1341 = vld [vmem:[%s1314 + $0x260] sm:$0xff]
        %v1342 = vld [vmem:[%s1314 + $0x270] sm:$0xff]
        %v1343 = vld [vmem:[%s1314 + $0x280] sm:$0xff]
        %v1344 = vld [vmem:[%s1314 + $0x290] sm:$0xff]
        %v1345 = vld [vmem:[%s1314 + $0x2a0] sm:$0xff]
        %v1346 = vld [vmem:[%s1314 + $0x2b0] sm:$0xff]
        %s1347 = scalar_lea.vmem %s1, 12
        %v1348 = vld [vmem:[%s1347] sm:$0xf]
        %v1350 = vsel %vm273, %v1315, 0
        %v1353 = vsel %vm273, %v1316, 0
        %v1356 = vsel %vm273, %v1317, 0
        %v1359 = vsel %vm273, %v1318, 0
        %v1362 = vsel %vm273, %v1319, 0
        %v1365 = vsel %vm273, %v1320, 0
        %v1368 = vsel %vm273, %v1321, 0
        %v1371 = vsel %vm273, %v1322, 0
        %v1374 = vsel %vm273, %v1323, 0
        %v1377 = vsel %vm273, %v1324, 0
        %v1380 = vsel %vm273, %v1325, 0
        %v1383 = vsel %vm273, %v1326, 0
        %v1386 = vsel %vm273, %v1327, 0
        %v1389 = vsel %vm273, %v1328, 0
        %v1392 = vsel %vm273, %v1329, 0
        %v1395 = vsel %vm273, %v1330, 0
        %v1398 = vsel %vm273, %v1331, 0
        %v1401 = vsel %vm273, %v1332, 0
        %v1404 = vsel %vm273, %v1333, 0
        %v1407 = vsel %vm273, %v1334, 0
        %v1410 = vsel %vm273, %v1335, 0
        %v1413 = vsel %vm273, %v1336, 0
        %v1416 = vsel %vm273, %v1337, 0
        %v1419 = vsel %vm273, %v1338, 0
        %v1422 = vsel %vm273, %v1339, 0
        %v1425 = vsel %vm273, %v1340, 0
        %v1428 = vsel %vm273, %v1341, 0
        %v1431 = vsel %vm273, %v1342, 0
        %v1434 = vsel %vm273, %v1343, 0
        %v1437 = vsel %vm273, %v1344, 0
        %v1440 = vsel %vm273, %v1345, 0
        %v1443 = vsel %vm273, %v1346, 0
        %v1446 = vsel %vm370, %v1348, 0
        %1448 = vmatprep.subr.mxu0 0.0
        %1449 = vmatpush1.msra.mxu0 %v1446
        %1450 = vmatprep.subr.mxu0 0.0
        %1451 = vmatpush1.msra.mxu0 0.0
        %1452 = vmatprep.subr.mxu0 0.0
        %1453 = vmatpush1.msra.mxu0 0.0
        %1454 = vmatprep.subr.mxu0 0.0
        %1455 = vmatpush1.msra.mxu0 0.0
        %1456 = vmatprep.subr.mxu0 0.0
        %1457 = vmatpush1.msra.mxu0 0.0
        %1458 = vmatprep.subr.mxu0 0.0
        %1459 = vmatpush1.msra.mxu0 0.0
        %1460 = vmatprep.subr.mxu0 0.0
        %1461 = vmatpush1.msra.mxu0 0.0
        %1462 = vmatprep.subr.mxu0 0.0
        %1463 = vmatpush1.msra.mxu0 0.0
        %1464 = vmatprep.subr.mxu0 0.0
        %1465 = vmatpush1.msra.mxu0 0.0
        %1466 = vmatprep.subr.mxu0 0.0
        %1467 = vmatpush1.msra.mxu0 0.0
        %1468 = vmatprep.subr.mxu0 0.0
        %1469 = vmatpush1.msra.mxu0 0.0
        %1470 = vmatprep.subr.mxu0 0.0
        %1471 = vmatpush1.msra.mxu0 0.0
        %1472 = vmatprep.subr.mxu0 0.0
        %1473 = vmatpush1.msra.mxu0 0.0
        %1474 = vmatprep.subr.mxu0 0.0
        %1475 = vmatpush1.msra.mxu0 0.0
        %1476 = vmatprep.subr.mxu0 0.0
        %1477 = vmatpush1.msra.mxu0 0.0
        %1478 = vmatprep.subr.mxu0 0.0
        %1479 = vmatpush1.msra.mxu0 0.0
        %1480 = vmatprep.subr.mxu0 0.0
        %1481 = vmatpush1.msra.mxu0 0.0
        %1482 = vmatprep.subr.mxu0 0.0
        %1483 = vmatpush1.msra.mxu0 0.0
        %1484 = vmatprep.subr.mxu0 0.0
        %1485 = vmatpush1.msra.mxu0 0.0
        %1486 = vmatprep.subr.mxu0 0.0
        %1487 = vmatpush1.msra.mxu0 0.0
        %1488 = vmatprep.subr.mxu0 0.0
        %1489 = vmatpush1.msra.mxu0 0.0
        %1490 = vmatprep.subr.mxu0 0.0
        %1491 = vmatpush1.msra.mxu0 0.0
        %1492 = vmatprep.subr.mxu0 0.0
        %1493 = vmatpush1.msra.mxu0 0.0
        %1494 = vmatprep.subr.mxu0 0.0
        %1495 = vmatpush1.msra.mxu0 0.0
        %1496 = vmatprep.subr.mxu0 0.0
        %1497 = vmatpush1.msra.mxu0 0.0
        %1498 = vmatprep.subr.mxu0 0.0
        %1499 = vmatpush1.msra.mxu0 0.0
        %1500 = vmatprep.subr.mxu0 0.0
        %1501 = vmatpush1.msra.mxu0 0.0
        %1502 = vmatprep.subr.mxu0 0.0
        %1503 = vmatpush1.msra.mxu0 0.0
        %1504 = vmatprep.subr.mxu0 0.0
        %1505 = vmatpush1.msra.mxu0 0.0
        %1506 = vmatprep.subr.mxu0 0.0
        %1507 = vmatpush1.msra.mxu0 0.0
        %1508 = vmatprep.subr.mxu0 0.0
        %1509 = vmatpush1.msra.mxu0 0.0
        %1510 = vmatprep.subr.mxu0 0.0
        %1511 = vmatpush1.msra.mxu0 0.0
        %1512 = vmatprep.mubr.f32.mxu0 0.0
        %1513 = vmatmul.mubr.f32.gmra.mrb[0].mxu0 %v1350
        %v1514 = vpop.f32.mrb[0].mxu0
        %v1515 = vadd.f32 0.0, %v1514
        %v1516 = vpop.f32.mrb[0].mxu0
        %1517 = vmatprep.mubr.f32.mxu0 0.0
        %1518 = vmatmul.mubr.f32.gmra.mrb[0].mxu0 %v1353
        %v1519 = vpop.f32.mrb[0].mxu0
        %v1520 = vadd.f32 0.0, %v1519
        %v1521 = vpop.f32.mrb[0].mxu0
        %1522 = vmatprep.mubr.f32.mxu0 0.0
        %1523 = vmatmul.mubr.f32.gmra.mrb[0].mxu0 %v1356
        %v1524 = vpop.f32.mrb[0].mxu0
        %v1525 = vadd.f32 0.0, %v1524
        %v1526 = vpop.f32.mrb[0].mxu0
        %1527 = vmatprep.mubr.f32.mxu0 0.0
        %1528 = vmatmul.mubr.f32.gmra.mrb[0].mxu0 %v1359
        %v1529 = vpop.f32.mrb[0].mxu0
        %v1530 = vadd.f32 0.0, %v1529
        %v1531 = vpop.f32.mrb[0].mxu0
        %1532 = vmatprep.mubr.f32.mxu0 0.0
        %1533 = vmatmul.mubr.f32.gmra.mrb[0].mxu0 %v1362
        %v1534 = vpop.f32.mrb[0].mxu0
        %v1535 = vadd.f32 0.0, %v1534
        %v1536 = vpop.f32.mrb[0].mxu0
        %1537 = vmatprep.mubr.f32.mxu0 0.0
        %1538 = vmatmul.mubr.f32.gmra.mrb[0].mxu0 %v1365
        %v1539 = vpop.f32.mrb[0].mxu0
        %v1540 = vadd.f32 0.0, %v1539
        %v1541 = vpop.f32.mrb[0].mxu0
        %1542 = vmatprep.mubr.f32.mxu0 0.0
        %1543 = vmatmul.mubr.f32.gmra.mrb[0].mxu0 %v1368
        %v1544 = vpop.f32.mrb[0].mxu0
        %v1545 = vadd.f32 0.0, %v1544
        %v1546 = vpop.f32.mrb[0].mxu0
        %1547 = vmatprep.mubr.f32.mxu0 0.0
        %1548 = vmatmul.mubr.f32.gmra.mrb[0].mxu0 %v1371
        %v1549 = vpop.f32.mrb[0].mxu0
        %v1550 = vadd.f32 0.0, %v1549
        %v1551 = vpop.f32.mrb[0].mxu0
        %1552 = vmatprep.mubr.f32.mxu0 0.0
        %1553 = vmatmul.mubr.f32.gmra.mrb[0].mxu0 %v1374
        %v1554 = vpop.f32.mrb[0].mxu0
        %v1555 = vadd.f32 0.0, %v1554
        %v1556 = vpop.f32.mrb[0].mxu0
        %1557 = vmatprep.mubr.f32.mxu0 0.0
        %1558 = vmatmul.mubr.f32.gmra.mrb[0].mxu0 %v1377
        %v1559 = vpop.f32.mrb[0].mxu0
        %v1560 = vadd.f32 0.0, %v1559
        %v1561 = vpop.f32.mrb[0].mxu0
        %1562 = vmatprep.mubr.f32.mxu0 0.0
        %1563 = vmatmul.mubr.f32.gmra.mrb[0].mxu0 %v1380
        %v1564 = vpop.f32.mrb[0].mxu0
        %v1565 = vadd.f32 0.0, %v1564
        %v1566 = vpop.f32.mrb[0].mxu0
        %1567 = vmatprep.mubr.f32.mxu0 0.0
        %1568 = vmatmul.mubr.f32.gmra.mrb[0].mxu0 %v1383
        %v1569 = vpop.f32.mrb[0].mxu0
        %v1570 = vadd.f32 0.0, %v1569
        %v1571 = vpop.f32.mrb[0].mxu0
        %1572 = vmatprep.mubr.f32.mxu0 0.0
        %1573 = vmatmul.mubr.f32.gmra.mrb[0].mxu0 %v1386
        %v1574 = vpop.f32.mrb[0].mxu0
        %v1575 = vadd.f32 0.0, %v1574
        %v1576 = vpop.f32.mrb[0].mxu0
        %1577 = vmatprep.mubr.f32.mxu0 0.0
        %1578 = vmatmul.mubr.f32.gmra.mrb[0].mxu0 %v1389
        %v1579 = vpop.f32.mrb[0].mxu0
        %v1580 = vadd.f32 0.0, %v1579
        %v1581 = vpop.f32.mrb[0].mxu0
        %1582 = vmatprep.mubr.f32.mxu0 0.0
        %1583 = vmatmul.mubr.f32.gmra.mrb[0].mxu0 %v1392
        %v1584 = vpop.f32.mrb[0].mxu0
        %v1585 = vadd.f32 0.0, %v1584
        %v1586 = vpop.f32.mrb[0].mxu0
        %1587 = vmatprep.mubr.f32.mxu0 0.0
        %1588 = vmatmul.mubr.f32.gmra.mrb[0].mxu0 %v1395
        %v1589 = vpop.f32.mrb[0].mxu0
        %v1590 = vadd.f32 0.0, %v1589
        %v1591 = vpop.f32.mrb[0].mxu0
        %1592 = vmatprep.mubr.f32.mxu0 0.0
        %1593 = vmatmul.mubr.f32.gmra.mrb[0].mxu0 %v1398
        %v1594 = vpop.f32.mrb[0].mxu0
        %v1595 = vadd.f32 0.0, %v1594
        %v1596 = vpop.f32.mrb[0].mxu0
        %1597 = vmatprep.mubr.f32.mxu0 0.0
        %1598 = vmatmul.mubr.f32.gmra.mrb[0].mxu0 %v1401
        %v1599 = vpop.f32.mrb[0].mxu0
        %v1600 = vadd.f32 0.0, %v1599
        %v1601 = vpop.f32.mrb[0].mxu0
        %1602 = vmatprep.mubr.f32.mxu0 0.0
        %1603 = vmatmul.mubr.f32.gmra.mrb[0].mxu0 %v1404
        %v1604 = vpop.f32.mrb[0].mxu0
        %v1605 = vadd.f32 0.0, %v1604
        %v1606 = vpop.f32.mrb[0].mxu0
        %1607 = vmatprep.mubr.f32.mxu0 0.0
        %1608 = vmatmul.mubr.f32.gmra.mrb[0].mxu0 %v1407
        %v1609 = vpop.f32.mrb[0].mxu0
        %v1610 = vadd.f32 0.0, %v1609
        %v1611 = vpop.f32.mrb[0].mxu0
        %1612 = vmatprep.mubr.f32.mxu0 0.0
        %1613 = vmatmul.mubr.f32.gmra.mrb[0].mxu0 %v1410
        %v1614 = vpop.f32.mrb[0].mxu0
        %v1615 = vadd.f32 0.0, %v1614
        %v1616 = vpop.f32.mrb[0].mxu0
        %1617 = vmatprep.mubr.f32.mxu0 0.0
        %1618 = vmatmul.mubr.f32.gmra.mrb[0].mxu0 %v1413
        %v1619 = vpop.f32.mrb[0].mxu0
        %v1620 = vadd.f32 0.0, %v1619
        %v1621 = vpop.f32.mrb[0].mxu0
        %1622 = vmatprep.mubr.f32.mxu0 0.0
        %1623 = vmatmul.mubr.f32.gmra.mrb[0].mxu0 %v1416
        %v1624 = vpop.f32.mrb[0].mxu0
        %v1625 = vadd.f32 0.0, %v1624
        %v1626 = vpop.f32.mrb[0].mxu0
        %1627 = vmatprep.mubr.f32.mxu0 0.0
        %1628 = vmatmul.mubr.f32.gmra.mrb[0].mxu0 %v1419
        %v1629 = vpop.f32.mrb[0].mxu0
        %v1630 = vadd.f32 0.0, %v1629
        %v1631 = vpop.f32.mrb[0].mxu0
        %1632 = vmatprep.mubr.f32.mxu0 0.0
        %1633 = vmatmul.mubr.f32.gmra.mrb[0].mxu0 %v1422
        %v1634 = vpop.f32.mrb[0].mxu0
        %v1635 = vadd.f32 0.0, %v1634
        %v1636 = vpop.f32.mrb[0].mxu0
        %1637 = vmatprep.mubr.f32.mxu0 0.0
        %1638 = vmatmul.mubr.f32.gmra.mrb[0].mxu0 %v1425
        %v1639 = vpop.f32.mrb[0].mxu0
        %v1640 = vadd.f32 0.0, %v1639
        %v1641 = vpop.f32.mrb[0].mxu0
        %1642 = vmatprep.mubr.f32.mxu0 0.0
        %1643 = vmatmul.mubr.f32.gmra.mrb[0].mxu0 %v1428
        %v1644 = vpop.f32.mrb[0].mxu0
        %v1645 = vadd.f32 0.0, %v1644
        %v1646 = vpop.f32.mrb[0].mxu0
        %1647 = vmatprep.mubr.f32.mxu0 0.0
        %1648 = vmatmul.mubr.f32.gmra.mrb[0].mxu0 %v1431
        %v1649 = vpop.f32.mrb[0].mxu0
        %v1650 = vadd.f32 0.0, %v1649
        %v1651 = vpop.f32.mrb[0].mxu0
        %1652 = vmatprep.mubr.f32.mxu0 0.0
        %1653 = vmatmul.mubr.f32.gmra.mrb[0].mxu0 %v1434
        %v1654 = vpop.f32.mrb[0].mxu0
        %v1655 = vadd.f32 0.0, %v1654
        %v1656 = vpop.f32.mrb[0].mxu0
        %1657 = vmatprep.mubr.f32.mxu0 0.0
        %1658 = vmatmul.mubr.f32.gmra.mrb[0].mxu0 %v1437
        %v1659 = vpop.f32.mrb[0].mxu0
        %v1660 = vadd.f32 0.0, %v1659
        %v1661 = vpop.f32.mrb[0].mxu0
        %1662 = vmatprep.mubr.f32.mxu0 0.0
        %1663 = vmatmul.mubr.f32.gmra.mrb[0].mxu0 %v1440
        %v1664 = vpop.f32.mrb[0].mxu0
        %v1665 = vadd.f32 0.0, %v1664
        %v1666 = vpop.f32.mrb[0].mxu0
        %1667 = vmatprep.mubr.f32.mxu0 0.0
        %1668 = vmatmul.mubr.f32.gmra.mrb[0].mxu0 %v1443
        %v1669 = vpop.f32.mrb[0].mxu0
        %v1670 = vadd.f32 0.0, %v1669
        %v1671 = vpop.f32.mrb[0].mxu0
        %1672 = vdwg.mxu0
        %v1673 = vadd.f32 %v1281, %v1515
        %v1674 = vadd.f32 %v1282, %v1520
        %v1675 = vadd.f32 %v1283, %v1525
        %v1676 = vadd.f32 %v1284, %v1530
        %v1677 = vadd.f32 %v1285, %v1535
        %v1678 = vadd.f32 %v1286, %v1540
        %v1679 = vadd.f32 %v1287, %v1545
        %v1680 = vadd.f32 %v1288, %v1550
        %v1681 = vadd.f32 %v1289, %v1555
        %v1682 = vadd.f32 %v1290, %v1560
        %v1683 = vadd.f32 %v1291, %v1565
        %v1684 = vadd.f32 %v1292, %v1570
        %v1685 = vadd.f32 %v1293, %v1575
        %v1686 = vadd.f32 %v1294, %v1580
        %v1687 = vadd.f32 %v1295, %v1585
        %v1688 = vadd.f32 %v1296, %v1590
        %v1689 = vadd.f32 %v1297, %v1595
        %v1690 = vadd.f32 %v1298, %v1600
        %v1691 = vadd.f32 %v1299, %v1605
        %v1692 = vadd.f32 %v1300, %v1610
        %v1693 = vadd.f32 %v1301, %v1615
        %v1694 = vadd.f32 %v1302, %v1620
        %v1695 = vadd.f32 %v1303, %v1625
        %v1696 = vadd.f32 %v1304, %v1630
        %v1697 = vadd.f32 %v1305, %v1635
        %v1698 = vadd.f32 %v1306, %v1640
        %v1699 = vadd.f32 %v1307, %v1645
        %v1700 = vadd.f32 %v1308, %v1650
        %v1701 = vadd.f32 %v1309, %v1655
        %v1702 = vadd.f32 %v1310, %v1660
        %v1703 = vadd.f32 %v1311, %v1665
        %v1704 = vadd.f32 %v1312, %v1670
        %v1705 = vld [vmem:[%s1314 + $0x2] sm:$0xff]
        %v1706 = vld [vmem:[%s1314 + $0x12] sm:$0xff]
        %v1707 = vld [vmem:[%s1314 + $0x22] sm:$0xff]
        %v1708 = vld [vmem:[%s1314 + $0x32] sm:$0xff]
        %v1709 = vld [vmem:[%s1314 + $0x42] sm:$0xff]
        %v1710 = vld [vmem:[%s1314 + $0x52] sm:$0xff]
        %v1711 = vld [vmem:[%s1314 + $0x62] sm:$0xff]
        %v1712 = vld [vmem:[%s1314 + $0x72] sm:$0xff]
        %v1713 = vld [vmem:[%s1314 + $0xc2] sm:$0xff]
        %v1714 = vld [vmem:[%s1314 + $0xd2] sm:$0xff]
        %v1715 = vld [vmem:[%s1314 + $0xe2] sm:$0xff]
        %v1716 = vld [vmem:[%s1314 + $0xf2] sm:$0xff]
        %v1717 = vld [vmem:[%s1314 + $0x102] sm:$0xff]
        %v1718 = vld [vmem:[%s1314 + $0x112] sm:$0xff]
        %v1719 = vld [vmem:[%s1314 + $0x122] sm:$0xff]
        %v1720 = vld [vmem:[%s1314 + $0x132] sm:$0xff]
        %v1721 = vld [vmem:[%s1314 + $0x182] sm:$0xff]
        %v1722 = vld [vmem:[%s1314 + $0x192] sm:$0xff]
        %v1723 = vld [vmem:[%s1314 + $0x1a2] sm:$0xff]
        %v1724 = vld [vmem:[%s1314 + $0x1b2] sm:$0xff]
        %v1725 = vld [vmem:[%s1314 + $0x1c2] sm:$0xff]
        %v1726 = vld [vmem:[%s1314 + $0x1d2] sm:$0xff]
        %v1727 = vld [vmem:[%s1314 + $0x1e2] sm:$0xff]
        %v1728 = vld [vmem:[%s1314 + $0x1f2] sm:$0xff]
        %v1729 = vld [vmem:[%s1314 + $0x242] sm:$0xff]
        %v1730 = vld [vmem:[%s1314 + $0x252] sm:$0xff]
        %v1731 = vld [vmem:[%s1314 + $0x262] sm:$0xff]
        %v1732 = vld [vmem:[%s1314 + $0x272] sm:$0xff]
        %v1733 = vld [vmem:[%s1314 + $0x282] sm:$0xff]
        %v1734 = vld [vmem:[%s1314 + $0x292] sm:$0xff]
        %v1735 = vld [vmem:[%s1314 + $0x2a2] sm:$0xff]
        %v1736 = vld [vmem:[%s1314 + $0x2b2] sm:$0xff]
        %s1737 = scalar_lea.vmem %s1, 16
        %v1738 = vld [vmem:[%s1737] sm:$0xf]
        %v1740 = vsel %vm273, %v1705, 0
        %v1743 = vsel %vm273, %v1706, 0
        %v1746 = vsel %vm273, %v1707, 0
        %v1749 = vsel %vm273, %v1708, 0
        %v1752 = vsel %vm273, %v1709, 0
        %v1755 = vsel %vm273, %v1710, 0
        %v1758 = vsel %vm273, %v1711, 0
        %v1761 = vsel %vm273, %v1712, 0
        %v1764 = vsel %vm273, %v1713, 0
        %v1767 = vsel %vm273, %v1714, 0
        %v1770 = vsel %vm273, %v1715, 0
        %v1773 = vsel %vm273, %v1716, 0
        %v1776 = vsel %vm273, %v1717, 0
        %v1779 = vsel %vm273, %v1718, 0
        %v1782 = vsel %vm273, %v1719, 0
        %v1785 = vsel %vm273, %v1720, 0
        %v1788 = vsel %vm273, %v1721, 0
        %v1791 = vsel %vm273, %v1722, 0
        %v1794 = vsel %vm273, %v1723, 0
        %v1797 = vsel %vm273, %v1724, 0
        %v1800 = vsel %vm273, %v1725, 0
        %v1803 = vsel %vm273, %v1726, 0
        %v1806 = vsel %vm273, %v1727, 0
        %v1809 = vsel %vm273, %v1728, 0
        %v1812 = vsel %vm273, %v1729, 0
        %v1815 = vsel %vm273, %v1730, 0
        %v1818 = vsel %vm273, %v1731, 0
        %v1821 = vsel %vm273, %v1732, 0
        %v1824 = vsel %vm273, %v1733, 0
        %v1827 = vsel %vm273, %v1734, 0
        %v1830 = vsel %vm273, %v1735, 0
        %v1833 = vsel %vm273, %v1736, 0
        %v1836 = vsel %vm370, %v1738, 0
        %1838 = vmatprep.subr.mxu0 0.0
        %1839 = vmatpush1.msra.mxu0 %v1836
        %1840 = vmatprep.subr.mxu0 0.0
        %1841 = vmatpush1.msra.mxu0 0.0
        %1842 = vmatprep.subr.mxu0 0.0
        %1843 = vmatpush1.msra.mxu0 0.0
        %1844 = vmatprep.subr.mxu0 0.0
        %1845 = vmatpush1.msra.mxu0 0.0
        %1846 = vmatprep.subr.mxu0 0.0
        %1847 = vmatpush1.msra.mxu0 0.0
        %1848 = vmatprep.subr.mxu0 0.0
        %1849 = vmatpush1.msra.mxu0 0.0
        %1850 = vmatprep.subr.mxu0 0.0
        %1851 = vmatpush1.msra.mxu0 0.0
        %1852 = vmatprep.subr.mxu0 0.0
        %1853 = vmatpush1.msra.mxu0 0.0
        %1854 = vmatprep.subr.mxu0 0.0
        %1855 = vmatpush1.msra.mxu0 0.0
        %1856 = vmatprep.subr.mxu0 0.0
        %1857 = vmatpush1.msra.mxu0 0.0
        %1858 = vmatprep.subr.mxu0 0.0
        %1859 = vmatpush1.msra.mxu0 0.0
        %1860 = vmatprep.subr.mxu0 0.0
        %1861 = vmatpush1.msra.mxu0 0.0
        %1862 = vmatprep.subr.mxu0 0.0
        %1863 = vmatpush1.msra.mxu0 0.0
        %1864 = vmatprep.subr.mxu0 0.0
        %1865 = vmatpush1.msra.mxu0 0.0
        %1866 = vmatprep.subr.mxu0 0.0
        %1867 = vmatpush1.msra.mxu0 0.0
        %1868 = vmatprep.subr.mxu0 0.0
        %1869 = vmatpush1.msra.mxu0 0.0
        %1870 = vmatprep.subr.mxu0 0.0
        %1871 = vmatpush1.msra.mxu0 0.0
        %1872 = vmatprep.subr.mxu0 0.0
        %1873 = vmatpush1.msra.mxu0 0.0
        %1874 = vmatprep.subr.mxu0 0.0
        %1875 = vmatpush1.msra.mxu0 0.0
        %1876 = vmatprep.subr.mxu0 0.0
        %1877 = vmatpush1.msra.mxu0 0.0
        %1878 = vmatprep.subr.mxu0 0.0
        %1879 = vmatpush1.msra.mxu0 0.0
        %1880 = vmatprep.subr.mxu0 0.0
        %1881 = vmatpush1.msra.mxu0 0.0
        %1882 = vmatprep.subr.mxu0 0.0
        %1883 = vmatpush1.msra.mxu0 0.0
        %1884 = vmatprep.subr.mxu0 0.0
        %1885 = vmatpush1.msra.mxu0 0.0
        %1886 = vmatprep.subr.mxu0 0.0
        %1887 = vmatpush1.msra.mxu0 0.0
        %1888 = vmatprep.subr.mxu0 0.0
        %1889 = vmatpush1.msra.mxu0 0.0
        %1890 = vmatprep.subr.mxu0 0.0
        %1891 = vmatpush1.msra.mxu0 0.0
        %1892 = vmatprep.subr.mxu0 0.0
        %1893 = vmatpush1.msra.mxu0 0.0
        %1894 = vmatprep.subr.mxu0 0.0
        %1895 = vmatpush1.msra.mxu0 0.0
        %1896 = vmatprep.subr.mxu0 0.0
        %1897 = vmatpush1.msra.mxu0 0.0
        %1898 = vmatprep.subr.mxu0 0.0
        %1899 = vmatpush1.msra.mxu0 0.0
        %1900 = vmatprep.subr.mxu0 0.0
        %1901 = vmatpush1.msra.mxu0 0.0
        %1902 = vmatprep.mubr.f32.mxu0 0.0
        %1903 = vmatmul.mubr.f32.gmra.mrb[0].mxu0 %v1740
        %v1904 = vpop.f32.mrb[0].mxu0
        %v1905 = vadd.f32 0.0, %v1904
        %v1906 = vpop.f32.mrb[0].mxu0
        %1907 = vmatprep.mubr.f32.mxu0 0.0
        %1908 = vmatmul.mubr.f32.gmra.mrb[0].mxu0 %v1743
        %v1909 = vpop.f32.mrb[0].mxu0
        %v1910 = vadd.f32 0.0, %v1909
        %v1911 = vpop.f32.mrb[0].mxu0
        %1912 = vmatprep.mubr.f32.mxu0 0.0
        %1913 = vmatmul.mubr.f32.gmra.mrb[0].mxu0 %v1746
        %v1914 = vpop.f32.mrb[0].mxu0
        %v1915 = vadd.f32 0.0, %v1914
        %v1916 = vpop.f32.mrb[0].mxu0
        %1917 = vmatprep.mubr.f32.mxu0 0.0
        %1918 = vmatmul.mubr.f32.gmra.mrb[0].mxu0 %v1749
        %v1919 = vpop.f32.mrb[0].mxu0
        %v1920 = vadd.f32 0.0, %v1919
        %v1921 = vpop.f32.mrb[0].mxu0
        %1922 = vmatprep.mubr.f32.mxu0 0.0
        %1923 = vmatmul.mubr.f32.gmra.mrb[0].mxu0 %v1752
        %v1924 = vpop.f32.mrb[0].mxu0
        %v1925 = vadd.f32 0.0, %v1924
        %v1926 = vpop.f32.mrb[0].mxu0
        %1927 = vmatprep.mubr.f32.mxu0 0.0
        %1928 = vmatmul.mubr.f32.gmra.mrb[0].mxu0 %v1755
        %v1929 = vpop.f32.mrb[0].mxu0
        %v1930 = vadd.f32 0.0, %v1929
        %v1931 = vpop.f32.mrb[0].mxu0
        %1932 = vmatprep.mubr.f32.mxu0 0.0
        %1933 = vmatmul.mubr.f32.gmra.mrb[0].mxu0 %v1758
        %v1934 = vpop.f32.mrb[0].mxu0
        %v1935 = vadd.f32 0.0, %v1934
        %v1936 = vpop.f32.mrb[0].mxu0
        %1937 = vmatprep.mubr.f32.mxu0 0.0
        %1938 = vmatmul.mubr.f32.gmra.mrb[0].mxu0 %v1761
        %v1939 = vpop.f32.mrb[0].mxu0
        %v1940 = vadd.f32 0.0, %v1939
        %v1941 = vpop.f32.mrb[0].mxu0
        %1942 = vmatprep.mubr.f32.mxu0 0.0
        %1943 = vmatmul.mubr.f32.gmra.mrb[0].mxu0 %v1764
        %v1944 = vpop.f32.mrb[0].mxu0
        %v1945 = vadd.f32 0.0, %v1944
        %v1946 = vpop.f32.mrb[0].mxu0
        %1947 = vmatprep.mubr.f32.mxu0 0.0
        %1948 = vmatmul.mubr.f32.gmra.mrb[0].mxu0 %v1767
        %v1949 = vpop.f32.mrb[0].mxu0
        %v1950 = vadd.f32 0.0, %v1949
        %v1951 = vpop.f32.mrb[0].mxu0
        %1952 = vmatprep.mubr.f32.mxu0 0.0
        %1953 = vmatmul.mubr.f32.gmra.mrb[0].mxu0 %v1770
        %v1954 = vpop.f32.mrb[0].mxu0
        %v1955 = vadd.f32 0.0, %v1954
        %v1956 = vpop.f32.mrb[0].mxu0
        %1957 = vmatprep.mubr.f32.mxu0 0.0
        %1958 = vmatmul.mubr.f32.gmra.mrb[0].mxu0 %v1773
        %v1959 = vpop.f32.mrb[0].mxu0
        %v1960 = vadd.f32 0.0, %v1959
        %v1961 = vpop.f32.mrb[0].mxu0
        %1962 = vmatprep.mubr.f32.mxu0 0.0
        %1963 = vmatmul.mubr.f32.gmra.mrb[0].mxu0 %v1776
        %v1964 = vpop.f32.mrb[0].mxu0
        %v1965 = vadd.f32 0.0, %v1964
        %v1966 = vpop.f32.mrb[0].mxu0
        %1967 = vmatprep.mubr.f32.mxu0 0.0
        %1968 = vmatmul.mubr.f32.gmra.mrb[0].mxu0 %v1779
        %v1969 = vpop.f32.mrb[0].mxu0
        %v1970 = vadd.f32 0.0, %v1969
        %v1971 = vpop.f32.mrb[0].mxu0
        %1972 = vmatprep.mubr.f32.mxu0 0.0
        %1973 = vmatmul.mubr.f32.gmra.mrb[0].mxu0 %v1782
        %v1974 = vpop.f32.mrb[0].mxu0
        %v1975 = vadd.f32 0.0, %v1974
        %v1976 = vpop.f32.mrb[0].mxu0
        %1977 = vmatprep.mubr.f32.mxu0 0.0
        %1978 = vmatmul.mubr.f32.gmra.mrb[0].mxu0 %v1785
        %v1979 = vpop.f32.mrb[0].mxu0
        %v1980 = vadd.f32 0.0, %v1979
        %v1981 = vpop.f32.mrb[0].mxu0
        %1982 = vmatprep.mubr.f32.mxu0 0.0
        %1983 = vmatmul.mubr.f32.gmra.mrb[0].mxu0 %v1788
        %v1984 = vpop.f32.mrb[0].mxu0
        %v1985 = vadd.f32 0.0, %v1984
        %v1986 = vpop.f32.mrb[0].mxu0
        %1987 = vmatprep.mubr.f32.mxu0 0.0
        %1988 = vmatmul.mubr.f32.gmra.mrb[0].mxu0 %v1791
        %v1989 = vpop.f32.mrb[0].mxu0
        %v1990 = vadd.f32 0.0, %v1989
        %v1991 = vpop.f32.mrb[0].mxu0
        %1992 = vmatprep.mubr.f32.mxu0 0.0
        %1993 = vmatmul.mubr.f32.gmra.mrb[0].mxu0 %v1794
        %v1994 = vpop.f32.mrb[0].mxu0
        %v1995 = vadd.f32 0.0, %v1994
        %v1996 = vpop.f32.mrb[0].mxu0
        %1997 = vmatprep.mubr.f32.mxu0 0.0
        %1998 = vmatmul.mubr.f32.gmra.mrb[0].mxu0 %v1797
        %v1999 = vpop.f32.mrb[0].mxu0
        %v2000 = vadd.f32 0.0, %v1999
        %v2001 = vpop.f32.mrb[0].mxu0
        %2002 = vmatprep.mubr.f32.mxu0 0.0
        %2003 = vmatmul.mubr.f32.gmra.mrb[0].mxu0 %v1800
        %v2004 = vpop.f32.mrb[0].mxu0
        %v2005 = vadd.f32 0.0, %v2004
        %v2006 = vpop.f32.mrb[0].mxu0
        %2007 = vmatprep.mubr.f32.mxu0 0.0
        %2008 = vmatmul.mubr.f32.gmra.mrb[0].mxu0 %v1803
        %v2009 = vpop.f32.mrb[0].mxu0
        %v2010 = vadd.f32 0.0, %v2009
        %v2011 = vpop.f32.mrb[0].mxu0
        %2012 = vmatprep.mubr.f32.mxu0 0.0
        %2013 = vmatmul.mubr.f32.gmra.mrb[0].mxu0 %v1806
        %v2014 = vpop.f32.mrb[0].mxu0
        %v2015 = vadd.f32 0.0, %v2014
        %v2016 = vpop.f32.mrb[0].mxu0
        %2017 = vmatprep.mubr.f32.mxu0 0.0
        %2018 = vmatmul.mubr.f32.gmra.mrb[0].mxu0 %v1809
        %v2019 = vpop.f32.mrb[0].mxu0
        %v2020 = vadd.f32 0.0, %v2019
        %v2021 = vpop.f32.mrb[0].mxu0
        %2022 = vmatprep.mubr.f32.mxu0 0.0
        %2023 = vmatmul.mubr.f32.gmra.mrb[0].mxu0 %v1812
        %v2024 = vpop.f32.mrb[0].mxu0
        %v2025 = vadd.f32 0.0, %v2024
        %v2026 = vpop.f32.mrb[0].mxu0
        %2027 = vmatprep.mubr.f32.mxu0 0.0
        %2028 = vmatmul.mubr.f32.gmra.mrb[0].mxu0 %v1815
        %v2029 = vpop.f32.mrb[0].mxu0
        %v2030 = vadd.f32 0.0, %v2029
        %v2031 = vpop.f32.mrb[0].mxu0
        %2032 = vmatprep.mubr.f32.mxu0 0.0
        %2033 = vmatmul.mubr.f32.gmra.mrb[0].mxu0 %v1818
        %v2034 = vpop.f32.mrb[0].mxu0
        %v2035 = vadd.f32 0.0, %v2034
        %v2036 = vpop.f32.mrb[0].mxu0
        %2037 = vmatprep.mubr.f32.mxu0 0.0
        %2038 = vmatmul.mubr.f32.gmra.mrb[0].mxu0 %v1821
        %v2039 = vpop.f32.mrb[0].mxu0
        %v2040 = vadd.f32 0.0, %v2039
        %v2041 = vpop.f32.mrb[0].mxu0
        %2042 = vmatprep.mubr.f32.mxu0 0.0
        %2043 = vmatmul.mubr.f32.gmra.mrb[0].mxu0 %v1824
        %v2044 = vpop.f32.mrb[0].mxu0
        %v2045 = vadd.f32 0.0, %v2044
        %v2046 = vpop.f32.mrb[0].mxu0
        %2047 = vmatprep.mubr.f32.mxu0 0.0
        %2048 = vmatmul.mubr.f32.gmra.mrb[0].mxu0 %v1827
        %v2049 = vpop.f32.mrb[0].mxu0
        %v2050 = vadd.f32 0.0, %v2049
        %v2051 = vpop.f32.mrb[0].mxu0
        %2052 = vmatprep.mubr.f32.mxu0 0.0
        %2053 = vmatmul.mubr.f32.gmra.mrb[0].mxu0 %v1830
        %v2054 = vpop.f32.mrb[0].mxu0
        %v2055 = vadd.f32 0.0, %v2054
        %v2056 = vpop.f32.mrb[0].mxu0
        %2057 = vmatprep.mubr.f32.mxu0 0.0
        %2058 = vmatmul.mubr.f32.gmra.mrb[0].mxu0 %v1833
        %v2059 = vpop.f32.mrb[0].mxu0
        %v2060 = vadd.f32 0.0, %v2059
        %v2061 = vpop.f32.mrb[0].mxu0
        %2062 = vdwg.mxu0
        %v2063 = vadd.f32 %v1673, %v1905
        %v2064 = vadd.f32 %v1674, %v1910
        %v2065 = vadd.f32 %v1675, %v1915
        %v2066 = vadd.f32 %v1676, %v1920
        %v2067 = vadd.f32 %v1677, %v1925
        %v2068 = vadd.f32 %v1678, %v1930
        %v2069 = vadd.f32 %v1679, %v1935
        %v2070 = vadd.f32 %v1680, %v1940
        %v2071 = vadd.f32 %v1681, %v1945
        %v2072 = vadd.f32 %v1682, %v1950
        %v2073 = vadd.f32 %v1683, %v1955
        %v2074 = vadd.f32 %v1684, %v1960
        %v2075 = vadd.f32 %v1685, %v1965
        %v2076 = vadd.f32 %v1686, %v1970
        %v2077 = vadd.f32 %v1687, %v1975
        %v2078 = vadd.f32 %v1688, %v1980
        %v2079 = vadd.f32 %v1689, %v1985
        %v2080 = vadd.f32 %v1690, %v1990
        %v2081 = vadd.f32 %v1691, %v1995
        %v2082 = vadd.f32 %v1692, %v2000
        %v2083 = vadd.f32 %v1693, %v2005
        %v2084 = vadd.f32 %v1694, %v2010
        %v2085 = vadd.f32 %v1695, %v2015
        %v2086 = vadd.f32 %v1696, %v2020
        %v2087 = vadd.f32 %v1697, %v2025
        %v2088 = vadd.f32 %v1698, %v2030
        %v2089 = vadd.f32 %v1699, %v2035
        %v2090 = vadd.f32 %v1700, %v2040
        %v2091 = vadd.f32 %v1701, %v2045
        %v2092 = vadd.f32 %v1702, %v2050
        %v2093 = vadd.f32 %v1703, %v2055
        %v2094 = vadd.f32 %v1704, %v2060
        %v2095 = vld [vmem:[%s1314 + $0x4] sm:$0xff]
        %v2096 = vld [vmem:[%s1314 + $0x14] sm:$0xff]
        %v2097 = vld [vmem:[%s1314 + $0x24] sm:$0xff]
        %v2098 = vld [vmem:[%s1314 + $0x34] sm:$0xff]
        %v2099 = vld [vmem:[%s1314 + $0x44] sm:$0xff]
        %v2100 = vld [vmem:[%s1314 + $0x54] sm:$0xff]
        %v2101 = vld [vmem:[%s1314 + $0x64] sm:$0xff]
        %v2102 = vld [vmem:[%s1314 + $0x74] sm:$0xff]
        %v2103 = vld [vmem:[%s1314 + $0xc4] sm:$0xff]
        %v2104 = vld [vmem:[%s1314 + $0xd4] sm:$0xff]
        %v2105 = vld [vmem:[%s1314 + $0xe4] sm:$0xff]
        %v2106 = vld [vmem:[%s1314 + $0xf4] sm:$0xff]
        %v2107 = vld [vmem:[%s1314 + $0x104] sm:$0xff]
        %v2108 = vld [vmem:[%s1314 + $0x114] sm:$0xff]
        %v2109 = vld [vmem:[%s1314 + $0x124] sm:$0xff]
        %v2110 = vld [vmem:[%s1314 + $0x134] sm:$0xff]
        %v2111 = vld [vmem:[%s1314 + $0x184] sm:$0xff]
        %v2112 = vld [vmem:[%s1314 + $0x194] sm:$0xff]
        %v2113 = vld [vmem:[%s1314 + $0x1a4] sm:$0xff]
        %v2114 = vld [vmem:[%s1314 + $0x1b4] sm:$0xff]
        %v2115 = vld [vmem:[%s1314 + $0x1c4] sm:$0xff]
        %v2116 = vld [vmem:[%s1314 + $0x1d4] sm:$0xff]
        %v2117 = vld [vmem:[%s1314 + $0x1e4] sm:$0xff]
        %v2118 = vld [vmem:[%s1314 + $0x1f4] sm:$0xff]
        %v2119 = vld [vmem:[%s1314 + $0x244] sm:$0xff]
        %v2120 = vld [vmem:[%s1314 + $0x254] sm:$0xff]
        %v2121 = vld [vmem:[%s1314 + $0x264] sm:$0xff]
        %v2122 = vld [vmem:[%s1314 + $0x274] sm:$0xff]
        %v2123 = vld [vmem:[%s1314 + $0x284] sm:$0xff]
        %v2124 = vld [vmem:[%s1314 + $0x294] sm:$0xff]
        %v2125 = vld [vmem:[%s1314 + $0x2a4] sm:$0xff]
        %v2126 = vld [vmem:[%s1314 + $0x2b4] sm:$0xff]
        %s2127 = scalar_lea.vmem %s1, 20
        %v2128 = vld [vmem:[%s2127] sm:$0xf]
        %v2130 = vsel %vm273, %v2095, 0
        %v2133 = vsel %vm273, %v2096, 0
        %v2136 = vsel %vm273, %v2097, 0
        %v2139 = vsel %vm273, %v2098, 0
        %v2142 = vsel %vm273, %v2099, 0
        %v2145 = vsel %vm273, %v2100, 0
        %v2148 = vsel %vm273, %v2101, 0
        %v2151 = vsel %vm273, %v2102, 0
        %v2154 = vsel %vm273, %v2103, 0
        %v2157 = vsel %vm273, %v2104, 0
        %v2160 = vsel %vm273, %v2105, 0
        %v2163 = vsel %vm273, %v2106, 0
        %v2166 = vsel %vm273, %v2107, 0
        %v2169 = vsel %vm273, %v2108, 0
        %v2172 = vsel %vm273, %v2109, 0
        %v2175 = vsel %vm273, %v2110, 0
        %v2178 = vsel %vm273, %v2111, 0
        %v2181 = vsel %vm273, %v2112, 0
        %v2184 = vsel %vm273, %v2113, 0
        %v2187 = vsel %vm273, %v2114, 0
        %v2190 = vsel %vm273, %v2115, 0
        %v2193 = vsel %vm273, %v2116, 0
        %v2196 = vsel %vm273, %v2117, 0
        %v2199 = vsel %vm273, %v2118, 0
        %v2202 = vsel %vm273, %v2119, 0
        %v2205 = vsel %vm273, %v2120, 0
        %v2208 = vsel %vm273, %v2121, 0
        %v2211 = vsel %vm273, %v2122, 0
        %v2214 = vsel %vm273, %v2123, 0
        %v2217 = vsel %vm273, %v2124, 0
        %v2220 = vsel %vm273, %v2125, 0
        %v2223 = vsel %vm273, %v2126, 0
        %v2226 = vsel %vm370, %v2128, 0
        %2228 = vmatprep.subr.mxu0 0.0
        %2229 = vmatpush1.msra.mxu0 %v2226
        %2230 = vmatprep.subr.mxu0 0.0
        %2231 = vmatpush1.msra.mxu0 0.0
        %2232 = vmatprep.subr.mxu0 0.0
        %2233 = vmatpush1.msra.mxu0 0.0
        %2234 = vmatprep.subr.mxu0 0.0
        %2235 = vmatpush1.msra.mxu0 0.0
        %2236 = vmatprep.subr.mxu0 0.0
        %2237 = vmatpush1.msra.mxu0 0.0
        %2238 = vmatprep.subr.mxu0 0.0
        %2239 = vmatpush1.msra.mxu0 0.0
        %2240 = vmatprep.subr.mxu0 0.0
        %2241 = vmatpush1.msra.mxu0 0.0
        %2242 = vmatprep.subr.mxu0 0.0
        %2243 = vmatpush1.msra.mxu0 0.0
        %2244 = vmatprep.subr.mxu0 0.0
        %2245 = vmatpush1.msra.mxu0 0.0
        %2246 = vmatprep.subr.mxu0 0.0
        %2247 = vmatpush1.msra.mxu0 0.0
        %2248 = vmatprep.subr.mxu0 0.0
        %2249 = vmatpush1.msra.mxu0 0.0
        %2250 = vmatprep.subr.mxu0 0.0
        %2251 = vmatpush1.msra.mxu0 0.0
        %2252 = vmatprep.subr.mxu0 0.0
        %2253 = vmatpush1.msra.mxu0 0.0
        %2254 = vmatprep.subr.mxu0 0.0
        %2255 = vmatpush1.msra.mxu0 0.0
        %2256 = vmatprep.subr.mxu0 0.0
        %2257 = vmatpush1.msra.mxu0 0.0
        %2258 = vmatprep.subr.mxu0 0.0
        %2259 = vmatpush1.msra.mxu0 0.0
        %2260 = vmatprep.subr.mxu0 0.0
        %2261 = vmatpush1.msra.mxu0 0.0
        %2262 = vmatprep.subr.mxu0 0.0
        %2263 = vmatpush1.msra.mxu0 0.0
        %2264 = vmatprep.subr.mxu0 0.0
        %2265 = vmatpush1.msra.mxu0 0.0
        %2266 = vmatprep.subr.mxu0 0.0
        %2267 = vmatpush1.msra.mxu0 0.0
        %2268 = vmatprep.subr.mxu0 0.0
        %2269 = vmatpush1.msra.mxu0 0.0
        %2270 = vmatprep.subr.mxu0 0.0
        %2271 = vmatpush1.msra.mxu0 0.0
        %2272 = vmatprep.subr.mxu0 0.0
        %2273 = vmatpush1.msra.mxu0 0.0
        %2274 = vmatprep.subr.mxu0 0.0
        %2275 = vmatpush1.msra.mxu0 0.0
        %2276 = vmatprep.subr.mxu0 0.0
        %2277 = vmatpush1.msra.mxu0 0.0
        %2278 = vmatprep.subr.mxu0 0.0
        %2279 = vmatpush1.msra.mxu0 0.0
        %2280 = vmatprep.subr.mxu0 0.0
        %2281 = vmatpush1.msra.mxu0 0.0
        %2282 = vmatprep.subr.mxu0 0.0
        %2283 = vmatpush1.msra.mxu0 0.0
        %2284 = vmatprep.subr.mxu0 0.0
        %2285 = vmatpush1.msra.mxu0 0.0
        %2286 = vmatprep.subr.mxu0 0.0
        %2287 = vmatpush1.msra.mxu0 0.0
        %2288 = vmatprep.subr.mxu0 0.0
        %2289 = vmatpush1.msra.mxu0 0.0
        %2290 = vmatprep.subr.mxu0 0.0
        %2291 = vmatpush1.msra.mxu0 0.0
        %2292 = vmatprep.mubr.f32.mxu0 0.0
        %2293 = vmatmul.mubr.f32.gmra.mrb[0].mxu0 %v2130
        %v2294 = vpop.f32.mrb[0].mxu0
        %v2295 = vadd.f32 0.0, %v2294
        %v2296 = vpop.f32.mrb[0].mxu0
        %2297 = vmatprep.mubr.f32.mxu0 0.0
        %2298 = vmatmul.mubr.f32.gmra.mrb[0].mxu0 %v2133
        %v2299 = vpop.f32.mrb[0].mxu0
        %v2300 = vadd.f32 0.0, %v2299
        %v2301 = vpop.f32.mrb[0].mxu0
        %2302 = vmatprep.mubr.f32.mxu0 0.0
        %2303 = vmatmul.mubr.f32.gmra.mrb[0].mxu0 %v2136
        %v2304 = vpop.f32.mrb[0].mxu0
        %v2305 = vadd.f32 0.0, %v2304
        %v2306 = vpop.f32.mrb[0].mxu0
        %2307 = vmatprep.mubr.f32.mxu0 0.0
        %2308 = vmatmul.mubr.f32.gmra.mrb[0].mxu0 %v2139
        %v2309 = vpop.f32.mrb[0].mxu0
        %v2310 = vadd.f32 0.0, %v2309
        %v2311 = vpop.f32.mrb[0].mxu0
        %2312 = vmatprep.mubr.f32.mxu0 0.0
        %2313 = vmatmul.mubr.f32.gmra.mrb[0].mxu0 %v2142
        %v2314 = vpop.f32.mrb[0].mxu0
        %v2315 = vadd.f32 0.0, %v2314
        %v2316 = vpop.f32.mrb[0].mxu0
        %2317 = vmatprep.mubr.f32.mxu0 0.0
        %2318 = vmatmul.mubr.f32.gmra.mrb[0].mxu0 %v2145
        %v2319 = vpop.f32.mrb[0].mxu0
        %v2320 = vadd.f32 0.0, %v2319
        %v2321 = vpop.f32.mrb[0].mxu0
        %2322 = vmatprep.mubr.f32.mxu0 0.0
        %2323 = vmatmul.mubr.f32.gmra.mrb[0].mxu0 %v2148
        %v2324 = vpop.f32.mrb[0].mxu0
        %v2325 = vadd.f32 0.0, %v2324
        %v2326 = vpop.f32.mrb[0].mxu0
        %2327 = vmatprep.mubr.f32.mxu0 0.0
        %2328 = vmatmul.mubr.f32.gmra.mrb[0].mxu0 %v2151
        %v2329 = vpop.f32.mrb[0].mxu0
        %v2330 = vadd.f32 0.0, %v2329
        %v2331 = vpop.f32.mrb[0].mxu0
        %2332 = vmatprep.mubr.f32.mxu0 0.0
        %2333 = vmatmul.mubr.f32.gmra.mrb[0].mxu0 %v2154
        %v2334 = vpop.f32.mrb[0].mxu0
        %v2335 = vadd.f32 0.0, %v2334
        %v2336 = vpop.f32.mrb[0].mxu0
        %2337 = vmatprep.mubr.f32.mxu0 0.0
        %2338 = vmatmul.mubr.f32.gmra.mrb[0].mxu0 %v2157
        %v2339 = vpop.f32.mrb[0].mxu0
        %v2340 = vadd.f32 0.0, %v2339
        %v2341 = vpop.f32.mrb[0].mxu0
        %2342 = vmatprep.mubr.f32.mxu0 0.0
        %2343 = vmatmul.mubr.f32.gmra.mrb[0].mxu0 %v2160
        %v2344 = vpop.f32.mrb[0].mxu0
        %v2345 = vadd.f32 0.0, %v2344
        %v2346 = vpop.f32.mrb[0].mxu0
        %2347 = vmatprep.mubr.f32.mxu0 0.0
        %2348 = vmatmul.mubr.f32.gmra.mrb[0].mxu0 %v2163
        %v2349 = vpop.f32.mrb[0].mxu0
        %v2350 = vadd.f32 0.0, %v2349
        %v2351 = vpop.f32.mrb[0].mxu0
        %2352 = vmatprep.mubr.f32.mxu0 0.0
        %2353 = vmatmul.mubr.f32.gmra.mrb[0].mxu0 %v2166
        %v2354 = vpop.f32.mrb[0].mxu0
        %v2355 = vadd.f32 0.0, %v2354
        %v2356 = vpop.f32.mrb[0].mxu0
        %2357 = vmatprep.mubr.f32.mxu0 0.0
        %2358 = vmatmul.mubr.f32.gmra.mrb[0].mxu0 %v2169
        %v2359 = vpop.f32.mrb[0].mxu0
        %v2360 = vadd.f32 0.0, %v2359
        %v2361 = vpop.f32.mrb[0].mxu0
        %2362 = vmatprep.mubr.f32.mxu0 0.0
        %2363 = vmatmul.mubr.f32.gmra.mrb[0].mxu0 %v2172
        %v2364 = vpop.f32.mrb[0].mxu0
        %v2365 = vadd.f32 0.0, %v2364
        %v2366 = vpop.f32.mrb[0].mxu0
        %2367 = vmatprep.mubr.f32.mxu0 0.0
        %2368 = vmatmul.mubr.f32.gmra.mrb[0].mxu0 %v2175
        %v2369 = vpop.f32.mrb[0].mxu0
        %v2370 = vadd.f32 0.0, %v2369
        %v2371 = vpop.f32.mrb[0].mxu0
        %2372 = vmatprep.mubr.f32.mxu0 0.0
        %2373 = vmatmul.mubr.f32.gmra.mrb[0].mxu0 %v2178
        %v2374 = vpop.f32.mrb[0].mxu0
        %v2375 = vadd.f32 0.0, %v2374
        %v2376 = vpop.f32.mrb[0].mxu0
        %2377 = vmatprep.mubr.f32.mxu0 0.0
        %2378 = vmatmul.mubr.f32.gmra.mrb[0].mxu0 %v2181
        %v2379 = vpop.f32.mrb[0].mxu0
        %v2380 = vadd.f32 0.0, %v2379
        %v2381 = vpop.f32.mrb[0].mxu0
        %2382 = vmatprep.mubr.f32.mxu0 0.0
        %2383 = vmatmul.mubr.f32.gmra.mrb[0].mxu0 %v2184
        %v2384 = vpop.f32.mrb[0].mxu0
        %v2385 = vadd.f32 0.0, %v2384
        %v2386 = vpop.f32.mrb[0].mxu0
        %2387 = vmatprep.mubr.f32.mxu0 0.0
        %2388 = vmatmul.mubr.f32.gmra.mrb[0].mxu0 %v2187
        %v2389 = vpop.f32.mrb[0].mxu0
        %v2390 = vadd.f32 0.0, %v2389
        %v2391 = vpop.f32.mrb[0].mxu0
        %2392 = vmatprep.mubr.f32.mxu0 0.0
        %2393 = vmatmul.mubr.f32.gmra.mrb[0].mxu0 %v2190
        %v2394 = vpop.f32.mrb[0].mxu0
        %v2395 = vadd.f32 0.0, %v2394
        %v2396 = vpop.f32.mrb[0].mxu0
        %2397 = vmatprep.mubr.f32.mxu0 0.0
        %2398 = vmatmul.mubr.f32.gmra.mrb[0].mxu0 %v2193
        %v2399 = vpop.f32.mrb[0].mxu0
        %v2400 = vadd.f32 0.0, %v2399
        %v2401 = vpop.f32.mrb[0].mxu0
        %2402 = vmatprep.mubr.f32.mxu0 0.0
        %2403 = vmatmul.mubr.f32.gmra.mrb[0].mxu0 %v2196
        %v2404 = vpop.f32.mrb[0].mxu0
        %v2405 = vadd.f32 0.0, %v2404
        %v2406 = vpop.f32.mrb[0].mxu0
        %2407 = vmatprep.mubr.f32.mxu0 0.0
        %2408 = vmatmul.mubr.f32.gmra.mrb[0].mxu0 %v2199
        %v2409 = vpop.f32.mrb[0].mxu0
        %v2410 = vadd.f32 0.0, %v2409
        %v2411 = vpop.f32.mrb[0].mxu0
        %2412 = vmatprep.mubr.f32.mxu0 0.0
        %2413 = vmatmul.mubr.f32.gmra.mrb[0].mxu0 %v2202
        %v2414 = vpop.f32.mrb[0].mxu0
        %v2415 = vadd.f32 0.0, %v2414
        %v2416 = vpop.f32.mrb[0].mxu0
        %2417 = vmatprep.mubr.f32.mxu0 0.0
        %2418 = vmatmul.mubr.f32.gmra.mrb[0].mxu0 %v2205
        %v2419 = vpop.f32.mrb[0].mxu0
        %v2420 = vadd.f32 0.0, %v2419
        %v2421 = vpop.f32.mrb[0].mxu0
        %2422 = vmatprep.mubr.f32.mxu0 0.0
        %2423 = vmatmul.mubr.f32.gmra.mrb[0].mxu0 %v2208
        %v2424 = vpop.f32.mrb[0].mxu0
        %v2425 = vadd.f32 0.0, %v2424
        %v2426 = vpop.f32.mrb[0].mxu0
        %2427 = vmatprep.mubr.f32.mxu0 0.0
        %2428 = vmatmul.mubr.f32.gmra.mrb[0].mxu0 %v2211
        %v2429 = vpop.f32.mrb[0].mxu0
        %v2430 = vadd.f32 0.0, %v2429
        %v2431 = vpop.f32.mrb[0].mxu0
        %2432 = vmatprep.mubr.f32.mxu0 0.0
        %2433 = vmatmul.mubr.f32.gmra.mrb[0].mxu0 %v2214
        %v2434 = vpop.f32.mrb[0].mxu0
        %v2435 = vadd.f32 0.0, %v2434
        %v2436 = vpop.f32.mrb[0].mxu0
        %2437 = vmatprep.mubr.f32.mxu0 0.0
        %2438 = vmatmul.mubr.f32.gmra.mrb[0].mxu0 %v2217
        %v2439 = vpop.f32.mrb[0].mxu0
        %v2440 = vadd.f32 0.0, %v2439
        %v2441 = vpop.f32.mrb[0].mxu0
        %2442 = vmatprep.mubr.f32.mxu0 0.0
        %2443 = vmatmul.mubr.f32.gmra.mrb[0].mxu0 %v2220
        %v2444 = vpop.f32.mrb[0].mxu0
        %v2445 = vadd.f32 0.0, %v2444
        %v2446 = vpop.f32.mrb[0].mxu0
        %2447 = vmatprep.mubr.f32.mxu0 0.0
        %2448 = vmatmul.mubr.f32.gmra.mrb[0].mxu0 %v2223
        %v2449 = vpop.f32.mrb[0].mxu0
        %v2450 = vadd.f32 0.0, %v2449
        %v2451 = vpop.f32.mrb[0].mxu0
        %2452 = vdwg.mxu0
        %v2453 = vadd.f32 %v2063, %v2295
        %v2454 = vadd.f32 %v2064, %v2300
        %v2455 = vadd.f32 %v2065, %v2305
        %v2456 = vadd.f32 %v2066, %v2310
        %v2457 = vadd.f32 %v2067, %v2315
        %v2458 = vadd.f32 %v2068, %v2320
        %v2459 = vadd.f32 %v2069, %v2325
        %v2460 = vadd.f32 %v2070, %v2330
        %v2461 = vadd.f32 %v2071, %v2335
        %v2462 = vadd.f32 %v2072, %v2340
        %v2463 = vadd.f32 %v2073, %v2345
        %v2464 = vadd.f32 %v2074, %v2350
        %v2465 = vadd.f32 %v2075, %v2355
        %v2466 = vadd.f32 %v2076, %v2360
        %v2467 = vadd.f32 %v2077, %v2365
        %v2468 = vadd.f32 %v2078, %v2370
        %v2469 = vadd.f32 %v2079, %v2375
        %v2470 = vadd.f32 %v2080, %v2380
        %v2471 = vadd.f32 %v2081, %v2385
        %v2472 = vadd.f32 %v2082, %v2390
        %v2473 = vadd.f32 %v2083, %v2395
        %v2474 = vadd.f32 %v2084, %v2400
        %v2475 = vadd.f32 %v2085, %v2405
        %v2476 = vadd.f32 %v2086, %v2410
        %v2477 = vadd.f32 %v2087, %v2415
        %v2478 = vadd.f32 %v2088, %v2420
        %v2479 = vadd.f32 %v2089, %v2425
        %v2480 = vadd.f32 %v2090, %v2430
        %v2481 = vadd.f32 %v2091, %v2435
        %v2482 = vadd.f32 %v2092, %v2440
        %v2483 = vadd.f32 %v2093, %v2445
        %v2484 = vadd.f32 %v2094, %v2450
        %s2485 = sadd.s32 64, %s204
        %s2486 = scalar_lea.vmem %s193, %s2485
        %v2487 = vld [vmem:[%s2486] sm:$0xff]
        %v2488 = vld [vmem:[%s2486 + $0x10] sm:$0xff]
        %v2489 = vld [vmem:[%s2486 + $0x20] sm:$0xff]
        %v2490 = vld [vmem:[%s2486 + $0x30] sm:$0xff]
        %v2491 = vld [vmem:[%s2486 + $0x40] sm:$0xff]
        %v2492 = vld [vmem:[%s2486 + $0x50] sm:$0xff]
        %v2493 = vld [vmem:[%s2486 + $0x60] sm:$0xff]
        %v2494 = vld [vmem:[%s2486 + $0x70] sm:$0xff]
        %v2495 = vld [vmem:[%s2486 + $0xc0] sm:$0xff]
        %v2496 = vld [vmem:[%s2486 + $0xd0] sm:$0xff]
        %v2497 = vld [vmem:[%s2486 + $0xe0] sm:$0xff]
        %v2498 = vld [vmem:[%s2486 + $0xf0] sm:$0xff]
        %v2499 = vld [vmem:[%s2486 + $0x100] sm:$0xff]
        %v2500 = vld [vmem:[%s2486 + $0x110] sm:$0xff]
        %v2501 = vld [vmem:[%s2486 + $0x120] sm:$0xff]
        %v2502 = vld [vmem:[%s2486 + $0x130] sm:$0xff]
        %v2503 = vld [vmem:[%s2486 + $0x180] sm:$0xff]
        %v2504 = vld [vmem:[%s2486 + $0x190] sm:$0xff]
        %v2505 = vld [vmem:[%s2486 + $0x1a0] sm:$0xff]
        %v2506 = vld [vmem:[%s2486 + $0x1b0] sm:$0xff]
        %v2507 = vld [vmem:[%s2486 + $0x1c0] sm:$0xff]
        %v2508 = vld [vmem:[%s2486 + $0x1d0] sm:$0xff]
        %v2509 = vld [vmem:[%s2486 + $0x1e0] sm:$0xff]
        %v2510 = vld [vmem:[%s2486 + $0x1f0] sm:$0xff]
        %v2511 = vld [vmem:[%s2486 + $0x240] sm:$0xff]
        %v2512 = vld [vmem:[%s2486 + $0x250] sm:$0xff]
        %v2513 = vld [vmem:[%s2486 + $0x260] sm:$0xff]
        %v2514 = vld [vmem:[%s2486 + $0x270] sm:$0xff]
        %v2515 = vld [vmem:[%s2486 + $0x280] sm:$0xff]
        %v2516 = vld [vmem:[%s2486 + $0x290] sm:$0xff]
        %v2517 = vld [vmem:[%s2486 + $0x2a0] sm:$0xff]
        %v2518 = vld [vmem:[%s2486 + $0x2b0] sm:$0xff]
        %s2519 = scalar_lea.vmem %s1, 24
        %v2520 = vld [vmem:[%s2519] sm:$0xf]
        %v2522 = vsel %vm273, %v2487, 0
        %v2525 = vsel %vm273, %v2488, 0
        %v2528 = vsel %vm273, %v2489, 0
        %v2531 = vsel %vm273, %v2490, 0
        %v2534 = vsel %vm273, %v2491, 0
        %v2537 = vsel %vm273, %v2492, 0
        %v2540 = vsel %vm273, %v2493, 0
        %v2543 = vsel %vm273, %v2494, 0
        %v2546 = vsel %vm273, %v2495, 0
        %v2549 = vsel %vm273, %v2496, 0
        %v2552 = vsel %vm273, %v2497, 0
        %v2555 = vsel %vm273, %v2498, 0
        %v2558 = vsel %vm273, %v2499, 0
        %v2561 = vsel %vm273, %v2500, 0
        %v2564 = vsel %vm273, %v2501, 0
        %v2567 = vsel %vm273, %v2502, 0
        %v2570 = vsel %vm273, %v2503, 0
        %v2573 = vsel %vm273, %v2504, 0
        %v2576 = vsel %vm273, %v2505, 0
        %v2579 = vsel %vm273, %v2506, 0
        %v2582 = vsel %vm273, %v2507, 0
        %v2585 = vsel %vm273, %v2508, 0
        %v2588 = vsel %vm273, %v2509, 0
        %v2591 = vsel %vm273, %v2510, 0
        %v2594 = vsel %vm273, %v2511, 0
        %v2597 = vsel %vm273, %v2512, 0
        %v2600 = vsel %vm273, %v2513, 0
        %v2603 = vsel %vm273, %v2514, 0
        %v2606 = vsel %vm273, %v2515, 0
        %v2609 = vsel %vm273, %v2516, 0
        %v2612 = vsel %vm273, %v2517, 0
        %v2615 = vsel %vm273, %v2518, 0
        %v2618 = vsel %vm370, %v2520, 0
        %2620 = vmatprep.subr.mxu0 0.0
        %2621 = vmatpush1.msra.mxu0 %v2618
        %2622 = vmatprep.subr.mxu0 0.0
        %2623 = vmatpush1.msra.mxu0 0.0
        %2624 = vmatprep.subr.mxu0 0.0
        %2625 = vmatpush1.msra.mxu0 0.0
        %2626 = vmatprep.subr.mxu0 0.0
        %2627 = vmatpush1.msra.mxu0 0.0
        %2628 = vmatprep.subr.mxu0 0.0
        %2629 = vmatpush1.msra.mxu0 0.0
        %2630 = vmatprep.subr.mxu0 0.0
        %2631 = vmatpush1.msra.mxu0 0.0
        %2632 = vmatprep.subr.mxu0 0.0
        %2633 = vmatpush1.msra.mxu0 0.0
        %2634 = vmatprep.subr.mxu0 0.0
        %2635 = vmatpush1.msra.mxu0 0.0
        %2636 = vmatprep.subr.mxu0 0.0
        %2637 = vmatpush1.msra.mxu0 0.0
        %2638 = vmatprep.subr.mxu0 0.0
        %2639 = vmatpush1.msra.mxu0 0.0
        %2640 = vmatprep.subr.mxu0 0.0
        %2641 = vmatpush1.msra.mxu0 0.0
        %2642 = vmatprep.subr.mxu0 0.0
        %2643 = vmatpush1.msra.mxu0 0.0
        %2644 = vmatprep.subr.mxu0 0.0
        %2645 = vmatpush1.msra.mxu0 0.0
        %2646 = vmatprep.subr.mxu0 0.0
        %2647 = vmatpush1.msra.mxu0 0.0
        %2648 = vmatprep.subr.mxu0 0.0
        %2649 = vmatpush1.msra.mxu0 0.0
        %2650 = vmatprep.subr.mxu0 0.0
        %2651 = vmatpush1.msra.mxu0 0.0
        %2652 = vmatprep.subr.mxu0 0.0
        %2653 = vmatpush1.msra.mxu0 0.0
        %2654 = vmatprep.subr.mxu0 0.0
        %2655 = vmatpush1.msra.mxu0 0.0
        %2656 = vmatprep.subr.mxu0 0.0
        %2657 = vmatpush1.msra.mxu0 0.0
        %2658 = vmatprep.subr.mxu0 0.0
        %2659 = vmatpush1.msra.mxu0 0.0
        %2660 = vmatprep.subr.mxu0 0.0
        %2661 = vmatpush1.msra.mxu0 0.0
        %2662 = vmatprep.subr.mxu0 0.0
        %2663 = vmatpush1.msra.mxu0 0.0
        %2664 = vmatprep.subr.mxu0 0.0
        %2665 = vmatpush1.msra.mxu0 0.0
        %2666 = vmatprep.subr.mxu0 0.0
        %2667 = vmatpush1.msra.mxu0 0.0
        %2668 = vmatprep.subr.mxu0 0.0
        %2669 = vmatpush1.msra.mxu0 0.0
        %2670 = vmatprep.subr.mxu0 0.0
        %2671 = vmatpush1.msra.mxu0 0.0
        %2672 = vmatprep.subr.mxu0 0.0
        %2673 = vmatpush1.msra.mxu0 0.0
        %2674 = vmatprep.subr.mxu0 0.0
        %2675 = vmatpush1.msra.mxu0 0.0
        %2676 = vmatprep.subr.mxu0 0.0
        %2677 = vmatpush1.msra.mxu0 0.0
        %2678 = vmatprep.subr.mxu0 0.0
        %2679 = vmatpush1.msra.mxu0 0.0
        %2680 = vmatprep.subr.mxu0 0.0
        %2681 = vmatpush1.msra.mxu0 0.0
        %2682 = vmatprep.subr.mxu0 0.0
        %2683 = vmatpush1.msra.mxu0 0.0
        %2684 = vmatprep.mubr.f32.mxu0 0.0
        %2685 = vmatmul.mubr.f32.gmra.mrb[0].mxu0 %v2522
        %v2686 = vpop.f32.mrb[0].mxu0
        %v2687 = vadd.f32 0.0, %v2686
        %v2688 = vpop.f32.mrb[0].mxu0
        %2689 = vmatprep.mubr.f32.mxu0 0.0
        %2690 = vmatmul.mubr.f32.gmra.mrb[0].mxu0 %v2525
        %v2691 = vpop.f32.mrb[0].mxu0
        %v2692 = vadd.f32 0.0, %v2691
        %v2693 = vpop.f32.mrb[0].mxu0
        %2694 = vmatprep.mubr.f32.mxu0 0.0
        %2695 = vmatmul.mubr.f32.gmra.mrb[0].mxu0 %v2528
        %v2696 = vpop.f32.mrb[0].mxu0
        %v2697 = vadd.f32 0.0, %v2696
        %v2698 = vpop.f32.mrb[0].mxu0
        %2699 = vmatprep.mubr.f32.mxu0 0.0
        %2700 = vmatmul.mubr.f32.gmra.mrb[0].mxu0 %v2531
        %v2701 = vpop.f32.mrb[0].mxu0
        %v2702 = vadd.f32 0.0, %v2701
        %v2703 = vpop.f32.mrb[0].mxu0
        %2704 = vmatprep.mubr.f32.mxu0 0.0
        %2705 = vmatmul.mubr.f32.gmra.mrb[0].mxu0 %v2534
        %v2706 = vpop.f32.mrb[0].mxu0
        %v2707 = vadd.f32 0.0, %v2706
        %v2708 = vpop.f32.mrb[0].mxu0
        %2709 = vmatprep.mubr.f32.mxu0 0.0
        %2710 = vmatmul.mubr.f32.gmra.mrb[0].mxu0 %v2537
        %v2711 = vpop.f32.mrb[0].mxu0
        %v2712 = vadd.f32 0.0, %v2711
        %v2713 = vpop.f32.mrb[0].mxu0
        %2714 = vmatprep.mubr.f32.mxu0 0.0
        %2715 = vmatmul.mubr.f32.gmra.mrb[0].mxu0 %v2540
        %v2716 = vpop.f32.mrb[0].mxu0
        %v2717 = vadd.f32 0.0, %v2716
        %v2718 = vpop.f32.mrb[0].mxu0
        %2719 = vmatprep.mubr.f32.mxu0 0.0
        %2720 = vmatmul.mubr.f32.gmra.mrb[0].mxu0 %v2543
        %v2721 = vpop.f32.mrb[0].mxu0
        %v2722 = vadd.f32 0.0, %v2721
        %v2723 = vpop.f32.mrb[0].mxu0
        %2724 = vmatprep.mubr.f32.mxu0 0.0
        %2725 = vmatmul.mubr.f32.gmra.mrb[0].mxu0 %v2546
        %v2726 = vpop.f32.mrb[0].mxu0
        %v2727 = vadd.f32 0.0, %v2726
        %v2728 = vpop.f32.mrb[0].mxu0
        %2729 = vmatprep.mubr.f32.mxu0 0.0
        %2730 = vmatmul.mubr.f32.gmra.mrb[0].mxu0 %v2549
        %v2731 = vpop.f32.mrb[0].mxu0
        %v2732 = vadd.f32 0.0, %v2731
        %v2733 = vpop.f32.mrb[0].mxu0
        %2734 = vmatprep.mubr.f32.mxu0 0.0
        %2735 = vmatmul.mubr.f32.gmra.mrb[0].mxu0 %v2552
        %v2736 = vpop.f32.mrb[0].mxu0
        %v2737 = vadd.f32 0.0, %v2736
        %v2738 = vpop.f32.mrb[0].mxu0
        %2739 = vmatprep.mubr.f32.mxu0 0.0
        %2740 = vmatmul.mubr.f32.gmra.mrb[0].mxu0 %v2555
        %v2741 = vpop.f32.mrb[0].mxu0
        %v2742 = vadd.f32 0.0, %v2741
        %v2743 = vpop.f32.mrb[0].mxu0
        %2744 = vmatprep.mubr.f32.mxu0 0.0
        %2745 = vmatmul.mubr.f32.gmra.mrb[0].mxu0 %v2558
        %v2746 = vpop.f32.mrb[0].mxu0
        %v2747 = vadd.f32 0.0, %v2746
        %v2748 = vpop.f32.mrb[0].mxu0
        %2749 = vmatprep.mubr.f32.mxu0 0.0
        %2750 = vmatmul.mubr.f32.gmra.mrb[0].mxu0 %v2561
        %v2751 = vpop.f32.mrb[0].mxu0
        %v2752 = vadd.f32 0.0, %v2751
        %v2753 = vpop.f32.mrb[0].mxu0
        %2754 = vmatprep.mubr.f32.mxu0 0.0
        %2755 = vmatmul.mubr.f32.gmra.mrb[0].mxu0 %v2564
        %v2756 = vpop.f32.mrb[0].mxu0
        %v2757 = vadd.f32 0.0, %v2756
        %v2758 = vpop.f32.mrb[0].mxu0
        %2759 = vmatprep.mubr.f32.mxu0 0.0
        %2760 = vmatmul.mubr.f32.gmra.mrb[0].mxu0 %v2567
        %v2761 = vpop.f32.mrb[0].mxu0
        %v2762 = vadd.f32 0.0, %v2761
        %v2763 = vpop.f32.mrb[0].mxu0
        %2764 = vmatprep.mubr.f32.mxu0 0.0
        %2765 = vmatmul.mubr.f32.gmra.mrb[0].mxu0 %v2570
        %v2766 = vpop.f32.mrb[0].mxu0
        %v2767 = vadd.f32 0.0, %v2766
        %v2768 = vpop.f32.mrb[0].mxu0
        %2769 = vmatprep.mubr.f32.mxu0 0.0
        %2770 = vmatmul.mubr.f32.gmra.mrb[0].mxu0 %v2573
        %v2771 = vpop.f32.mrb[0].mxu0
        %v2772 = vadd.f32 0.0, %v2771
        %v2773 = vpop.f32.mrb[0].mxu0
        %2774 = vmatprep.mubr.f32.mxu0 0.0
        %2775 = vmatmul.mubr.f32.gmra.mrb[0].mxu0 %v2576
        %v2776 = vpop.f32.mrb[0].mxu0
        %v2777 = vadd.f32 0.0, %v2776
        %v2778 = vpop.f32.mrb[0].mxu0
        %2779 = vmatprep.mubr.f32.mxu0 0.0
        %2780 = vmatmul.mubr.f32.gmra.mrb[0].mxu0 %v2579
        %v2781 = vpop.f32.mrb[0].mxu0
        %v2782 = vadd.f32 0.0, %v2781
        %v2783 = vpop.f32.mrb[0].mxu0
        %2784 = vmatprep.mubr.f32.mxu0 0.0
        %2785 = vmatmul.mubr.f32.gmra.mrb[0].mxu0 %v2582
        %v2786 = vpop.f32.mrb[0].mxu0
        %v2787 = vadd.f32 0.0, %v2786
        %v2788 = vpop.f32.mrb[0].mxu0
        %2789 = vmatprep.mubr.f32.mxu0 0.0
        %2790 = vmatmul.mubr.f32.gmra.mrb[0].mxu0 %v2585
        %v2791 = vpop.f32.mrb[0].mxu0
        %v2792 = vadd.f32 0.0, %v2791
        %v2793 = vpop.f32.mrb[0].mxu0
        %2794 = vmatprep.mubr.f32.mxu0 0.0
        %2795 = vmatmul.mubr.f32.gmra.mrb[0].mxu0 %v2588
        %v2796 = vpop.f32.mrb[0].mxu0
        %v2797 = vadd.f32 0.0, %v2796
        %v2798 = vpop.f32.mrb[0].mxu0
        %2799 = vmatprep.mubr.f32.mxu0 0.0
        %2800 = vmatmul.mubr.f32.gmra.mrb[0].mxu0 %v2591
        %v2801 = vpop.f32.mrb[0].mxu0
        %v2802 = vadd.f32 0.0, %v2801
        %v2803 = vpop.f32.mrb[0].mxu0
        %2804 = vmatprep.mubr.f32.mxu0 0.0
        %2805 = vmatmul.mubr.f32.gmra.mrb[0].mxu0 %v2594
        %v2806 = vpop.f32.mrb[0].mxu0
        %v2807 = vadd.f32 0.0, %v2806
        %v2808 = vpop.f32.mrb[0].mxu0
        %2809 = vmatprep.mubr.f32.mxu0 0.0
        %2810 = vmatmul.mubr.f32.gmra.mrb[0].mxu0 %v2597
        %v2811 = vpop.f32.mrb[0].mxu0
        %v2812 = vadd.f32 0.0, %v2811
        %v2813 = vpop.f32.mrb[0].mxu0
        %2814 = vmatprep.mubr.f32.mxu0 0.0
        %2815 = vmatmul.mubr.f32.gmra.mrb[0].mxu0 %v2600
        %v2816 = vpop.f32.mrb[0].mxu0
        %v2817 = vadd.f32 0.0, %v2816
        %v2818 = vpop.f32.mrb[0].mxu0
        %2819 = vmatprep.mubr.f32.mxu0 0.0
        %2820 = vmatmul.mubr.f32.gmra.mrb[0].mxu0 %v2603
        %v2821 = vpop.f32.mrb[0].mxu0
        %v2822 = vadd.f32 0.0, %v2821
        %v2823 = vpop.f32.mrb[0].mxu0
        %2824 = vmatprep.mubr.f32.mxu0 0.0
        %2825 = vmatmul.mubr.f32.gmra.mrb[0].mxu0 %v2606
        %v2826 = vpop.f32.mrb[0].mxu0
        %v2827 = vadd.f32 0.0, %v2826
        %v2828 = vpop.f32.mrb[0].mxu0
        %2829 = vmatprep.mubr.f32.mxu0 0.0
        %2830 = vmatmul.mubr.f32.gmra.mrb[0].mxu0 %v2609
        %v2831 = vpop.f32.mrb[0].mxu0
        %v2832 = vadd.f32 0.0, %v2831
        %v2833 = vpop.f32.mrb[0].mxu0
        %2834 = vmatprep.mubr.f32.mxu0 0.0
        %2835 = vmatmul.mubr.f32.gmra.mrb[0].mxu0 %v2612
        %v2836 = vpop.f32.mrb[0].mxu0
        %v2837 = vadd.f32 0.0, %v2836
        %v2838 = vpop.f32.mrb[0].mxu0
        %2839 = vmatprep.mubr.f32.mxu0 0.0
        %2840 = vmatmul.mubr.f32.gmra.mrb[0].mxu0 %v2615
        %v2841 = vpop.f32.mrb[0].mxu0
        %v2842 = vadd.f32 0.0, %v2841
        %v2843 = vpop.f32.mrb[0].mxu0
        %2844 = vdwg.mxu0
        %v2845 = vadd.f32 %v2453, %v2687
        %v2846 = vadd.f32 %v2454, %v2692
        %v2847 = vadd.f32 %v2455, %v2697
        %v2848 = vadd.f32 %v2456, %v2702
        %v2849 = vadd.f32 %v2457, %v2707
        %v2850 = vadd.f32 %v2458, %v2712
        %v2851 = vadd.f32 %v2459, %v2717
        %v2852 = vadd.f32 %v2460, %v2722
        %v2853 = vadd.f32 %v2461, %v2727
        %v2854 = vadd.f32 %v2462, %v2732
        %v2855 = vadd.f32 %v2463, %v2737
        %v2856 = vadd.f32 %v2464, %v2742
        %v2857 = vadd.f32 %v2465, %v2747
        %v2858 = vadd.f32 %v2466, %v2752
        %v2859 = vadd.f32 %v2467, %v2757
        %v2860 = vadd.f32 %v2468, %v2762
        %v2861 = vadd.f32 %v2469, %v2767
        %v2862 = vadd.f32 %v2470, %v2772
        %v2863 = vadd.f32 %v2471, %v2777
        %v2864 = vadd.f32 %v2472, %v2782
        %v2865 = vadd.f32 %v2473, %v2787
        %v2866 = vadd.f32 %v2474, %v2792
        %v2867 = vadd.f32 %v2475, %v2797
        %v2868 = vadd.f32 %v2476, %v2802
        %v2869 = vadd.f32 %v2477, %v2807
        %v2870 = vadd.f32 %v2478, %v2812
        %v2871 = vadd.f32 %v2479, %v2817
        %v2872 = vadd.f32 %v2480, %v2822
        %v2873 = vadd.f32 %v2481, %v2827
        %v2874 = vadd.f32 %v2482, %v2832
        %v2875 = vadd.f32 %v2483, %v2837
        %v2876 = vadd.f32 %v2484, %v2842
        %v2877 = vld [vmem:[%s2486 + $0x2] sm:$0xff]
        %v2878 = vld [vmem:[%s2486 + $0x12] sm:$0xff]
        %v2879 = vld [vmem:[%s2486 + $0x22] sm:$0xff]
        %v2880 = vld [vmem:[%s2486 + $0x32] sm:$0xff]
        %v2881 = vld [vmem:[%s2486 + $0x42] sm:$0xff]
        %v2882 = vld [vmem:[%s2486 + $0x52] sm:$0xff]
        %v2883 = vld [vmem:[%s2486 + $0x62] sm:$0xff]
        %v2884 = vld [vmem:[%s2486 + $0x72] sm:$0xff]
        %v2885 = vld [vmem:[%s2486 + $0xc2] sm:$0xff]
        %v2886 = vld [vmem:[%s2486 + $0xd2] sm:$0xff]
        %v2887 = vld [vmem:[%s2486 + $0xe2] sm:$0xff]
        %v2888 = vld [vmem:[%s2486 + $0xf2] sm:$0xff]
        %v2889 = vld [vmem:[%s2486 + $0x102] sm:$0xff]
        %v2890 = vld [vmem:[%s2486 + $0x112] sm:$0xff]
        %v2891 = vld [vmem:[%s2486 + $0x122] sm:$0xff]
        %v2892 = vld [vmem:[%s2486 + $0x132] sm:$0xff]
        %v2893 = vld [vmem:[%s2486 + $0x182] sm:$0xff]
        %v2894 = vld [vmem:[%s2486 + $0x192] sm:$0xff]
        %v2895 = vld [vmem:[%s2486 + $0x1a2] sm:$0xff]
        %v2896 = vld [vmem:[%s2486 + $0x1b2] sm:$0xff]
        %v2897 = vld [vmem:[%s2486 + $0x1c2] sm:$0xff]
        %v2898 = vld [vmem:[%s2486 + $0x1d2] sm:$0xff]
        %v2899 = vld [vmem:[%s2486 + $0x1e2] sm:$0xff]
        %v2900 = vld [vmem:[%s2486 + $0x1f2] sm:$0xff]
        %v2901 = vld [vmem:[%s2486 + $0x242] sm:$0xff]
        %v2902 = vld [vmem:[%s2486 + $0x252] sm:$0xff]
        %v2903 = vld [vmem:[%s2486 + $0x262] sm:$0xff]
        %v2904 = vld [vmem:[%s2486 + $0x272] sm:$0xff]
        %v2905 = vld [vmem:[%s2486 + $0x282] sm:$0xff]
        %v2906 = vld [vmem:[%s2486 + $0x292] sm:$0xff]
        %v2907 = vld [vmem:[%s2486 + $0x2a2] sm:$0xff]
        %v2908 = vld [vmem:[%s2486 + $0x2b2] sm:$0xff]
        %s2909 = scalar_lea.vmem %s1, 28
        %v2910 = vld [vmem:[%s2909] sm:$0xf]
        %v2912 = vsel %vm273, %v2877, 0
        %v2915 = vsel %vm273, %v2878, 0
        %v2918 = vsel %vm273, %v2879, 0
        %v2921 = vsel %vm273, %v2880, 0
        %v2924 = vsel %vm273, %v2881, 0
        %v2927 = vsel %vm273, %v2882, 0
        %v2930 = vsel %vm273, %v2883, 0
        %v2933 = vsel %vm273, %v2884, 0
        %v2936 = vsel %vm273, %v2885, 0
        %v2939 = vsel %vm273, %v2886, 0
        %v2942 = vsel %vm273, %v2887, 0
        %v2945 = vsel %vm273, %v2888, 0
        %v2948 = vsel %vm273, %v2889, 0
        %v2951 = vsel %vm273, %v2890, 0
        %v2954 = vsel %vm273, %v2891, 0
        %v2957 = vsel %vm273, %v2892, 0
        %v2960 = vsel %vm273, %v2893, 0
        %v2963 = vsel %vm273, %v2894, 0
        %v2966 = vsel %vm273, %v2895, 0
        %v2969 = vsel %vm273, %v2896, 0
        %v2972 = vsel %vm273, %v2897, 0
        %v2975 = vsel %vm273, %v2898, 0
        %v2978 = vsel %vm273, %v2899, 0
        %v2981 = vsel %vm273, %v2900, 0
        %v2984 = vsel %vm273, %v2901, 0
        %v2987 = vsel %vm273, %v2902, 0
        %v2990 = vsel %vm273, %v2903, 0
        %v2993 = vsel %vm273, %v2904, 0
        %v2996 = vsel %vm273, %v2905, 0
        %v2999 = vsel %vm273, %v2906, 0
        %v3002 = vsel %vm273, %v2907, 0
        %v3005 = vsel %vm273, %v2908, 0
        %v3008 = vsel %vm370, %v2910, 0
        %3010 = vmatprep.subr.mxu0 0.0
        %3011 = vmatpush1.msra.mxu0 %v3008
        %3012 = vmatprep.subr.mxu0 0.0
        %3013 = vmatpush1.msra.mxu0 0.0
        %3014 = vmatprep.subr.mxu0 0.0
        %3015 = vmatpush1.msra.mxu0 0.0
        %3016 = vmatprep.subr.mxu0 0.0
        %3017 = vmatpush1.msra.mxu0 0.0
        %3018 = vmatprep.subr.mxu0 0.0
        %3019 = vmatpush1.msra.mxu0 0.0
        %3020 = vmatprep.subr.mxu0 0.0
        %3021 = vmatpush1.msra.mxu0 0.0
        %3022 = vmatprep.subr.mxu0 0.0
        %3023 = vmatpush1.msra.mxu0 0.0
        %3024 = vmatprep.subr.mxu0 0.0
        %3025 = vmatpush1.msra.mxu0 0.0
        %3026 = vmatprep.subr.mxu0 0.0
        %3027 = vmatpush1.msra.mxu0 0.0
        %3028 = vmatprep.subr.mxu0 0.0
        %3029 = vmatpush1.msra.mxu0 0.0
        %3030 = vmatprep.subr.mxu0 0.0
        %3031 = vmatpush1.msra.mxu0 0.0
        %3032 = vmatprep.subr.mxu0 0.0
        %3033 = vmatpush1.msra.mxu0 0.0
        %3034 = vmatprep.subr.mxu0 0.0
        %3035 = vmatpush1.msra.mxu0 0.0
        %3036 = vmatprep.subr.mxu0 0.0
        %3037 = vmatpush1.msra.mxu0 0.0
        %3038 = vmatprep.subr.mxu0 0.0
        %3039 = vmatpush1.msra.mxu0 0.0
        %3040 = vmatprep.subr.mxu0 0.0
        %3041 = vmatpush1.msra.mxu0 0.0
        %3042 = vmatprep.subr.mxu0 0.0
        %3043 = vmatpush1.msra.mxu0 0.0
        %3044 = vmatprep.subr.mxu0 0.0
        %3045 = vmatpush1.msra.mxu0 0.0
        %3046 = vmatprep.subr.mxu0 0.0
        %3047 = vmatpush1.msra.mxu0 0.0
        %3048 = vmatprep.subr.mxu0 0.0
        %3049 = vmatpush1.msra.mxu0 0.0
        %3050 = vmatprep.subr.mxu0 0.0
        %3051 = vmatpush1.msra.mxu0 0.0
        %3052 = vmatprep.subr.mxu0 0.0
        %3053 = vmatpush1.msra.mxu0 0.0
        %3054 = vmatprep.subr.mxu0 0.0
        %3055 = vmatpush1.msra.mxu0 0.0
        %3056 = vmatprep.subr.mxu0 0.0
        %3057 = vmatpush1.msra.mxu0 0.0
        %3058 = vmatprep.subr.mxu0 0.0
        %3059 = vmatpush1.msra.mxu0 0.0
        %3060 = vmatprep.subr.mxu0 0.0
        %3061 = vmatpush1.msra.mxu0 0.0
        %3062 = vmatprep.subr.mxu0 0.0
        %3063 = vmatpush1.msra.mxu0 0.0
        %3064 = vmatprep.subr.mxu0 0.0
        %3065 = vmatpush1.msra.mxu0 0.0
        %3066 = vmatprep.subr.mxu0 0.0
        %3067 = vmatpush1.msra.mxu0 0.0
        %3068 = vmatprep.subr.mxu0 0.0
        %3069 = vmatpush1.msra.mxu0 0.0
        %3070 = vmatprep.subr.mxu0 0.0
        %3071 = vmatpush1.msra.mxu0 0.0
        %3072 = vmatprep.subr.mxu0 0.0
        %3073 = vmatpush1.msra.mxu0 0.0
        %3074 = vmatprep.mubr.f32.mxu0 0.0
        %3075 = vmatmul.mubr.f32.gmra.mrb[0].mxu0 %v2912
        %v3076 = vpop.f32.mrb[0].mxu0
        %v3077 = vadd.f32 0.0, %v3076
        %v3078 = vpop.f32.mrb[0].mxu0
        %3079 = vmatprep.mubr.f32.mxu0 0.0
        %3080 = vmatmul.mubr.f32.gmra.mrb[0].mxu0 %v2915
        %v3081 = vpop.f32.mrb[0].mxu0
        %v3082 = vadd.f32 0.0, %v3081
        %v3083 = vpop.f32.mrb[0].mxu0
        %3084 = vmatprep.mubr.f32.mxu0 0.0
        %3085 = vmatmul.mubr.f32.gmra.mrb[0].mxu0 %v2918
        %v3086 = vpop.f32.mrb[0].mxu0
        %v3087 = vadd.f32 0.0, %v3086
        %v3088 = vpop.f32.mrb[0].mxu0
        %3089 = vmatprep.mubr.f32.mxu0 0.0
        %3090 = vmatmul.mubr.f32.gmra.mrb[0].mxu0 %v2921
        %v3091 = vpop.f32.mrb[0].mxu0
        %v3092 = vadd.f32 0.0, %v3091
        %v3093 = vpop.f32.mrb[0].mxu0
        %3094 = vmatprep.mubr.f32.mxu0 0.0
        %3095 = vmatmul.mubr.f32.gmra.mrb[0].mxu0 %v2924
        %v3096 = vpop.f32.mrb[0].mxu0
        %v3097 = vadd.f32 0.0, %v3096
        %v3098 = vpop.f32.mrb[0].mxu0
        %3099 = vmatprep.mubr.f32.mxu0 0.0
        %3100 = vmatmul.mubr.f32.gmra.mrb[0].mxu0 %v2927
        %v3101 = vpop.f32.mrb[0].mxu0
        %v3102 = vadd.f32 0.0, %v3101
        %v3103 = vpop.f32.mrb[0].mxu0
        %3104 = vmatprep.mubr.f32.mxu0 0.0
        %3105 = vmatmul.mubr.f32.gmra.mrb[0].mxu0 %v2930
        %v3106 = vpop.f32.mrb[0].mxu0
        %v3107 = vadd.f32 0.0, %v3106
        %v3108 = vpop.f32.mrb[0].mxu0
        %3109 = vmatprep.mubr.f32.mxu0 0.0
        %3110 = vmatmul.mubr.f32.gmra.mrb[0].mxu0 %v2933
        %v3111 = vpop.f32.mrb[0].mxu0
        %v3112 = vadd.f32 0.0, %v3111
        %v3113 = vpop.f32.mrb[0].mxu0
        %3114 = vmatprep.mubr.f32.mxu0 0.0
        %3115 = vmatmul.mubr.f32.gmra.mrb[0].mxu0 %v2936
        %v3116 = vpop.f32.mrb[0].mxu0
        %v3117 = vadd.f32 0.0, %v3116
        %v3118 = vpop.f32.mrb[0].mxu0
        %3119 = vmatprep.mubr.f32.mxu0 0.0
        %3120 = vmatmul.mubr.f32.gmra.mrb[0].mxu0 %v2939
        %v3121 = vpop.f32.mrb[0].mxu0
        %v3122 = vadd.f32 0.0, %v3121
        %v3123 = vpop.f32.mrb[0].mxu0
        %3124 = vmatprep.mubr.f32.mxu0 0.0
        %3125 = vmatmul.mubr.f32.gmra.mrb[0].mxu0 %v2942
        %v3126 = vpop.f32.mrb[0].mxu0
        %v3127 = vadd.f32 0.0, %v3126
        %v3128 = vpop.f32.mrb[0].mxu0
        %3129 = vmatprep.mubr.f32.mxu0 0.0
        %3130 = vmatmul.mubr.f32.gmra.mrb[0].mxu0 %v2945
        %v3131 = vpop.f32.mrb[0].mxu0
        %v3132 = vadd.f32 0.0, %v3131
        %v3133 = vpop.f32.mrb[0].mxu0
        %3134 = vmatprep.mubr.f32.mxu0 0.0
        %3135 = vmatmul.mubr.f32.gmra.mrb[0].mxu0 %v2948
        %v3136 = vpop.f32.mrb[0].mxu0
        %v3137 = vadd.f32 0.0, %v3136
        %v3138 = vpop.f32.mrb[0].mxu0
        %3139 = vmatprep.mubr.f32.mxu0 0.0
        %3140 = vmatmul.mubr.f32.gmra.mrb[0].mxu0 %v2951
        %v3141 = vpop.f32.mrb[0].mxu0
        %v3142 = vadd.f32 0.0, %v3141
        %v3143 = vpop.f32.mrb[0].mxu0
        %3144 = vmatprep.mubr.f32.mxu0 0.0
        %3145 = vmatmul.mubr.f32.gmra.mrb[0].mxu0 %v2954
        %v3146 = vpop.f32.mrb[0].mxu0
        %v3147 = vadd.f32 0.0, %v3146
        %v3148 = vpop.f32.mrb[0].mxu0
        %3149 = vmatprep.mubr.f32.mxu0 0.0
        %3150 = vmatmul.mubr.f32.gmra.mrb[0].mxu0 %v2957
        %v3151 = vpop.f32.mrb[0].mxu0
        %v3152 = vadd.f32 0.0, %v3151
        %v3153 = vpop.f32.mrb[0].mxu0
        %3154 = vmatprep.mubr.f32.mxu0 0.0
        %3155 = vmatmul.mubr.f32.gmra.mrb[0].mxu0 %v2960
        %v3156 = vpop.f32.mrb[0].mxu0
        %v3157 = vadd.f32 0.0, %v3156
        %v3158 = vpop.f32.mrb[0].mxu0
        %3159 = vmatprep.mubr.f32.mxu0 0.0
        %3160 = vmatmul.mubr.f32.gmra.mrb[0].mxu0 %v2963
        %v3161 = vpop.f32.mrb[0].mxu0
        %v3162 = vadd.f32 0.0, %v3161
        %v3163 = vpop.f32.mrb[0].mxu0
        %3164 = vmatprep.mubr.f32.mxu0 0.0
        %3165 = vmatmul.mubr.f32.gmra.mrb[0].mxu0 %v2966
        %v3166 = vpop.f32.mrb[0].mxu0
        %v3167 = vadd.f32 0.0, %v3166
        %v3168 = vpop.f32.mrb[0].mxu0
        %3169 = vmatprep.mubr.f32.mxu0 0.0
        %3170 = vmatmul.mubr.f32.gmra.mrb[0].mxu0 %v2969
        %v3171 = vpop.f32.mrb[0].mxu0
        %v3172 = vadd.f32 0.0, %v3171
        %v3173 = vpop.f32.mrb[0].mxu0
        %3174 = vmatprep.mubr.f32.mxu0 0.0
        %3175 = vmatmul.mubr.f32.gmra.mrb[0].mxu0 %v2972
        %v3176 = vpop.f32.mrb[0].mxu0
        %v3177 = vadd.f32 0.0, %v3176
        %v3178 = vpop.f32.mrb[0].mxu0
        %3179 = vmatprep.mubr.f32.mxu0 0.0
        %3180 = vmatmul.mubr.f32.gmra.mrb[0].mxu0 %v2975
        %v3181 = vpop.f32.mrb[0].mxu0
        %v3182 = vadd.f32 0.0, %v3181
        %v3183 = vpop.f32.mrb[0].mxu0
        %3184 = vmatprep.mubr.f32.mxu0 0.0
        %3185 = vmatmul.mubr.f32.gmra.mrb[0].mxu0 %v2978
        %v3186 = vpop.f32.mrb[0].mxu0
        %v3187 = vadd.f32 0.0, %v3186
        %v3188 = vpop.f32.mrb[0].mxu0
        %3189 = vmatprep.mubr.f32.mxu0 0.0
        %3190 = vmatmul.mubr.f32.gmra.mrb[0].mxu0 %v2981
        %v3191 = vpop.f32.mrb[0].mxu0
        %v3192 = vadd.f32 0.0, %v3191
        %v3193 = vpop.f32.mrb[0].mxu0
        %3194 = vmatprep.mubr.f32.mxu0 0.0
        %3195 = vmatmul.mubr.f32.gmra.mrb[0].mxu0 %v2984
        %v3196 = vpop.f32.mrb[0].mxu0
        %v3197 = vadd.f32 0.0, %v3196
        %v3198 = vpop.f32.mrb[0].mxu0
        %3199 = vmatprep.mubr.f32.mxu0 0.0
        %3200 = vmatmul.mubr.f32.gmra.mrb[0].mxu0 %v2987
        %v3201 = vpop.f32.mrb[0].mxu0
        %v3202 = vadd.f32 0.0, %v3201
        %v3203 = vpop.f32.mrb[0].mxu0
        %3204 = vmatprep.mubr.f32.mxu0 0.0
        %3205 = vmatmul.mubr.f32.gmra.mrb[0].mxu0 %v2990
        %v3206 = vpop.f32.mrb[0].mxu0
        %v3207 = vadd.f32 0.0, %v3206
        %v3208 = vpop.f32.mrb[0].mxu0
        %3209 = vmatprep.mubr.f32.mxu0 0.0
        %3210 = vmatmul.mubr.f32.gmra.mrb[0].mxu0 %v2993
        %v3211 = vpop.f32.mrb[0].mxu0
        %v3212 = vadd.f32 0.0, %v3211
        %v3213 = vpop.f32.mrb[0].mxu0
        %3214 = vmatprep.mubr.f32.mxu0 0.0
        %3215 = vmatmul.mubr.f32.gmra.mrb[0].mxu0 %v2996
        %v3216 = vpop.f32.mrb[0].mxu0
        %v3217 = vadd.f32 0.0, %v3216
        %v3218 = vpop.f32.mrb[0].mxu0
        %3219 = vmatprep.mubr.f32.mxu0 0.0
        %3220 = vmatmul.mubr.f32.gmra.mrb[0].mxu0 %v2999
        %v3221 = vpop.f32.mrb[0].mxu0
        %v3222 = vadd.f32 0.0, %v3221
        %v3223 = vpop.f32.mrb[0].mxu0
        %3224 = vmatprep.mubr.f32.mxu0 0.0
        %3225 = vmatmul.mubr.f32.gmra.mrb[0].mxu0 %v3002
        %v3226 = vpop.f32.mrb[0].mxu0
        %v3227 = vadd.f32 0.0, %v3226
        %v3228 = vpop.f32.mrb[0].mxu0
        %3229 = vmatprep.mubr.f32.mxu0 0.0
        %3230 = vmatmul.mubr.f32.gmra.mrb[0].mxu0 %v3005
        %v3231 = vpop.f32.mrb[0].mxu0
        %v3232 = vadd.f32 0.0, %v3231
        %v3233 = vpop.f32.mrb[0].mxu0
        %3234 = vdwg.mxu0
        %v3235 = vadd.f32 %v2845, %v3077
        %v3236 = vadd.f32 %v2846, %v3082
        %v3237 = vadd.f32 %v2847, %v3087
        %v3238 = vadd.f32 %v2848, %v3092
        %v3239 = vadd.f32 %v2849, %v3097
        %v3240 = vadd.f32 %v2850, %v3102
        %v3241 = vadd.f32 %v2851, %v3107
        %v3242 = vadd.f32 %v2852, %v3112
        %v3243 = vadd.f32 %v2853, %v3117
        %v3244 = vadd.f32 %v2854, %v3122
        %v3245 = vadd.f32 %v2855, %v3127
        %v3246 = vadd.f32 %v2856, %v3132
        %v3247 = vadd.f32 %v2857, %v3137
        %v3248 = vadd.f32 %v2858, %v3142
        %v3249 = vadd.f32 %v2859, %v3147
        %v3250 = vadd.f32 %v2860, %v3152
        %v3251 = vadd.f32 %v2861, %v3157
        %v3252 = vadd.f32 %v2862, %v3162
        %v3253 = vadd.f32 %v2863, %v3167
        %v3254 = vadd.f32 %v2864, %v3172
        %v3255 = vadd.f32 %v2865, %v3177
        %v3256 = vadd.f32 %v2866, %v3182
        %v3257 = vadd.f32 %v2867, %v3187
        %v3258 = vadd.f32 %v2868, %v3192
        %v3259 = vadd.f32 %v2869, %v3197
        %v3260 = vadd.f32 %v2870, %v3202
        %v3261 = vadd.f32 %v2871, %v3207
        %v3262 = vadd.f32 %v2872, %v3212
        %v3263 = vadd.f32 %v2873, %v3217
        %v3264 = vadd.f32 %v2874, %v3222
        %v3265 = vadd.f32 %v2875, %v3227
        %v3266 = vadd.f32 %v2876, %v3232
        %v3267 = vld [vmem:[%s2486 + $0x4] sm:$0xff]
        %v3268 = vld [vmem:[%s2486 + $0x14] sm:$0xff]
        %v3269 = vld [vmem:[%s2486 + $0x24] sm:$0xff]
        %v3270 = vld [vmem:[%s2486 + $0x34] sm:$0xff]
        %v3271 = vld [vmem:[%s2486 + $0x44] sm:$0xff]
        %v3272 = vld [vmem:[%s2486 + $0x54] sm:$0xff]
        %v3273 = vld [vmem:[%s2486 + $0x64] sm:$0xff]
        %v3274 = vld [vmem:[%s2486 + $0x74] sm:$0xff]
        %v3275 = vld [vmem:[%s2486 + $0xc4] sm:$0xff]
        %v3276 = vld [vmem:[%s2486 + $0xd4] sm:$0xff]
        %v3277 = vld [vmem:[%s2486 + $0xe4] sm:$0xff]
        %v3278 = vld [vmem:[%s2486 + $0xf4] sm:$0xff]
        %v3279 = vld [vmem:[%s2486 + $0x104] sm:$0xff]
        %v3280 = vld [vmem:[%s2486 + $0x114] sm:$0xff]
        %v3281 = vld [vmem:[%s2486 + $0x124] sm:$0xff]
        %v3282 = vld [vmem:[%s2486 + $0x134] sm:$0xff]
        %v3283 = vld [vmem:[%s2486 + $0x184] sm:$0xff]
        %v3284 = vld [vmem:[%s2486 + $0x194] sm:$0xff]
        %v3285 = vld [vmem:[%s2486 + $0x1a4] sm:$0xff]
        %v3286 = vld [vmem:[%s2486 + $0x1b4] sm:$0xff]
        %v3287 = vld [vmem:[%s2486 + $0x1c4] sm:$0xff]
        %v3288 = vld [vmem:[%s2486 + $0x1d4] sm:$0xff]
        %v3289 = vld [vmem:[%s2486 + $0x1e4] sm:$0xff]
        %v3290 = vld [vmem:[%s2486 + $0x1f4] sm:$0xff]
        %v3291 = vld [vmem:[%s2486 + $0x244] sm:$0xff]
        %v3292 = vld [vmem:[%s2486 + $0x254] sm:$0xff]
        %v3293 = vld [vmem:[%s2486 + $0x264] sm:$0xff]
        %v3294 = vld [vmem:[%s2486 + $0x274] sm:$0xff]
        %v3295 = vld [vmem:[%s2486 + $0x284] sm:$0xff]
        %v3296 = vld [vmem:[%s2486 + $0x294] sm:$0xff]
        %v3297 = vld [vmem:[%s2486 + $0x2a4] sm:$0xff]
        %v3298 = vld [vmem:[%s2486 + $0x2b4] sm:$0xff]
        %s3299 = scalar_lea.vmem %s1, 32
        %v3300 = vld [vmem:[%s3299] sm:$0xf]
        %v3302 = vsel %vm273, %v3267, 0
        %v3305 = vsel %vm273, %v3268, 0
        %v3308 = vsel %vm273, %v3269, 0
        %v3311 = vsel %vm273, %v3270, 0
        %v3314 = vsel %vm273, %v3271, 0
        %v3317 = vsel %vm273, %v3272, 0
        %v3320 = vsel %vm273, %v3273, 0
        %v3323 = vsel %vm273, %v3274, 0
        %v3326 = vsel %vm273, %v3275, 0
        %v3329 = vsel %vm273, %v3276, 0
        %v3332 = vsel %vm273, %v3277, 0
        %v3335 = vsel %vm273, %v3278, 0
        %v3338 = vsel %vm273, %v3279, 0
        %v3341 = vsel %vm273, %v3280, 0
        %v3344 = vsel %vm273, %v3281, 0
        %v3347 = vsel %vm273, %v3282, 0
        %v3350 = vsel %vm273, %v3283, 0
        %v3353 = vsel %vm273, %v3284, 0
        %v3356 = vsel %vm273, %v3285, 0
        %v3359 = vsel %vm273, %v3286, 0
        %v3362 = vsel %vm273, %v3287, 0
        %v3365 = vsel %vm273, %v3288, 0
        %v3368 = vsel %vm273, %v3289, 0
        %v3371 = vsel %vm273, %v3290, 0
        %v3374 = vsel %vm273, %v3291, 0
        %v3377 = vsel %vm273, %v3292, 0
        %v3380 = vsel %vm273, %v3293, 0
        %v3383 = vsel %vm273, %v3294, 0
        %v3386 = vsel %vm273, %v3295, 0
        %v3389 = vsel %vm273, %v3296, 0
        %v3392 = vsel %vm273, %v3297, 0
        %v3395 = vsel %vm273, %v3298, 0
        %v3398 = vsel %vm370, %v3300, 0
        %3400 = vmatprep.subr.mxu0 0.0
        %3401 = vmatpush1.msra.mxu0 %v3398
        %3402 = vmatprep.subr.mxu0 0.0
        %3403 = vmatpush1.msra.mxu0 0.0
        %3404 = vmatprep.subr.mxu0 0.0
        %3405 = vmatpush1.msra.mxu0 0.0
        %3406 = vmatprep.subr.mxu0 0.0
        %3407 = vmatpush1.msra.mxu0 0.0
        %3408 = vmatprep.subr.mxu0 0.0
        %3409 = vmatpush1.msra.mxu0 0.0
        %3410 = vmatprep.subr.mxu0 0.0
        %3411 = vmatpush1.msra.mxu0 0.0
        %3412 = vmatprep.subr.mxu0 0.0
        %3413 = vmatpush1.msra.mxu0 0.0
        %3414 = vmatprep.subr.mxu0 0.0
        %3415 = vmatpush1.msra.mxu0 0.0
        %3416 = vmatprep.subr.mxu0 0.0
        %3417 = vmatpush1.msra.mxu0 0.0
        %3418 = vmatprep.subr.mxu0 0.0
        %3419 = vmatpush1.msra.mxu0 0.0
        %3420 = vmatprep.subr.mxu0 0.0
        %3421 = vmatpush1.msra.mxu0 0.0
        %3422 = vmatprep.subr.mxu0 0.0
        %3423 = vmatpush1.msra.mxu0 0.0
        %3424 = vmatprep.subr.mxu0 0.0
        %3425 = vmatpush1.msra.mxu0 0.0
        %3426 = vmatprep.subr.mxu0 0.0
        %3427 = vmatpush1.msra.mxu0 0.0
        %3428 = vmatprep.subr.mxu0 0.0
        %3429 = vmatpush1.msra.mxu0 0.0
        %3430 = vmatprep.subr.mxu0 0.0
        %3431 = vmatpush1.msra.mxu0 0.0
        %3432 = vmatprep.subr.mxu0 0.0
        %3433 = vmatpush1.msra.mxu0 0.0
        %3434 = vmatprep.subr.mxu0 0.0
        %3435 = vmatpush1.msra.mxu0 0.0
        %3436 = vmatprep.subr.mxu0 0.0
        %3437 = vmatpush1.msra.mxu0 0.0
        %3438 = vmatprep.subr.mxu0 0.0
        %3439 = vmatpush1.msra.mxu0 0.0
        %3440 = vmatprep.subr.mxu0 0.0
        %3441 = vmatpush1.msra.mxu0 0.0
        %3442 = vmatprep.subr.mxu0 0.0
        %3443 = vmatpush1.msra.mxu0 0.0
        %3444 = vmatprep.subr.mxu0 0.0
        %3445 = vmatpush1.msra.mxu0 0.0
        %3446 = vmatprep.subr.mxu0 0.0
        %3447 = vmatpush1.msra.mxu0 0.0
        %3448 = vmatprep.subr.mxu0 0.0
        %3449 = vmatpush1.msra.mxu0 0.0
        %3450 = vmatprep.subr.mxu0 0.0
        %3451 = vmatpush1.msra.mxu0 0.0
        %3452 = vmatprep.subr.mxu0 0.0
        %3453 = vmatpush1.msra.mxu0 0.0
        %3454 = vmatprep.subr.mxu0 0.0
        %3455 = vmatpush1.msra.mxu0 0.0
        %3456 = vmatprep.subr.mxu0 0.0
        %3457 = vmatpush1.msra.mxu0 0.0
        %3458 = vmatprep.subr.mxu0 0.0
        %3459 = vmatpush1.msra.mxu0 0.0
        %3460 = vmatprep.subr.mxu0 0.0
        %3461 = vmatpush1.msra.mxu0 0.0
        %3462 = vmatprep.subr.mxu0 0.0
        %3463 = vmatpush1.msra.mxu0 0.0
        %3464 = vmatprep.mubr.f32.mxu0 0.0
        %3465 = vmatmul.mubr.f32.gmra.mrb[0].mxu0 %v3302
        %v3466 = vpop.f32.mrb[0].mxu0
        %v3467 = vadd.f32 0.0, %v3466
        %v3468 = vpop.f32.mrb[0].mxu0
        %3469 = vmatprep.mubr.f32.mxu0 0.0
        %3470 = vmatmul.mubr.f32.gmra.mrb[0].mxu0 %v3305
        %v3471 = vpop.f32.mrb[0].mxu0
        %v3472 = vadd.f32 0.0, %v3471
        %v3473 = vpop.f32.mrb[0].mxu0
        %3474 = vmatprep.mubr.f32.mxu0 0.0
        %3475 = vmatmul.mubr.f32.gmra.mrb[0].mxu0 %v3308
        %v3476 = vpop.f32.mrb[0].mxu0
        %v3477 = vadd.f32 0.0, %v3476
        %v3478 = vpop.f32.mrb[0].mxu0
        %3479 = vmatprep.mubr.f32.mxu0 0.0
        %3480 = vmatmul.mubr.f32.gmra.mrb[0].mxu0 %v3311
        %v3481 = vpop.f32.mrb[0].mxu0
        %v3482 = vadd.f32 0.0, %v3481
        %v3483 = vpop.f32.mrb[0].mxu0
        %3484 = vmatprep.mubr.f32.mxu0 0.0
        %3485 = vmatmul.mubr.f32.gmra.mrb[0].mxu0 %v3314
        %v3486 = vpop.f32.mrb[0].mxu0
        %v3487 = vadd.f32 0.0, %v3486
        %v3488 = vpop.f32.mrb[0].mxu0
        %3489 = vmatprep.mubr.f32.mxu0 0.0
        %3490 = vmatmul.mubr.f32.gmra.mrb[0].mxu0 %v3317
        %v3491 = vpop.f32.mrb[0].mxu0
        %v3492 = vadd.f32 0.0, %v3491
        %v3493 = vpop.f32.mrb[0].mxu0
        %3494 = vmatprep.mubr.f32.mxu0 0.0
        %3495 = vmatmul.mubr.f32.gmra.mrb[0].mxu0 %v3320
        %v3496 = vpop.f32.mrb[0].mxu0
        %v3497 = vadd.f32 0.0, %v3496
        %v3498 = vpop.f32.mrb[0].mxu0
        %3499 = vmatprep.mubr.f32.mxu0 0.0
        %3500 = vmatmul.mubr.f32.gmra.mrb[0].mxu0 %v3323
        %v3501 = vpop.f32.mrb[0].mxu0
        %v3502 = vadd.f32 0.0, %v3501
        %v3503 = vpop.f32.mrb[0].mxu0
        %3504 = vmatprep.mubr.f32.mxu0 0.0
        %3505 = vmatmul.mubr.f32.gmra.mrb[0].mxu0 %v3326
        %v3506 = vpop.f32.mrb[0].mxu0
        %v3507 = vadd.f32 0.0, %v3506
        %v3508 = vpop.f32.mrb[0].mxu0
        %3509 = vmatprep.mubr.f32.mxu0 0.0
        %3510 = vmatmul.mubr.f32.gmra.mrb[0].mxu0 %v3329
        %v3511 = vpop.f32.mrb[0].mxu0
        %v3512 = vadd.f32 0.0, %v3511
        %v3513 = vpop.f32.mrb[0].mxu0
        %3514 = vmatprep.mubr.f32.mxu0 0.0
        %3515 = vmatmul.mubr.f32.gmra.mrb[0].mxu0 %v3332
        %v3516 = vpop.f32.mrb[0].mxu0
        %v3517 = vadd.f32 0.0, %v3516
        %v3518 = vpop.f32.mrb[0].mxu0
        %3519 = vmatprep.mubr.f32.mxu0 0.0
        %3520 = vmatmul.mubr.f32.gmra.mrb[0].mxu0 %v3335
        %v3521 = vpop.f32.mrb[0].mxu0
        %v3522 = vadd.f32 0.0, %v3521
        %v3523 = vpop.f32.mrb[0].mxu0
        %3524 = vmatprep.mubr.f32.mxu0 0.0
        %3525 = vmatmul.mubr.f32.gmra.mrb[0].mxu0 %v3338
        %v3526 = vpop.f32.mrb[0].mxu0
        %v3527 = vadd.f32 0.0, %v3526
        %v3528 = vpop.f32.mrb[0].mxu0
        %3529 = vmatprep.mubr.f32.mxu0 0.0
        %3530 = vmatmul.mubr.f32.gmra.mrb[0].mxu0 %v3341
        %v3531 = vpop.f32.mrb[0].mxu0
        %v3532 = vadd.f32 0.0, %v3531
        %v3533 = vpop.f32.mrb[0].mxu0
        %3534 = vmatprep.mubr.f32.mxu0 0.0
        %3535 = vmatmul.mubr.f32.gmra.mrb[0].mxu0 %v3344
        %v3536 = vpop.f32.mrb[0].mxu0
        %v3537 = vadd.f32 0.0, %v3536
        %v3538 = vpop.f32.mrb[0].mxu0
        %3539 = vmatprep.mubr.f32.mxu0 0.0
        %3540 = vmatmul.mubr.f32.gmra.mrb[0].mxu0 %v3347
        %v3541 = vpop.f32.mrb[0].mxu0
        %v3542 = vadd.f32 0.0, %v3541
        %v3543 = vpop.f32.mrb[0].mxu0
        %3544 = vmatprep.mubr.f32.mxu0 0.0
        %3545 = vmatmul.mubr.f32.gmra.mrb[0].mxu0 %v3350
        %v3546 = vpop.f32.mrb[0].mxu0
        %v3547 = vadd.f32 0.0, %v3546
        %v3548 = vpop.f32.mrb[0].mxu0
        %3549 = vmatprep.mubr.f32.mxu0 0.0
        %3550 = vmatmul.mubr.f32.gmra.mrb[0].mxu0 %v3353
        %v3551 = vpop.f32.mrb[0].mxu0
        %v3552 = vadd.f32 0.0, %v3551
        %v3553 = vpop.f32.mrb[0].mxu0
        %3554 = vmatprep.mubr.f32.mxu0 0.0
        %3555 = vmatmul.mubr.f32.gmra.mrb[0].mxu0 %v3356
        %v3556 = vpop.f32.mrb[0].mxu0
        %v3557 = vadd.f32 0.0, %v3556
        %v3558 = vpop.f32.mrb[0].mxu0
        %3559 = vmatprep.mubr.f32.mxu0 0.0
        %3560 = vmatmul.mubr.f32.gmra.mrb[0].mxu0 %v3359
        %v3561 = vpop.f32.mrb[0].mxu0
        %v3562 = vadd.f32 0.0, %v3561
        %v3563 = vpop.f32.mrb[0].mxu0
        %3564 = vmatprep.mubr.f32.mxu0 0.0
        %3565 = vmatmul.mubr.f32.gmra.mrb[0].mxu0 %v3362
        %v3566 = vpop.f32.mrb[0].mxu0
        %v3567 = vadd.f32 0.0, %v3566
        %v3568 = vpop.f32.mrb[0].mxu0
        %3569 = vmatprep.mubr.f32.mxu0 0.0
        %3570 = vmatmul.mubr.f32.gmra.mrb[0].mxu0 %v3365
        %v3571 = vpop.f32.mrb[0].mxu0
        %v3572 = vadd.f32 0.0, %v3571
        %v3573 = vpop.f32.mrb[0].mxu0
        %3574 = vmatprep.mubr.f32.mxu0 0.0
        %3575 = vmatmul.mubr.f32.gmra.mrb[0].mxu0 %v3368
        %v3576 = vpop.f32.mrb[0].mxu0
        %v3577 = vadd.f32 0.0, %v3576
        %v3578 = vpop.f32.mrb[0].mxu0
        %3579 = vmatprep.mubr.f32.mxu0 0.0
        %3580 = vmatmul.mubr.f32.gmra.mrb[0].mxu0 %v3371
        %v3581 = vpop.f32.mrb[0].mxu0
        %v3582 = vadd.f32 0.0, %v3581
        %v3583 = vpop.f32.mrb[0].mxu0
        %3584 = vmatprep.mubr.f32.mxu0 0.0
        %3585 = vmatmul.mubr.f32.gmra.mrb[0].mxu0 %v3374
        %v3586 = vpop.f32.mrb[0].mxu0
        %v3587 = vadd.f32 0.0, %v3586
        %v3588 = vpop.f32.mrb[0].mxu0
        %3589 = vmatprep.mubr.f32.mxu0 0.0
        %3590 = vmatmul.mubr.f32.gmra.mrb[0].mxu0 %v3377
        %v3591 = vpop.f32.mrb[0].mxu0
        %v3592 = vadd.f32 0.0, %v3591
        %v3593 = vpop.f32.mrb[0].mxu0
        %3594 = vmatprep.mubr.f32.mxu0 0.0
        %3595 = vmatmul.mubr.f32.gmra.mrb[0].mxu0 %v3380
        %v3596 = vpop.f32.mrb[0].mxu0
        %v3597 = vadd.f32 0.0, %v3596
        %v3598 = vpop.f32.mrb[0].mxu0
        %3599 = vmatprep.mubr.f32.mxu0 0.0
        %3600 = vmatmul.mubr.f32.gmra.mrb[0].mxu0 %v3383
        %v3601 = vpop.f32.mrb[0].mxu0
        %v3602 = vadd.f32 0.0, %v3601
        %v3603 = vpop.f32.mrb[0].mxu0
        %3604 = vmatprep.mubr.f32.mxu0 0.0
        %3605 = vmatmul.mubr.f32.gmra.mrb[0].mxu0 %v3386
        %v3606 = vpop.f32.mrb[0].mxu0
        %v3607 = vadd.f32 0.0, %v3606
        %v3608 = vpop.f32.mrb[0].mxu0
        %3609 = vmatprep.mubr.f32.mxu0 0.0
        %3610 = vmatmul.mubr.f32.gmra.mrb[0].mxu0 %v3389
        %v3611 = vpop.f32.mrb[0].mxu0
        %v3612 = vadd.f32 0.0, %v3611
        %v3613 = vpop.f32.mrb[0].mxu0
        %3614 = vmatprep.mubr.f32.mxu0 0.0
        %3615 = vmatmul.mubr.f32.gmra.mrb[0].mxu0 %v3392
        %v3616 = vpop.f32.mrb[0].mxu0
        %v3617 = vadd.f32 0.0, %v3616
        %v3618 = vpop.f32.mrb[0].mxu0
        %3619 = vmatprep.mubr.f32.mxu0 0.0
        %3620 = vmatmul.mubr.f32.gmra.mrb[0].mxu0 %v3395
        %v3621 = vpop.f32.mrb[0].mxu0
        %v3622 = vadd.f32 0.0, %v3621
        %v3623 = vpop.f32.mrb[0].mxu0
        %3624 = vdwg.mxu0
        %v3625 = vadd.f32 %v3235, %v3467
        %v3626 = vadd.f32 %v3236, %v3472
        %v3627 = vadd.f32 %v3237, %v3477
        %v3628 = vadd.f32 %v3238, %v3482
        %v3629 = vadd.f32 %v3239, %v3487
        %v3630 = vadd.f32 %v3240, %v3492
        %v3631 = vadd.f32 %v3241, %v3497
        %v3632 = vadd.f32 %v3242, %v3502
        %v3633 = vadd.f32 %v3243, %v3507
        %v3634 = vadd.f32 %v3244, %v3512
        %v3635 = vadd.f32 %v3245, %v3517
        %v3636 = vadd.f32 %v3246, %v3522
        %v3637 = vadd.f32 %v3247, %v3527
        %v3638 = vadd.f32 %v3248, %v3532
        %v3639 = vadd.f32 %v3249, %v3537
        %v3640 = vadd.f32 %v3250, %v3542
        %v3641 = vadd.f32 %v3251, %v3547
        %v3642 = vadd.f32 %v3252, %v3552
        %v3643 = vadd.f32 %v3253, %v3557
        %v3644 = vadd.f32 %v3254, %v3562
        %v3645 = vadd.f32 %v3255, %v3567
        %v3646 = vadd.f32 %v3256, %v3572
        %v3647 = vadd.f32 %v3257, %v3577
        %v3648 = vadd.f32 %v3258, %v3582
        %v3649 = vadd.f32 %v3259, %v3587
        %v3650 = vadd.f32 %v3260, %v3592
        %v3651 = vadd.f32 %v3261, %v3597
        %v3652 = vadd.f32 %v3262, %v3602
        %v3653 = vadd.f32 %v3263, %v3607
        %v3654 = vadd.f32 %v3264, %v3612
        %v3655 = vadd.f32 %v3265, %v3617
        %v3656 = vadd.f32 %v3266, %v3622
        %s3657 = sadd.s32 %s203, 1
        %s3658 = smul.u32 %s3657, 192
        %s3659 = scalar_lea.vmem %s193, %s3658
        %v3660 = vld [vmem:[%s3659] sm:$0xff]
        %v3661 = vld [vmem:[%s3659 + $0x10] sm:$0xff]
        %v3662 = vld [vmem:[%s3659 + $0x20] sm:$0xff]
        %v3663 = vld [vmem:[%s3659 + $0x30] sm:$0xff]
        %v3664 = vld [vmem:[%s3659 + $0x40] sm:$0xff]
        %v3665 = vld [vmem:[%s3659 + $0x50] sm:$0xff]
        %v3666 = vld [vmem:[%s3659 + $0x60] sm:$0xff]
        %v3667 = vld [vmem:[%s3659 + $0x70] sm:$0xff]
        %v3668 = vld [vmem:[%s3659 + $0xc0] sm:$0xff]
        %v3669 = vld [vmem:[%s3659 + $0xd0] sm:$0xff]
        %v3670 = vld [vmem:[%s3659 + $0xe0] sm:$0xff]
        %v3671 = vld [vmem:[%s3659 + $0xf0] sm:$0xff]
        %v3672 = vld [vmem:[%s3659 + $0x100] sm:$0xff]
        %v3673 = vld [vmem:[%s3659 + $0x110] sm:$0xff]
        %v3674 = vld [vmem:[%s3659 + $0x120] sm:$0xff]
        %v3675 = vld [vmem:[%s3659 + $0x130] sm:$0xff]
        %v3676 = vld [vmem:[%s3659 + $0x180] sm:$0xff]
        %v3677 = vld [vmem:[%s3659 + $0x190] sm:$0xff]
        %v3678 = vld [vmem:[%s3659 + $0x1a0] sm:$0xff]
        %v3679 = vld [vmem:[%s3659 + $0x1b0] sm:$0xff]
        %v3680 = vld [vmem:[%s3659 + $0x1c0] sm:$0xff]
        %v3681 = vld [vmem:[%s3659 + $0x1d0] sm:$0xff]
        %v3682 = vld [vmem:[%s3659 + $0x1e0] sm:$0xff]
        %v3683 = vld [vmem:[%s3659 + $0x1f0] sm:$0xff]
        %v3684 = vld [vmem:[%s3659 + $0x240] sm:$0xff]
        %v3685 = vld [vmem:[%s3659 + $0x250] sm:$0xff]
        %v3686 = vld [vmem:[%s3659 + $0x260] sm:$0xff]
        %v3687 = vld [vmem:[%s3659 + $0x270] sm:$0xff]
        %v3688 = vld [vmem:[%s3659 + $0x280] sm:$0xff]
        %v3689 = vld [vmem:[%s3659 + $0x290] sm:$0xff]
        %v3690 = vld [vmem:[%s3659 + $0x2a0] sm:$0xff]
        %v3691 = vld [vmem:[%s3659 + $0x2b0] sm:$0xff]
        %s3692 = scalar_lea.vmem %s1, 36
        %v3693 = vld [vmem:[%s3692] sm:$0xf]
        %v3695 = vsel %vm273, %v3660, 0
        %v3698 = vsel %vm273, %v3661, 0
        %v3701 = vsel %vm273, %v3662, 0
        %v3704 = vsel %vm273, %v3663, 0
        %v3707 = vsel %vm273, %v3664, 0
        %v3710 = vsel %vm273, %v3665, 0
        %v3713 = vsel %vm273, %v3666, 0
        %v3716 = vsel %vm273, %v3667, 0
        %v3719 = vsel %vm273, %v3668, 0
        %v3722 = vsel %vm273, %v3669, 0
        %v3725 = vsel %vm273, %v3670, 0
        %v3728 = vsel %vm273, %v3671, 0
        %v3731 = vsel %vm273, %v3672, 0
        %v3734 = vsel %vm273, %v3673, 0
        %v3737 = vsel %vm273, %v3674, 0
        %v3740 = vsel %vm273, %v3675, 0
        %v3743 = vsel %vm273, %v3676, 0
        %v3746 = vsel %vm273, %v3677, 0
        %v3749 = vsel %vm273, %v3678, 0
        %v3752 = vsel %vm273, %v3679, 0
        %v3755 = vsel %vm273, %v3680, 0
        %v3758 = vsel %vm273, %v3681, 0
        %v3761 = vsel %vm273, %v3682, 0
        %v3764 = vsel %vm273, %v3683, 0
        %v3767 = vsel %vm273, %v3684, 0
        %v3770 = vsel %vm273, %v3685, 0
        %v3773 = vsel %vm273, %v3686, 0
        %v3776 = vsel %vm273, %v3687, 0
        %v3779 = vsel %vm273, %v3688, 0
        %v3782 = vsel %vm273, %v3689, 0
        %v3785 = vsel %vm273, %v3690, 0
        %v3788 = vsel %vm273, %v3691, 0
        %v3791 = vsel %vm370, %v3693, 0
        %3793 = vmatprep.subr.mxu0 0.0
        %3794 = vmatpush1.msra.mxu0 %v3791
        %3795 = vmatprep.subr.mxu0 0.0
        %3796 = vmatpush1.msra.mxu0 0.0
        %3797 = vmatprep.subr.mxu0 0.0
        %3798 = vmatpush1.msra.mxu0 0.0
        %3799 = vmatprep.subr.mxu0 0.0
        %3800 = vmatpush1.msra.mxu0 0.0
        %3801 = vmatprep.subr.mxu0 0.0
        %3802 = vmatpush1.msra.mxu0 0.0
        %3803 = vmatprep.subr.mxu0 0.0
        %3804 = vmatpush1.msra.mxu0 0.0
        %3805 = vmatprep.subr.mxu0 0.0
        %3806 = vmatpush1.msra.mxu0 0.0
        %3807 = vmatprep.subr.mxu0 0.0
        %3808 = vmatpush1.msra.mxu0 0.0
        %3809 = vmatprep.subr.mxu0 0.0
        %3810 = vmatpush1.msra.mxu0 0.0
        %3811 = vmatprep.subr.mxu0 0.0
        %3812 = vmatpush1.msra.mxu0 0.0
        %3813 = vmatprep.subr.mxu0 0.0
        %3814 = vmatpush1.msra.mxu0 0.0
        %3815 = vmatprep.subr.mxu0 0.0
        %3816 = vmatpush1.msra.mxu0 0.0
        %3817 = vmatprep.subr.mxu0 0.0
        %3818 = vmatpush1.msra.mxu0 0.0
        %3819 = vmatprep.subr.mxu0 0.0
        %3820 = vmatpush1.msra.mxu0 0.0
        %3821 = vmatprep.subr.mxu0 0.0
        %3822 = vmatpush1.msra.mxu0 0.0
        %3823 = vmatprep.subr.mxu0 0.0
        %3824 = vmatpush1.msra.mxu0 0.0
        %3825 = vmatprep.subr.mxu0 0.0
        %3826 = vmatpush1.msra.mxu0 0.0
        %3827 = vmatprep.subr.mxu0 0.0
        %3828 = vmatpush1.msra.mxu0 0.0
        %3829 = vmatprep.subr.mxu0 0.0
        %3830 = vmatpush1.msra.mxu0 0.0
        %3831 = vmatprep.subr.mxu0 0.0
        %3832 = vmatpush1.msra.mxu0 0.0
        %3833 = vmatprep.subr.mxu0 0.0
        %3834 = vmatpush1.msra.mxu0 0.0
        %3835 = vmatprep.subr.mxu0 0.0
        %3836 = vmatpush1.msra.mxu0 0.0
        %3837 = vmatprep.subr.mxu0 0.0
        %3838 = vmatpush1.msra.mxu0 0.0
        %3839 = vmatprep.subr.mxu0 0.0
        %3840 = vmatpush1.msra.mxu0 0.0
        %3841 = vmatprep.subr.mxu0 0.0
        %3842 = vmatpush1.msra.mxu0 0.0
        %3843 = vmatprep.subr.mxu0 0.0
        %3844 = vmatpush1.msra.mxu0 0.0
        %3845 = vmatprep.subr.mxu0 0.0
        %3846 = vmatpush1.msra.mxu0 0.0
        %3847 = vmatprep.subr.mxu0 0.0
        %3848 = vmatpush1.msra.mxu0 0.0
        %3849 = vmatprep.subr.mxu0 0.0
        %3850 = vmatpush1.msra.mxu0 0.0
        %3851 = vmatprep.subr.mxu0 0.0
        %3852 = vmatpush1.msra.mxu0 0.0
        %3853 = vmatprep.subr.mxu0 0.0
        %3854 = vmatpush1.msra.mxu0 0.0
        %3855 = vmatprep.subr.mxu0 0.0
        %3856 = vmatpush1.msra.mxu0 0.0
        %3857 = vmatprep.mubr.f32.mxu0 0.0
        %3858 = vmatmul.mubr.f32.gmra.mrb[0].mxu0 %v3695
        %v3859 = vpop.f32.mrb[0].mxu0
        %v3860 = vadd.f32 0.0, %v3859
        %v3861 = vpop.f32.mrb[0].mxu0
        %3862 = vmatprep.mubr.f32.mxu0 0.0
        %3863 = vmatmul.mubr.f32.gmra.mrb[0].mxu0 %v3698
        %v3864 = vpop.f32.mrb[0].mxu0
        %v3865 = vadd.f32 0.0, %v3864
        %v3866 = vpop.f32.mrb[0].mxu0
        %3867 = vmatprep.mubr.f32.mxu0 0.0
        %3868 = vmatmul.mubr.f32.gmra.mrb[0].mxu0 %v3701
        %v3869 = vpop.f32.mrb[0].mxu0
        %v3870 = vadd.f32 0.0, %v3869
        %v3871 = vpop.f32.mrb[0].mxu0
        %3872 = vmatprep.mubr.f32.mxu0 0.0
        %3873 = vmatmul.mubr.f32.gmra.mrb[0].mxu0 %v3704
        %v3874 = vpop.f32.mrb[0].mxu0
        %v3875 = vadd.f32 0.0, %v3874
        %v3876 = vpop.f32.mrb[0].mxu0
        %3877 = vmatprep.mubr.f32.mxu0 0.0
        %3878 = vmatmul.mubr.f32.gmra.mrb[0].mxu0 %v3707
        %v3879 = vpop.f32.mrb[0].mxu0
        %v3880 = vadd.f32 0.0, %v3879
        %v3881 = vpop.f32.mrb[0].mxu0
        %3882 = vmatprep.mubr.f32.mxu0 0.0
        %3883 = vmatmul.mubr.f32.gmra.mrb[0].mxu0 %v3710
        %v3884 = vpop.f32.mrb[0].mxu0
        %v3885 = vadd.f32 0.0, %v3884
        %v3886 = vpop.f32.mrb[0].mxu0
        %3887 = vmatprep.mubr.f32.mxu0 0.0
        %3888 = vmatmul.mubr.f32.gmra.mrb[0].mxu0 %v3713
        %v3889 = vpop.f32.mrb[0].mxu0
        %v3890 = vadd.f32 0.0, %v3889
        %v3891 = vpop.f32.mrb[0].mxu0
        %3892 = vmatprep.mubr.f32.mxu0 0.0
        %3893 = vmatmul.mubr.f32.gmra.mrb[0].mxu0 %v3716
        %v3894 = vpop.f32.mrb[0].mxu0
        %v3895 = vadd.f32 0.0, %v3894
        %v3896 = vpop.f32.mrb[0].mxu0
        %3897 = vmatprep.mubr.f32.mxu0 0.0
        %3898 = vmatmul.mubr.f32.gmra.mrb[0].mxu0 %v3719
        %v3899 = vpop.f32.mrb[0].mxu0
        %v3900 = vadd.f32 0.0, %v3899
        %v3901 = vpop.f32.mrb[0].mxu0
        %3902 = vmatprep.mubr.f32.mxu0 0.0
        %3903 = vmatmul.mubr.f32.gmra.mrb[0].mxu0 %v3722
        %v3904 = vpop.f32.mrb[0].mxu0
        %v3905 = vadd.f32 0.0, %v3904
        %v3906 = vpop.f32.mrb[0].mxu0
        %3907 = vmatprep.mubr.f32.mxu0 0.0
        %3908 = vmatmul.mubr.f32.gmra.mrb[0].mxu0 %v3725
        %v3909 = vpop.f32.mrb[0].mxu0
        %v3910 = vadd.f32 0.0, %v3909
        %v3911 = vpop.f32.mrb[0].mxu0
        %3912 = vmatprep.mubr.f32.mxu0 0.0
        %3913 = vmatmul.mubr.f32.gmra.mrb[0].mxu0 %v3728
        %v3914 = vpop.f32.mrb[0].mxu0
        %v3915 = vadd.f32 0.0, %v3914
        %v3916 = vpop.f32.mrb[0].mxu0
        %3917 = vmatprep.mubr.f32.mxu0 0.0
        %3918 = vmatmul.mubr.f32.gmra.mrb[0].mxu0 %v3731
        %v3919 = vpop.f32.mrb[0].mxu0
        %v3920 = vadd.f32 0.0, %v3919
        %v3921 = vpop.f32.mrb[0].mxu0
        %3922 = vmatprep.mubr.f32.mxu0 0.0
        %3923 = vmatmul.mubr.f32.gmra.mrb[0].mxu0 %v3734
        %v3924 = vpop.f32.mrb[0].mxu0
        %v3925 = vadd.f32 0.0, %v3924
        %v3926 = vpop.f32.mrb[0].mxu0
        %3927 = vmatprep.mubr.f32.mxu0 0.0
        %3928 = vmatmul.mubr.f32.gmra.mrb[0].mxu0 %v3737
        %v3929 = vpop.f32.mrb[0].mxu0
        %v3930 = vadd.f32 0.0, %v3929
        %v3931 = vpop.f32.mrb[0].mxu0
        %3932 = vmatprep.mubr.f32.mxu0 0.0
        %3933 = vmatmul.mubr.f32.gmra.mrb[0].mxu0 %v3740
        %v3934 = vpop.f32.mrb[0].mxu0
        %v3935 = vadd.f32 0.0, %v3934
        %v3936 = vpop.f32.mrb[0].mxu0
        %3937 = vmatprep.mubr.f32.mxu0 0.0
        %3938 = vmatmul.mubr.f32.gmra.mrb[0].mxu0 %v3743
        %v3939 = vpop.f32.mrb[0].mxu0
        %v3940 = vadd.f32 0.0, %v3939
        %v3941 = vpop.f32.mrb[0].mxu0
        %3942 = vmatprep.mubr.f32.mxu0 0.0
        %3943 = vmatmul.mubr.f32.gmra.mrb[0].mxu0 %v3746
        %v3944 = vpop.f32.mrb[0].mxu0
        %v3945 = vadd.f32 0.0, %v3944
        %v3946 = vpop.f32.mrb[0].mxu0
        %3947 = vmatprep.mubr.f32.mxu0 0.0
        %3948 = vmatmul.mubr.f32.gmra.mrb[0].mxu0 %v3749
        %v3949 = vpop.f32.mrb[0].mxu0
        %v3950 = vadd.f32 0.0, %v3949
        %v3951 = vpop.f32.mrb[0].mxu0
        %3952 = vmatprep.mubr.f32.mxu0 0.0
        %3953 = vmatmul.mubr.f32.gmra.mrb[0].mxu0 %v3752
        %v3954 = vpop.f32.mrb[0].mxu0
        %v3955 = vadd.f32 0.0, %v3954
        %v3956 = vpop.f32.mrb[0].mxu0
        %3957 = vmatprep.mubr.f32.mxu0 0.0
        %3958 = vmatmul.mubr.f32.gmra.mrb[0].mxu0 %v3755
        %v3959 = vpop.f32.mrb[0].mxu0
        %v3960 = vadd.f32 0.0, %v3959
        %v3961 = vpop.f32.mrb[0].mxu0
        %3962 = vmatprep.mubr.f32.mxu0 0.0
        %3963 = vmatmul.mubr.f32.gmra.mrb[0].mxu0 %v3758
        %v3964 = vpop.f32.mrb[0].mxu0
        %v3965 = vadd.f32 0.0, %v3964
        %v3966 = vpop.f32.mrb[0].mxu0
        %3967 = vmatprep.mubr.f32.mxu0 0.0
        %3968 = vmatmul.mubr.f32.gmra.mrb[0].mxu0 %v3761
        %v3969 = vpop.f32.mrb[0].mxu0
        %v3970 = vadd.f32 0.0, %v3969
        %v3971 = vpop.f32.mrb[0].mxu0
        %3972 = vmatprep.mubr.f32.mxu0 0.0
        %3973 = vmatmul.mubr.f32.gmra.mrb[0].mxu0 %v3764
        %v3974 = vpop.f32.mrb[0].mxu0
        %v3975 = vadd.f32 0.0, %v3974
        %v3976 = vpop.f32.mrb[0].mxu0
        %3977 = vmatprep.mubr.f32.mxu0 0.0
        %3978 = vmatmul.mubr.f32.gmra.mrb[0].mxu0 %v3767
        %v3979 = vpop.f32.mrb[0].mxu0
        %v3980 = vadd.f32 0.0, %v3979
        %v3981 = vpop.f32.mrb[0].mxu0
        %3982 = vmatprep.mubr.f32.mxu0 0.0
        %3983 = vmatmul.mubr.f32.gmra.mrb[0].mxu0 %v3770
        %v3984 = vpop.f32.mrb[0].mxu0
        %v3985 = vadd.f32 0.0, %v3984
        %v3986 = vpop.f32.mrb[0].mxu0
        %3987 = vmatprep.mubr.f32.mxu0 0.0
        %3988 = vmatmul.mubr.f32.gmra.mrb[0].mxu0 %v3773
        %v3989 = vpop.f32.mrb[0].mxu0
        %v3990 = vadd.f32 0.0, %v3989
        %v3991 = vpop.f32.mrb[0].mxu0
        %3992 = vmatprep.mubr.f32.mxu0 0.0
        %3993 = vmatmul.mubr.f32.gmra.mrb[0].mxu0 %v3776
        %v3994 = vpop.f32.mrb[0].mxu0
        %v3995 = vadd.f32 0.0, %v3994
        %v3996 = vpop.f32.mrb[0].mxu0
        %3997 = vmatprep.mubr.f32.mxu0 0.0
        %3998 = vmatmul.mubr.f32.gmra.mrb[0].mxu0 %v3779
        %v3999 = vpop.f32.mrb[0].mxu0
        %v4000 = vadd.f32 0.0, %v3999
        %v4001 = vpop.f32.mrb[0].mxu0
        %4002 = vmatprep.mubr.f32.mxu0 0.0
        %4003 = vmatmul.mubr.f32.gmra.mrb[0].mxu0 %v3782
        %v4004 = vpop.f32.mrb[0].mxu0
        %v4005 = vadd.f32 0.0, %v4004
        %v4006 = vpop.f32.mrb[0].mxu0
        %4007 = vmatprep.mubr.f32.mxu0 0.0
        %4008 = vmatmul.mubr.f32.gmra.mrb[0].mxu0 %v3785
        %v4009 = vpop.f32.mrb[0].mxu0
        %v4010 = vadd.f32 0.0, %v4009
        %v4011 = vpop.f32.mrb[0].mxu0
        %4012 = vmatprep.mubr.f32.mxu0 0.0
        %4013 = vmatmul.mubr.f32.gmra.mrb[0].mxu0 %v3788
        %v4014 = vpop.f32.mrb[0].mxu0
        %v4015 = vadd.f32 0.0, %v4014
        %v4016 = vpop.f32.mrb[0].mxu0
        %4017 = vdwg.mxu0
        %v4018 = vadd.f32 %v3625, %v3860
        %v4019 = vadd.f32 %v3626, %v3865
        %v4020 = vadd.f32 %v3627, %v3870
        %v4021 = vadd.f32 %v3628, %v3875
        %v4022 = vadd.f32 %v3629, %v3880
        %v4023 = vadd.f32 %v3630, %v3885
        %v4024 = vadd.f32 %v3631, %v3890
        %v4025 = vadd.f32 %v3632, %v3895
        %v4026 = vadd.f32 %v3633, %v3900
        %v4027 = vadd.f32 %v3634, %v3905
        %v4028 = vadd.f32 %v3635, %v3910
        %v4029 = vadd.f32 %v3636, %v3915
        %v4030 = vadd.f32 %v3637, %v3920
        %v4031 = vadd.f32 %v3638, %v3925
        %v4032 = vadd.f32 %v3639, %v3930
        %v4033 = vadd.f32 %v3640, %v3935
        %v4034 = vadd.f32 %v3641, %v3940
        %v4035 = vadd.f32 %v3642, %v3945
        %v4036 = vadd.f32 %v3643, %v3950
        %v4037 = vadd.f32 %v3644, %v3955
        %v4038 = vadd.f32 %v3645, %v3960
        %v4039 = vadd.f32 %v3646, %v3965
        %v4040 = vadd.f32 %v3647, %v3970
        %v4041 = vadd.f32 %v3648, %v3975
        %v4042 = vadd.f32 %v3649, %v3980
        %v4043 = vadd.f32 %v3650, %v3985
        %v4044 = vadd.f32 %v3651, %v3990
        %v4045 = vadd.f32 %v3652, %v3995
        %v4046 = vadd.f32 %v3653, %v4000
        %v4047 = vadd.f32 %v3654, %v4005
        %v4048 = vadd.f32 %v3655, %v4010
        %v4049 = vadd.f32 %v3656, %v4015
        %v4050 = vld [vmem:[%s3659 + $0x2] sm:$0xff]
        %v4051 = vld [vmem:[%s3659 + $0x12] sm:$0xff]
        %v4052 = vld [vmem:[%s3659 + $0x22] sm:$0xff]
        %v4053 = vld [vmem:[%s3659 + $0x32] sm:$0xff]
        %v4054 = vld [vmem:[%s3659 + $0x42] sm:$0xff]
        %v4055 = vld [vmem:[%s3659 + $0x52] sm:$0xff]
        %v4056 = vld [vmem:[%s3659 + $0x62] sm:$0xff]
        %v4057 = vld [vmem:[%s3659 + $0x72] sm:$0xff]
        %v4058 = vld [vmem:[%s3659 + $0xc2] sm:$0xff]
        %v4059 = vld [vmem:[%s3659 + $0xd2] sm:$0xff]
        %v4060 = vld [vmem:[%s3659 + $0xe2] sm:$0xff]
        %v4061 = vld [vmem:[%s3659 + $0xf2] sm:$0xff]
        %v4062 = vld [vmem:[%s3659 + $0x102] sm:$0xff]
        %v4063 = vld [vmem:[%s3659 + $0x112] sm:$0xff]
        %v4064 = vld [vmem:[%s3659 + $0x122] sm:$0xff]
        %v4065 = vld [vmem:[%s3659 + $0x132] sm:$0xff]
        %v4066 = vld [vmem:[%s3659 + $0x182] sm:$0xff]
        %v4067 = vld [vmem:[%s3659 + $0x192] sm:$0xff]
        %v4068 = vld [vmem:[%s3659 + $0x1a2] sm:$0xff]
        %v4069 = vld [vmem:[%s3659 + $0x1b2] sm:$0xff]
        %v4070 = vld [vmem:[%s3659 + $0x1c2] sm:$0xff]
        %v4071 = vld [vmem:[%s3659 + $0x1d2] sm:$0xff]
        %v4072 = vld [vmem:[%s3659 + $0x1e2] sm:$0xff]
        %v4073 = vld [vmem:[%s3659 + $0x1f2] sm:$0xff]
        %v4074 = vld [vmem:[%s3659 + $0x242] sm:$0xff]
        %v4075 = vld [vmem:[%s3659 + $0x252] sm:$0xff]
        %v4076 = vld [vmem:[%s3659 + $0x262] sm:$0xff]
        %v4077 = vld [vmem:[%s3659 + $0x272] sm:$0xff]
        %v4078 = vld [vmem:[%s3659 + $0x282] sm:$0xff]
        %v4079 = vld [vmem:[%s3659 + $0x292] sm:$0xff]
        %v4080 = vld [vmem:[%s3659 + $0x2a2] sm:$0xff]
        %v4081 = vld [vmem:[%s3659 + $0x2b2] sm:$0xff]
        %s4082 = scalar_lea.vmem %s1, 40
        %v4083 = vld [vmem:[%s4082] sm:$0xf]
        %v4085 = vsel %vm273, %v4050, 0
        %v4088 = vsel %vm273, %v4051, 0
        %v4091 = vsel %vm273, %v4052, 0
        %v4094 = vsel %vm273, %v4053, 0
        %v4097 = vsel %vm273, %v4054, 0
        %v4100 = vsel %vm273, %v4055, 0
        %v4103 = vsel %vm273, %v4056, 0
        %v4106 = vsel %vm273, %v4057, 0
        %v4109 = vsel %vm273, %v4058, 0
        %v4112 = vsel %vm273, %v4059, 0
        %v4115 = vsel %vm273, %v4060, 0
        %v4118 = vsel %vm273, %v4061, 0
        %v4121 = vsel %vm273, %v4062, 0
        %v4124 = vsel %vm273, %v4063, 0
        %v4127 = vsel %vm273, %v4064, 0
        %v4130 = vsel %vm273, %v4065, 0
        %v4133 = vsel %vm273, %v4066, 0
        %v4136 = vsel %vm273, %v4067, 0
        %v4139 = vsel %vm273, %v4068, 0
        %v4142 = vsel %vm273, %v4069, 0
        %v4145 = vsel %vm273, %v4070, 0
        %v4148 = vsel %vm273, %v4071, 0
        %v4151 = vsel %vm273, %v4072, 0
        %v4154 = vsel %vm273, %v4073, 0
        %v4157 = vsel %vm273, %v4074, 0
        %v4160 = vsel %vm273, %v4075, 0
        %v4163 = vsel %vm273, %v4076, 0
        %v4166 = vsel %vm273, %v4077, 0
        %v4169 = vsel %vm273, %v4078, 0
        %v4172 = vsel %vm273, %v4079, 0
        %v4175 = vsel %vm273, %v4080, 0
        %v4178 = vsel %vm273, %v4081, 0
        %v4181 = vsel %vm370, %v4083, 0
        %4183 = vmatprep.subr.mxu0 0.0
        %4184 = vmatpush1.msra.mxu0 %v4181
        %4185 = vmatprep.subr.mxu0 0.0
        %4186 = vmatpush1.msra.mxu0 0.0
        %4187 = vmatprep.subr.mxu0 0.0
        %4188 = vmatpush1.msra.mxu0 0.0
        %4189 = vmatprep.subr.mxu0 0.0
        %4190 = vmatpush1.msra.mxu0 0.0
        %4191 = vmatprep.subr.mxu0 0.0
        %4192 = vmatpush1.msra.mxu0 0.0
        %4193 = vmatprep.subr.mxu0 0.0
        %4194 = vmatpush1.msra.mxu0 0.0
        %4195 = vmatprep.subr.mxu0 0.0
        %4196 = vmatpush1.msra.mxu0 0.0
        %4197 = vmatprep.subr.mxu0 0.0
        %4198 = vmatpush1.msra.mxu0 0.0
        %4199 = vmatprep.subr.mxu0 0.0
        %4200 = vmatpush1.msra.mxu0 0.0
        %4201 = vmatprep.subr.mxu0 0.0
        %4202 = vmatpush1.msra.mxu0 0.0
        %4203 = vmatprep.subr.mxu0 0.0
        %4204 = vmatpush1.msra.mxu0 0.0
        %4205 = vmatprep.subr.mxu0 0.0
        %4206 = vmatpush1.msra.mxu0 0.0
        %4207 = vmatprep.subr.mxu0 0.0
        %4208 = vmatpush1.msra.mxu0 0.0
        %4209 = vmatprep.subr.mxu0 0.0
        %4210 = vmatpush1.msra.mxu0 0.0
        %4211 = vmatprep.subr.mxu0 0.0
        %4212 = vmatpush1.msra.mxu0 0.0
        %4213 = vmatprep.subr.mxu0 0.0
        %4214 = vmatpush1.msra.mxu0 0.0
        %4215 = vmatprep.subr.mxu0 0.0
        %4216 = vmatpush1.msra.mxu0 0.0
        %4217 = vmatprep.subr.mxu0 0.0
        %4218 = vmatpush1.msra.mxu0 0.0
        %4219 = vmatprep.subr.mxu0 0.0
        %4220 = vmatpush1.msra.mxu0 0.0
        %4221 = vmatprep.subr.mxu0 0.0
        %4222 = vmatpush1.msra.mxu0 0.0
        %4223 = vmatprep.subr.mxu0 0.0
        %4224 = vmatpush1.msra.mxu0 0.0
        %4225 = vmatprep.subr.mxu0 0.0
        %4226 = vmatpush1.msra.mxu0 0.0
        %4227 = vmatprep.subr.mxu0 0.0
        %4228 = vmatpush1.msra.mxu0 0.0
        %4229 = vmatprep.subr.mxu0 0.0
        %4230 = vmatpush1.msra.mxu0 0.0
        %4231 = vmatprep.subr.mxu0 0.0
        %4232 = vmatpush1.msra.mxu0 0.0
        %4233 = vmatprep.subr.mxu0 0.0
        %4234 = vmatpush1.msra.mxu0 0.0
        %4235 = vmatprep.subr.mxu0 0.0
        %4236 = vmatpush1.msra.mxu0 0.0
        %4237 = vmatprep.subr.mxu0 0.0
        %4238 = vmatpush1.msra.mxu0 0.0
        %4239 = vmatprep.subr.mxu0 0.0
        %4240 = vmatpush1.msra.mxu0 0.0
        %4241 = vmatprep.subr.mxu0 0.0
        %4242 = vmatpush1.msra.mxu0 0.0
        %4243 = vmatprep.subr.mxu0 0.0
        %4244 = vmatpush1.msra.mxu0 0.0
        %4245 = vmatprep.subr.mxu0 0.0
        %4246 = vmatpush1.msra.mxu0 0.0
        %4247 = vmatprep.mubr.f32.mxu0 0.0
        %4248 = vmatmul.mubr.f32.gmra.mrb[0].mxu0 %v4085
        %v4249 = vpop.f32.mrb[0].mxu0
        %v4250 = vadd.f32 0.0, %v4249
        %v4251 = vpop.f32.mrb[0].mxu0
        %4252 = vmatprep.mubr.f32.mxu0 0.0
        %4253 = vmatmul.mubr.f32.gmra.mrb[0].mxu0 %v4088
        %v4254 = vpop.f32.mrb[0].mxu0
        %v4255 = vadd.f32 0.0, %v4254
        %v4256 = vpop.f32.mrb[0].mxu0
        %4257 = vmatprep.mubr.f32.mxu0 0.0
        %4258 = vmatmul.mubr.f32.gmra.mrb[0].mxu0 %v4091
        %v4259 = vpop.f32.mrb[0].mxu0
        %v4260 = vadd.f32 0.0, %v4259
        %v4261 = vpop.f32.mrb[0].mxu0
        %4262 = vmatprep.mubr.f32.mxu0 0.0
        %4263 = vmatmul.mubr.f32.gmra.mrb[0].mxu0 %v4094
        %v4264 = vpop.f32.mrb[0].mxu0
        %v4265 = vadd.f32 0.0, %v4264
        %v4266 = vpop.f32.mrb[0].mxu0
        %4267 = vmatprep.mubr.f32.mxu0 0.0
        %4268 = vmatmul.mubr.f32.gmra.mrb[0].mxu0 %v4097
        %v4269 = vpop.f32.mrb[0].mxu0
        %v4270 = vadd.f32 0.0, %v4269
        %v4271 = vpop.f32.mrb[0].mxu0
        %4272 = vmatprep.mubr.f32.mxu0 0.0
        %4273 = vmatmul.mubr.f32.gmra.mrb[0].mxu0 %v4100
        %v4274 = vpop.f32.mrb[0].mxu0
        %v4275 = vadd.f32 0.0, %v4274
        %v4276 = vpop.f32.mrb[0].mxu0
        %4277 = vmatprep.mubr.f32.mxu0 0.0
        %4278 = vmatmul.mubr.f32.gmra.mrb[0].mxu0 %v4103
        %v4279 = vpop.f32.mrb[0].mxu0
        %v4280 = vadd.f32 0.0, %v4279
        %v4281 = vpop.f32.mrb[0].mxu0
        %4282 = vmatprep.mubr.f32.mxu0 0.0
        %4283 = vmatmul.mubr.f32.gmra.mrb[0].mxu0 %v4106
        %v4284 = vpop.f32.mrb[0].mxu0
        %v4285 = vadd.f32 0.0, %v4284
        %v4286 = vpop.f32.mrb[0].mxu0
        %4287 = vmatprep.mubr.f32.mxu0 0.0
        %4288 = vmatmul.mubr.f32.gmra.mrb[0].mxu0 %v4109
        %v4289 = vpop.f32.mrb[0].mxu0
        %v4290 = vadd.f32 0.0, %v4289
        %v4291 = vpop.f32.mrb[0].mxu0
        %4292 = vmatprep.mubr.f32.mxu0 0.0
        %4293 = vmatmul.mubr.f32.gmra.mrb[0].mxu0 %v4112
        %v4294 = vpop.f32.mrb[0].mxu0
        %v4295 = vadd.f32 0.0, %v4294
        %v4296 = vpop.f32.mrb[0].mxu0
        %4297 = vmatprep.mubr.f32.mxu0 0.0
        %4298 = vmatmul.mubr.f32.gmra.mrb[0].mxu0 %v4115
        %v4299 = vpop.f32.mrb[0].mxu0
        %v4300 = vadd.f32 0.0, %v4299
        %v4301 = vpop.f32.mrb[0].mxu0
        %4302 = vmatprep.mubr.f32.mxu0 0.0
        %4303 = vmatmul.mubr.f32.gmra.mrb[0].mxu0 %v4118
        %v4304 = vpop.f32.mrb[0].mxu0
        %v4305 = vadd.f32 0.0, %v4304
        %v4306 = vpop.f32.mrb[0].mxu0
        %4307 = vmatprep.mubr.f32.mxu0 0.0
        %4308 = vmatmul.mubr.f32.gmra.mrb[0].mxu0 %v4121
        %v4309 = vpop.f32.mrb[0].mxu0
        %v4310 = vadd.f32 0.0, %v4309
        %v4311 = vpop.f32.mrb[0].mxu0
        %4312 = vmatprep.mubr.f32.mxu0 0.0
        %4313 = vmatmul.mubr.f32.gmra.mrb[0].mxu0 %v4124
        %v4314 = vpop.f32.mrb[0].mxu0
        %v4315 = vadd.f32 0.0, %v4314
        %v4316 = vpop.f32.mrb[0].mxu0
        %4317 = vmatprep.mubr.f32.mxu0 0.0
        %4318 = vmatmul.mubr.f32.gmra.mrb[0].mxu0 %v4127
        %v4319 = vpop.f32.mrb[0].mxu0
        %v4320 = vadd.f32 0.0, %v4319
        %v4321 = vpop.f32.mrb[0].mxu0
        %4322 = vmatprep.mubr.f32.mxu0 0.0
        %4323 = vmatmul.mubr.f32.gmra.mrb[0].mxu0 %v4130
        %v4324 = vpop.f32.mrb[0].mxu0
        %v4325 = vadd.f32 0.0, %v4324
        %v4326 = vpop.f32.mrb[0].mxu0
        %4327 = vmatprep.mubr.f32.mxu0 0.0
        %4328 = vmatmul.mubr.f32.gmra.mrb[0].mxu0 %v4133
        %v4329 = vpop.f32.mrb[0].mxu0
        %v4330 = vadd.f32 0.0, %v4329
        %v4331 = vpop.f32.mrb[0].mxu0
        %4332 = vmatprep.mubr.f32.mxu0 0.0
        %4333 = vmatmul.mubr.f32.gmra.mrb[0].mxu0 %v4136
        %v4334 = vpop.f32.mrb[0].mxu0
        %v4335 = vadd.f32 0.0, %v4334
        %v4336 = vpop.f32.mrb[0].mxu0
        %4337 = vmatprep.mubr.f32.mxu0 0.0
        %4338 = vmatmul.mubr.f32.gmra.mrb[0].mxu0 %v4139
        %v4339 = vpop.f32.mrb[0].mxu0
        %v4340 = vadd.f32 0.0, %v4339
        %v4341 = vpop.f32.mrb[0].mxu0
        %4342 = vmatprep.mubr.f32.mxu0 0.0
        %4343 = vmatmul.mubr.f32.gmra.mrb[0].mxu0 %v4142
        %v4344 = vpop.f32.mrb[0].mxu0
        %v4345 = vadd.f32 0.0, %v4344
        %v4346 = vpop.f32.mrb[0].mxu0
        %4347 = vmatprep.mubr.f32.mxu0 0.0
        %4348 = vmatmul.mubr.f32.gmra.mrb[0].mxu0 %v4145
        %v4349 = vpop.f32.mrb[0].mxu0
        %v4350 = vadd.f32 0.0, %v4349
        %v4351 = vpop.f32.mrb[0].mxu0
        %4352 = vmatprep.mubr.f32.mxu0 0.0
        %4353 = vmatmul.mubr.f32.gmra.mrb[0].mxu0 %v4148
        %v4354 = vpop.f32.mrb[0].mxu0
        %v4355 = vadd.f32 0.0, %v4354
        %v4356 = vpop.f32.mrb[0].mxu0
        %4357 = vmatprep.mubr.f32.mxu0 0.0
        %4358 = vmatmul.mubr.f32.gmra.mrb[0].mxu0 %v4151
        %v4359 = vpop.f32.mrb[0].mxu0
        %v4360 = vadd.f32 0.0, %v4359
        %v4361 = vpop.f32.mrb[0].mxu0
        %4362 = vmatprep.mubr.f32.mxu0 0.0
        %4363 = vmatmul.mubr.f32.gmra.mrb[0].mxu0 %v4154
        %v4364 = vpop.f32.mrb[0].mxu0
        %v4365 = vadd.f32 0.0, %v4364
        %v4366 = vpop.f32.mrb[0].mxu0
        %4367 = vmatprep.mubr.f32.mxu0 0.0
        %4368 = vmatmul.mubr.f32.gmra.mrb[0].mxu0 %v4157
        %v4369 = vpop.f32.mrb[0].mxu0
        %v4370 = vadd.f32 0.0, %v4369
        %v4371 = vpop.f32.mrb[0].mxu0
        %4372 = vmatprep.mubr.f32.mxu0 0.0
        %4373 = vmatmul.mubr.f32.gmra.mrb[0].mxu0 %v4160
        %v4374 = vpop.f32.mrb[0].mxu0
        %v4375 = vadd.f32 0.0, %v4374
        %v4376 = vpop.f32.mrb[0].mxu0
        %4377 = vmatprep.mubr.f32.mxu0 0.0
        %4378 = vmatmul.mubr.f32.gmra.mrb[0].mxu0 %v4163
        %v4379 = vpop.f32.mrb[0].mxu0
        %v4380 = vadd.f32 0.0, %v4379
        %v4381 = vpop.f32.mrb[0].mxu0
        %4382 = vmatprep.mubr.f32.mxu0 0.0
        %4383 = vmatmul.mubr.f32.gmra.mrb[0].mxu0 %v4166
        %v4384 = vpop.f32.mrb[0].mxu0
        %v4385 = vadd.f32 0.0, %v4384
        %v4386 = vpop.f32.mrb[0].mxu0
        %4387 = vmatprep.mubr.f32.mxu0 0.0
        %4388 = vmatmul.mubr.f32.gmra.mrb[0].mxu0 %v4169
        %v4389 = vpop.f32.mrb[0].mxu0
        %v4390 = vadd.f32 0.0, %v4389
        %v4391 = vpop.f32.mrb[0].mxu0
        %4392 = vmatprep.mubr.f32.mxu0 0.0
        %4393 = vmatmul.mubr.f32.gmra.mrb[0].mxu0 %v4172
        %v4394 = vpop.f32.mrb[0].mxu0
        %v4395 = vadd.f32 0.0, %v4394
        %v4396 = vpop.f32.mrb[0].mxu0
        %4397 = vmatprep.mubr.f32.mxu0 0.0
        %4398 = vmatmul.mubr.f32.gmra.mrb[0].mxu0 %v4175
        %v4399 = vpop.f32.mrb[0].mxu0
        %v4400 = vadd.f32 0.0, %v4399
        %v4401 = vpop.f32.mrb[0].mxu0
        %4402 = vmatprep.mubr.f32.mxu0 0.0
        %4403 = vmatmul.mubr.f32.gmra.mrb[0].mxu0 %v4178
        %v4404 = vpop.f32.mrb[0].mxu0
        %v4405 = vadd.f32 0.0, %v4404
        %v4406 = vpop.f32.mrb[0].mxu0
        %4407 = vdwg.mxu0
        %v4408 = vadd.f32 %v4018, %v4250
        %v4409 = vadd.f32 %v4019, %v4255
        %v4410 = vadd.f32 %v4020, %v4260
        %v4411 = vadd.f32 %v4021, %v4265
        %v4412 = vadd.f32 %v4022, %v4270
        %v4413 = vadd.f32 %v4023, %v4275
        %v4414 = vadd.f32 %v4024, %v4280
        %v4415 = vadd.f32 %v4025, %v4285
        %v4416 = vadd.f32 %v4026, %v4290
        %v4417 = vadd.f32 %v4027, %v4295
        %v4418 = vadd.f32 %v4028, %v4300
        %v4419 = vadd.f32 %v4029, %v4305
        %v4420 = vadd.f32 %v4030, %v4310
        %v4421 = vadd.f32 %v4031, %v4315
        %v4422 = vadd.f32 %v4032, %v4320
        %v4423 = vadd.f32 %v4033, %v4325
        %v4424 = vadd.f32 %v4034, %v4330
        %v4425 = vadd.f32 %v4035, %v4335
        %v4426 = vadd.f32 %v4036, %v4340
        %v4427 = vadd.f32 %v4037, %v4345
        %v4428 = vadd.f32 %v4038, %v4350
        %v4429 = vadd.f32 %v4039, %v4355
        %v4430 = vadd.f32 %v4040, %v4360
        %v4431 = vadd.f32 %v4041, %v4365
        %v4432 = vadd.f32 %v4042, %v4370
        %v4433 = vadd.f32 %v4043, %v4375
        %v4434 = vadd.f32 %v4044, %v4380
        %v4435 = vadd.f32 %v4045, %v4385
        %v4436 = vadd.f32 %v4046, %v4390
        %v4437 = vadd.f32 %v4047, %v4395
        %v4438 = vadd.f32 %v4048, %v4400
        %v4439 = vadd.f32 %v4049, %v4405
        %v4440 = vld [vmem:[%s3659 + $0x4] sm:$0xff]
        %v4441 = vld [vmem:[%s3659 + $0x14] sm:$0xff]
        %v4442 = vld [vmem:[%s3659 + $0x24] sm:$0xff]
        %v4443 = vld [vmem:[%s3659 + $0x34] sm:$0xff]
        %v4444 = vld [vmem:[%s3659 + $0x44] sm:$0xff]
        %v4445 = vld [vmem:[%s3659 + $0x54] sm:$0xff]
        %v4446 = vld [vmem:[%s3659 + $0x64] sm:$0xff]
        %v4447 = vld [vmem:[%s3659 + $0x74] sm:$0xff]
        %v4448 = vld [vmem:[%s3659 + $0xc4] sm:$0xff]
        %v4449 = vld [vmem:[%s3659 + $0xd4] sm:$0xff]
        %v4450 = vld [vmem:[%s3659 + $0xe4] sm:$0xff]
        %v4451 = vld [vmem:[%s3659 + $0xf4] sm:$0xff]
        %v4452 = vld [vmem:[%s3659 + $0x104] sm:$0xff]
        %v4453 = vld [vmem:[%s3659 + $0x114] sm:$0xff]
        %v4454 = vld [vmem:[%s3659 + $0x124] sm:$0xff]
        %v4455 = vld [vmem:[%s3659 + $0x134] sm:$0xff]
        %v4456 = vld [vmem:[%s3659 + $0x184] sm:$0xff]
        %v4457 = vld [vmem:[%s3659 + $0x194] sm:$0xff]
        %v4458 = vld [vmem:[%s3659 + $0x1a4] sm:$0xff]
        %v4459 = vld [vmem:[%s3659 + $0x1b4] sm:$0xff]
        %v4460 = vld [vmem:[%s3659 + $0x1c4] sm:$0xff]
        %v4461 = vld [vmem:[%s3659 + $0x1d4] sm:$0xff]
        %v4462 = vld [vmem:[%s3659 + $0x1e4] sm:$0xff]
        %v4463 = vld [vmem:[%s3659 + $0x1f4] sm:$0xff]
        %v4464 = vld [vmem:[%s3659 + $0x244] sm:$0xff]
        %v4465 = vld [vmem:[%s3659 + $0x254] sm:$0xff]
        %v4466 = vld [vmem:[%s3659 + $0x264] sm:$0xff]
        %v4467 = vld [vmem:[%s3659 + $0x274] sm:$0xff]
        %v4468 = vld [vmem:[%s3659 + $0x284] sm:$0xff]
        %v4469 = vld [vmem:[%s3659 + $0x294] sm:$0xff]
        %v4470 = vld [vmem:[%s3659 + $0x2a4] sm:$0xff]
        %v4471 = vld [vmem:[%s3659 + $0x2b4] sm:$0xff]
        %s4472 = scalar_lea.vmem %s1, 44
        %v4473 = vld [vmem:[%s4472] sm:$0xf]
        %v4475 = vsel %vm273, %v4440, 0
        %v4478 = vsel %vm273, %v4441, 0
        %v4481 = vsel %vm273, %v4442, 0
        %v4484 = vsel %vm273, %v4443, 0
        %v4487 = vsel %vm273, %v4444, 0
        %v4490 = vsel %vm273, %v4445, 0
        %v4493 = vsel %vm273, %v4446, 0
        %v4496 = vsel %vm273, %v4447, 0
        %v4499 = vsel %vm273, %v4448, 0
        %v4502 = vsel %vm273, %v4449, 0
        %v4505 = vsel %vm273, %v4450, 0
        %v4508 = vsel %vm273, %v4451, 0
        %v4511 = vsel %vm273, %v4452, 0
        %v4514 = vsel %vm273, %v4453, 0
        %v4517 = vsel %vm273, %v4454, 0
        %v4520 = vsel %vm273, %v4455, 0
        %v4523 = vsel %vm273, %v4456, 0
        %v4526 = vsel %vm273, %v4457, 0
        %v4529 = vsel %vm273, %v4458, 0
        %v4532 = vsel %vm273, %v4459, 0
        %v4535 = vsel %vm273, %v4460, 0
        %v4538 = vsel %vm273, %v4461, 0
        %v4541 = vsel %vm273, %v4462, 0
        %v4544 = vsel %vm273, %v4463, 0
        %v4547 = vsel %vm273, %v4464, 0
        %v4550 = vsel %vm273, %v4465, 0
        %v4553 = vsel %vm273, %v4466, 0
        %v4556 = vsel %vm273, %v4467, 0
        %v4559 = vsel %vm273, %v4468, 0
        %v4562 = vsel %vm273, %v4469, 0
        %v4565 = vsel %vm273, %v4470, 0
        %v4568 = vsel %vm273, %v4471, 0
        %v4571 = vsel %vm370, %v4473, 0
        %4573 = vmatprep.subr.mxu0 0.0
        %4574 = vmatpush1.msra.mxu0 %v4571
        %4575 = vmatprep.subr.mxu0 0.0
        %4576 = vmatpush1.msra.mxu0 0.0
        %4577 = vmatprep.subr.mxu0 0.0
        %4578 = vmatpush1.msra.mxu0 0.0
        %4579 = vmatprep.subr.mxu0 0.0
        %4580 = vmatpush1.msra.mxu0 0.0
        %4581 = vmatprep.subr.mxu0 0.0
        %4582 = vmatpush1.msra.mxu0 0.0
        %4583 = vmatprep.subr.mxu0 0.0
        %4584 = vmatpush1.msra.mxu0 0.0
        %4585 = vmatprep.subr.mxu0 0.0
        %4586 = vmatpush1.msra.mxu0 0.0
        %4587 = vmatprep.subr.mxu0 0.0
        %4588 = vmatpush1.msra.mxu0 0.0
        %4589 = vmatprep.subr.mxu0 0.0
        %4590 = vmatpush1.msra.mxu0 0.0
        %4591 = vmatprep.subr.mxu0 0.0
        %4592 = vmatpush1.msra.mxu0 0.0
        %4593 = vmatprep.subr.mxu0 0.0
        %4594 = vmatpush1.msra.mxu0 0.0
        %4595 = vmatprep.subr.mxu0 0.0
        %4596 = vmatpush1.msra.mxu0 0.0
        %4597 = vmatprep.subr.mxu0 0.0
        %4598 = vmatpush1.msra.mxu0 0.0
        %4599 = vmatprep.subr.mxu0 0.0
        %4600 = vmatpush1.msra.mxu0 0.0
        %4601 = vmatprep.subr.mxu0 0.0
        %4602 = vmatpush1.msra.mxu0 0.0
        %4603 = vmatprep.subr.mxu0 0.0
        %4604 = vmatpush1.msra.mxu0 0.0
        %4605 = vmatprep.subr.mxu0 0.0
        %4606 = vmatpush1.msra.mxu0 0.0
        %4607 = vmatprep.subr.mxu0 0.0
        %4608 = vmatpush1.msra.mxu0 0.0
        %4609 = vmatprep.subr.mxu0 0.0
        %4610 = vmatpush1.msra.mxu0 0.0
        %4611 = vmatprep.subr.mxu0 0.0
        %4612 = vmatpush1.msra.mxu0 0.0
        %4613 = vmatprep.subr.mxu0 0.0
        %4614 = vmatpush1.msra.mxu0 0.0
        %4615 = vmatprep.subr.mxu0 0.0
        %4616 = vmatpush1.msra.mxu0 0.0
        %4617 = vmatprep.subr.mxu0 0.0
        %4618 = vmatpush1.msra.mxu0 0.0
        %4619 = vmatprep.subr.mxu0 0.0
        %4620 = vmatpush1.msra.mxu0 0.0
        %4621 = vmatprep.subr.mxu0 0.0
        %4622 = vmatpush1.msra.mxu0 0.0
        %4623 = vmatprep.subr.mxu0 0.0
        %4624 = vmatpush1.msra.mxu0 0.0
        %4625 = vmatprep.subr.mxu0 0.0
        %4626 = vmatpush1.msra.mxu0 0.0
        %4627 = vmatprep.subr.mxu0 0.0
        %4628 = vmatpush1.msra.mxu0 0.0
        %4629 = vmatprep.subr.mxu0 0.0
        %4630 = vmatpush1.msra.mxu0 0.0
        %4631 = vmatprep.subr.mxu0 0.0
        %4632 = vmatpush1.msra.mxu0 0.0
        %4633 = vmatprep.subr.mxu0 0.0
        %4634 = vmatpush1.msra.mxu0 0.0
        %4635 = vmatprep.subr.mxu0 0.0
        %4636 = vmatpush1.msra.mxu0 0.0
        %4637 = vmatprep.mubr.f32.mxu0 0.0
        %4638 = vmatmul.mubr.f32.gmra.mrb[0].mxu0 %v4475
        %v4639 = vpop.f32.mrb[0].mxu0
        %v4640 = vadd.f32 0.0, %v4639
        %v4641 = vpop.f32.mrb[0].mxu0
        %4642 = vmatprep.mubr.f32.mxu0 0.0
        %4643 = vmatmul.mubr.f32.gmra.mrb[0].mxu0 %v4478
        %v4644 = vpop.f32.mrb[0].mxu0
        %v4645 = vadd.f32 0.0, %v4644
        %v4646 = vpop.f32.mrb[0].mxu0
        %4647 = vmatprep.mubr.f32.mxu0 0.0
        %4648 = vmatmul.mubr.f32.gmra.mrb[0].mxu0 %v4481
        %v4649 = vpop.f32.mrb[0].mxu0
        %v4650 = vadd.f32 0.0, %v4649
        %v4651 = vpop.f32.mrb[0].mxu0
        %4652 = vmatprep.mubr.f32.mxu0 0.0
        %4653 = vmatmul.mubr.f32.gmra.mrb[0].mxu0 %v4484
        %v4654 = vpop.f32.mrb[0].mxu0
        %v4655 = vadd.f32 0.0, %v4654
        %v4656 = vpop.f32.mrb[0].mxu0
        %4657 = vmatprep.mubr.f32.mxu0 0.0
        %4658 = vmatmul.mubr.f32.gmra.mrb[0].mxu0 %v4487
        %v4659 = vpop.f32.mrb[0].mxu0
        %v4660 = vadd.f32 0.0, %v4659
        %v4661 = vpop.f32.mrb[0].mxu0
        %4662 = vmatprep.mubr.f32.mxu0 0.0
        %4663 = vmatmul.mubr.f32.gmra.mrb[0].mxu0 %v4490
        %v4664 = vpop.f32.mrb[0].mxu0
        %v4665 = vadd.f32 0.0, %v4664
        %v4666 = vpop.f32.mrb[0].mxu0
        %4667 = vmatprep.mubr.f32.mxu0 0.0
        %4668 = vmatmul.mubr.f32.gmra.mrb[0].mxu0 %v4493
        %v4669 = vpop.f32.mrb[0].mxu0
        %v4670 = vadd.f32 0.0, %v4669
        %v4671 = vpop.f32.mrb[0].mxu0
        %4672 = vmatprep.mubr.f32.mxu0 0.0
        %4673 = vmatmul.mubr.f32.gmra.mrb[0].mxu0 %v4496
        %v4674 = vpop.f32.mrb[0].mxu0
        %v4675 = vadd.f32 0.0, %v4674
        %v4676 = vpop.f32.mrb[0].mxu0
        %4677 = vmatprep.mubr.f32.mxu0 0.0
        %4678 = vmatmul.mubr.f32.gmra.mrb[0].mxu0 %v4499
        %v4679 = vpop.f32.mrb[0].mxu0
        %v4680 = vadd.f32 0.0, %v4679
        %v4681 = vpop.f32.mrb[0].mxu0
        %4682 = vmatprep.mubr.f32.mxu0 0.0
        %4683 = vmatmul.mubr.f32.gmra.mrb[0].mxu0 %v4502
        %v4684 = vpop.f32.mrb[0].mxu0
        %v4685 = vadd.f32 0.0, %v4684
        %v4686 = vpop.f32.mrb[0].mxu0
        %4687 = vmatprep.mubr.f32.mxu0 0.0
        %4688 = vmatmul.mubr.f32.gmra.mrb[0].mxu0 %v4505
        %v4689 = vpop.f32.mrb[0].mxu0
        %v4690 = vadd.f32 0.0, %v4689
        %v4691 = vpop.f32.mrb[0].mxu0
        %4692 = vmatprep.mubr.f32.mxu0 0.0
        %4693 = vmatmul.mubr.f32.gmra.mrb[0].mxu0 %v4508
        %v4694 = vpop.f32.mrb[0].mxu0
        %v4695 = vadd.f32 0.0, %v4694
        %v4696 = vpop.f32.mrb[0].mxu0
        %4697 = vmatprep.mubr.f32.mxu0 0.0
        %4698 = vmatmul.mubr.f32.gmra.mrb[0].mxu0 %v4511
        %v4699 = vpop.f32.mrb[0].mxu0
        %v4700 = vadd.f32 0.0, %v4699
        %v4701 = vpop.f32.mrb[0].mxu0
        %4702 = vmatprep.mubr.f32.mxu0 0.0
        %4703 = vmatmul.mubr.f32.gmra.mrb[0].mxu0 %v4514
        %v4704 = vpop.f32.mrb[0].mxu0
        %v4705 = vadd.f32 0.0, %v4704
        %v4706 = vpop.f32.mrb[0].mxu0
        %4707 = vmatprep.mubr.f32.mxu0 0.0
        %4708 = vmatmul.mubr.f32.gmra.mrb[0].mxu0 %v4517
        %v4709 = vpop.f32.mrb[0].mxu0
        %v4710 = vadd.f32 0.0, %v4709
        %v4711 = vpop.f32.mrb[0].mxu0
        %4712 = vmatprep.mubr.f32.mxu0 0.0
        %4713 = vmatmul.mubr.f32.gmra.mrb[0].mxu0 %v4520
        %v4714 = vpop.f32.mrb[0].mxu0
        %v4715 = vadd.f32 0.0, %v4714
        %v4716 = vpop.f32.mrb[0].mxu0
        %4717 = vmatprep.mubr.f32.mxu0 0.0
        %4718 = vmatmul.mubr.f32.gmra.mrb[0].mxu0 %v4523
        %v4719 = vpop.f32.mrb[0].mxu0
        %v4720 = vadd.f32 0.0, %v4719
        %v4721 = vpop.f32.mrb[0].mxu0
        %4722 = vmatprep.mubr.f32.mxu0 0.0
        %4723 = vmatmul.mubr.f32.gmra.mrb[0].mxu0 %v4526
        %v4724 = vpop.f32.mrb[0].mxu0
        %v4725 = vadd.f32 0.0, %v4724
        %v4726 = vpop.f32.mrb[0].mxu0
        %4727 = vmatprep.mubr.f32.mxu0 0.0
        %4728 = vmatmul.mubr.f32.gmra.mrb[0].mxu0 %v4529
        %v4729 = vpop.f32.mrb[0].mxu0
        %v4730 = vadd.f32 0.0, %v4729
        %v4731 = vpop.f32.mrb[0].mxu0
        %4732 = vmatprep.mubr.f32.mxu0 0.0
        %4733 = vmatmul.mubr.f32.gmra.mrb[0].mxu0 %v4532
        %v4734 = vpop.f32.mrb[0].mxu0
        %v4735 = vadd.f32 0.0, %v4734
        %v4736 = vpop.f32.mrb[0].mxu0
        %4737 = vmatprep.mubr.f32.mxu0 0.0
        %4738 = vmatmul.mubr.f32.gmra.mrb[0].mxu0 %v4535
        %v4739 = vpop.f32.mrb[0].mxu0
        %v4740 = vadd.f32 0.0, %v4739
        %v4741 = vpop.f32.mrb[0].mxu0
        %4742 = vmatprep.mubr.f32.mxu0 0.0
        %4743 = vmatmul.mubr.f32.gmra.mrb[0].mxu0 %v4538
        %v4744 = vpop.f32.mrb[0].mxu0
        %v4745 = vadd.f32 0.0, %v4744
        %v4746 = vpop.f32.mrb[0].mxu0
        %4747 = vmatprep.mubr.f32.mxu0 0.0
        %4748 = vmatmul.mubr.f32.gmra.mrb[0].mxu0 %v4541
        %v4749 = vpop.f32.mrb[0].mxu0
        %v4750 = vadd.f32 0.0, %v4749
        %v4751 = vpop.f32.mrb[0].mxu0
        %4752 = vmatprep.mubr.f32.mxu0 0.0
        %4753 = vmatmul.mubr.f32.gmra.mrb[0].mxu0 %v4544
        %v4754 = vpop.f32.mrb[0].mxu0
        %v4755 = vadd.f32 0.0, %v4754
        %v4756 = vpop.f32.mrb[0].mxu0
        %4757 = vmatprep.mubr.f32.mxu0 0.0
        %4758 = vmatmul.mubr.f32.gmra.mrb[0].mxu0 %v4547
        %v4759 = vpop.f32.mrb[0].mxu0
        %v4760 = vadd.f32 0.0, %v4759
        %v4761 = vpop.f32.mrb[0].mxu0
        %4762 = vmatprep.mubr.f32.mxu0 0.0
        %4763 = vmatmul.mubr.f32.gmra.mrb[0].mxu0 %v4550
        %v4764 = vpop.f32.mrb[0].mxu0
        %v4765 = vadd.f32 0.0, %v4764
        %v4766 = vpop.f32.mrb[0].mxu0
        %4767 = vmatprep.mubr.f32.mxu0 0.0
        %4768 = vmatmul.mubr.f32.gmra.mrb[0].mxu0 %v4553
        %v4769 = vpop.f32.mrb[0].mxu0
        %v4770 = vadd.f32 0.0, %v4769
        %v4771 = vpop.f32.mrb[0].mxu0
        %4772 = vmatprep.mubr.f32.mxu0 0.0
        %4773 = vmatmul.mubr.f32.gmra.mrb[0].mxu0 %v4556
        %v4774 = vpop.f32.mrb[0].mxu0
        %v4775 = vadd.f32 0.0, %v4774
        %v4776 = vpop.f32.mrb[0].mxu0
        %4777 = vmatprep.mubr.f32.mxu0 0.0
        %4778 = vmatmul.mubr.f32.gmra.mrb[0].mxu0 %v4559
        %v4779 = vpop.f32.mrb[0].mxu0
        %v4780 = vadd.f32 0.0, %v4779
        %v4781 = vpop.f32.mrb[0].mxu0
        %4782 = vmatprep.mubr.f32.mxu0 0.0
        %4783 = vmatmul.mubr.f32.gmra.mrb[0].mxu0 %v4562
        %v4784 = vpop.f32.mrb[0].mxu0
        %v4785 = vadd.f32 0.0, %v4784
        %v4786 = vpop.f32.mrb[0].mxu0
        %4787 = vmatprep.mubr.f32.mxu0 0.0
        %4788 = vmatmul.mubr.f32.gmra.mrb[0].mxu0 %v4565
        %v4789 = vpop.f32.mrb[0].mxu0
        %v4790 = vadd.f32 0.0, %v4789
        %v4791 = vpop.f32.mrb[0].mxu0
        %4792 = vmatprep.mubr.f32.mxu0 0.0
        %4793 = vmatmul.mubr.f32.gmra.mrb[0].mxu0 %v4568
        %v4794 = vpop.f32.mrb[0].mxu0
        %v4795 = vadd.f32 0.0, %v4794
        %v4796 = vpop.f32.mrb[0].mxu0
        %4797 = vdwg.mxu0
        %v4798 = vadd.f32 %v4408, %v4640
        %v4799 = vadd.f32 %v4409, %v4645
        %v4800 = vadd.f32 %v4410, %v4650
        %v4801 = vadd.f32 %v4411, %v4655
        %v4802 = vadd.f32 %v4412, %v4660
        %v4803 = vadd.f32 %v4413, %v4665
        %v4804 = vadd.f32 %v4414, %v4670
        %v4805 = vadd.f32 %v4415, %v4675
        %v4806 = vadd.f32 %v4416, %v4680
        %v4807 = vadd.f32 %v4417, %v4685
        %v4808 = vadd.f32 %v4418, %v4690
        %v4809 = vadd.f32 %v4419, %v4695
        %v4810 = vadd.f32 %v4420, %v4700
        %v4811 = vadd.f32 %v4421, %v4705
        %v4812 = vadd.f32 %v4422, %v4710
        %v4813 = vadd.f32 %v4423, %v4715
        %v4814 = vadd.f32 %v4424, %v4720
        %v4815 = vadd.f32 %v4425, %v4725
        %v4816 = vadd.f32 %v4426, %v4730
        %v4817 = vadd.f32 %v4427, %v4735
        %v4818 = vadd.f32 %v4428, %v4740
        %v4819 = vadd.f32 %v4429, %v4745
        %v4820 = vadd.f32 %v4430, %v4750
        %v4821 = vadd.f32 %v4431, %v4755
        %v4822 = vadd.f32 %v4432, %v4760
        %v4823 = vadd.f32 %v4433, %v4765
        %v4824 = vadd.f32 %v4434, %v4770
        %v4825 = vadd.f32 %v4435, %v4775
        %v4826 = vadd.f32 %v4436, %v4780
        %v4827 = vadd.f32 %v4437, %v4785
        %v4828 = vadd.f32 %v4438, %v4790
        %v4829 = vadd.f32 %v4439, %v4795
        %s4830 = sadd.s32 32, %s3658
        %s4831 = scalar_lea.vmem %s193, %s4830
        %v4832 = vld [vmem:[%s4831] sm:$0xff]
        %v4833 = vld [vmem:[%s4831 + $0x10] sm:$0xff]
        %v4834 = vld [vmem:[%s4831 + $0x20] sm:$0xff]
        %v4835 = vld [vmem:[%s4831 + $0x30] sm:$0xff]
        %v4836 = vld [vmem:[%s4831 + $0x40] sm:$0xff]
        %v4837 = vld [vmem:[%s4831 + $0x50] sm:$0xff]
        %v4838 = vld [vmem:[%s4831 + $0x60] sm:$0xff]
        %v4839 = vld [vmem:[%s4831 + $0x70] sm:$0xff]
        %v4840 = vld [vmem:[%s4831 + $0xc0] sm:$0xff]
        %v4841 = vld [vmem:[%s4831 + $0xd0] sm:$0xff]
        %v4842 = vld [vmem:[%s4831 + $0xe0] sm:$0xff]
        %v4843 = vld [vmem:[%s4831 + $0xf0] sm:$0xff]
        %v4844 = vld [vmem:[%s4831 + $0x100] sm:$0xff]
        %v4845 = vld [vmem:[%s4831 + $0x110] sm:$0xff]
        %v4846 = vld [vmem:[%s4831 + $0x120] sm:$0xff]
        %v4847 = vld [vmem:[%s4831 + $0x130] sm:$0xff]
        %v4848 = vld [vmem:[%s4831 + $0x180] sm:$0xff]
        %v4849 = vld [vmem:[%s4831 + $0x190] sm:$0xff]
        %v4850 = vld [vmem:[%s4831 + $0x1a0] sm:$0xff]
        %v4851 = vld [vmem:[%s4831 + $0x1b0] sm:$0xff]
        %v4852 = vld [vmem:[%s4831 + $0x1c0] sm:$0xff]
        %v4853 = vld [vmem:[%s4831 + $0x1d0] sm:$0xff]
        %v4854 = vld [vmem:[%s4831 + $0x1e0] sm:$0xff]
        %v4855 = vld [vmem:[%s4831 + $0x1f0] sm:$0xff]
        %v4856 = vld [vmem:[%s4831 + $0x240] sm:$0xff]
        %v4857 = vld [vmem:[%s4831 + $0x250] sm:$0xff]
        %v4858 = vld [vmem:[%s4831 + $0x260] sm:$0xff]
        %v4859 = vld [vmem:[%s4831 + $0x270] sm:$0xff]
        %v4860 = vld [vmem:[%s4831 + $0x280] sm:$0xff]
        %v4861 = vld [vmem:[%s4831 + $0x290] sm:$0xff]
        %v4862 = vld [vmem:[%s4831 + $0x2a0] sm:$0xff]
        %v4863 = vld [vmem:[%s4831 + $0x2b0] sm:$0xff]
        %s4864 = scalar_lea.vmem %s1, 48
        %v4865 = vld [vmem:[%s4864] sm:$0xf]
        %v4867 = vsel %vm273, %v4832, 0
        %v4870 = vsel %vm273, %v4833, 0
        %v4873 = vsel %vm273, %v4834, 0
        %v4876 = vsel %vm273, %v4835, 0
        %v4879 = vsel %vm273, %v4836, 0
        %v4882 = vsel %vm273, %v4837, 0
        %v4885 = vsel %vm273, %v4838, 0
        %v4888 = vsel %vm273, %v4839, 0
        %v4891 = vsel %vm273, %v4840, 0
        %v4894 = vsel %vm273, %v4841, 0
        %v4897 = vsel %vm273, %v4842, 0
        %v4900 = vsel %vm273, %v4843, 0
        %v4903 = vsel %vm273, %v4844, 0
        %v4906 = vsel %vm273, %v4845, 0
        %v4909 = vsel %vm273, %v4846, 0
        %v4912 = vsel %vm273, %v4847, 0
        %v4915 = vsel %vm273, %v4848, 0
        %v4918 = vsel %vm273, %v4849, 0
        %v4921 = vsel %vm273, %v4850, 0
        %v4924 = vsel %vm273, %v4851, 0
        %v4927 = vsel %vm273, %v4852, 0
        %v4930 = vsel %vm273, %v4853, 0
        %v4933 = vsel %vm273, %v4854, 0
        %v4936 = vsel %vm273, %v4855, 0
        %v4939 = vsel %vm273, %v4856, 0
        %v4942 = vsel %vm273, %v4857, 0
        %v4945 = vsel %vm273, %v4858, 0
        %v4948 = vsel %vm273, %v4859, 0
        %v4951 = vsel %vm273, %v4860, 0
        %v4954 = vsel %vm273, %v4861, 0
        %v4957 = vsel %vm273, %v4862, 0
        %v4960 = vsel %vm273, %v4863, 0
        %v4963 = vsel %vm370, %v4865, 0
        %4965 = vmatprep.subr.mxu0 0.0
        %4966 = vmatpush1.msra.mxu0 %v4963
        %4967 = vmatprep.subr.mxu0 0.0
        %4968 = vmatpush1.msra.mxu0 0.0
        %4969 = vmatprep.subr.mxu0 0.0
        %4970 = vmatpush1.msra.mxu0 0.0
        %4971 = vmatprep.subr.mxu0 0.0
        %4972 = vmatpush1.msra.mxu0 0.0
        %4973 = vmatprep.subr.mxu0 0.0
        %4974 = vmatpush1.msra.mxu0 0.0
        %4975 = vmatprep.subr.mxu0 0.0
        %4976 = vmatpush1.msra.mxu0 0.0
        %4977 = vmatprep.subr.mxu0 0.0
        %4978 = vmatpush1.msra.mxu0 0.0
        %4979 = vmatprep.subr.mxu0 0.0
        %4980 = vmatpush1.msra.mxu0 0.0
        %4981 = vmatprep.subr.mxu0 0.0
        %4982 = vmatpush1.msra.mxu0 0.0
        %4983 = vmatprep.subr.mxu0 0.0
        %4984 = vmatpush1.msra.mxu0 0.0
        %4985 = vmatprep.subr.mxu0 0.0
        %4986 = vmatpush1.msra.mxu0 0.0
        %4987 = vmatprep.subr.mxu0 0.0
        %4988 = vmatpush1.msra.mxu0 0.0
        %4989 = vmatprep.subr.mxu0 0.0
        %4990 = vmatpush1.msra.mxu0 0.0
        %4991 = vmatprep.subr.mxu0 0.0
        %4992 = vmatpush1.msra.mxu0 0.0
        %4993 = vmatprep.subr.mxu0 0.0
        %4994 = vmatpush1.msra.mxu0 0.0
        %4995 = vmatprep.subr.mxu0 0.0
        %4996 = vmatpush1.msra.mxu0 0.0
        %4997 = vmatprep.subr.mxu0 0.0
        %4998 = vmatpush1.msra.mxu0 0.0
        %4999 = vmatprep.subr.mxu0 0.0
        %5000 = vmatpush1.msra.mxu0 0.0
        %5001 = vmatprep.subr.mxu0 0.0
        %5002 = vmatpush1.msra.mxu0 0.0
        %5003 = vmatprep.subr.mxu0 0.0
        %5004 = vmatpush1.msra.mxu0 0.0
        %5005 = vmatprep.subr.mxu0 0.0
        %5006 = vmatpush1.msra.mxu0 0.0
        %5007 = vmatprep.subr.mxu0 0.0
        %5008 = vmatpush1.msra.mxu0 0.0
        %5009 = vmatprep.subr.mxu0 0.0
        %5010 = vmatpush1.msra.mxu0 0.0
        %5011 = vmatprep.subr.mxu0 0.0
        %5012 = vmatpush1.msra.mxu0 0.0
        %5013 = vmatprep.subr.mxu0 0.0
        %5014 = vmatpush1.msra.mxu0 0.0
        %5015 = vmatprep.subr.mxu0 0.0
        %5016 = vmatpush1.msra.mxu0 0.0
        %5017 = vmatprep.subr.mxu0 0.0
        %5018 = vmatpush1.msra.mxu0 0.0
        %5019 = vmatprep.subr.mxu0 0.0
        %5020 = vmatpush1.msra.mxu0 0.0
        %5021 = vmatprep.subr.mxu0 0.0
        %5022 = vmatpush1.msra.mxu0 0.0
        %5023 = vmatprep.subr.mxu0 0.0
        %5024 = vmatpush1.msra.mxu0 0.0
        %5025 = vmatprep.subr.mxu0 0.0
        %5026 = vmatpush1.msra.mxu0 0.0
        %5027 = vmatprep.subr.mxu0 0.0
        %5028 = vmatpush1.msra.mxu0 0.0
        %5029 = vmatprep.mubr.f32.mxu0 0.0
        %5030 = vmatmul.mubr.f32.gmra.mrb[0].mxu0 %v4867
        %v5031 = vpop.f32.mrb[0].mxu0
        %v5032 = vadd.f32 0.0, %v5031
        %v5033 = vpop.f32.mrb[0].mxu0
        %5034 = vmatprep.mubr.f32.mxu0 0.0
        %5035 = vmatmul.mubr.f32.gmra.mrb[0].mxu0 %v4870
        %v5036 = vpop.f32.mrb[0].mxu0
        %v5037 = vadd.f32 0.0, %v5036
        %v5038 = vpop.f32.mrb[0].mxu0
        %5039 = vmatprep.mubr.f32.mxu0 0.0
        %5040 = vmatmul.mubr.f32.gmra.mrb[0].mxu0 %v4873
        %v5041 = vpop.f32.mrb[0].mxu0
        %v5042 = vadd.f32 0.0, %v5041
        %v5043 = vpop.f32.mrb[0].mxu0
        %5044 = vmatprep.mubr.f32.mxu0 0.0
        %5045 = vmatmul.mubr.f32.gmra.mrb[0].mxu0 %v4876
        %v5046 = vpop.f32.mrb[0].mxu0
        %v5047 = vadd.f32 0.0, %v5046
        %v5048 = vpop.f32.mrb[0].mxu0
        %5049 = vmatprep.mubr.f32.mxu0 0.0
        %5050 = vmatmul.mubr.f32.gmra.mrb[0].mxu0 %v4879
        %v5051 = vpop.f32.mrb[0].mxu0
        %v5052 = vadd.f32 0.0, %v5051
        %v5053 = vpop.f32.mrb[0].mxu0
        %5054 = vmatprep.mubr.f32.mxu0 0.0
        %5055 = vmatmul.mubr.f32.gmra.mrb[0].mxu0 %v4882
        %v5056 = vpop.f32.mrb[0].mxu0
        %v5057 = vadd.f32 0.0, %v5056
        %v5058 = vpop.f32.mrb[0].mxu0
        %5059 = vmatprep.mubr.f32.mxu0 0.0
        %5060 = vmatmul.mubr.f32.gmra.mrb[0].mxu0 %v4885
        %v5061 = vpop.f32.mrb[0].mxu0
        %v5062 = vadd.f32 0.0, %v5061
        %v5063 = vpop.f32.mrb[0].mxu0
        %5064 = vmatprep.mubr.f32.mxu0 0.0
        %5065 = vmatmul.mubr.f32.gmra.mrb[0].mxu0 %v4888
        %v5066 = vpop.f32.mrb[0].mxu0
        %v5067 = vadd.f32 0.0, %v5066
        %v5068 = vpop.f32.mrb[0].mxu0
        %5069 = vmatprep.mubr.f32.mxu0 0.0
        %5070 = vmatmul.mubr.f32.gmra.mrb[0].mxu0 %v4891
        %v5071 = vpop.f32.mrb[0].mxu0
        %v5072 = vadd.f32 0.0, %v5071
        %v5073 = vpop.f32.mrb[0].mxu0
        %5074 = vmatprep.mubr.f32.mxu0 0.0
        %5075 = vmatmul.mubr.f32.gmra.mrb[0].mxu0 %v4894
        %v5076 = vpop.f32.mrb[0].mxu0
        %v5077 = vadd.f32 0.0, %v5076
        %v5078 = vpop.f32.mrb[0].mxu0
        %5079 = vmatprep.mubr.f32.mxu0 0.0
        %5080 = vmatmul.mubr.f32.gmra.mrb[0].mxu0 %v4897
        %v5081 = vpop.f32.mrb[0].mxu0
        %v5082 = vadd.f32 0.0, %v5081
        %v5083 = vpop.f32.mrb[0].mxu0
        %5084 = vmatprep.mubr.f32.mxu0 0.0
        %5085 = vmatmul.mubr.f32.gmra.mrb[0].mxu0 %v4900
        %v5086 = vpop.f32.mrb[0].mxu0
        %v5087 = vadd.f32 0.0, %v5086
        %v5088 = vpop.f32.mrb[0].mxu0
        %5089 = vmatprep.mubr.f32.mxu0 0.0
        %5090 = vmatmul.mubr.f32.gmra.mrb[0].mxu0 %v4903
        %v5091 = vpop.f32.mrb[0].mxu0
        %v5092 = vadd.f32 0.0, %v5091
        %v5093 = vpop.f32.mrb[0].mxu0
        %5094 = vmatprep.mubr.f32.mxu0 0.0
        %5095 = vmatmul.mubr.f32.gmra.mrb[0].mxu0 %v4906
        %v5096 = vpop.f32.mrb[0].mxu0
        %v5097 = vadd.f32 0.0, %v5096
        %v5098 = vpop.f32.mrb[0].mxu0
        %5099 = vmatprep.mubr.f32.mxu0 0.0
        %5100 = vmatmul.mubr.f32.gmra.mrb[0].mxu0 %v4909
        %v5101 = vpop.f32.mrb[0].mxu0
        %v5102 = vadd.f32 0.0, %v5101
        %v5103 = vpop.f32.mrb[0].mxu0
        %5104 = vmatprep.mubr.f32.mxu0 0.0
        %5105 = vmatmul.mubr.f32.gmra.mrb[0].mxu0 %v4912
        %v5106 = vpop.f32.mrb[0].mxu0
        %v5107 = vadd.f32 0.0, %v5106
        %v5108 = vpop.f32.mrb[0].mxu0
        %5109 = vmatprep.mubr.f32.mxu0 0.0
        %5110 = vmatmul.mubr.f32.gmra.mrb[0].mxu0 %v4915
        %v5111 = vpop.f32.mrb[0].mxu0
        %v5112 = vadd.f32 0.0, %v5111
        %v5113 = vpop.f32.mrb[0].mxu0
        %5114 = vmatprep.mubr.f32.mxu0 0.0
        %5115 = vmatmul.mubr.f32.gmra.mrb[0].mxu0 %v4918
        %v5116 = vpop.f32.mrb[0].mxu0
        %v5117 = vadd.f32 0.0, %v5116
        %v5118 = vpop.f32.mrb[0].mxu0
        %5119 = vmatprep.mubr.f32.mxu0 0.0
        %5120 = vmatmul.mubr.f32.gmra.mrb[0].mxu0 %v4921
        %v5121 = vpop.f32.mrb[0].mxu0
        %v5122 = vadd.f32 0.0, %v5121
        %v5123 = vpop.f32.mrb[0].mxu0
        %5124 = vmatprep.mubr.f32.mxu0 0.0
        %5125 = vmatmul.mubr.f32.gmra.mrb[0].mxu0 %v4924
        %v5126 = vpop.f32.mrb[0].mxu0
        %v5127 = vadd.f32 0.0, %v5126
        %v5128 = vpop.f32.mrb[0].mxu0
        %5129 = vmatprep.mubr.f32.mxu0 0.0
        %5130 = vmatmul.mubr.f32.gmra.mrb[0].mxu0 %v4927
        %v5131 = vpop.f32.mrb[0].mxu0
        %v5132 = vadd.f32 0.0, %v5131
        %v5133 = vpop.f32.mrb[0].mxu0
        %5134 = vmatprep.mubr.f32.mxu0 0.0
        %5135 = vmatmul.mubr.f32.gmra.mrb[0].mxu0 %v4930
        %v5136 = vpop.f32.mrb[0].mxu0
        %v5137 = vadd.f32 0.0, %v5136
        %v5138 = vpop.f32.mrb[0].mxu0
        %5139 = vmatprep.mubr.f32.mxu0 0.0
        %5140 = vmatmul.mubr.f32.gmra.mrb[0].mxu0 %v4933
        %v5141 = vpop.f32.mrb[0].mxu0
        %v5142 = vadd.f32 0.0, %v5141
        %v5143 = vpop.f32.mrb[0].mxu0
        %5144 = vmatprep.mubr.f32.mxu0 0.0
        %5145 = vmatmul.mubr.f32.gmra.mrb[0].mxu0 %v4936
        %v5146 = vpop.f32.mrb[0].mxu0
        %v5147 = vadd.f32 0.0, %v5146
        %v5148 = vpop.f32.mrb[0].mxu0
        %5149 = vmatprep.mubr.f32.mxu0 0.0
        %5150 = vmatmul.mubr.f32.gmra.mrb[0].mxu0 %v4939
        %v5151 = vpop.f32.mrb[0].mxu0
        %v5152 = vadd.f32 0.0, %v5151
        %v5153 = vpop.f32.mrb[0].mxu0
        %5154 = vmatprep.mubr.f32.mxu0 0.0
        %5155 = vmatmul.mubr.f32.gmra.mrb[0].mxu0 %v4942
        %v5156 = vpop.f32.mrb[0].mxu0
        %v5157 = vadd.f32 0.0, %v5156
        %v5158 = vpop.f32.mrb[0].mxu0
        %5159 = vmatprep.mubr.f32.mxu0 0.0
        %5160 = vmatmul.mubr.f32.gmra.mrb[0].mxu0 %v4945
        %v5161 = vpop.f32.mrb[0].mxu0
        %v5162 = vadd.f32 0.0, %v5161
        %v5163 = vpop.f32.mrb[0].mxu0
        %5164 = vmatprep.mubr.f32.mxu0 0.0
        %5165 = vmatmul.mubr.f32.gmra.mrb[0].mxu0 %v4948
        %v5166 = vpop.f32.mrb[0].mxu0
        %v5167 = vadd.f32 0.0, %v5166
        %v5168 = vpop.f32.mrb[0].mxu0
        %5169 = vmatprep.mubr.f32.mxu0 0.0
        %5170 = vmatmul.mubr.f32.gmra.mrb[0].mxu0 %v4951
        %v5171 = vpop.f32.mrb[0].mxu0
        %v5172 = vadd.f32 0.0, %v5171
        %v5173 = vpop.f32.mrb[0].mxu0
        %5174 = vmatprep.mubr.f32.mxu0 0.0
        %5175 = vmatmul.mubr.f32.gmra.mrb[0].mxu0 %v4954
        %v5176 = vpop.f32.mrb[0].mxu0
        %v5177 = vadd.f32 0.0, %v5176
        %v5178 = vpop.f32.mrb[0].mxu0
        %5179 = vmatprep.mubr.f32.mxu0 0.0
        %5180 = vmatmul.mubr.f32.gmra.mrb[0].mxu0 %v4957
        %v5181 = vpop.f32.mrb[0].mxu0
        %v5182 = vadd.f32 0.0, %v5181
        %v5183 = vpop.f32.mrb[0].mxu0
        %5184 = vmatprep.mubr.f32.mxu0 0.0
        %5185 = vmatmul.mubr.f32.gmra.mrb[0].mxu0 %v4960
        %v5186 = vpop.f32.mrb[0].mxu0
        %v5187 = vadd.f32 0.0, %v5186
        %v5188 = vpop.f32.mrb[0].mxu0
        %5189 = vdwg.mxu0
        %v5190 = vadd.f32 %v4798, %v5032
        %v5191 = vadd.f32 %v4799, %v5037
        %v5192 = vadd.f32 %v4800, %v5042
        %v5193 = vadd.f32 %v4801, %v5047
        %v5194 = vadd.f32 %v4802, %v5052
        %v5195 = vadd.f32 %v4803, %v5057
        %v5196 = vadd.f32 %v4804, %v5062
        %v5197 = vadd.f32 %v4805, %v5067
        %v5198 = vadd.f32 %v4806, %v5072
        %v5199 = vadd.f32 %v4807, %v5077
        %v5200 = vadd.f32 %v4808, %v5082
        %v5201 = vadd.f32 %v4809, %v5087
        %v5202 = vadd.f32 %v4810, %v5092
        %v5203 = vadd.f32 %v4811, %v5097
        %v5204 = vadd.f32 %v4812, %v5102
        %v5205 = vadd.f32 %v4813, %v5107
        %v5206 = vadd.f32 %v4814, %v5112
        %v5207 = vadd.f32 %v4815, %v5117
        %v5208 = vadd.f32 %v4816, %v5122
        %v5209 = vadd.f32 %v4817, %v5127
        %v5210 = vadd.f32 %v4818, %v5132
        %v5211 = vadd.f32 %v4819, %v5137
        %v5212 = vadd.f32 %v4820, %v5142
        %v5213 = vadd.f32 %v4821, %v5147
        %v5214 = vadd.f32 %v4822, %v5152
        %v5215 = vadd.f32 %v4823, %v5157
        %v5216 = vadd.f32 %v4824, %v5162
        %v5217 = vadd.f32 %v4825, %v5167
        %v5218 = vadd.f32 %v4826, %v5172
        %v5219 = vadd.f32 %v4827, %v5177
        %v5220 = vadd.f32 %v4828, %v5182
        %v5221 = vadd.f32 %v4829, %v5187
        %v5222 = vld [vmem:[%s4831 + $0x2] sm:$0xff]
        %v5223 = vld [vmem:[%s4831 + $0x12] sm:$0xff]
        %v5224 = vld [vmem:[%s4831 + $0x22] sm:$0xff]
        %v5225 = vld [vmem:[%s4831 + $0x32] sm:$0xff]
        %v5226 = vld [vmem:[%s4831 + $0x42] sm:$0xff]
        %v5227 = vld [vmem:[%s4831 + $0x52] sm:$0xff]
        %v5228 = vld [vmem:[%s4831 + $0x62] sm:$0xff]
        %v5229 = vld [vmem:[%s4831 + $0x72] sm:$0xff]
        %v5230 = vld [vmem:[%s4831 + $0xc2] sm:$0xff]
        %v5231 = vld [vmem:[%s4831 + $0xd2] sm:$0xff]
        %v5232 = vld [vmem:[%s4831 + $0xe2] sm:$0xff]
        %v5233 = vld [vmem:[%s4831 + $0xf2] sm:$0xff]
        %v5234 = vld [vmem:[%s4831 + $0x102] sm:$0xff]
        %v5235 = vld [vmem:[%s4831 + $0x112] sm:$0xff]
        %v5236 = vld [vmem:[%s4831 + $0x122] sm:$0xff]
        %v5237 = vld [vmem:[%s4831 + $0x132] sm:$0xff]
        %v5238 = vld [vmem:[%s4831 + $0x182] sm:$0xff]
        %v5239 = vld [vmem:[%s4831 + $0x192] sm:$0xff]
        %v5240 = vld [vmem:[%s4831 + $0x1a2] sm:$0xff]
        %v5241 = vld [vmem:[%s4831 + $0x1b2] sm:$0xff]
        %v5242 = vld [vmem:[%s4831 + $0x1c2] sm:$0xff]
        %v5243 = vld [vmem:[%s4831 + $0x1d2] sm:$0xff]
        %v5244 = vld [vmem:[%s4831 + $0x1e2] sm:$0xff]
        %v5245 = vld [vmem:[%s4831 + $0x1f2] sm:$0xff]
        %v5246 = vld [vmem:[%s4831 + $0x242] sm:$0xff]
        %v5247 = vld [vmem:[%s4831 + $0x252] sm:$0xff]
        %v5248 = vld [vmem:[%s4831 + $0x262] sm:$0xff]
        %v5249 = vld [vmem:[%s4831 + $0x272] sm:$0xff]
        %v5250 = vld [vmem:[%s4831 + $0x282] sm:$0xff]
        %v5251 = vld [vmem:[%s4831 + $0x292] sm:$0xff]
        %v5252 = vld [vmem:[%s4831 + $0x2a2] sm:$0xff]
        %v5253 = vld [vmem:[%s4831 + $0x2b2] sm:$0xff]
        %s5254 = scalar_lea.vmem %s1, 52
        %v5255 = vld [vmem:[%s5254] sm:$0xf]
        %v5257 = vsel %vm273, %v5222, 0
        %v5260 = vsel %vm273, %v5223, 0
        %v5263 = vsel %vm273, %v5224, 0
        %v5266 = vsel %vm273, %v5225, 0
        %v5269 = vsel %vm273, %v5226, 0
        %v5272 = vsel %vm273, %v5227, 0
        %v5275 = vsel %vm273, %v5228, 0
        %v5278 = vsel %vm273, %v5229, 0
        %v5281 = vsel %vm273, %v5230, 0
        %v5284 = vsel %vm273, %v5231, 0
        %v5287 = vsel %vm273, %v5232, 0
        %v5290 = vsel %vm273, %v5233, 0
        %v5293 = vsel %vm273, %v5234, 0
        %v5296 = vsel %vm273, %v5235, 0
        %v5299 = vsel %vm273, %v5236, 0
        %v5302 = vsel %vm273, %v5237, 0
        %v5305 = vsel %vm273, %v5238, 0
        %v5308 = vsel %vm273, %v5239, 0
        %v5311 = vsel %vm273, %v5240, 0
        %v5314 = vsel %vm273, %v5241, 0
        %v5317 = vsel %vm273, %v5242, 0
        %v5320 = vsel %vm273, %v5243, 0
        %v5323 = vsel %vm273, %v5244, 0
        %v5326 = vsel %vm273, %v5245, 0
        %v5329 = vsel %vm273, %v5246, 0
        %v5332 = vsel %vm273, %v5247, 0
        %v5335 = vsel %vm273, %v5248, 0
        %v5338 = vsel %vm273, %v5249, 0
        %v5341 = vsel %vm273, %v5250, 0
        %v5344 = vsel %vm273, %v5251, 0
        %v5347 = vsel %vm273, %v5252, 0
        %v5350 = vsel %vm273, %v5253, 0
        %v5353 = vsel %vm370, %v5255, 0
        %5355 = vmatprep.subr.mxu0 0.0
        %5356 = vmatpush1.msra.mxu0 %v5353
        %5357 = vmatprep.subr.mxu0 0.0
        %5358 = vmatpush1.msra.mxu0 0.0
        %5359 = vmatprep.subr.mxu0 0.0
        %5360 = vmatpush1.msra.mxu0 0.0
        %5361 = vmatprep.subr.mxu0 0.0
        %5362 = vmatpush1.msra.mxu0 0.0
        %5363 = vmatprep.subr.mxu0 0.0
        %5364 = vmatpush1.msra.mxu0 0.0
        %5365 = vmatprep.subr.mxu0 0.0
        %5366 = vmatpush1.msra.mxu0 0.0
        %5367 = vmatprep.subr.mxu0 0.0
        %5368 = vmatpush1.msra.mxu0 0.0
        %5369 = vmatprep.subr.mxu0 0.0
        %5370 = vmatpush1.msra.mxu0 0.0
        %5371 = vmatprep.subr.mxu0 0.0
        %5372 = vmatpush1.msra.mxu0 0.0
        %5373 = vmatprep.subr.mxu0 0.0
        %5374 = vmatpush1.msra.mxu0 0.0
        %5375 = vmatprep.subr.mxu0 0.0
        %5376 = vmatpush1.msra.mxu0 0.0
        %5377 = vmatprep.subr.mxu0 0.0
        %5378 = vmatpush1.msra.mxu0 0.0
        %5379 = vmatprep.subr.mxu0 0.0
        %5380 = vmatpush1.msra.mxu0 0.0
        %5381 = vmatprep.subr.mxu0 0.0
        %5382 = vmatpush1.msra.mxu0 0.0
        %5383 = vmatprep.subr.mxu0 0.0
        %5384 = vmatpush1.msra.mxu0 0.0
        %5385 = vmatprep.subr.mxu0 0.0
        %5386 = vmatpush1.msra.mxu0 0.0
        %5387 = vmatprep.subr.mxu0 0.0
        %5388 = vmatpush1.msra.mxu0 0.0
        %5389 = vmatprep.subr.mxu0 0.0
        %5390 = vmatpush1.msra.mxu0 0.0
        %5391 = vmatprep.subr.mxu0 0.0
        %5392 = vmatpush1.msra.mxu0 0.0
        %5393 = vmatprep.subr.mxu0 0.0
        %5394 = vmatpush1.msra.mxu0 0.0
        %5395 = vmatprep.subr.mxu0 0.0
        %5396 = vmatpush1.msra.mxu0 0.0
        %5397 = vmatprep.subr.mxu0 0.0
        %5398 = vmatpush1.msra.mxu0 0.0
        %5399 = vmatprep.subr.mxu0 0.0
        %5400 = vmatpush1.msra.mxu0 0.0
        %5401 = vmatprep.subr.mxu0 0.0
        %5402 = vmatpush1.msra.mxu0 0.0
        %5403 = vmatprep.subr.mxu0 0.0
        %5404 = vmatpush1.msra.mxu0 0.0
        %5405 = vmatprep.subr.mxu0 0.0
        %5406 = vmatpush1.msra.mxu0 0.0
        %5407 = vmatprep.subr.mxu0 0.0
        %5408 = vmatpush1.msra.mxu0 0.0
        %5409 = vmatprep.subr.mxu0 0.0
        %5410 = vmatpush1.msra.mxu0 0.0
        %5411 = vmatprep.subr.mxu0 0.0
        %5412 = vmatpush1.msra.mxu0 0.0
        %5413 = vmatprep.subr.mxu0 0.0
        %5414 = vmatpush1.msra.mxu0 0.0
        %5415 = vmatprep.subr.mxu0 0.0
        %5416 = vmatpush1.msra.mxu0 0.0
        %5417 = vmatprep.subr.mxu0 0.0
        %5418 = vmatpush1.msra.mxu0 0.0
        %5419 = vmatprep.mubr.f32.mxu0 0.0
        %5420 = vmatmul.mubr.f32.gmra.mrb[0].mxu0 %v5257
        %v5421 = vpop.f32.mrb[0].mxu0
        %v5422 = vadd.f32 0.0, %v5421
        %v5423 = vpop.f32.mrb[0].mxu0
        %5424 = vmatprep.mubr.f32.mxu0 0.0
        %5425 = vmatmul.mubr.f32.gmra.mrb[0].mxu0 %v5260
        %v5426 = vpop.f32.mrb[0].mxu0
        %v5427 = vadd.f32 0.0, %v5426
        %v5428 = vpop.f32.mrb[0].mxu0
        %5429 = vmatprep.mubr.f32.mxu0 0.0
        %5430 = vmatmul.mubr.f32.gmra.mrb[0].mxu0 %v5263
        %v5431 = vpop.f32.mrb[0].mxu0
        %v5432 = vadd.f32 0.0, %v5431
        %v5433 = vpop.f32.mrb[0].mxu0
        %5434 = vmatprep.mubr.f32.mxu0 0.0
        %5435 = vmatmul.mubr.f32.gmra.mrb[0].mxu0 %v5266
        %v5436 = vpop.f32.mrb[0].mxu0
        %v5437 = vadd.f32 0.0, %v5436
        %v5438 = vpop.f32.mrb[0].mxu0
        %5439 = vmatprep.mubr.f32.mxu0 0.0
        %5440 = vmatmul.mubr.f32.gmra.mrb[0].mxu0 %v5269
        %v5441 = vpop.f32.mrb[0].mxu0
        %v5442 = vadd.f32 0.0, %v5441
        %v5443 = vpop.f32.mrb[0].mxu0
        %5444 = vmatprep.mubr.f32.mxu0 0.0
        %5445 = vmatmul.mubr.f32.gmra.mrb[0].mxu0 %v5272
        %v5446 = vpop.f32.mrb[0].mxu0
        %v5447 = vadd.f32 0.0, %v5446
        %v5448 = vpop.f32.mrb[0].mxu0
        %5449 = vmatprep.mubr.f32.mxu0 0.0
        %5450 = vmatmul.mubr.f32.gmra.mrb[0].mxu0 %v5275
        %v5451 = vpop.f32.mrb[0].mxu0
        %v5452 = vadd.f32 0.0, %v5451
        %v5453 = vpop.f32.mrb[0].mxu0
        %5454 = vmatprep.mubr.f32.mxu0 0.0
        %5455 = vmatmul.mubr.f32.gmra.mrb[0].mxu0 %v5278
        %v5456 = vpop.f32.mrb[0].mxu0
        %v5457 = vadd.f32 0.0, %v5456
        %v5458 = vpop.f32.mrb[0].mxu0
        %5459 = vmatprep.mubr.f32.mxu0 0.0
        %5460 = vmatmul.mubr.f32.gmra.mrb[0].mxu0 %v5281
        %v5461 = vpop.f32.mrb[0].mxu0
        %v5462 = vadd.f32 0.0, %v5461
        %v5463 = vpop.f32.mrb[0].mxu0
        %5464 = vmatprep.mubr.f32.mxu0 0.0
        %5465 = vmatmul.mubr.f32.gmra.mrb[0].mxu0 %v5284
        %v5466 = vpop.f32.mrb[0].mxu0
        %v5467 = vadd.f32 0.0, %v5466
        %v5468 = vpop.f32.mrb[0].mxu0
        %5469 = vmatprep.mubr.f32.mxu0 0.0
        %5470 = vmatmul.mubr.f32.gmra.mrb[0].mxu0 %v5287
        %v5471 = vpop.f32.mrb[0].mxu0
        %v5472 = vadd.f32 0.0, %v5471
        %v5473 = vpop.f32.mrb[0].mxu0
        %5474 = vmatprep.mubr.f32.mxu0 0.0
        %5475 = vmatmul.mubr.f32.gmra.mrb[0].mxu0 %v5290
        %v5476 = vpop.f32.mrb[0].mxu0
        %v5477 = vadd.f32 0.0, %v5476
        %v5478 = vpop.f32.mrb[0].mxu0
        %5479 = vmatprep.mubr.f32.mxu0 0.0
        %5480 = vmatmul.mubr.f32.gmra.mrb[0].mxu0 %v5293
        %v5481 = vpop.f32.mrb[0].mxu0
        %v5482 = vadd.f32 0.0, %v5481
        %v5483 = vpop.f32.mrb[0].mxu0
        %5484 = vmatprep.mubr.f32.mxu0 0.0
        %5485 = vmatmul.mubr.f32.gmra.mrb[0].mxu0 %v5296
        %v5486 = vpop.f32.mrb[0].mxu0
        %v5487 = vadd.f32 0.0, %v5486
        %v5488 = vpop.f32.mrb[0].mxu0
        %5489 = vmatprep.mubr.f32.mxu0 0.0
        %5490 = vmatmul.mubr.f32.gmra.mrb[0].mxu0 %v5299
        %v5491 = vpop.f32.mrb[0].mxu0
        %v5492 = vadd.f32 0.0, %v5491
        %v5493 = vpop.f32.mrb[0].mxu0
        %5494 = vmatprep.mubr.f32.mxu0 0.0
        %5495 = vmatmul.mubr.f32.gmra.mrb[0].mxu0 %v5302
        %v5496 = vpop.f32.mrb[0].mxu0
        %v5497 = vadd.f32 0.0, %v5496
        %v5498 = vpop.f32.mrb[0].mxu0
        %5499 = vmatprep.mubr.f32.mxu0 0.0
        %5500 = vmatmul.mubr.f32.gmra.mrb[0].mxu0 %v5305
        %v5501 = vpop.f32.mrb[0].mxu0
        %v5502 = vadd.f32 0.0, %v5501
        %v5503 = vpop.f32.mrb[0].mxu0
        %5504 = vmatprep.mubr.f32.mxu0 0.0
        %5505 = vmatmul.mubr.f32.gmra.mrb[0].mxu0 %v5308
        %v5506 = vpop.f32.mrb[0].mxu0
        %v5507 = vadd.f32 0.0, %v5506
        %v5508 = vpop.f32.mrb[0].mxu0
        %5509 = vmatprep.mubr.f32.mxu0 0.0
        %5510 = vmatmul.mubr.f32.gmra.mrb[0].mxu0 %v5311
        %v5511 = vpop.f32.mrb[0].mxu0
        %v5512 = vadd.f32 0.0, %v5511
        %v5513 = vpop.f32.mrb[0].mxu0
        %5514 = vmatprep.mubr.f32.mxu0 0.0
        %5515 = vmatmul.mubr.f32.gmra.mrb[0].mxu0 %v5314
        %v5516 = vpop.f32.mrb[0].mxu0
        %v5517 = vadd.f32 0.0, %v5516
        %v5518 = vpop.f32.mrb[0].mxu0
        %5519 = vmatprep.mubr.f32.mxu0 0.0
        %5520 = vmatmul.mubr.f32.gmra.mrb[0].mxu0 %v5317
        %v5521 = vpop.f32.mrb[0].mxu0
        %v5522 = vadd.f32 0.0, %v5521
        %v5523 = vpop.f32.mrb[0].mxu0
        %5524 = vmatprep.mubr.f32.mxu0 0.0
        %5525 = vmatmul.mubr.f32.gmra.mrb[0].mxu0 %v5320
        %v5526 = vpop.f32.mrb[0].mxu0
        %v5527 = vadd.f32 0.0, %v5526
        %v5528 = vpop.f32.mrb[0].mxu0
        %5529 = vmatprep.mubr.f32.mxu0 0.0
        %5530 = vmatmul.mubr.f32.gmra.mrb[0].mxu0 %v5323
        %v5531 = vpop.f32.mrb[0].mxu0
        %v5532 = vadd.f32 0.0, %v5531
        %v5533 = vpop.f32.mrb[0].mxu0
        %5534 = vmatprep.mubr.f32.mxu0 0.0
        %5535 = vmatmul.mubr.f32.gmra.mrb[0].mxu0 %v5326
        %v5536 = vpop.f32.mrb[0].mxu0
        %v5537 = vadd.f32 0.0, %v5536
        %v5538 = vpop.f32.mrb[0].mxu0
        %5539 = vmatprep.mubr.f32.mxu0 0.0
        %5540 = vmatmul.mubr.f32.gmra.mrb[0].mxu0 %v5329
        %v5541 = vpop.f32.mrb[0].mxu0
        %v5542 = vadd.f32 0.0, %v5541
        %v5543 = vpop.f32.mrb[0].mxu0
        %5544 = vmatprep.mubr.f32.mxu0 0.0
        %5545 = vmatmul.mubr.f32.gmra.mrb[0].mxu0 %v5332
        %v5546 = vpop.f32.mrb[0].mxu0
        %v5547 = vadd.f32 0.0, %v5546
        %v5548 = vpop.f32.mrb[0].mxu0
        %5549 = vmatprep.mubr.f32.mxu0 0.0
        %5550 = vmatmul.mubr.f32.gmra.mrb[0].mxu0 %v5335
        %v5551 = vpop.f32.mrb[0].mxu0
        %v5552 = vadd.f32 0.0, %v5551
        %v5553 = vpop.f32.mrb[0].mxu0
        %5554 = vmatprep.mubr.f32.mxu0 0.0
        %5555 = vmatmul.mubr.f32.gmra.mrb[0].mxu0 %v5338
        %v5556 = vpop.f32.mrb[0].mxu0
        %v5557 = vadd.f32 0.0, %v5556
        %v5558 = vpop.f32.mrb[0].mxu0
        %5559 = vmatprep.mubr.f32.mxu0 0.0
        %5560 = vmatmul.mubr.f32.gmra.mrb[0].mxu0 %v5341
        %v5561 = vpop.f32.mrb[0].mxu0
        %v5562 = vadd.f32 0.0, %v5561
        %v5563 = vpop.f32.mrb[0].mxu0
        %5564 = vmatprep.mubr.f32.mxu0 0.0
        %5565 = vmatmul.mubr.f32.gmra.mrb[0].mxu0 %v5344
        %v5566 = vpop.f32.mrb[0].mxu0
        %v5567 = vadd.f32 0.0, %v5566
        %v5568 = vpop.f32.mrb[0].mxu0
        %5569 = vmatprep.mubr.f32.mxu0 0.0
        %5570 = vmatmul.mubr.f32.gmra.mrb[0].mxu0 %v5347
        %v5571 = vpop.f32.mrb[0].mxu0
        %v5572 = vadd.f32 0.0, %v5571
        %v5573 = vpop.f32.mrb[0].mxu0
        %5574 = vmatprep.mubr.f32.mxu0 0.0
        %5575 = vmatmul.mubr.f32.gmra.mrb[0].mxu0 %v5350
        %v5576 = vpop.f32.mrb[0].mxu0
        %v5577 = vadd.f32 0.0, %v5576
        %v5578 = vpop.f32.mrb[0].mxu0
        %5579 = vdwg.mxu0
        %v5580 = vadd.f32 %v5190, %v5422
        %v5581 = vadd.f32 %v5191, %v5427
        %v5582 = vadd.f32 %v5192, %v5432
        %v5583 = vadd.f32 %v5193, %v5437
        %v5584 = vadd.f32 %v5194, %v5442
        %v5585 = vadd.f32 %v5195, %v5447
        %v5586 = vadd.f32 %v5196, %v5452
        %v5587 = vadd.f32 %v5197, %v5457
        %v5588 = vadd.f32 %v5198, %v5462
        %v5589 = vadd.f32 %v5199, %v5467
        %v5590 = vadd.f32 %v5200, %v5472
        %v5591 = vadd.f32 %v5201, %v5477
        %v5592 = vadd.f32 %v5202, %v5482
        %v5593 = vadd.f32 %v5203, %v5487
        %v5594 = vadd.f32 %v5204, %v5492
        %v5595 = vadd.f32 %v5205, %v5497
        %v5596 = vadd.f32 %v5206, %v5502
        %v5597 = vadd.f32 %v5207, %v5507
        %v5598 = vadd.f32 %v5208, %v5512
        %v5599 = vadd.f32 %v5209, %v5517
        %v5600 = vadd.f32 %v5210, %v5522
        %v5601 = vadd.f32 %v5211, %v5527
        %v5602 = vadd.f32 %v5212, %v5532
        %v5603 = vadd.f32 %v5213, %v5537
        %v5604 = vadd.f32 %v5214, %v5542
        %v5605 = vadd.f32 %v5215, %v5547
        %v5606 = vadd.f32 %v5216, %v5552
        %v5607 = vadd.f32 %v5217, %v5557
        %v5608 = vadd.f32 %v5218, %v5562
        %v5609 = vadd.f32 %v5219, %v5567
        %v5610 = vadd.f32 %v5220, %v5572
        %v5611 = vadd.f32 %v5221, %v5577
        %v5612 = vld [vmem:[%s4831 + $0x4] sm:$0xff]
        %v5613 = vld [vmem:[%s4831 + $0x14] sm:$0xff]
        %v5614 = vld [vmem:[%s4831 + $0x24] sm:$0xff]
        %v5615 = vld [vmem:[%s4831 + $0x34] sm:$0xff]
        %v5616 = vld [vmem:[%s4831 + $0x44] sm:$0xff]
        %v5617 = vld [vmem:[%s4831 + $0x54] sm:$0xff]
        %v5618 = vld [vmem:[%s4831 + $0x64] sm:$0xff]
        %v5619 = vld [vmem:[%s4831 + $0x74] sm:$0xff]
        %v5620 = vld [vmem:[%s4831 + $0xc4] sm:$0xff]
        %v5621 = vld [vmem:[%s4831 + $0xd4] sm:$0xff]
        %v5622 = vld [vmem:[%s4831 + $0xe4] sm:$0xff]
        %v5623 = vld [vmem:[%s4831 + $0xf4] sm:$0xff]
        %v5624 = vld [vmem:[%s4831 + $0x104] sm:$0xff]
        %v5625 = vld [vmem:[%s4831 + $0x114] sm:$0xff]
        %v5626 = vld [vmem:[%s4831 + $0x124] sm:$0xff]
        %v5627 = vld [vmem:[%s4831 + $0x134] sm:$0xff]
        %v5628 = vld [vmem:[%s4831 + $0x184] sm:$0xff]
        %v5629 = vld [vmem:[%s4831 + $0x194] sm:$0xff]
        %v5630 = vld [vmem:[%s4831 + $0x1a4] sm:$0xff]
        %v5631 = vld [vmem:[%s4831 + $0x1b4] sm:$0xff]
        %v5632 = vld [vmem:[%s4831 + $0x1c4] sm:$0xff]
        %v5633 = vld [vmem:[%s4831 + $0x1d4] sm:$0xff]
        %v5634 = vld [vmem:[%s4831 + $0x1e4] sm:$0xff]
        %v5635 = vld [vmem:[%s4831 + $0x1f4] sm:$0xff]
        %v5636 = vld [vmem:[%s4831 + $0x244] sm:$0xff]
        %v5637 = vld [vmem:[%s4831 + $0x254] sm:$0xff]
        %v5638 = vld [vmem:[%s4831 + $0x264] sm:$0xff]
        %v5639 = vld [vmem:[%s4831 + $0x274] sm:$0xff]
        %v5640 = vld [vmem:[%s4831 + $0x284] sm:$0xff]
        %v5641 = vld [vmem:[%s4831 + $0x294] sm:$0xff]
        %v5642 = vld [vmem:[%s4831 + $0x2a4] sm:$0xff]
        %v5643 = vld [vmem:[%s4831 + $0x2b4] sm:$0xff]
        %s5644 = scalar_lea.vmem %s1, 56
        %v5645 = vld [vmem:[%s5644] sm:$0xf]
        %v5647 = vsel %vm273, %v5612, 0
        %v5650 = vsel %vm273, %v5613, 0
        %v5653 = vsel %vm273, %v5614, 0
        %v5656 = vsel %vm273, %v5615, 0
        %v5659 = vsel %vm273, %v5616, 0
        %v5662 = vsel %vm273, %v5617, 0
        %v5665 = vsel %vm273, %v5618, 0
        %v5668 = vsel %vm273, %v5619, 0
        %v5671 = vsel %vm273, %v5620, 0
        %v5674 = vsel %vm273, %v5621, 0
        %v5677 = vsel %vm273, %v5622, 0
        %v5680 = vsel %vm273, %v5623, 0
        %v5683 = vsel %vm273, %v5624, 0
        %v5686 = vsel %vm273, %v5625, 0
        %v5689 = vsel %vm273, %v5626, 0
        %v5692 = vsel %vm273, %v5627, 0
        %v5695 = vsel %vm273, %v5628, 0
        %v5698 = vsel %vm273, %v5629, 0
        %v5701 = vsel %vm273, %v5630, 0
        %v5704 = vsel %vm273, %v5631, 0
        %v5707 = vsel %vm273, %v5632, 0
        %v5710 = vsel %vm273, %v5633, 0
        %v5713 = vsel %vm273, %v5634, 0
        %v5716 = vsel %vm273, %v5635, 0
        %v5719 = vsel %vm273, %v5636, 0
        %v5722 = vsel %vm273, %v5637, 0
        %v5725 = vsel %vm273, %v5638, 0
        %v5728 = vsel %vm273, %v5639, 0
        %v5731 = vsel %vm273, %v5640, 0
        %v5734 = vsel %vm273, %v5641, 0
        %v5737 = vsel %vm273, %v5642, 0
        %v5740 = vsel %vm273, %v5643, 0
        %v5743 = vsel %vm370, %v5645, 0
        %5745 = vmatprep.subr.mxu0 0.0
        %5746 = vmatpush1.msra.mxu0 %v5743
        %5747 = vmatprep.subr.mxu0 0.0
        %5748 = vmatpush1.msra.mxu0 0.0
        %5749 = vmatprep.subr.mxu0 0.0
        %5750 = vmatpush1.msra.mxu0 0.0
        %5751 = vmatprep.subr.mxu0 0.0
        %5752 = vmatpush1.msra.mxu0 0.0
        %5753 = vmatprep.subr.mxu0 0.0
        %5754 = vmatpush1.msra.mxu0 0.0
        %5755 = vmatprep.subr.mxu0 0.0
        %5756 = vmatpush1.msra.mxu0 0.0
        %5757 = vmatprep.subr.mxu0 0.0
        %5758 = vmatpush1.msra.mxu0 0.0
        %5759 = vmatprep.subr.mxu0 0.0
        %5760 = vmatpush1.msra.mxu0 0.0
        %5761 = vmatprep.subr.mxu0 0.0
        %5762 = vmatpush1.msra.mxu0 0.0
        %5763 = vmatprep.subr.mxu0 0.0
        %5764 = vmatpush1.msra.mxu0 0.0
        %5765 = vmatprep.subr.mxu0 0.0
        %5766 = vmatpush1.msra.mxu0 0.0
        %5767 = vmatprep.subr.mxu0 0.0
        %5768 = vmatpush1.msra.mxu0 0.0
        %5769 = vmatprep.subr.mxu0 0.0
        %5770 = vmatpush1.msra.mxu0 0.0
        %5771 = vmatprep.subr.mxu0 0.0
        %5772 = vmatpush1.msra.mxu0 0.0
        %5773 = vmatprep.subr.mxu0 0.0
        %5774 = vmatpush1.msra.mxu0 0.0
        %5775 = vmatprep.subr.mxu0 0.0
        %5776 = vmatpush1.msra.mxu0 0.0
        %5777 = vmatprep.subr.mxu0 0.0
        %5778 = vmatpush1.msra.mxu0 0.0
        %5779 = vmatprep.subr.mxu0 0.0
        %5780 = vmatpush1.msra.mxu0 0.0
        %5781 = vmatprep.subr.mxu0 0.0
        %5782 = vmatpush1.msra.mxu0 0.0
        %5783 = vmatprep.subr.mxu0 0.0
        %5784 = vmatpush1.msra.mxu0 0.0
        %5785 = vmatprep.subr.mxu0 0.0
        %5786 = vmatpush1.msra.mxu0 0.0
        %5787 = vmatprep.subr.mxu0 0.0
        %5788 = vmatpush1.msra.mxu0 0.0
        %5789 = vmatprep.subr.mxu0 0.0
        %5790 = vmatpush1.msra.mxu0 0.0
        %5791 = vmatprep.subr.mxu0 0.0
        %5792 = vmatpush1.msra.mxu0 0.0
        %5793 = vmatprep.subr.mxu0 0.0
        %5794 = vmatpush1.msra.mxu0 0.0
        %5795 = vmatprep.subr.mxu0 0.0
        %5796 = vmatpush1.msra.mxu0 0.0
        %5797 = vmatprep.subr.mxu0 0.0
        %5798 = vmatpush1.msra.mxu0 0.0
        %5799 = vmatprep.subr.mxu0 0.0
        %5800 = vmatpush1.msra.mxu0 0.0
        %5801 = vmatprep.subr.mxu0 0.0
        %5802 = vmatpush1.msra.mxu0 0.0
        %5803 = vmatprep.subr.mxu0 0.0
        %5804 = vmatpush1.msra.mxu0 0.0
        %5805 = vmatprep.subr.mxu0 0.0
        %5806 = vmatpush1.msra.mxu0 0.0
        %5807 = vmatprep.subr.mxu0 0.0
        %5808 = vmatpush1.msra.mxu0 0.0
        %5809 = vmatprep.mubr.f32.mxu0 0.0
        %5810 = vmatmul.mubr.f32.gmra.mrb[0].mxu0 %v5647
        %v5811 = vpop.f32.mrb[0].mxu0
        %v5812 = vadd.f32 0.0, %v5811
        %v5813 = vpop.f32.mrb[0].mxu0
        %5814 = vmatprep.mubr.f32.mxu0 0.0
        %5815 = vmatmul.mubr.f32.gmra.mrb[0].mxu0 %v5650
        %v5816 = vpop.f32.mrb[0].mxu0
        %v5817 = vadd.f32 0.0, %v5816
        %v5818 = vpop.f32.mrb[0].mxu0
        %5819 = vmatprep.mubr.f32.mxu0 0.0
        %5820 = vmatmul.mubr.f32.gmra.mrb[0].mxu0 %v5653
        %v5821 = vpop.f32.mrb[0].mxu0
        %v5822 = vadd.f32 0.0, %v5821
        %v5823 = vpop.f32.mrb[0].mxu0
        %5824 = vmatprep.mubr.f32.mxu0 0.0
        %5825 = vmatmul.mubr.f32.gmra.mrb[0].mxu0 %v5656
        %v5826 = vpop.f32.mrb[0].mxu0
        %v5827 = vadd.f32 0.0, %v5826
        %v5828 = vpop.f32.mrb[0].mxu0
        %5829 = vmatprep.mubr.f32.mxu0 0.0
        %5830 = vmatmul.mubr.f32.gmra.mrb[0].mxu0 %v5659
        %v5831 = vpop.f32.mrb[0].mxu0
        %v5832 = vadd.f32 0.0, %v5831
        %v5833 = vpop.f32.mrb[0].mxu0
        %5834 = vmatprep.mubr.f32.mxu0 0.0
        %5835 = vmatmul.mubr.f32.gmra.mrb[0].mxu0 %v5662
        %v5836 = vpop.f32.mrb[0].mxu0
        %v5837 = vadd.f32 0.0, %v5836
        %v5838 = vpop.f32.mrb[0].mxu0
        %5839 = vmatprep.mubr.f32.mxu0 0.0
        %5840 = vmatmul.mubr.f32.gmra.mrb[0].mxu0 %v5665
        %v5841 = vpop.f32.mrb[0].mxu0
        %v5842 = vadd.f32 0.0, %v5841
        %v5843 = vpop.f32.mrb[0].mxu0
        %5844 = vmatprep.mubr.f32.mxu0 0.0
        %5845 = vmatmul.mubr.f32.gmra.mrb[0].mxu0 %v5668
        %v5846 = vpop.f32.mrb[0].mxu0
        %v5847 = vadd.f32 0.0, %v5846
        %v5848 = vpop.f32.mrb[0].mxu0
        %5849 = vmatprep.mubr.f32.mxu0 0.0
        %5850 = vmatmul.mubr.f32.gmra.mrb[0].mxu0 %v5671
        %v5851 = vpop.f32.mrb[0].mxu0
        %v5852 = vadd.f32 0.0, %v5851
        %v5853 = vpop.f32.mrb[0].mxu0
        %5854 = vmatprep.mubr.f32.mxu0 0.0
        %5855 = vmatmul.mubr.f32.gmra.mrb[0].mxu0 %v5674
        %v5856 = vpop.f32.mrb[0].mxu0
        %v5857 = vadd.f32 0.0, %v5856
        %v5858 = vpop.f32.mrb[0].mxu0
        %5859 = vmatprep.mubr.f32.mxu0 0.0
        %5860 = vmatmul.mubr.f32.gmra.mrb[0].mxu0 %v5677
        %v5861 = vpop.f32.mrb[0].mxu0
        %v5862 = vadd.f32 0.0, %v5861
        %v5863 = vpop.f32.mrb[0].mxu0
        %5864 = vmatprep.mubr.f32.mxu0 0.0
        %5865 = vmatmul.mubr.f32.gmra.mrb[0].mxu0 %v5680
        %v5866 = vpop.f32.mrb[0].mxu0
        %v5867 = vadd.f32 0.0, %v5866
        %v5868 = vpop.f32.mrb[0].mxu0
        %5869 = vmatprep.mubr.f32.mxu0 0.0
        %5870 = vmatmul.mubr.f32.gmra.mrb[0].mxu0 %v5683
        %v5871 = vpop.f32.mrb[0].mxu0
        %v5872 = vadd.f32 0.0, %v5871
        %v5873 = vpop.f32.mrb[0].mxu0
        %5874 = vmatprep.mubr.f32.mxu0 0.0
        %5875 = vmatmul.mubr.f32.gmra.mrb[0].mxu0 %v5686
        %v5876 = vpop.f32.mrb[0].mxu0
        %v5877 = vadd.f32 0.0, %v5876
        %v5878 = vpop.f32.mrb[0].mxu0
        %5879 = vmatprep.mubr.f32.mxu0 0.0
        %5880 = vmatmul.mubr.f32.gmra.mrb[0].mxu0 %v5689
        %v5881 = vpop.f32.mrb[0].mxu0
        %v5882 = vadd.f32 0.0, %v5881
        %v5883 = vpop.f32.mrb[0].mxu0
        %5884 = vmatprep.mubr.f32.mxu0 0.0
        %5885 = vmatmul.mubr.f32.gmra.mrb[0].mxu0 %v5692
        %v5886 = vpop.f32.mrb[0].mxu0
        %v5887 = vadd.f32 0.0, %v5886
        %v5888 = vpop.f32.mrb[0].mxu0
        %5889 = vmatprep.mubr.f32.mxu0 0.0
        %5890 = vmatmul.mubr.f32.gmra.mrb[0].mxu0 %v5695
        %v5891 = vpop.f32.mrb[0].mxu0
        %v5892 = vadd.f32 0.0, %v5891
        %v5893 = vpop.f32.mrb[0].mxu0
        %5894 = vmatprep.mubr.f32.mxu0 0.0
        %5895 = vmatmul.mubr.f32.gmra.mrb[0].mxu0 %v5698
        %v5896 = vpop.f32.mrb[0].mxu0
        %v5897 = vadd.f32 0.0, %v5896
        %v5898 = vpop.f32.mrb[0].mxu0
        %5899 = vmatprep.mubr.f32.mxu0 0.0
        %5900 = vmatmul.mubr.f32.gmra.mrb[0].mxu0 %v5701
        %v5901 = vpop.f32.mrb[0].mxu0
        %v5902 = vadd.f32 0.0, %v5901
        %v5903 = vpop.f32.mrb[0].mxu0
        %5904 = vmatprep.mubr.f32.mxu0 0.0
        %5905 = vmatmul.mubr.f32.gmra.mrb[0].mxu0 %v5704
        %v5906 = vpop.f32.mrb[0].mxu0
        %v5907 = vadd.f32 0.0, %v5906
        %v5908 = vpop.f32.mrb[0].mxu0
        %5909 = vmatprep.mubr.f32.mxu0 0.0
        %5910 = vmatmul.mubr.f32.gmra.mrb[0].mxu0 %v5707
        %v5911 = vpop.f32.mrb[0].mxu0
        %v5912 = vadd.f32 0.0, %v5911
        %v5913 = vpop.f32.mrb[0].mxu0
        %5914 = vmatprep.mubr.f32.mxu0 0.0
        %5915 = vmatmul.mubr.f32.gmra.mrb[0].mxu0 %v5710
        %v5916 = vpop.f32.mrb[0].mxu0
        %v5917 = vadd.f32 0.0, %v5916
        %v5918 = vpop.f32.mrb[0].mxu0
        %5919 = vmatprep.mubr.f32.mxu0 0.0
        %5920 = vmatmul.mubr.f32.gmra.mrb[0].mxu0 %v5713
        %v5921 = vpop.f32.mrb[0].mxu0
        %v5922 = vadd.f32 0.0, %v5921
        %v5923 = vpop.f32.mrb[0].mxu0
        %5924 = vmatprep.mubr.f32.mxu0 0.0
        %5925 = vmatmul.mubr.f32.gmra.mrb[0].mxu0 %v5716
        %v5926 = vpop.f32.mrb[0].mxu0
        %v5927 = vadd.f32 0.0, %v5926
        %v5928 = vpop.f32.mrb[0].mxu0
        %5929 = vmatprep.mubr.f32.mxu0 0.0
        %5930 = vmatmul.mubr.f32.gmra.mrb[0].mxu0 %v5719
        %v5931 = vpop.f32.mrb[0].mxu0
        %v5932 = vadd.f32 0.0, %v5931
        %v5933 = vpop.f32.mrb[0].mxu0
        %5934 = vmatprep.mubr.f32.mxu0 0.0
        %5935 = vmatmul.mubr.f32.gmra.mrb[0].mxu0 %v5722
        %v5936 = vpop.f32.mrb[0].mxu0
        %v5937 = vadd.f32 0.0, %v5936
        %v5938 = vpop.f32.mrb[0].mxu0
        %5939 = vmatprep.mubr.f32.mxu0 0.0
        %5940 = vmatmul.mubr.f32.gmra.mrb[0].mxu0 %v5725
        %v5941 = vpop.f32.mrb[0].mxu0
        %v5942 = vadd.f32 0.0, %v5941
        %v5943 = vpop.f32.mrb[0].mxu0
        %5944 = vmatprep.mubr.f32.mxu0 0.0
        %5945 = vmatmul.mubr.f32.gmra.mrb[0].mxu0 %v5728
        %v5946 = vpop.f32.mrb[0].mxu0
        %v5947 = vadd.f32 0.0, %v5946
        %v5948 = vpop.f32.mrb[0].mxu0
        %5949 = vmatprep.mubr.f32.mxu0 0.0
        %5950 = vmatmul.mubr.f32.gmra.mrb[0].mxu0 %v5731
        %v5951 = vpop.f32.mrb[0].mxu0
        %v5952 = vadd.f32 0.0, %v5951
        %v5953 = vpop.f32.mrb[0].mxu0
        %5954 = vmatprep.mubr.f32.mxu0 0.0
        %5955 = vmatmul.mubr.f32.gmra.mrb[0].mxu0 %v5734
        %v5956 = vpop.f32.mrb[0].mxu0
        %v5957 = vadd.f32 0.0, %v5956
        %v5958 = vpop.f32.mrb[0].mxu0
        %5959 = vmatprep.mubr.f32.mxu0 0.0
        %5960 = vmatmul.mubr.f32.gmra.mrb[0].mxu0 %v5737
        %v5961 = vpop.f32.mrb[0].mxu0
        %v5962 = vadd.f32 0.0, %v5961
        %v5963 = vpop.f32.mrb[0].mxu0
        %5964 = vmatprep.mubr.f32.mxu0 0.0
        %5965 = vmatmul.mubr.f32.gmra.mrb[0].mxu0 %v5740
        %v5966 = vpop.f32.mrb[0].mxu0
        %v5967 = vadd.f32 0.0, %v5966
        %v5968 = vpop.f32.mrb[0].mxu0
        %5969 = vdwg.mxu0
        %v5970 = vadd.f32 %v5580, %v5812
        %v5971 = vadd.f32 %v5581, %v5817
        %v5972 = vadd.f32 %v5582, %v5822
        %v5973 = vadd.f32 %v5583, %v5827
        %v5974 = vadd.f32 %v5584, %v5832
        %v5975 = vadd.f32 %v5585, %v5837
        %v5976 = vadd.f32 %v5586, %v5842
        %v5977 = vadd.f32 %v5587, %v5847
        %v5978 = vadd.f32 %v5588, %v5852
        %v5979 = vadd.f32 %v5589, %v5857
        %v5980 = vadd.f32 %v5590, %v5862
        %v5981 = vadd.f32 %v5591, %v5867
        %v5982 = vadd.f32 %v5592, %v5872
        %v5983 = vadd.f32 %v5593, %v5877
        %v5984 = vadd.f32 %v5594, %v5882
        %v5985 = vadd.f32 %v5595, %v5887
        %v5986 = vadd.f32 %v5596, %v5892
        %v5987 = vadd.f32 %v5597, %v5897
        %v5988 = vadd.f32 %v5598, %v5902
        %v5989 = vadd.f32 %v5599, %v5907
        %v5990 = vadd.f32 %v5600, %v5912
        %v5991 = vadd.f32 %v5601, %v5917
        %v5992 = vadd.f32 %v5602, %v5922
        %v5993 = vadd.f32 %v5603, %v5927
        %v5994 = vadd.f32 %v5604, %v5932
        %v5995 = vadd.f32 %v5605, %v5937
        %v5996 = vadd.f32 %v5606, %v5942
        %v5997 = vadd.f32 %v5607, %v5947
        %v5998 = vadd.f32 %v5608, %v5952
        %v5999 = vadd.f32 %v5609, %v5957
        %v6000 = vadd.f32 %v5610, %v5962
        %v6001 = vadd.f32 %v5611, %v5967
        %s6002 = sadd.s32 64, %s3658
        %s6003 = scalar_lea.vmem %s193, %s6002
        %v6004 = vld [vmem:[%s6003] sm:$0xff]
        %v6005 = vld [vmem:[%s6003 + $0x10] sm:$0xff]
        %v6006 = vld [vmem:[%s6003 + $0x20] sm:$0xff]
        %v6007 = vld [vmem:[%s6003 + $0x30] sm:$0xff]
        %v6008 = vld [vmem:[%s6003 + $0x40] sm:$0xff]
        %v6009 = vld [vmem:[%s6003 + $0x50] sm:$0xff]
        %v6010 = vld [vmem:[%s6003 + $0x60] sm:$0xff]
        %v6011 = vld [vmem:[%s6003 + $0x70] sm:$0xff]
        %v6012 = vld [vmem:[%s6003 + $0xc0] sm:$0xff]
        %v6013 = vld [vmem:[%s6003 + $0xd0] sm:$0xff]
        %v6014 = vld [vmem:[%s6003 + $0xe0] sm:$0xff]
        %v6015 = vld [vmem:[%s6003 + $0xf0] sm:$0xff]
        %v6016 = vld [vmem:[%s6003 + $0x100] sm:$0xff]
        %v6017 = vld [vmem:[%s6003 + $0x110] sm:$0xff]
        %v6018 = vld [vmem:[%s6003 + $0x120] sm:$0xff]
        %v6019 = vld [vmem:[%s6003 + $0x130] sm:$0xff]
        %v6020 = vld [vmem:[%s6003 + $0x180] sm:$0xff]
        %v6021 = vld [vmem:[%s6003 + $0x190] sm:$0xff]
        %v6022 = vld [vmem:[%s6003 + $0x1a0] sm:$0xff]
        %v6023 = vld [vmem:[%s6003 + $0x1b0] sm:$0xff]
        %v6024 = vld [vmem:[%s6003 + $0x1c0] sm:$0xff]
        %v6025 = vld [vmem:[%s6003 + $0x1d0] sm:$0xff]
        %v6026 = vld [vmem:[%s6003 + $0x1e0] sm:$0xff]
        %v6027 = vld [vmem:[%s6003 + $0x1f0] sm:$0xff]
        %v6028 = vld [vmem:[%s6003 + $0x240] sm:$0xff]
        %v6029 = vld [vmem:[%s6003 + $0x250] sm:$0xff]
        %v6030 = vld [vmem:[%s6003 + $0x260] sm:$0xff]
        %v6031 = vld [vmem:[%s6003 + $0x270] sm:$0xff]
        %v6032 = vld [vmem:[%s6003 + $0x280] sm:$0xff]
        %v6033 = vld [vmem:[%s6003 + $0x290] sm:$0xff]
        %v6034 = vld [vmem:[%s6003 + $0x2a0] sm:$0xff]
        %v6035 = vld [vmem:[%s6003 + $0x2b0] sm:$0xff]
        %s6036 = scalar_lea.vmem %s1, 60
        %v6037 = vld [vmem:[%s6036] sm:$0xf]
        %v6039 = vsel %vm273, %v6004, 0
        %v6042 = vsel %vm273, %v6005, 0
        %v6045 = vsel %vm273, %v6006, 0
        %v6048 = vsel %vm273, %v6007, 0
        %v6051 = vsel %vm273, %v6008, 0
        %v6054 = vsel %vm273, %v6009, 0
        %v6057 = vsel %vm273, %v6010, 0
        %v6060 = vsel %vm273, %v6011, 0
        %v6063 = vsel %vm273, %v6012, 0
        %v6066 = vsel %vm273, %v6013, 0
        %v6069 = vsel %vm273, %v6014, 0
        %v6072 = vsel %vm273, %v6015, 0
        %v6075 = vsel %vm273, %v6016, 0
        %v6078 = vsel %vm273, %v6017, 0
        %v6081 = vsel %vm273, %v6018, 0
        %v6084 = vsel %vm273, %v6019, 0
        %v6087 = vsel %vm273, %v6020, 0
        %v6090 = vsel %vm273, %v6021, 0
        %v6093 = vsel %vm273, %v6022, 0
        %v6096 = vsel %vm273, %v6023, 0
        %v6099 = vsel %vm273, %v6024, 0
        %v6102 = vsel %vm273, %v6025, 0
        %v6105 = vsel %vm273, %v6026, 0
        %v6108 = vsel %vm273, %v6027, 0
        %v6111 = vsel %vm273, %v6028, 0
        %v6114 = vsel %vm273, %v6029, 0
        %v6117 = vsel %vm273, %v6030, 0
        %v6120 = vsel %vm273, %v6031, 0
        %v6123 = vsel %vm273, %v6032, 0
        %v6126 = vsel %vm273, %v6033, 0
        %v6129 = vsel %vm273, %v6034, 0
        %v6132 = vsel %vm273, %v6035, 0
        %v6135 = vsel %vm370, %v6037, 0
        %6137 = vmatprep.subr.mxu0 0.0
        %6138 = vmatpush1.msra.mxu0 %v6135
        %6139 = vmatprep.subr.mxu0 0.0
        %6140 = vmatpush1.msra.mxu0 0.0
        %6141 = vmatprep.subr.mxu0 0.0
        %6142 = vmatpush1.msra.mxu0 0.0
        %6143 = vmatprep.subr.mxu0 0.0
        %6144 = vmatpush1.msra.mxu0 0.0
        %6145 = vmatprep.subr.mxu0 0.0
        %6146 = vmatpush1.msra.mxu0 0.0
        %6147 = vmatprep.subr.mxu0 0.0
        %6148 = vmatpush1.msra.mxu0 0.0
        %6149 = vmatprep.subr.mxu0 0.0
        %6150 = vmatpush1.msra.mxu0 0.0
        %6151 = vmatprep.subr.mxu0 0.0
        %6152 = vmatpush1.msra.mxu0 0.0
        %6153 = vmatprep.subr.mxu0 0.0
        %6154 = vmatpush1.msra.mxu0 0.0
        %6155 = vmatprep.subr.mxu0 0.0
        %6156 = vmatpush1.msra.mxu0 0.0
        %6157 = vmatprep.subr.mxu0 0.0
        %6158 = vmatpush1.msra.mxu0 0.0
        %6159 = vmatprep.subr.mxu0 0.0
        %6160 = vmatpush1.msra.mxu0 0.0
        %6161 = vmatprep.subr.mxu0 0.0
        %6162 = vmatpush1.msra.mxu0 0.0
        %6163 = vmatprep.subr.mxu0 0.0
        %6164 = vmatpush1.msra.mxu0 0.0
        %6165 = vmatprep.subr.mxu0 0.0
        %6166 = vmatpush1.msra.mxu0 0.0
        %6167 = vmatprep.subr.mxu0 0.0
        %6168 = vmatpush1.msra.mxu0 0.0
        %6169 = vmatprep.subr.mxu0 0.0
        %6170 = vmatpush1.msra.mxu0 0.0
        %6171 = vmatprep.subr.mxu0 0.0
        %6172 = vmatpush1.msra.mxu0 0.0
        %6173 = vmatprep.subr.mxu0 0.0
        %6174 = vmatpush1.msra.mxu0 0.0
        %6175 = vmatprep.subr.mxu0 0.0
        %6176 = vmatpush1.msra.mxu0 0.0
        %6177 = vmatprep.subr.mxu0 0.0
        %6178 = vmatpush1.msra.mxu0 0.0
        %6179 = vmatprep.subr.mxu0 0.0
        %6180 = vmatpush1.msra.mxu0 0.0
        %6181 = vmatprep.subr.mxu0 0.0
        %6182 = vmatpush1.msra.mxu0 0.0
        %6183 = vmatprep.subr.mxu0 0.0
        %6184 = vmatpush1.msra.mxu0 0.0
        %6185 = vmatprep.subr.mxu0 0.0
        %6186 = vmatpush1.msra.mxu0 0.0
        %6187 = vmatprep.subr.mxu0 0.0
        %6188 = vmatpush1.msra.mxu0 0.0
        %6189 = vmatprep.subr.mxu0 0.0
        %6190 = vmatpush1.msra.mxu0 0.0
        %6191 = vmatprep.subr.mxu0 0.0
        %6192 = vmatpush1.msra.mxu0 0.0
        %6193 = vmatprep.subr.mxu0 0.0
        %6194 = vmatpush1.msra.mxu0 0.0
        %6195 = vmatprep.subr.mxu0 0.0
        %6196 = vmatpush1.msra.mxu0 0.0
        %6197 = vmatprep.subr.mxu0 0.0
        %6198 = vmatpush1.msra.mxu0 0.0
        %6199 = vmatprep.subr.mxu0 0.0
        %6200 = vmatpush1.msra.mxu0 0.0
        %6201 = vmatprep.mubr.f32.mxu0 0.0
        %6202 = vmatmul.mubr.f32.gmra.mrb[0].mxu0 %v6039
        %v6203 = vpop.f32.mrb[0].mxu0
        %v6204 = vadd.f32 0.0, %v6203
        %v6205 = vpop.f32.mrb[0].mxu0
        %6206 = vmatprep.mubr.f32.mxu0 0.0
        %6207 = vmatmul.mubr.f32.gmra.mrb[0].mxu0 %v6042
        %v6208 = vpop.f32.mrb[0].mxu0
        %v6209 = vadd.f32 0.0, %v6208
        %v6210 = vpop.f32.mrb[0].mxu0
        %6211 = vmatprep.mubr.f32.mxu0 0.0
        %6212 = vmatmul.mubr.f32.gmra.mrb[0].mxu0 %v6045
        %v6213 = vpop.f32.mrb[0].mxu0
        %v6214 = vadd.f32 0.0, %v6213
        %v6215 = vpop.f32.mrb[0].mxu0
        %6216 = vmatprep.mubr.f32.mxu0 0.0
        %6217 = vmatmul.mubr.f32.gmra.mrb[0].mxu0 %v6048
        %v6218 = vpop.f32.mrb[0].mxu0
        %v6219 = vadd.f32 0.0, %v6218
        %v6220 = vpop.f32.mrb[0].mxu0
        %6221 = vmatprep.mubr.f32.mxu0 0.0
        %6222 = vmatmul.mubr.f32.gmra.mrb[0].mxu0 %v6051
        %v6223 = vpop.f32.mrb[0].mxu0
        %v6224 = vadd.f32 0.0, %v6223
        %v6225 = vpop.f32.mrb[0].mxu0
        %6226 = vmatprep.mubr.f32.mxu0 0.0
        %6227 = vmatmul.mubr.f32.gmra.mrb[0].mxu0 %v6054
        %v6228 = vpop.f32.mrb[0].mxu0
        %v6229 = vadd.f32 0.0, %v6228
        %v6230 = vpop.f32.mrb[0].mxu0
        %6231 = vmatprep.mubr.f32.mxu0 0.0
        %6232 = vmatmul.mubr.f32.gmra.mrb[0].mxu0 %v6057
        %v6233 = vpop.f32.mrb[0].mxu0
        %v6234 = vadd.f32 0.0, %v6233
        %v6235 = vpop.f32.mrb[0].mxu0
        %6236 = vmatprep.mubr.f32.mxu0 0.0
        %6237 = vmatmul.mubr.f32.gmra.mrb[0].mxu0 %v6060
        %v6238 = vpop.f32.mrb[0].mxu0
        %v6239 = vadd.f32 0.0, %v6238
        %v6240 = vpop.f32.mrb[0].mxu0
        %6241 = vmatprep.mubr.f32.mxu0 0.0
        %6242 = vmatmul.mubr.f32.gmra.mrb[0].mxu0 %v6063
        %v6243 = vpop.f32.mrb[0].mxu0
        %v6244 = vadd.f32 0.0, %v6243
        %v6245 = vpop.f32.mrb[0].mxu0
        %6246 = vmatprep.mubr.f32.mxu0 0.0
        %6247 = vmatmul.mubr.f32.gmra.mrb[0].mxu0 %v6066
        %v6248 = vpop.f32.mrb[0].mxu0
        %v6249 = vadd.f32 0.0, %v6248
        %v6250 = vpop.f32.mrb[0].mxu0
        %6251 = vmatprep.mubr.f32.mxu0 0.0
        %6252 = vmatmul.mubr.f32.gmra.mrb[0].mxu0 %v6069
        %v6253 = vpop.f32.mrb[0].mxu0
        %v6254 = vadd.f32 0.0, %v6253
        %v6255 = vpop.f32.mrb[0].mxu0
        %6256 = vmatprep.mubr.f32.mxu0 0.0
        %6257 = vmatmul.mubr.f32.gmra.mrb[0].mxu0 %v6072
        %v6258 = vpop.f32.mrb[0].mxu0
        %v6259 = vadd.f32 0.0, %v6258
        %v6260 = vpop.f32.mrb[0].mxu0
        %6261 = vmatprep.mubr.f32.mxu0 0.0
        %6262 = vmatmul.mubr.f32.gmra.mrb[0].mxu0 %v6075
        %v6263 = vpop.f32.mrb[0].mxu0
        %v6264 = vadd.f32 0.0, %v6263
        %v6265 = vpop.f32.mrb[0].mxu0
        %6266 = vmatprep.mubr.f32.mxu0 0.0
        %6267 = vmatmul.mubr.f32.gmra.mrb[0].mxu0 %v6078
        %v6268 = vpop.f32.mrb[0].mxu0
        %v6269 = vadd.f32 0.0, %v6268
        %v6270 = vpop.f32.mrb[0].mxu0
        %6271 = vmatprep.mubr.f32.mxu0 0.0
        %6272 = vmatmul.mubr.f32.gmra.mrb[0].mxu0 %v6081
        %v6273 = vpop.f32.mrb[0].mxu0
        %v6274 = vadd.f32 0.0, %v6273
        %v6275 = vpop.f32.mrb[0].mxu0
        %6276 = vmatprep.mubr.f32.mxu0 0.0
        %6277 = vmatmul.mubr.f32.gmra.mrb[0].mxu0 %v6084
        %v6278 = vpop.f32.mrb[0].mxu0
        %v6279 = vadd.f32 0.0, %v6278
        %v6280 = vpop.f32.mrb[0].mxu0
        %6281 = vmatprep.mubr.f32.mxu0 0.0
        %6282 = vmatmul.mubr.f32.gmra.mrb[0].mxu0 %v6087
        %v6283 = vpop.f32.mrb[0].mxu0
        %v6284 = vadd.f32 0.0, %v6283
        %v6285 = vpop.f32.mrb[0].mxu0
        %6286 = vmatprep.mubr.f32.mxu0 0.0
        %6287 = vmatmul.mubr.f32.gmra.mrb[0].mxu0 %v6090
        %v6288 = vpop.f32.mrb[0].mxu0
        %v6289 = vadd.f32 0.0, %v6288
        %v6290 = vpop.f32.mrb[0].mxu0
        %6291 = vmatprep.mubr.f32.mxu0 0.0
        %6292 = vmatmul.mubr.f32.gmra.mrb[0].mxu0 %v6093
        %v6293 = vpop.f32.mrb[0].mxu0
        %v6294 = vadd.f32 0.0, %v6293
        %v6295 = vpop.f32.mrb[0].mxu0
        %6296 = vmatprep.mubr.f32.mxu0 0.0
        %6297 = vmatmul.mubr.f32.gmra.mrb[0].mxu0 %v6096
        %v6298 = vpop.f32.mrb[0].mxu0
        %v6299 = vadd.f32 0.0, %v6298
        %v6300 = vpop.f32.mrb[0].mxu0
        %6301 = vmatprep.mubr.f32.mxu0 0.0
        %6302 = vmatmul.mubr.f32.gmra.mrb[0].mxu0 %v6099
        %v6303 = vpop.f32.mrb[0].mxu0
        %v6304 = vadd.f32 0.0, %v6303
        %v6305 = vpop.f32.mrb[0].mxu0
        %6306 = vmatprep.mubr.f32.mxu0 0.0
        %6307 = vmatmul.mubr.f32.gmra.mrb[0].mxu0 %v6102
        %v6308 = vpop.f32.mrb[0].mxu0
        %v6309 = vadd.f32 0.0, %v6308
        %v6310 = vpop.f32.mrb[0].mxu0
        %6311 = vmatprep.mubr.f32.mxu0 0.0
        %6312 = vmatmul.mubr.f32.gmra.mrb[0].mxu0 %v6105
        %v6313 = vpop.f32.mrb[0].mxu0
        %v6314 = vadd.f32 0.0, %v6313
        %v6315 = vpop.f32.mrb[0].mxu0
        %6316 = vmatprep.mubr.f32.mxu0 0.0
        %6317 = vmatmul.mubr.f32.gmra.mrb[0].mxu0 %v6108
        %v6318 = vpop.f32.mrb[0].mxu0
        %v6319 = vadd.f32 0.0, %v6318
        %v6320 = vpop.f32.mrb[0].mxu0
        %6321 = vmatprep.mubr.f32.mxu0 0.0
        %6322 = vmatmul.mubr.f32.gmra.mrb[0].mxu0 %v6111
        %v6323 = vpop.f32.mrb[0].mxu0
        %v6324 = vadd.f32 0.0, %v6323
        %v6325 = vpop.f32.mrb[0].mxu0
        %6326 = vmatprep.mubr.f32.mxu0 0.0
        %6327 = vmatmul.mubr.f32.gmra.mrb[0].mxu0 %v6114
        %v6328 = vpop.f32.mrb[0].mxu0
        %v6329 = vadd.f32 0.0, %v6328
        %v6330 = vpop.f32.mrb[0].mxu0
        %6331 = vmatprep.mubr.f32.mxu0 0.0
        %6332 = vmatmul.mubr.f32.gmra.mrb[0].mxu0 %v6117
        %v6333 = vpop.f32.mrb[0].mxu0
        %v6334 = vadd.f32 0.0, %v6333
        %v6335 = vpop.f32.mrb[0].mxu0
        %6336 = vmatprep.mubr.f32.mxu0 0.0
        %6337 = vmatmul.mubr.f32.gmra.mrb[0].mxu0 %v6120
        %v6338 = vpop.f32.mrb[0].mxu0
        %v6339 = vadd.f32 0.0, %v6338
        %v6340 = vpop.f32.mrb[0].mxu0
        %6341 = vmatprep.mubr.f32.mxu0 0.0
        %6342 = vmatmul.mubr.f32.gmra.mrb[0].mxu0 %v6123
        %v6343 = vpop.f32.mrb[0].mxu0
        %v6344 = vadd.f32 0.0, %v6343
        %v6345 = vpop.f32.mrb[0].mxu0
        %6346 = vmatprep.mubr.f32.mxu0 0.0
        %6347 = vmatmul.mubr.f32.gmra.mrb[0].mxu0 %v6126
        %v6348 = vpop.f32.mrb[0].mxu0
        %v6349 = vadd.f32 0.0, %v6348
        %v6350 = vpop.f32.mrb[0].mxu0
        %6351 = vmatprep.mubr.f32.mxu0 0.0
        %6352 = vmatmul.mubr.f32.gmra.mrb[0].mxu0 %v6129
        %v6353 = vpop.f32.mrb[0].mxu0
        %v6354 = vadd.f32 0.0, %v6353
        %v6355 = vpop.f32.mrb[0].mxu0
        %6356 = vmatprep.mubr.f32.mxu0 0.0
        %6357 = vmatmul.mubr.f32.gmra.mrb[0].mxu0 %v6132
        %v6358 = vpop.f32.mrb[0].mxu0
        %v6359 = vadd.f32 0.0, %v6358
        %v6360 = vpop.f32.mrb[0].mxu0
        %6361 = vdwg.mxu0
        %v6362 = vadd.f32 %v5970, %v6204
        %v6363 = vadd.f32 %v5971, %v6209
        %v6364 = vadd.f32 %v5972, %v6214
        %v6365 = vadd.f32 %v5973, %v6219
        %v6366 = vadd.f32 %v5974, %v6224
        %v6367 = vadd.f32 %v5975, %v6229
        %v6368 = vadd.f32 %v5976, %v6234
        %v6369 = vadd.f32 %v5977, %v6239
        %v6370 = vadd.f32 %v5978, %v6244
        %v6371 = vadd.f32 %v5979, %v6249
        %v6372 = vadd.f32 %v5980, %v6254
        %v6373 = vadd.f32 %v5981, %v6259
        %v6374 = vadd.f32 %v5982, %v6264
        %v6375 = vadd.f32 %v5983, %v6269
        %v6376 = vadd.f32 %v5984, %v6274
        %v6377 = vadd.f32 %v5985, %v6279
        %v6378 = vadd.f32 %v5986, %v6284
        %v6379 = vadd.f32 %v5987, %v6289
        %v6380 = vadd.f32 %v5988, %v6294
        %v6381 = vadd.f32 %v5989, %v6299
        %v6382 = vadd.f32 %v5990, %v6304
        %v6383 = vadd.f32 %v5991, %v6309
        %v6384 = vadd.f32 %v5992, %v6314
        %v6385 = vadd.f32 %v5993, %v6319
        %v6386 = vadd.f32 %v5994, %v6324
        %v6387 = vadd.f32 %v5995, %v6329
        %v6388 = vadd.f32 %v5996, %v6334
        %v6389 = vadd.f32 %v5997, %v6339
        %v6390 = vadd.f32 %v5998, %v6344
        %v6391 = vadd.f32 %v5999, %v6349
        %v6392 = vadd.f32 %v6000, %v6354
        %v6393 = vadd.f32 %v6001, %v6359
        %v6394 = vld [vmem:[%s6003 + $0x2] sm:$0xff]
        %v6395 = vld [vmem:[%s6003 + $0x12] sm:$0xff]
        %v6396 = vld [vmem:[%s6003 + $0x22] sm:$0xff]
        %v6397 = vld [vmem:[%s6003 + $0x32] sm:$0xff]
        %v6398 = vld [vmem:[%s6003 + $0x42] sm:$0xff]
        %v6399 = vld [vmem:[%s6003 + $0x52] sm:$0xff]
        %v6400 = vld [vmem:[%s6003 + $0x62] sm:$0xff]
        %v6401 = vld [vmem:[%s6003 + $0x72] sm:$0xff]
        %v6402 = vld [vmem:[%s6003 + $0xc2] sm:$0xff]
        %v6403 = vld [vmem:[%s6003 + $0xd2] sm:$0xff]
        %v6404 = vld [vmem:[%s6003 + $0xe2] sm:$0xff]
        %v6405 = vld [vmem:[%s6003 + $0xf2] sm:$0xff]
        %v6406 = vld [vmem:[%s6003 + $0x102] sm:$0xff]
        %v6407 = vld [vmem:[%s6003 + $0x112] sm:$0xff]
        %v6408 = vld [vmem:[%s6003 + $0x122] sm:$0xff]
        %v6409 = vld [vmem:[%s6003 + $0x132] sm:$0xff]
        %v6410 = vld [vmem:[%s6003 + $0x182] sm:$0xff]
        %v6411 = vld [vmem:[%s6003 + $0x192] sm:$0xff]
        %v6412 = vld [vmem:[%s6003 + $0x1a2] sm:$0xff]
        %v6413 = vld [vmem:[%s6003 + $0x1b2] sm:$0xff]
        %v6414 = vld [vmem:[%s6003 + $0x1c2] sm:$0xff]
        %v6415 = vld [vmem:[%s6003 + $0x1d2] sm:$0xff]
        %v6416 = vld [vmem:[%s6003 + $0x1e2] sm:$0xff]
        %v6417 = vld [vmem:[%s6003 + $0x1f2] sm:$0xff]
        %v6418 = vld [vmem:[%s6003 + $0x242] sm:$0xff]
        %v6419 = vld [vmem:[%s6003 + $0x252] sm:$0xff]
        %v6420 = vld [vmem:[%s6003 + $0x262] sm:$0xff]
        %v6421 = vld [vmem:[%s6003 + $0x272] sm:$0xff]
        %v6422 = vld [vmem:[%s6003 + $0x282] sm:$0xff]
        %v6423 = vld [vmem:[%s6003 + $0x292] sm:$0xff]
        %v6424 = vld [vmem:[%s6003 + $0x2a2] sm:$0xff]
        %v6425 = vld [vmem:[%s6003 + $0x2b2] sm:$0xff]
        %s6426 = scalar_lea.vmem %s1, 64
        %v6427 = vld [vmem:[%s6426] sm:$0xf]
        %v6429 = vsel %vm273, %v6394, 0
        %v6432 = vsel %vm273, %v6395, 0
        %v6435 = vsel %vm273, %v6396, 0
        %v6438 = vsel %vm273, %v6397, 0
        %v6441 = vsel %vm273, %v6398, 0
        %v6444 = vsel %vm273, %v6399, 0
        %v6447 = vsel %vm273, %v6400, 0
        %v6450 = vsel %vm273, %v6401, 0
        %v6453 = vsel %vm273, %v6402, 0
        %v6456 = vsel %vm273, %v6403, 0
        %v6459 = vsel %vm273, %v6404, 0
        %v6462 = vsel %vm273, %v6405, 0
        %v6465 = vsel %vm273, %v6406, 0
        %v6468 = vsel %vm273, %v6407, 0
        %v6471 = vsel %vm273, %v6408, 0
        %v6474 = vsel %vm273, %v6409, 0
        %v6477 = vsel %vm273, %v6410, 0
        %v6480 = vsel %vm273, %v6411, 0
        %v6483 = vsel %vm273, %v6412, 0
        %v6486 = vsel %vm273, %v6413, 0
        %v6489 = vsel %vm273, %v6414, 0
        %v6492 = vsel %vm273, %v6415, 0
        %v6495 = vsel %vm273, %v6416, 0
        %v6498 = vsel %vm273, %v6417, 0
        %v6501 = vsel %vm273, %v6418, 0
        %v6504 = vsel %vm273, %v6419, 0
        %v6507 = vsel %vm273, %v6420, 0
        %v6510 = vsel %vm273, %v6421, 0
        %v6513 = vsel %vm273, %v6422, 0
        %v6516 = vsel %vm273, %v6423, 0
        %v6519 = vsel %vm273, %v6424, 0
        %v6522 = vsel %vm273, %v6425, 0
        %v6525 = vsel %vm370, %v6427, 0
        %6527 = vmatprep.subr.mxu0 0.0
        %6528 = vmatpush1.msra.mxu0 %v6525
        %6529 = vmatprep.subr.mxu0 0.0
        %6530 = vmatpush1.msra.mxu0 0.0
        %6531 = vmatprep.subr.mxu0 0.0
        %6532 = vmatpush1.msra.mxu0 0.0
        %6533 = vmatprep.subr.mxu0 0.0
        %6534 = vmatpush1.msra.mxu0 0.0
        %6535 = vmatprep.subr.mxu0 0.0
        %6536 = vmatpush1.msra.mxu0 0.0
        %6537 = vmatprep.subr.mxu0 0.0
        %6538 = vmatpush1.msra.mxu0 0.0
        %6539 = vmatprep.subr.mxu0 0.0
        %6540 = vmatpush1.msra.mxu0 0.0
        %6541 = vmatprep.subr.mxu0 0.0
        %6542 = vmatpush1.msra.mxu0 0.0
        %6543 = vmatprep.subr.mxu0 0.0
        %6544 = vmatpush1.msra.mxu0 0.0
        %6545 = vmatprep.subr.mxu0 0.0
        %6546 = vmatpush1.msra.mxu0 0.0
        %6547 = vmatprep.subr.mxu0 0.0
        %6548 = vmatpush1.msra.mxu0 0.0
        %6549 = vmatprep.subr.mxu0 0.0
        %6550 = vmatpush1.msra.mxu0 0.0
        %6551 = vmatprep.subr.mxu0 0.0
        %6552 = vmatpush1.msra.mxu0 0.0
        %6553 = vmatprep.subr.mxu0 0.0
        %6554 = vmatpush1.msra.mxu0 0.0
        %6555 = vmatprep.subr.mxu0 0.0
        %6556 = vmatpush1.msra.mxu0 0.0
        %6557 = vmatprep.subr.mxu0 0.0
        %6558 = vmatpush1.msra.mxu0 0.0
        %6559 = vmatprep.subr.mxu0 0.0
        %6560 = vmatpush1.msra.mxu0 0.0
        %6561 = vmatprep.subr.mxu0 0.0
        %6562 = vmatpush1.msra.mxu0 0.0
        %6563 = vmatprep.subr.mxu0 0.0
        %6564 = vmatpush1.msra.mxu0 0.0
        %6565 = vmatprep.subr.mxu0 0.0
        %6566 = vmatpush1.msra.mxu0 0.0
        %6567 = vmatprep.subr.mxu0 0.0
        %6568 = vmatpush1.msra.mxu0 0.0
        %6569 = vmatprep.subr.mxu0 0.0
        %6570 = vmatpush1.msra.mxu0 0.0
        %6571 = vmatprep.subr.mxu0 0.0
        %6572 = vmatpush1.msra.mxu0 0.0
        %6573 = vmatprep.subr.mxu0 0.0
        %6574 = vmatpush1.msra.mxu0 0.0
        %6575 = vmatprep.subr.mxu0 0.0
        %6576 = vmatpush1.msra.mxu0 0.0
        %6577 = vmatprep.subr.mxu0 0.0
        %6578 = vmatpush1.msra.mxu0 0.0
        %6579 = vmatprep.subr.mxu0 0.0
        %6580 = vmatpush1.msra.mxu0 0.0
        %6581 = vmatprep.subr.mxu0 0.0
        %6582 = vmatpush1.msra.mxu0 0.0
        %6583 = vmatprep.subr.mxu0 0.0
        %6584 = vmatpush1.msra.mxu0 0.0
        %6585 = vmatprep.subr.mxu0 0.0
        %6586 = vmatpush1.msra.mxu0 0.0
        %6587 = vmatprep.subr.mxu0 0.0
        %6588 = vmatpush1.msra.mxu0 0.0
        %6589 = vmatprep.subr.mxu0 0.0
        %6590 = vmatpush1.msra.mxu0 0.0
        %6591 = vmatprep.mubr.f32.mxu0 0.0
        %6592 = vmatmul.mubr.f32.gmra.mrb[0].mxu0 %v6429
        %v6593 = vpop.f32.mrb[0].mxu0
        %v6594 = vadd.f32 0.0, %v6593
        %v6595 = vpop.f32.mrb[0].mxu0
        %6596 = vmatprep.mubr.f32.mxu0 0.0
        %6597 = vmatmul.mubr.f32.gmra.mrb[0].mxu0 %v6432
        %v6598 = vpop.f32.mrb[0].mxu0
        %v6599 = vadd.f32 0.0, %v6598
        %v6600 = vpop.f32.mrb[0].mxu0
        %6601 = vmatprep.mubr.f32.mxu0 0.0
        %6602 = vmatmul.mubr.f32.gmra.mrb[0].mxu0 %v6435
        %v6603 = vpop.f32.mrb[0].mxu0
        %v6604 = vadd.f32 0.0, %v6603
        %v6605 = vpop.f32.mrb[0].mxu0
        %6606 = vmatprep.mubr.f32.mxu0 0.0
        %6607 = vmatmul.mubr.f32.gmra.mrb[0].mxu0 %v6438
        %v6608 = vpop.f32.mrb[0].mxu0
        %v6609 = vadd.f32 0.0, %v6608
        %v6610 = vpop.f32.mrb[0].mxu0
        %6611 = vmatprep.mubr.f32.mxu0 0.0
        %6612 = vmatmul.mubr.f32.gmra.mrb[0].mxu0 %v6441
        %v6613 = vpop.f32.mrb[0].mxu0
        %v6614 = vadd.f32 0.0, %v6613
        %v6615 = vpop.f32.mrb[0].mxu0
        %6616 = vmatprep.mubr.f32.mxu0 0.0
        %6617 = vmatmul.mubr.f32.gmra.mrb[0].mxu0 %v6444
        %v6618 = vpop.f32.mrb[0].mxu0
        %v6619 = vadd.f32 0.0, %v6618
        %v6620 = vpop.f32.mrb[0].mxu0
        %6621 = vmatprep.mubr.f32.mxu0 0.0
        %6622 = vmatmul.mubr.f32.gmra.mrb[0].mxu0 %v6447
        %v6623 = vpop.f32.mrb[0].mxu0
        %v6624 = vadd.f32 0.0, %v6623
        %v6625 = vpop.f32.mrb[0].mxu0
        %6626 = vmatprep.mubr.f32.mxu0 0.0
        %6627 = vmatmul.mubr.f32.gmra.mrb[0].mxu0 %v6450
        %v6628 = vpop.f32.mrb[0].mxu0
        %v6629 = vadd.f32 0.0, %v6628
        %v6630 = vpop.f32.mrb[0].mxu0
        %6631 = vmatprep.mubr.f32.mxu0 0.0
        %6632 = vmatmul.mubr.f32.gmra.mrb[0].mxu0 %v6453
        %v6633 = vpop.f32.mrb[0].mxu0
        %v6634 = vadd.f32 0.0, %v6633
        %v6635 = vpop.f32.mrb[0].mxu0
        %6636 = vmatprep.mubr.f32.mxu0 0.0
        %6637 = vmatmul.mubr.f32.gmra.mrb[0].mxu0 %v6456
        %v6638 = vpop.f32.mrb[0].mxu0
        %v6639 = vadd.f32 0.0, %v6638
        %v6640 = vpop.f32.mrb[0].mxu0
        %6641 = vmatprep.mubr.f32.mxu0 0.0
        %6642 = vmatmul.mubr.f32.gmra.mrb[0].mxu0 %v6459
        %v6643 = vpop.f32.mrb[0].mxu0
        %v6644 = vadd.f32 0.0, %v6643
        %v6645 = vpop.f32.mrb[0].mxu0
        %6646 = vmatprep.mubr.f32.mxu0 0.0
        %6647 = vmatmul.mubr.f32.gmra.mrb[0].mxu0 %v6462
        %v6648 = vpop.f32.mrb[0].mxu0
        %v6649 = vadd.f32 0.0, %v6648
        %v6650 = vpop.f32.mrb[0].mxu0
        %6651 = vmatprep.mubr.f32.mxu0 0.0
        %6652 = vmatmul.mubr.f32.gmra.mrb[0].mxu0 %v6465
        %v6653 = vpop.f32.mrb[0].mxu0
        %v6654 = vadd.f32 0.0, %v6653
        %v6655 = vpop.f32.mrb[0].mxu0
        %6656 = vmatprep.mubr.f32.mxu0 0.0
        %6657 = vmatmul.mubr.f32.gmra.mrb[0].mxu0 %v6468
        %v6658 = vpop.f32.mrb[0].mxu0
        %v6659 = vadd.f32 0.0, %v6658
        %v6660 = vpop.f32.mrb[0].mxu0
        %6661 = vmatprep.mubr.f32.mxu0 0.0
        %6662 = vmatmul.mubr.f32.gmra.mrb[0].mxu0 %v6471
        %v6663 = vpop.f32.mrb[0].mxu0
        %v6664 = vadd.f32 0.0, %v6663
        %v6665 = vpop.f32.mrb[0].mxu0
        %6666 = vmatprep.mubr.f32.mxu0 0.0
        %6667 = vmatmul.mubr.f32.gmra.mrb[0].mxu0 %v6474
        %v6668 = vpop.f32.mrb[0].mxu0
        %v6669 = vadd.f32 0.0, %v6668
        %v6670 = vpop.f32.mrb[0].mxu0
        %6671 = vmatprep.mubr.f32.mxu0 0.0
        %6672 = vmatmul.mubr.f32.gmra.mrb[0].mxu0 %v6477
        %v6673 = vpop.f32.mrb[0].mxu0
        %v6674 = vadd.f32 0.0, %v6673
        %v6675 = vpop.f32.mrb[0].mxu0
        %6676 = vmatprep.mubr.f32.mxu0 0.0
        %6677 = vmatmul.mubr.f32.gmra.mrb[0].mxu0 %v6480
        %v6678 = vpop.f32.mrb[0].mxu0
        %v6679 = vadd.f32 0.0, %v6678
        %v6680 = vpop.f32.mrb[0].mxu0
        %6681 = vmatprep.mubr.f32.mxu0 0.0
        %6682 = vmatmul.mubr.f32.gmra.mrb[0].mxu0 %v6483
        %v6683 = vpop.f32.mrb[0].mxu0
        %v6684 = vadd.f32 0.0, %v6683
        %v6685 = vpop.f32.mrb[0].mxu0
        %6686 = vmatprep.mubr.f32.mxu0 0.0
        %6687 = vmatmul.mubr.f32.gmra.mrb[0].mxu0 %v6486
        %v6688 = vpop.f32.mrb[0].mxu0
        %v6689 = vadd.f32 0.0, %v6688
        %v6690 = vpop.f32.mrb[0].mxu0
        %6691 = vmatprep.mubr.f32.mxu0 0.0
        %6692 = vmatmul.mubr.f32.gmra.mrb[0].mxu0 %v6489
        %v6693 = vpop.f32.mrb[0].mxu0
        %v6694 = vadd.f32 0.0, %v6693
        %v6695 = vpop.f32.mrb[0].mxu0
        %6696 = vmatprep.mubr.f32.mxu0 0.0
        %6697 = vmatmul.mubr.f32.gmra.mrb[0].mxu0 %v6492
        %v6698 = vpop.f32.mrb[0].mxu0
        %v6699 = vadd.f32 0.0, %v6698
        %v6700 = vpop.f32.mrb[0].mxu0
        %6701 = vmatprep.mubr.f32.mxu0 0.0
        %6702 = vmatmul.mubr.f32.gmra.mrb[0].mxu0 %v6495
        %v6703 = vpop.f32.mrb[0].mxu0
        %v6704 = vadd.f32 0.0, %v6703
        %v6705 = vpop.f32.mrb[0].mxu0
        %6706 = vmatprep.mubr.f32.mxu0 0.0
        %6707 = vmatmul.mubr.f32.gmra.mrb[0].mxu0 %v6498
        %v6708 = vpop.f32.mrb[0].mxu0
        %v6709 = vadd.f32 0.0, %v6708
        %v6710 = vpop.f32.mrb[0].mxu0
        %6711 = vmatprep.mubr.f32.mxu0 0.0
        %6712 = vmatmul.mubr.f32.gmra.mrb[0].mxu0 %v6501
        %v6713 = vpop.f32.mrb[0].mxu0
        %v6714 = vadd.f32 0.0, %v6713
        %v6715 = vpop.f32.mrb[0].mxu0
        %6716 = vmatprep.mubr.f32.mxu0 0.0
        %6717 = vmatmul.mubr.f32.gmra.mrb[0].mxu0 %v6504
        %v6718 = vpop.f32.mrb[0].mxu0
        %v6719 = vadd.f32 0.0, %v6718
        %v6720 = vpop.f32.mrb[0].mxu0
        %6721 = vmatprep.mubr.f32.mxu0 0.0
        %6722 = vmatmul.mubr.f32.gmra.mrb[0].mxu0 %v6507
        %v6723 = vpop.f32.mrb[0].mxu0
        %v6724 = vadd.f32 0.0, %v6723
        %v6725 = vpop.f32.mrb[0].mxu0
        %6726 = vmatprep.mubr.f32.mxu0 0.0
        %6727 = vmatmul.mubr.f32.gmra.mrb[0].mxu0 %v6510
        %v6728 = vpop.f32.mrb[0].mxu0
        %v6729 = vadd.f32 0.0, %v6728
        %v6730 = vpop.f32.mrb[0].mxu0
        %6731 = vmatprep.mubr.f32.mxu0 0.0
        %6732 = vmatmul.mubr.f32.gmra.mrb[0].mxu0 %v6513
        %v6733 = vpop.f32.mrb[0].mxu0
        %v6734 = vadd.f32 0.0, %v6733
        %v6735 = vpop.f32.mrb[0].mxu0
        %6736 = vmatprep.mubr.f32.mxu0 0.0
        %6737 = vmatmul.mubr.f32.gmra.mrb[0].mxu0 %v6516
        %v6738 = vpop.f32.mrb[0].mxu0
        %v6739 = vadd.f32 0.0, %v6738
        %v6740 = vpop.f32.mrb[0].mxu0
        %6741 = vmatprep.mubr.f32.mxu0 0.0
        %6742 = vmatmul.mubr.f32.gmra.mrb[0].mxu0 %v6519
        %v6743 = vpop.f32.mrb[0].mxu0
        %v6744 = vadd.f32 0.0, %v6743
        %v6745 = vpop.f32.mrb[0].mxu0
        %6746 = vmatprep.mubr.f32.mxu0 0.0
        %6747 = vmatmul.mubr.f32.gmra.mrb[0].mxu0 %v6522
        %v6748 = vpop.f32.mrb[0].mxu0
        %v6749 = vadd.f32 0.0, %v6748
        %v6750 = vpop.f32.mrb[0].mxu0
        %6751 = vdwg.mxu0
        %v6752 = vadd.f32 %v6362, %v6594
        %v6753 = vadd.f32 %v6363, %v6599
        %v6754 = vadd.f32 %v6364, %v6604
        %v6755 = vadd.f32 %v6365, %v6609
        %v6756 = vadd.f32 %v6366, %v6614
        %v6757 = vadd.f32 %v6367, %v6619
        %v6758 = vadd.f32 %v6368, %v6624
        %v6759 = vadd.f32 %v6369, %v6629
        %v6760 = vadd.f32 %v6370, %v6634
        %v6761 = vadd.f32 %v6371, %v6639
        %v6762 = vadd.f32 %v6372, %v6644
        %v6763 = vadd.f32 %v6373, %v6649
        %v6764 = vadd.f32 %v6374, %v6654
        %v6765 = vadd.f32 %v6375, %v6659
        %v6766 = vadd.f32 %v6376, %v6664
        %v6767 = vadd.f32 %v6377, %v6669
        %v6768 = vadd.f32 %v6378, %v6674
        %v6769 = vadd.f32 %v6379, %v6679
        %v6770 = vadd.f32 %v6380, %v6684
        %v6771 = vadd.f32 %v6381, %v6689
        %v6772 = vadd.f32 %v6382, %v6694
        %v6773 = vadd.f32 %v6383, %v6699
        %v6774 = vadd.f32 %v6384, %v6704
        %v6775 = vadd.f32 %v6385, %v6709
        %v6776 = vadd.f32 %v6386, %v6714
        %v6777 = vadd.f32 %v6387, %v6719
        %v6778 = vadd.f32 %v6388, %v6724
        %v6779 = vadd.f32 %v6389, %v6729
        %v6780 = vadd.f32 %v6390, %v6734
        %v6781 = vadd.f32 %v6391, %v6739
        %v6782 = vadd.f32 %v6392, %v6744
        %v6783 = vadd.f32 %v6393, %v6749
        %v6784 = vld [vmem:[%s6003 + $0x4] sm:$0xff]
        %v6785 = vld [vmem:[%s6003 + $0x14] sm:$0xff]
        %v6786 = vld [vmem:[%s6003 + $0x24] sm:$0xff]
        %v6787 = vld [vmem:[%s6003 + $0x34] sm:$0xff]
        %v6788 = vld [vmem:[%s6003 + $0x44] sm:$0xff]
        %v6789 = vld [vmem:[%s6003 + $0x54] sm:$0xff]
        %v6790 = vld [vmem:[%s6003 + $0x64] sm:$0xff]
        %v6791 = vld [vmem:[%s6003 + $0x74] sm:$0xff]
        %v6792 = vld [vmem:[%s6003 + $0xc4] sm:$0xff]
        %v6793 = vld [vmem:[%s6003 + $0xd4] sm:$0xff]
        %v6794 = vld [vmem:[%s6003 + $0xe4] sm:$0xff]
        %v6795 = vld [vmem:[%s6003 + $0xf4] sm:$0xff]
        %v6796 = vld [vmem:[%s6003 + $0x104] sm:$0xff]
        %v6797 = vld [vmem:[%s6003 + $0x114] sm:$0xff]
        %v6798 = vld [vmem:[%s6003 + $0x124] sm:$0xff]
        %v6799 = vld [vmem:[%s6003 + $0x134] sm:$0xff]
        %v6800 = vld [vmem:[%s6003 + $0x184] sm:$0xff]
        %v6801 = vld [vmem:[%s6003 + $0x194] sm:$0xff]
        %v6802 = vld [vmem:[%s6003 + $0x1a4] sm:$0xff]
        %v6803 = vld [vmem:[%s6003 + $0x1b4] sm:$0xff]
        %v6804 = vld [vmem:[%s6003 + $0x1c4] sm:$0xff]
        %v6805 = vld [vmem:[%s6003 + $0x1d4] sm:$0xff]
        %v6806 = vld [vmem:[%s6003 + $0x1e4] sm:$0xff]
        %v6807 = vld [vmem:[%s6003 + $0x1f4] sm:$0xff]
        %v6808 = vld [vmem:[%s6003 + $0x244] sm:$0xff]
        %v6809 = vld [vmem:[%s6003 + $0x254] sm:$0xff]
        %v6810 = vld [vmem:[%s6003 + $0x264] sm:$0xff]
        %v6811 = vld [vmem:[%s6003 + $0x274] sm:$0xff]
        %v6812 = vld [vmem:[%s6003 + $0x284] sm:$0xff]
        %v6813 = vld [vmem:[%s6003 + $0x294] sm:$0xff]
        %v6814 = vld [vmem:[%s6003 + $0x2a4] sm:$0xff]
        %v6815 = vld [vmem:[%s6003 + $0x2b4] sm:$0xff]
        %s6816 = scalar_lea.vmem %s1, 68
        %v6817 = vld [vmem:[%s6816] sm:$0xf]
        %v6819 = vsel %vm273, %v6784, 0
        %v6822 = vsel %vm273, %v6785, 0
        %v6825 = vsel %vm273, %v6786, 0
        %v6828 = vsel %vm273, %v6787, 0
        %v6831 = vsel %vm273, %v6788, 0
        %v6834 = vsel %vm273, %v6789, 0
        %v6837 = vsel %vm273, %v6790, 0
        %v6840 = vsel %vm273, %v6791, 0
        %v6843 = vsel %vm273, %v6792, 0
        %v6846 = vsel %vm273, %v6793, 0
        %v6849 = vsel %vm273, %v6794, 0
        %v6852 = vsel %vm273, %v6795, 0
        %v6855 = vsel %vm273, %v6796, 0
        %v6858 = vsel %vm273, %v6797, 0
        %v6861 = vsel %vm273, %v6798, 0
        %v6864 = vsel %vm273, %v6799, 0
        %v6867 = vsel %vm273, %v6800, 0
        %v6870 = vsel %vm273, %v6801, 0
        %v6873 = vsel %vm273, %v6802, 0
        %v6876 = vsel %vm273, %v6803, 0
        %v6879 = vsel %vm273, %v6804, 0
        %v6882 = vsel %vm273, %v6805, 0
        %v6885 = vsel %vm273, %v6806, 0
        %v6888 = vsel %vm273, %v6807, 0
        %v6891 = vsel %vm273, %v6808, 0
        %v6894 = vsel %vm273, %v6809, 0
        %v6897 = vsel %vm273, %v6810, 0
        %v6900 = vsel %vm273, %v6811, 0
        %v6903 = vsel %vm273, %v6812, 0
        %v6906 = vsel %vm273, %v6813, 0
        %v6909 = vsel %vm273, %v6814, 0
        %v6912 = vsel %vm273, %v6815, 0
        %v6915 = vsel %vm370, %v6817, 0
        %6917 = vmatprep.subr.mxu0 0.0
        %6918 = vmatpush1.msra.mxu0 %v6915
        %6919 = vmatprep.subr.mxu0 0.0
        %6920 = vmatpush1.msra.mxu0 0.0
        %6921 = vmatprep.subr.mxu0 0.0
        %6922 = vmatpush1.msra.mxu0 0.0
        %6923 = vmatprep.subr.mxu0 0.0
        %6924 = vmatpush1.msra.mxu0 0.0
        %6925 = vmatprep.subr.mxu0 0.0
        %6926 = vmatpush1.msra.mxu0 0.0
        %6927 = vmatprep.subr.mxu0 0.0
        %6928 = vmatpush1.msra.mxu0 0.0
        %6929 = vmatprep.subr.mxu0 0.0
        %6930 = vmatpush1.msra.mxu0 0.0
        %6931 = vmatprep.subr.mxu0 0.0
        %6932 = vmatpush1.msra.mxu0 0.0
        %6933 = vmatprep.subr.mxu0 0.0
        %6934 = vmatpush1.msra.mxu0 0.0
        %6935 = vmatprep.subr.mxu0 0.0
        %6936 = vmatpush1.msra.mxu0 0.0
        %6937 = vmatprep.subr.mxu0 0.0
        %6938 = vmatpush1.msra.mxu0 0.0
        %6939 = vmatprep.subr.mxu0 0.0
        %6940 = vmatpush1.msra.mxu0 0.0
        %6941 = vmatprep.subr.mxu0 0.0
        %6942 = vmatpush1.msra.mxu0 0.0
        %6943 = vmatprep.subr.mxu0 0.0
        %6944 = vmatpush1.msra.mxu0 0.0
        %6945 = vmatprep.subr.mxu0 0.0
        %6946 = vmatpush1.msra.mxu0 0.0
        %6947 = vmatprep.subr.mxu0 0.0
        %6948 = vmatpush1.msra.mxu0 0.0
        %6949 = vmatprep.subr.mxu0 0.0
        %6950 = vmatpush1.msra.mxu0 0.0
        %6951 = vmatprep.subr.mxu0 0.0
        %6952 = vmatpush1.msra.mxu0 0.0
        %6953 = vmatprep.subr.mxu0 0.0
        %6954 = vmatpush1.msra.mxu0 0.0
        %6955 = vmatprep.subr.mxu0 0.0
        %6956 = vmatpush1.msra.mxu0 0.0
        %6957 = vmatprep.subr.mxu0 0.0
        %6958 = vmatpush1.msra.mxu0 0.0
        %6959 = vmatprep.subr.mxu0 0.0
        %6960 = vmatpush1.msra.mxu0 0.0
        %6961 = vmatprep.subr.mxu0 0.0
        %6962 = vmatpush1.msra.mxu0 0.0
        %6963 = vmatprep.subr.mxu0 0.0
        %6964 = vmatpush1.msra.mxu0 0.0
        %6965 = vmatprep.subr.mxu0 0.0
        %6966 = vmatpush1.msra.mxu0 0.0
        %6967 = vmatprep.subr.mxu0 0.0
        %6968 = vmatpush1.msra.mxu0 0.0
        %6969 = vmatprep.subr.mxu0 0.0
        %6970 = vmatpush1.msra.mxu0 0.0
        %6971 = vmatprep.subr.mxu0 0.0
        %6972 = vmatpush1.msra.mxu0 0.0
        %6973 = vmatprep.subr.mxu0 0.0
        %6974 = vmatpush1.msra.mxu0 0.0
        %6975 = vmatprep.subr.mxu0 0.0
        %6976 = vmatpush1.msra.mxu0 0.0
        %6977 = vmatprep.subr.mxu0 0.0
        %6978 = vmatpush1.msra.mxu0 0.0
        %6979 = vmatprep.subr.mxu0 0.0
        %6980 = vmatpush1.msra.mxu0 0.0
        %6981 = vmatprep.mubr.f32.mxu0 0.0
        %6982 = vmatmul.mubr.f32.gmra.mrb[0].mxu0 %v6819
        %v6983 = vpop.f32.mrb[0].mxu0
        %v6984 = vadd.f32 0.0, %v6983
        %v6985 = vpop.f32.mrb[0].mxu0
        %6986 = vmatprep.mubr.f32.mxu0 0.0
        %6987 = vmatmul.mubr.f32.gmra.mrb[0].mxu0 %v6822
        %v6988 = vpop.f32.mrb[0].mxu0
        %v6989 = vadd.f32 0.0, %v6988
        %v6990 = vpop.f32.mrb[0].mxu0
        %6991 = vmatprep.mubr.f32.mxu0 0.0
        %6992 = vmatmul.mubr.f32.gmra.mrb[0].mxu0 %v6825
        %v6993 = vpop.f32.mrb[0].mxu0
        %v6994 = vadd.f32 0.0, %v6993
        %v6995 = vpop.f32.mrb[0].mxu0
        %6996 = vmatprep.mubr.f32.mxu0 0.0
        %6997 = vmatmul.mubr.f32.gmra.mrb[0].mxu0 %v6828
        %v6998 = vpop.f32.mrb[0].mxu0
        %v6999 = vadd.f32 0.0, %v6998
        %v7000 = vpop.f32.mrb[0].mxu0
        %7001 = vmatprep.mubr.f32.mxu0 0.0
        %7002 = vmatmul.mubr.f32.gmra.mrb[0].mxu0 %v6831
        %v7003 = vpop.f32.mrb[0].mxu0
        %v7004 = vadd.f32 0.0, %v7003
        %v7005 = vpop.f32.mrb[0].mxu0
        %7006 = vmatprep.mubr.f32.mxu0 0.0
        %7007 = vmatmul.mubr.f32.gmra.mrb[0].mxu0 %v6834
        %v7008 = vpop.f32.mrb[0].mxu0
        %v7009 = vadd.f32 0.0, %v7008
        %v7010 = vpop.f32.mrb[0].mxu0
        %7011 = vmatprep.mubr.f32.mxu0 0.0
        %7012 = vmatmul.mubr.f32.gmra.mrb[0].mxu0 %v6837
        %v7013 = vpop.f32.mrb[0].mxu0
        %v7014 = vadd.f32 0.0, %v7013
        %v7015 = vpop.f32.mrb[0].mxu0
        %7016 = vmatprep.mubr.f32.mxu0 0.0
        %7017 = vmatmul.mubr.f32.gmra.mrb[0].mxu0 %v6840
        %v7018 = vpop.f32.mrb[0].mxu0
        %v7019 = vadd.f32 0.0, %v7018
        %v7020 = vpop.f32.mrb[0].mxu0
        %7021 = vmatprep.mubr.f32.mxu0 0.0
        %7022 = vmatmul.mubr.f32.gmra.mrb[0].mxu0 %v6843
        %v7023 = vpop.f32.mrb[0].mxu0
        %v7024 = vadd.f32 0.0, %v7023
        %v7025 = vpop.f32.mrb[0].mxu0
        %7026 = vmatprep.mubr.f32.mxu0 0.0
        %7027 = vmatmul.mubr.f32.gmra.mrb[0].mxu0 %v6846
        %v7028 = vpop.f32.mrb[0].mxu0
        %v7029 = vadd.f32 0.0, %v7028
        %v7030 = vpop.f32.mrb[0].mxu0
        %7031 = vmatprep.mubr.f32.mxu0 0.0
        %7032 = vmatmul.mubr.f32.gmra.mrb[0].mxu0 %v6849
        %v7033 = vpop.f32.mrb[0].mxu0
        %v7034 = vadd.f32 0.0, %v7033
        %v7035 = vpop.f32.mrb[0].mxu0
        %7036 = vmatprep.mubr.f32.mxu0 0.0
        %7037 = vmatmul.mubr.f32.gmra.mrb[0].mxu0 %v6852
        %v7038 = vpop.f32.mrb[0].mxu0
        %v7039 = vadd.f32 0.0, %v7038
        %v7040 = vpop.f32.mrb[0].mxu0
        %7041 = vmatprep.mubr.f32.mxu0 0.0
        %7042 = vmatmul.mubr.f32.gmra.mrb[0].mxu0 %v6855
        %v7043 = vpop.f32.mrb[0].mxu0
        %v7044 = vadd.f32 0.0, %v7043
        %v7045 = vpop.f32.mrb[0].mxu0
        %7046 = vmatprep.mubr.f32.mxu0 0.0
        %7047 = vmatmul.mubr.f32.gmra.mrb[0].mxu0 %v6858
        %v7048 = vpop.f32.mrb[0].mxu0
        %v7049 = vadd.f32 0.0, %v7048
        %v7050 = vpop.f32.mrb[0].mxu0
        %7051 = vmatprep.mubr.f32.mxu0 0.0
        %7052 = vmatmul.mubr.f32.gmra.mrb[0].mxu0 %v6861
        %v7053 = vpop.f32.mrb[0].mxu0
        %v7054 = vadd.f32 0.0, %v7053
        %v7055 = vpop.f32.mrb[0].mxu0
        %7056 = vmatprep.mubr.f32.mxu0 0.0
        %7057 = vmatmul.mubr.f32.gmra.mrb[0].mxu0 %v6864
        %v7058 = vpop.f32.mrb[0].mxu0
        %v7059 = vadd.f32 0.0, %v7058
        %v7060 = vpop.f32.mrb[0].mxu0
        %7061 = vmatprep.mubr.f32.mxu0 0.0
        %7062 = vmatmul.mubr.f32.gmra.mrb[0].mxu0 %v6867
        %v7063 = vpop.f32.mrb[0].mxu0
        %v7064 = vadd.f32 0.0, %v7063
        %v7065 = vpop.f32.mrb[0].mxu0
        %7066 = vmatprep.mubr.f32.mxu0 0.0
        %7067 = vmatmul.mubr.f32.gmra.mrb[0].mxu0 %v6870
        %v7068 = vpop.f32.mrb[0].mxu0
        %v7069 = vadd.f32 0.0, %v7068
        %v7070 = vpop.f32.mrb[0].mxu0
        %7071 = vmatprep.mubr.f32.mxu0 0.0
        %7072 = vmatmul.mubr.f32.gmra.mrb[0].mxu0 %v6873
        %v7073 = vpop.f32.mrb[0].mxu0
        %v7074 = vadd.f32 0.0, %v7073
        %v7075 = vpop.f32.mrb[0].mxu0
        %7076 = vmatprep.mubr.f32.mxu0 0.0
        %7077 = vmatmul.mubr.f32.gmra.mrb[0].mxu0 %v6876
        %v7078 = vpop.f32.mrb[0].mxu0
        %v7079 = vadd.f32 0.0, %v7078
        %v7080 = vpop.f32.mrb[0].mxu0
        %7081 = vmatprep.mubr.f32.mxu0 0.0
        %7082 = vmatmul.mubr.f32.gmra.mrb[0].mxu0 %v6879
        %v7083 = vpop.f32.mrb[0].mxu0
        %v7084 = vadd.f32 0.0, %v7083
        %v7085 = vpop.f32.mrb[0].mxu0
        %7086 = vmatprep.mubr.f32.mxu0 0.0
        %7087 = vmatmul.mubr.f32.gmra.mrb[0].mxu0 %v6882
        %v7088 = vpop.f32.mrb[0].mxu0
        %v7089 = vadd.f32 0.0, %v7088
        %v7090 = vpop.f32.mrb[0].mxu0
        %7091 = vmatprep.mubr.f32.mxu0 0.0
        %7092 = vmatmul.mubr.f32.gmra.mrb[0].mxu0 %v6885
        %v7093 = vpop.f32.mrb[0].mxu0
        %v7094 = vadd.f32 0.0, %v7093
        %v7095 = vpop.f32.mrb[0].mxu0
        %7096 = vmatprep.mubr.f32.mxu0 0.0
        %7097 = vmatmul.mubr.f32.gmra.mrb[0].mxu0 %v6888
        %v7098 = vpop.f32.mrb[0].mxu0
        %v7099 = vadd.f32 0.0, %v7098
        %v7100 = vpop.f32.mrb[0].mxu0
        %7101 = vmatprep.mubr.f32.mxu0 0.0
        %7102 = vmatmul.mubr.f32.gmra.mrb[0].mxu0 %v6891
        %v7103 = vpop.f32.mrb[0].mxu0
        %v7104 = vadd.f32 0.0, %v7103
        %v7105 = vpop.f32.mrb[0].mxu0
        %7106 = vmatprep.mubr.f32.mxu0 0.0
        %7107 = vmatmul.mubr.f32.gmra.mrb[0].mxu0 %v6894
        %v7108 = vpop.f32.mrb[0].mxu0
        %v7109 = vadd.f32 0.0, %v7108
        %v7110 = vpop.f32.mrb[0].mxu0
        %7111 = vmatprep.mubr.f32.mxu0 0.0
        %7112 = vmatmul.mubr.f32.gmra.mrb[0].mxu0 %v6897
        %v7113 = vpop.f32.mrb[0].mxu0
        %v7114 = vadd.f32 0.0, %v7113
        %v7115 = vpop.f32.mrb[0].mxu0
        %7116 = vmatprep.mubr.f32.mxu0 0.0
        %7117 = vmatmul.mubr.f32.gmra.mrb[0].mxu0 %v6900
        %v7118 = vpop.f32.mrb[0].mxu0
        %v7119 = vadd.f32 0.0, %v7118
        %v7120 = vpop.f32.mrb[0].mxu0
        %7121 = vmatprep.mubr.f32.mxu0 0.0
        %7122 = vmatmul.mubr.f32.gmra.mrb[0].mxu0 %v6903
        %v7123 = vpop.f32.mrb[0].mxu0
        %v7124 = vadd.f32 0.0, %v7123
        %v7125 = vpop.f32.mrb[0].mxu0
        %7126 = vmatprep.mubr.f32.mxu0 0.0
        %7127 = vmatmul.mubr.f32.gmra.mrb[0].mxu0 %v6906
        %v7128 = vpop.f32.mrb[0].mxu0
        %v7129 = vadd.f32 0.0, %v7128
        %v7130 = vpop.f32.mrb[0].mxu0
        %7131 = vmatprep.mubr.f32.mxu0 0.0
        %7132 = vmatmul.mubr.f32.gmra.mrb[0].mxu0 %v6909
        %v7133 = vpop.f32.mrb[0].mxu0
        %v7134 = vadd.f32 0.0, %v7133
        %v7135 = vpop.f32.mrb[0].mxu0
        %7136 = vmatprep.mubr.f32.mxu0 0.0
        %7137 = vmatmul.mubr.f32.gmra.mrb[0].mxu0 %v6912
        %v7138 = vpop.f32.mrb[0].mxu0
        %v7139 = vadd.f32 0.0, %v7138
        %v7140 = vpop.f32.mrb[0].mxu0
        %7141 = vdwg.mxu0
        %v7142 = vadd.f32 %v6752, %v6984
        %v7143 = vadd.f32 %v6753, %v6989
        %v7144 = vadd.f32 %v6754, %v6994
        %v7145 = vadd.f32 %v6755, %v6999
        %v7146 = vadd.f32 %v6756, %v7004
        %v7147 = vadd.f32 %v6757, %v7009
        %v7148 = vadd.f32 %v6758, %v7014
        %v7149 = vadd.f32 %v6759, %v7019
        %v7150 = vadd.f32 %v6760, %v7024
        %v7151 = vadd.f32 %v6761, %v7029
        %v7152 = vadd.f32 %v6762, %v7034
        %v7153 = vadd.f32 %v6763, %v7039
        %v7154 = vadd.f32 %v6764, %v7044
        %v7155 = vadd.f32 %v6765, %v7049
        %v7156 = vadd.f32 %v6766, %v7054
        %v7157 = vadd.f32 %v6767, %v7059
        %v7158 = vadd.f32 %v6768, %v7064
        %v7159 = vadd.f32 %v6769, %v7069
        %v7160 = vadd.f32 %v6770, %v7074
        %v7161 = vadd.f32 %v6771, %v7079
        %v7162 = vadd.f32 %v6772, %v7084
        %v7163 = vadd.f32 %v6773, %v7089
        %v7164 = vadd.f32 %v6774, %v7094
        %v7165 = vadd.f32 %v6775, %v7099
        %v7166 = vadd.f32 %v6776, %v7104
        %v7167 = vadd.f32 %v6777, %v7109
        %v7168 = vadd.f32 %v6778, %v7114
        %v7169 = vadd.f32 %v6779, %v7119
        %v7170 = vadd.f32 %v6780, %v7124
        %v7171 = vadd.f32 %v6781, %v7129
        %v7172 = vadd.f32 %v6782, %v7134
        %v7173 = vadd.f32 %v6783, %v7139
        %s7174 = sadd.s32 %s203, 2
        %s7175 = smul.u32 %s7174, 192
        %s7176 = scalar_lea.vmem %s193, %s7175
        %v7177 = vld [vmem:[%s7176] sm:$0xff]
        %v7178 = vld [vmem:[%s7176 + $0x10] sm:$0xff]
        %v7179 = vld [vmem:[%s7176 + $0x20] sm:$0xff]
        %v7180 = vld [vmem:[%s7176 + $0x30] sm:$0xff]
        %v7181 = vld [vmem:[%s7176 + $0x40] sm:$0xff]
        %v7182 = vld [vmem:[%s7176 + $0x50] sm:$0xff]
        %v7183 = vld [vmem:[%s7176 + $0x60] sm:$0xff]
        %v7184 = vld [vmem:[%s7176 + $0x70] sm:$0xff]
        %v7185 = vld [vmem:[%s7176 + $0xc0] sm:$0xff]
        %v7186 = vld [vmem:[%s7176 + $0xd0] sm:$0xff]
        %v7187 = vld [vmem:[%s7176 + $0xe0] sm:$0xff]
        %v7188 = vld [vmem:[%s7176 + $0xf0] sm:$0xff]
        %v7189 = vld [vmem:[%s7176 + $0x100] sm:$0xff]
        %v7190 = vld [vmem:[%s7176 + $0x110] sm:$0xff]
        %v7191 = vld [vmem:[%s7176 + $0x120] sm:$0xff]
        %v7192 = vld [vmem:[%s7176 + $0x130] sm:$0xff]
        %v7193 = vld [vmem:[%s7176 + $0x180] sm:$0xff]
        %v7194 = vld [vmem:[%s7176 + $0x190] sm:$0xff]
        %v7195 = vld [vmem:[%s7176 + $0x1a0] sm:$0xff]
        %v7196 = vld [vmem:[%s7176 + $0x1b0] sm:$0xff]
        %v7197 = vld [vmem:[%s7176 + $0x1c0] sm:$0xff]
        %v7198 = vld [vmem:[%s7176 + $0x1d0] sm:$0xff]
        %v7199 = vld [vmem:[%s7176 + $0x1e0] sm:$0xff]
        %v7200 = vld [vmem:[%s7176 + $0x1f0] sm:$0xff]
        %v7201 = vld [vmem:[%s7176 + $0x240] sm:$0xff]
        %v7202 = vld [vmem:[%s7176 + $0x250] sm:$0xff]
        %v7203 = vld [vmem:[%s7176 + $0x260] sm:$0xff]
        %v7204 = vld [vmem:[%s7176 + $0x270] sm:$0xff]
        %v7205 = vld [vmem:[%s7176 + $0x280] sm:$0xff]
        %v7206 = vld [vmem:[%s7176 + $0x290] sm:$0xff]
        %v7207 = vld [vmem:[%s7176 + $0x2a0] sm:$0xff]
        %v7208 = vld [vmem:[%s7176 + $0x2b0] sm:$0xff]
        %s7209 = scalar_lea.vmem %s1, 72
        %v7210 = vld [vmem:[%s7209] sm:$0xf]
        %v7212 = vsel %vm273, %v7177, 0
        %v7215 = vsel %vm273, %v7178, 0
        %v7218 = vsel %vm273, %v7179, 0
        %v7221 = vsel %vm273, %v7180, 0
        %v7224 = vsel %vm273, %v7181, 0
        %v7227 = vsel %vm273, %v7182, 0
        %v7230 = vsel %vm273, %v7183, 0
        %v7233 = vsel %vm273, %v7184, 0
        %v7236 = vsel %vm273, %v7185, 0
        %v7239 = vsel %vm273, %v7186, 0
        %v7242 = vsel %vm273, %v7187, 0
        %v7245 = vsel %vm273, %v7188, 0
        %v7248 = vsel %vm273, %v7189, 0
        %v7251 = vsel %vm273, %v7190, 0
        %v7254 = vsel %vm273, %v7191, 0
        %v7257 = vsel %vm273, %v7192, 0
        %v7260 = vsel %vm273, %v7193, 0
        %v7263 = vsel %vm273, %v7194, 0
        %v7266 = vsel %vm273, %v7195, 0
        %v7269 = vsel %vm273, %v7196, 0
        %v7272 = vsel %vm273, %v7197, 0
        %v7275 = vsel %vm273, %v7198, 0
        %v7278 = vsel %vm273, %v7199, 0
        %v7281 = vsel %vm273, %v7200, 0
        %v7284 = vsel %vm273, %v7201, 0
        %v7287 = vsel %vm273, %v7202, 0
        %v7290 = vsel %vm273, %v7203, 0
        %v7293 = vsel %vm273, %v7204, 0
        %v7296 = vsel %vm273, %v7205, 0
        %v7299 = vsel %vm273, %v7206, 0
        %v7302 = vsel %vm273, %v7207, 0
        %v7305 = vsel %vm273, %v7208, 0
        %v7308 = vsel %vm370, %v7210, 0
        %7310 = vmatprep.subr.mxu0 0.0
        %7311 = vmatpush1.msra.mxu0 %v7308
        %7312 = vmatprep.subr.mxu0 0.0
        %7313 = vmatpush1.msra.mxu0 0.0
        %7314 = vmatprep.subr.mxu0 0.0
        %7315 = vmatpush1.msra.mxu0 0.0
        %7316 = vmatprep.subr.mxu0 0.0
        %7317 = vmatpush1.msra.mxu0 0.0
        %7318 = vmatprep.subr.mxu0 0.0
        %7319 = vmatpush1.msra.mxu0 0.0
        %7320 = vmatprep.subr.mxu0 0.0
        %7321 = vmatpush1.msra.mxu0 0.0
        %7322 = vmatprep.subr.mxu0 0.0
        %7323 = vmatpush1.msra.mxu0 0.0
        %7324 = vmatprep.subr.mxu0 0.0
        %7325 = vmatpush1.msra.mxu0 0.0
        %7326 = vmatprep.subr.mxu0 0.0
        %7327 = vmatpush1.msra.mxu0 0.0
        %7328 = vmatprep.subr.mxu0 0.0
        %7329 = vmatpush1.msra.mxu0 0.0
        %7330 = vmatprep.subr.mxu0 0.0
        %7331 = vmatpush1.msra.mxu0 0.0
        %7332 = vmatprep.subr.mxu0 0.0
        %7333 = vmatpush1.msra.mxu0 0.0
        %7334 = vmatprep.subr.mxu0 0.0
        %7335 = vmatpush1.msra.mxu0 0.0
        %7336 = vmatprep.subr.mxu0 0.0
        %7337 = vmatpush1.msra.mxu0 0.0
        %7338 = vmatprep.subr.mxu0 0.0
        %7339 = vmatpush1.msra.mxu0 0.0
        %7340 = vmatprep.subr.mxu0 0.0
        %7341 = vmatpush1.msra.mxu0 0.0
        %7342 = vmatprep.subr.mxu0 0.0
        %7343 = vmatpush1.msra.mxu0 0.0
        %7344 = vmatprep.subr.mxu0 0.0
        %7345 = vmatpush1.msra.mxu0 0.0
        %7346 = vmatprep.subr.mxu0 0.0
        %7347 = vmatpush1.msra.mxu0 0.0
        %7348 = vmatprep.subr.mxu0 0.0
        %7349 = vmatpush1.msra.mxu0 0.0
        %7350 = vmatprep.subr.mxu0 0.0
        %7351 = vmatpush1.msra.mxu0 0.0
        %7352 = vmatprep.subr.mxu0 0.0
        %7353 = vmatpush1.msra.mxu0 0.0
        %7354 = vmatprep.subr.mxu0 0.0
        %7355 = vmatpush1.msra.mxu0 0.0
        %7356 = vmatprep.subr.mxu0 0.0
        %7357 = vmatpush1.msra.mxu0 0.0
        %7358 = vmatprep.subr.mxu0 0.0
        %7359 = vmatpush1.msra.mxu0 0.0
        %7360 = vmatprep.subr.mxu0 0.0
        %7361 = vmatpush1.msra.mxu0 0.0
        %7362 = vmatprep.subr.mxu0 0.0
        %7363 = vmatpush1.msra.mxu0 0.0
        %7364 = vmatprep.subr.mxu0 0.0
        %7365 = vmatpush1.msra.mxu0 0.0
        %7366 = vmatprep.subr.mxu0 0.0
        %7367 = vmatpush1.msra.mxu0 0.0
        %7368 = vmatprep.subr.mxu0 0.0
        %7369 = vmatpush1.msra.mxu0 0.0
        %7370 = vmatprep.subr.mxu0 0.0
        %7371 = vmatpush1.msra.mxu0 0.0
        %7372 = vmatprep.subr.mxu0 0.0
        %7373 = vmatpush1.msra.mxu0 0.0
        %7374 = vmatprep.mubr.f32.mxu0 0.0
        %7375 = vmatmul.mubr.f32.gmra.mrb[0].mxu0 %v7212
        %v7376 = vpop.f32.mrb[0].mxu0
        %v7377 = vadd.f32 0.0, %v7376
        %v7378 = vpop.f32.mrb[0].mxu0
        %7379 = vmatprep.mubr.f32.mxu0 0.0
        %7380 = vmatmul.mubr.f32.gmra.mrb[0].mxu0 %v7215
        %v7381 = vpop.f32.mrb[0].mxu0
        %v7382 = vadd.f32 0.0, %v7381
        %v7383 = vpop.f32.mrb[0].mxu0
        %7384 = vmatprep.mubr.f32.mxu0 0.0
        %7385 = vmatmul.mubr.f32.gmra.mrb[0].mxu0 %v7218
        %v7386 = vpop.f32.mrb[0].mxu0
        %v7387 = vadd.f32 0.0, %v7386
        %v7388 = vpop.f32.mrb[0].mxu0
        %7389 = vmatprep.mubr.f32.mxu0 0.0
        %7390 = vmatmul.mubr.f32.gmra.mrb[0].mxu0 %v7221
        %v7391 = vpop.f32.mrb[0].mxu0
        %v7392 = vadd.f32 0.0, %v7391
        %v7393 = vpop.f32.mrb[0].mxu0
        %7394 = vmatprep.mubr.f32.mxu0 0.0
        %7395 = vmatmul.mubr.f32.gmra.mrb[0].mxu0 %v7224
        %v7396 = vpop.f32.mrb[0].mxu0
        %v7397 = vadd.f32 0.0, %v7396
        %v7398 = vpop.f32.mrb[0].mxu0
        %7399 = vmatprep.mubr.f32.mxu0 0.0
        %7400 = vmatmul.mubr.f32.gmra.mrb[0].mxu0 %v7227
        %v7401 = vpop.f32.mrb[0].mxu0
        %v7402 = vadd.f32 0.0, %v7401
        %v7403 = vpop.f32.mrb[0].mxu0
        %7404 = vmatprep.mubr.f32.mxu0 0.0
        %7405 = vmatmul.mubr.f32.gmra.mrb[0].mxu0 %v7230
        %v7406 = vpop.f32.mrb[0].mxu0
        %v7407 = vadd.f32 0.0, %v7406
        %v7408 = vpop.f32.mrb[0].mxu0
        %7409 = vmatprep.mubr.f32.mxu0 0.0
        %7410 = vmatmul.mubr.f32.gmra.mrb[0].mxu0 %v7233
        %v7411 = vpop.f32.mrb[0].mxu0
        %v7412 = vadd.f32 0.0, %v7411
        %v7413 = vpop.f32.mrb[0].mxu0
        %7414 = vmatprep.mubr.f32.mxu0 0.0
        %7415 = vmatmul.mubr.f32.gmra.mrb[0].mxu0 %v7236
        %v7416 = vpop.f32.mrb[0].mxu0
        %v7417 = vadd.f32 0.0, %v7416
        %v7418 = vpop.f32.mrb[0].mxu0
        %7419 = vmatprep.mubr.f32.mxu0 0.0
        %7420 = vmatmul.mubr.f32.gmra.mrb[0].mxu0 %v7239
        %v7421 = vpop.f32.mrb[0].mxu0
        %v7422 = vadd.f32 0.0, %v7421
        %v7423 = vpop.f32.mrb[0].mxu0
        %7424 = vmatprep.mubr.f32.mxu0 0.0
        %7425 = vmatmul.mubr.f32.gmra.mrb[0].mxu0 %v7242
        %v7426 = vpop.f32.mrb[0].mxu0
        %v7427 = vadd.f32 0.0, %v7426
        %v7428 = vpop.f32.mrb[0].mxu0
        %7429 = vmatprep.mubr.f32.mxu0 0.0
        %7430 = vmatmul.mubr.f32.gmra.mrb[0].mxu0 %v7245
        %v7431 = vpop.f32.mrb[0].mxu0
        %v7432 = vadd.f32 0.0, %v7431
        %v7433 = vpop.f32.mrb[0].mxu0
        %7434 = vmatprep.mubr.f32.mxu0 0.0
        %7435 = vmatmul.mubr.f32.gmra.mrb[0].mxu0 %v7248
        %v7436 = vpop.f32.mrb[0].mxu0
        %v7437 = vadd.f32 0.0, %v7436
        %v7438 = vpop.f32.mrb[0].mxu0
        %7439 = vmatprep.mubr.f32.mxu0 0.0
        %7440 = vmatmul.mubr.f32.gmra.mrb[0].mxu0 %v7251
        %v7441 = vpop.f32.mrb[0].mxu0
        %v7442 = vadd.f32 0.0, %v7441
        %v7443 = vpop.f32.mrb[0].mxu0
        %7444 = vmatprep.mubr.f32.mxu0 0.0
        %7445 = vmatmul.mubr.f32.gmra.mrb[0].mxu0 %v7254
        %v7446 = vpop.f32.mrb[0].mxu0
        %v7447 = vadd.f32 0.0, %v7446
        %v7448 = vpop.f32.mrb[0].mxu0
        %7449 = vmatprep.mubr.f32.mxu0 0.0
        %7450 = vmatmul.mubr.f32.gmra.mrb[0].mxu0 %v7257
        %v7451 = vpop.f32.mrb[0].mxu0
        %v7452 = vadd.f32 0.0, %v7451
        %v7453 = vpop.f32.mrb[0].mxu0
        %7454 = vmatprep.mubr.f32.mxu0 0.0
        %7455 = vmatmul.mubr.f32.gmra.mrb[0].mxu0 %v7260
        %v7456 = vpop.f32.mrb[0].mxu0
        %v7457 = vadd.f32 0.0, %v7456
        %v7458 = vpop.f32.mrb[0].mxu0
        %7459 = vmatprep.mubr.f32.mxu0 0.0
        %7460 = vmatmul.mubr.f32.gmra.mrb[0].mxu0 %v7263
        %v7461 = vpop.f32.mrb[0].mxu0
        %v7462 = vadd.f32 0.0, %v7461
        %v7463 = vpop.f32.mrb[0].mxu0
        %7464 = vmatprep.mubr.f32.mxu0 0.0
        %7465 = vmatmul.mubr.f32.gmra.mrb[0].mxu0 %v7266
        %v7466 = vpop.f32.mrb[0].mxu0
        %v7467 = vadd.f32 0.0, %v7466
        %v7468 = vpop.f32.mrb[0].mxu0
        %7469 = vmatprep.mubr.f32.mxu0 0.0
        %7470 = vmatmul.mubr.f32.gmra.mrb[0].mxu0 %v7269
        %v7471 = vpop.f32.mrb[0].mxu0
        %v7472 = vadd.f32 0.0, %v7471
        %v7473 = vpop.f32.mrb[0].mxu0
        %7474 = vmatprep.mubr.f32.mxu0 0.0
        %7475 = vmatmul.mubr.f32.gmra.mrb[0].mxu0 %v7272
        %v7476 = vpop.f32.mrb[0].mxu0
        %v7477 = vadd.f32 0.0, %v7476
        %v7478 = vpop.f32.mrb[0].mxu0
        %7479 = vmatprep.mubr.f32.mxu0 0.0
        %7480 = vmatmul.mubr.f32.gmra.mrb[0].mxu0 %v7275
        %v7481 = vpop.f32.mrb[0].mxu0
        %v7482 = vadd.f32 0.0, %v7481
        %v7483 = vpop.f32.mrb[0].mxu0
        %7484 = vmatprep.mubr.f32.mxu0 0.0
        %7485 = vmatmul.mubr.f32.gmra.mrb[0].mxu0 %v7278
        %v7486 = vpop.f32.mrb[0].mxu0
        %v7487 = vadd.f32 0.0, %v7486
        %v7488 = vpop.f32.mrb[0].mxu0
        %7489 = vmatprep.mubr.f32.mxu0 0.0
        %7490 = vmatmul.mubr.f32.gmra.mrb[0].mxu0 %v7281
        %v7491 = vpop.f32.mrb[0].mxu0
        %v7492 = vadd.f32 0.0, %v7491
        %v7493 = vpop.f32.mrb[0].mxu0
        %7494 = vmatprep.mubr.f32.mxu0 0.0
        %7495 = vmatmul.mubr.f32.gmra.mrb[0].mxu0 %v7284
        %v7496 = vpop.f32.mrb[0].mxu0
        %v7497 = vadd.f32 0.0, %v7496
        %v7498 = vpop.f32.mrb[0].mxu0
        %7499 = vmatprep.mubr.f32.mxu0 0.0
        %7500 = vmatmul.mubr.f32.gmra.mrb[0].mxu0 %v7287
        %v7501 = vpop.f32.mrb[0].mxu0
        %v7502 = vadd.f32 0.0, %v7501
        %v7503 = vpop.f32.mrb[0].mxu0
        %7504 = vmatprep.mubr.f32.mxu0 0.0
        %7505 = vmatmul.mubr.f32.gmra.mrb[0].mxu0 %v7290
        %v7506 = vpop.f32.mrb[0].mxu0
        %v7507 = vadd.f32 0.0, %v7506
        %v7508 = vpop.f32.mrb[0].mxu0
        %7509 = vmatprep.mubr.f32.mxu0 0.0
        %7510 = vmatmul.mubr.f32.gmra.mrb[0].mxu0 %v7293
        %v7511 = vpop.f32.mrb[0].mxu0
        %v7512 = vadd.f32 0.0, %v7511
        %v7513 = vpop.f32.mrb[0].mxu0
        %7514 = vmatprep.mubr.f32.mxu0 0.0
        %7515 = vmatmul.mubr.f32.gmra.mrb[0].mxu0 %v7296
        %v7516 = vpop.f32.mrb[0].mxu0
        %v7517 = vadd.f32 0.0, %v7516
        %v7518 = vpop.f32.mrb[0].mxu0
        %7519 = vmatprep.mubr.f32.mxu0 0.0
        %7520 = vmatmul.mubr.f32.gmra.mrb[0].mxu0 %v7299
        %v7521 = vpop.f32.mrb[0].mxu0
        %v7522 = vadd.f32 0.0, %v7521
        %v7523 = vpop.f32.mrb[0].mxu0
        %7524 = vmatprep.mubr.f32.mxu0 0.0
        %7525 = vmatmul.mubr.f32.gmra.mrb[0].mxu0 %v7302
        %v7526 = vpop.f32.mrb[0].mxu0
        %v7527 = vadd.f32 0.0, %v7526
        %v7528 = vpop.f32.mrb[0].mxu0
        %7529 = vmatprep.mubr.f32.mxu0 0.0
        %7530 = vmatmul.mubr.f32.gmra.mrb[0].mxu0 %v7305
        %v7531 = vpop.f32.mrb[0].mxu0
        %v7532 = vadd.f32 0.0, %v7531
        %v7533 = vpop.f32.mrb[0].mxu0
        %7534 = vdwg.mxu0
        %v7535 = vadd.f32 %v7142, %v7377
        %v7536 = vadd.f32 %v7143, %v7382
        %v7537 = vadd.f32 %v7144, %v7387
        %v7538 = vadd.f32 %v7145, %v7392
        %v7539 = vadd.f32 %v7146, %v7397
        %v7540 = vadd.f32 %v7147, %v7402
        %v7541 = vadd.f32 %v7148, %v7407
        %v7542 = vadd.f32 %v7149, %v7412
        %v7543 = vadd.f32 %v7150, %v7417
        %v7544 = vadd.f32 %v7151, %v7422
        %v7545 = vadd.f32 %v7152, %v7427
        %v7546 = vadd.f32 %v7153, %v7432
        %v7547 = vadd.f32 %v7154, %v7437
        %v7548 = vadd.f32 %v7155, %v7442
        %v7549 = vadd.f32 %v7156, %v7447
        %v7550 = vadd.f32 %v7157, %v7452
        %v7551 = vadd.f32 %v7158, %v7457
        %v7552 = vadd.f32 %v7159, %v7462
        %v7553 = vadd.f32 %v7160, %v7467
        %v7554 = vadd.f32 %v7161, %v7472
        %v7555 = vadd.f32 %v7162, %v7477
        %v7556 = vadd.f32 %v7163, %v7482
        %v7557 = vadd.f32 %v7164, %v7487
        %v7558 = vadd.f32 %v7165, %v7492
        %v7559 = vadd.f32 %v7166, %v7497
        %v7560 = vadd.f32 %v7167, %v7502
        %v7561 = vadd.f32 %v7168, %v7507
        %v7562 = vadd.f32 %v7169, %v7512
        %v7563 = vadd.f32 %v7170, %v7517
        %v7564 = vadd.f32 %v7171, %v7522
        %v7565 = vadd.f32 %v7172, %v7527
        %v7566 = vadd.f32 %v7173, %v7532
        %v7567 = vld [vmem:[%s7176 + $0x2] sm:$0xff]
        %v7568 = vld [vmem:[%s7176 + $0x12] sm:$0xff]
        %v7569 = vld [vmem:[%s7176 + $0x22] sm:$0xff]
        %v7570 = vld [vmem:[%s7176 + $0x32] sm:$0xff]
        %v7571 = vld [vmem:[%s7176 + $0x42] sm:$0xff]
        %v7572 = vld [vmem:[%s7176 + $0x52] sm:$0xff]
        %v7573 = vld [vmem:[%s7176 + $0x62] sm:$0xff]
        %v7574 = vld [vmem:[%s7176 + $0x72] sm:$0xff]
        %v7575 = vld [vmem:[%s7176 + $0xc2] sm:$0xff]
        %v7576 = vld [vmem:[%s7176 + $0xd2] sm:$0xff]
        %v7577 = vld [vmem:[%s7176 + $0xe2] sm:$0xff]
        %v7578 = vld [vmem:[%s7176 + $0xf2] sm:$0xff]
        %v7579 = vld [vmem:[%s7176 + $0x102] sm:$0xff]
        %v7580 = vld [vmem:[%s7176 + $0x112] sm:$0xff]
        %v7581 = vld [vmem:[%s7176 + $0x122] sm:$0xff]
        %v7582 = vld [vmem:[%s7176 + $0x132] sm:$0xff]
        %v7583 = vld [vmem:[%s7176 + $0x182] sm:$0xff]
        %v7584 = vld [vmem:[%s7176 + $0x192] sm:$0xff]
        %v7585 = vld [vmem:[%s7176 + $0x1a2] sm:$0xff]
        %v7586 = vld [vmem:[%s7176 + $0x1b2] sm:$0xff]
        %v7587 = vld [vmem:[%s7176 + $0x1c2] sm:$0xff]
        %v7588 = vld [vmem:[%s7176 + $0x1d2] sm:$0xff]
        %v7589 = vld [vmem:[%s7176 + $0x1e2] sm:$0xff]
        %v7590 = vld [vmem:[%s7176 + $0x1f2] sm:$0xff]
        %v7591 = vld [vmem:[%s7176 + $0x242] sm:$0xff]
        %v7592 = vld [vmem:[%s7176 + $0x252] sm:$0xff]
        %v7593 = vld [vmem:[%s7176 + $0x262] sm:$0xff]
        %v7594 = vld [vmem:[%s7176 + $0x272] sm:$0xff]
        %v7595 = vld [vmem:[%s7176 + $0x282] sm:$0xff]
        %v7596 = vld [vmem:[%s7176 + $0x292] sm:$0xff]
        %v7597 = vld [vmem:[%s7176 + $0x2a2] sm:$0xff]
        %v7598 = vld [vmem:[%s7176 + $0x2b2] sm:$0xff]
        %s7599 = scalar_lea.vmem %s1, 76
        %v7600 = vld [vmem:[%s7599] sm:$0xf]
        %v7602 = vsel %vm273, %v7567, 0
        %v7605 = vsel %vm273, %v7568, 0
        %v7608 = vsel %vm273, %v7569, 0
        %v7611 = vsel %vm273, %v7570, 0
        %v7614 = vsel %vm273, %v7571, 0
        %v7617 = vsel %vm273, %v7572, 0
        %v7620 = vsel %vm273, %v7573, 0
        %v7623 = vsel %vm273, %v7574, 0
        %v7626 = vsel %vm273, %v7575, 0
        %v7629 = vsel %vm273, %v7576, 0
        %v7632 = vsel %vm273, %v7577, 0
        %v7635 = vsel %vm273, %v7578, 0
        %v7638 = vsel %vm273, %v7579, 0
        %v7641 = vsel %vm273, %v7580, 0
        %v7644 = vsel %vm273, %v7581, 0
        %v7647 = vsel %vm273, %v7582, 0
        %v7650 = vsel %vm273, %v7583, 0
        %v7653 = vsel %vm273, %v7584, 0
        %v7656 = vsel %vm273, %v7585, 0
        %v7659 = vsel %vm273, %v7586, 0
        %v7662 = vsel %vm273, %v7587, 0
        %v7665 = vsel %vm273, %v7588, 0
        %v7668 = vsel %vm273, %v7589, 0
        %v7671 = vsel %vm273, %v7590, 0
        %v7674 = vsel %vm273, %v7591, 0
        %v7677 = vsel %vm273, %v7592, 0
        %v7680 = vsel %vm273, %v7593, 0
        %v7683 = vsel %vm273, %v7594, 0
        %v7686 = vsel %vm273, %v7595, 0
        %v7689 = vsel %vm273, %v7596, 0
        %v7692 = vsel %vm273, %v7597, 0
        %v7695 = vsel %vm273, %v7598, 0
        %v7698 = vsel %vm370, %v7600, 0
        %7700 = vmatprep.subr.mxu0 0.0
        %7701 = vmatpush1.msra.mxu0 %v7698
        %7702 = vmatprep.subr.mxu0 0.0
        %7703 = vmatpush1.msra.mxu0 0.0
        %7704 = vmatprep.subr.mxu0 0.0
        %7705 = vmatpush1.msra.mxu0 0.0
        %7706 = vmatprep.subr.mxu0 0.0
        %7707 = vmatpush1.msra.mxu0 0.0
        %7708 = vmatprep.subr.mxu0 0.0
        %7709 = vmatpush1.msra.mxu0 0.0
        %7710 = vmatprep.subr.mxu0 0.0
        %7711 = vmatpush1.msra.mxu0 0.0
        %7712 = vmatprep.subr.mxu0 0.0
        %7713 = vmatpush1.msra.mxu0 0.0
        %7714 = vmatprep.subr.mxu0 0.0
        %7715 = vmatpush1.msra.mxu0 0.0
        %7716 = vmatprep.subr.mxu0 0.0
        %7717 = vmatpush1.msra.mxu0 0.0
        %7718 = vmatprep.subr.mxu0 0.0
        %7719 = vmatpush1.msra.mxu0 0.0
        %7720 = vmatprep.subr.mxu0 0.0
        %7721 = vmatpush1.msra.mxu0 0.0
        %7722 = vmatprep.subr.mxu0 0.0
        %7723 = vmatpush1.msra.mxu0 0.0
        %7724 = vmatprep.subr.mxu0 0.0
        %7725 = vmatpush1.msra.mxu0 0.0
        %7726 = vmatprep.subr.mxu0 0.0
        %7727 = vmatpush1.msra.mxu0 0.0
        %7728 = vmatprep.subr.mxu0 0.0
        %7729 = vmatpush1.msra.mxu0 0.0
        %7730 = vmatprep.subr.mxu0 0.0
        %7731 = vmatpush1.msra.mxu0 0.0
        %7732 = vmatprep.subr.mxu0 0.0
        %7733 = vmatpush1.msra.mxu0 0.0
        %7734 = vmatprep.subr.mxu0 0.0
        %7735 = vmatpush1.msra.mxu0 0.0
        %7736 = vmatprep.subr.mxu0 0.0
        %7737 = vmatpush1.msra.mxu0 0.0
        %7738 = vmatprep.subr.mxu0 0.0
        %7739 = vmatpush1.msra.mxu0 0.0
        %7740 = vmatprep.subr.mxu0 0.0
        %7741 = vmatpush1.msra.mxu0 0.0
        %7742 = vmatprep.subr.mxu0 0.0
        %7743 = vmatpush1.msra.mxu0 0.0
        %7744 = vmatprep.subr.mxu0 0.0
        %7745 = vmatpush1.msra.mxu0 0.0
        %7746 = vmatprep.subr.mxu0 0.0
        %7747 = vmatpush1.msra.mxu0 0.0
        %7748 = vmatprep.subr.mxu0 0.0
        %7749 = vmatpush1.msra.mxu0 0.0
        %7750 = vmatprep.subr.mxu0 0.0
        %7751 = vmatpush1.msra.mxu0 0.0
        %7752 = vmatprep.subr.mxu0 0.0
        %7753 = vmatpush1.msra.mxu0 0.0
        %7754 = vmatprep.subr.mxu0 0.0
        %7755 = vmatpush1.msra.mxu0 0.0
        %7756 = vmatprep.subr.mxu0 0.0
        %7757 = vmatpush1.msra.mxu0 0.0
        %7758 = vmatprep.subr.mxu0 0.0
        %7759 = vmatpush1.msra.mxu0 0.0
        %7760 = vmatprep.subr.mxu0 0.0
        %7761 = vmatpush1.msra.mxu0 0.0
        %7762 = vmatprep.subr.mxu0 0.0
        %7763 = vmatpush1.msra.mxu0 0.0
        %7764 = vmatprep.mubr.f32.mxu0 0.0
        %7765 = vmatmul.mubr.f32.gmra.mrb[0].mxu0 %v7602
        %v7766 = vpop.f32.mrb[0].mxu0
        %v7767 = vadd.f32 0.0, %v7766
        %v7768 = vpop.f32.mrb[0].mxu0
        %7769 = vmatprep.mubr.f32.mxu0 0.0
        %7770 = vmatmul.mubr.f32.gmra.mrb[0].mxu0 %v7605
        %v7771 = vpop.f32.mrb[0].mxu0
        %v7772 = vadd.f32 0.0, %v7771
        %v7773 = vpop.f32.mrb[0].mxu0
        %7774 = vmatprep.mubr.f32.mxu0 0.0
        %7775 = vmatmul.mubr.f32.gmra.mrb[0].mxu0 %v7608
        %v7776 = vpop.f32.mrb[0].mxu0
        %v7777 = vadd.f32 0.0, %v7776
        %v7778 = vpop.f32.mrb[0].mxu0
        %7779 = vmatprep.mubr.f32.mxu0 0.0
        %7780 = vmatmul.mubr.f32.gmra.mrb[0].mxu0 %v7611
        %v7781 = vpop.f32.mrb[0].mxu0
        %v7782 = vadd.f32 0.0, %v7781
        %v7783 = vpop.f32.mrb[0].mxu0
        %7784 = vmatprep.mubr.f32.mxu0 0.0
        %7785 = vmatmul.mubr.f32.gmra.mrb[0].mxu0 %v7614
        %v7786 = vpop.f32.mrb[0].mxu0
        %v7787 = vadd.f32 0.0, %v7786
        %v7788 = vpop.f32.mrb[0].mxu0
        %7789 = vmatprep.mubr.f32.mxu0 0.0
        %7790 = vmatmul.mubr.f32.gmra.mrb[0].mxu0 %v7617
        %v7791 = vpop.f32.mrb[0].mxu0
        %v7792 = vadd.f32 0.0, %v7791
        %v7793 = vpop.f32.mrb[0].mxu0
        %7794 = vmatprep.mubr.f32.mxu0 0.0
        %7795 = vmatmul.mubr.f32.gmra.mrb[0].mxu0 %v7620
        %v7796 = vpop.f32.mrb[0].mxu0
        %v7797 = vadd.f32 0.0, %v7796
        %v7798 = vpop.f32.mrb[0].mxu0
        %7799 = vmatprep.mubr.f32.mxu0 0.0
        %7800 = vmatmul.mubr.f32.gmra.mrb[0].mxu0 %v7623
        %v7801 = vpop.f32.mrb[0].mxu0
        %v7802 = vadd.f32 0.0, %v7801
        %v7803 = vpop.f32.mrb[0].mxu0
        %7804 = vmatprep.mubr.f32.mxu0 0.0
        %7805 = vmatmul.mubr.f32.gmra.mrb[0].mxu0 %v7626
        %v7806 = vpop.f32.mrb[0].mxu0
        %v7807 = vadd.f32 0.0, %v7806
        %v7808 = vpop.f32.mrb[0].mxu0
        %7809 = vmatprep.mubr.f32.mxu0 0.0
        %7810 = vmatmul.mubr.f32.gmra.mrb[0].mxu0 %v7629
        %v7811 = vpop.f32.mrb[0].mxu0
        %v7812 = vadd.f32 0.0, %v7811
        %v7813 = vpop.f32.mrb[0].mxu0
        %7814 = vmatprep.mubr.f32.mxu0 0.0
        %7815 = vmatmul.mubr.f32.gmra.mrb[0].mxu0 %v7632
        %v7816 = vpop.f32.mrb[0].mxu0
        %v7817 = vadd.f32 0.0, %v7816
        %v7818 = vpop.f32.mrb[0].mxu0
        %7819 = vmatprep.mubr.f32.mxu0 0.0
        %7820 = vmatmul.mubr.f32.gmra.mrb[0].mxu0 %v7635
        %v7821 = vpop.f32.mrb[0].mxu0
        %v7822 = vadd.f32 0.0, %v7821
        %v7823 = vpop.f32.mrb[0].mxu0
        %7824 = vmatprep.mubr.f32.mxu0 0.0
        %7825 = vmatmul.mubr.f32.gmra.mrb[0].mxu0 %v7638
        %v7826 = vpop.f32.mrb[0].mxu0
        %v7827 = vadd.f32 0.0, %v7826
        %v7828 = vpop.f32.mrb[0].mxu0
        %7829 = vmatprep.mubr.f32.mxu0 0.0
        %7830 = vmatmul.mubr.f32.gmra.mrb[0].mxu0 %v7641
        %v7831 = vpop.f32.mrb[0].mxu0
        %v7832 = vadd.f32 0.0, %v7831
        %v7833 = vpop.f32.mrb[0].mxu0
        %7834 = vmatprep.mubr.f32.mxu0 0.0
        %7835 = vmatmul.mubr.f32.gmra.mrb[0].mxu0 %v7644
        %v7836 = vpop.f32.mrb[0].mxu0
        %v7837 = vadd.f32 0.0, %v7836
        %v7838 = vpop.f32.mrb[0].mxu0
        %7839 = vmatprep.mubr.f32.mxu0 0.0
        %7840 = vmatmul.mubr.f32.gmra.mrb[0].mxu0 %v7647
        %v7841 = vpop.f32.mrb[0].mxu0
        %v7842 = vadd.f32 0.0, %v7841
        %v7843 = vpop.f32.mrb[0].mxu0
        %7844 = vmatprep.mubr.f32.mxu0 0.0
        %7845 = vmatmul.mubr.f32.gmra.mrb[0].mxu0 %v7650
        %v7846 = vpop.f32.mrb[0].mxu0
        %v7847 = vadd.f32 0.0, %v7846
        %v7848 = vpop.f32.mrb[0].mxu0
        %7849 = vmatprep.mubr.f32.mxu0 0.0
        %7850 = vmatmul.mubr.f32.gmra.mrb[0].mxu0 %v7653
        %v7851 = vpop.f32.mrb[0].mxu0
        %v7852 = vadd.f32 0.0, %v7851
        %v7853 = vpop.f32.mrb[0].mxu0
        %7854 = vmatprep.mubr.f32.mxu0 0.0
        %7855 = vmatmul.mubr.f32.gmra.mrb[0].mxu0 %v7656
        %v7856 = vpop.f32.mrb[0].mxu0
        %v7857 = vadd.f32 0.0, %v7856
        %v7858 = vpop.f32.mrb[0].mxu0
        %7859 = vmatprep.mubr.f32.mxu0 0.0
        %7860 = vmatmul.mubr.f32.gmra.mrb[0].mxu0 %v7659
        %v7861 = vpop.f32.mrb[0].mxu0
        %v7862 = vadd.f32 0.0, %v7861
        %v7863 = vpop.f32.mrb[0].mxu0
        %7864 = vmatprep.mubr.f32.mxu0 0.0
        %7865 = vmatmul.mubr.f32.gmra.mrb[0].mxu0 %v7662
        %v7866 = vpop.f32.mrb[0].mxu0
        %v7867 = vadd.f32 0.0, %v7866
        %v7868 = vpop.f32.mrb[0].mxu0
        %7869 = vmatprep.mubr.f32.mxu0 0.0
        %7870 = vmatmul.mubr.f32.gmra.mrb[0].mxu0 %v7665
        %v7871 = vpop.f32.mrb[0].mxu0
        %v7872 = vadd.f32 0.0, %v7871
        %v7873 = vpop.f32.mrb[0].mxu0
        %7874 = vmatprep.mubr.f32.mxu0 0.0
        %7875 = vmatmul.mubr.f32.gmra.mrb[0].mxu0 %v7668
        %v7876 = vpop.f32.mrb[0].mxu0
        %v7877 = vadd.f32 0.0, %v7876
        %v7878 = vpop.f32.mrb[0].mxu0
        %7879 = vmatprep.mubr.f32.mxu0 0.0
        %7880 = vmatmul.mubr.f32.gmra.mrb[0].mxu0 %v7671
        %v7881 = vpop.f32.mrb[0].mxu0
        %v7882 = vadd.f32 0.0, %v7881
        %v7883 = vpop.f32.mrb[0].mxu0
        %7884 = vmatprep.mubr.f32.mxu0 0.0
        %7885 = vmatmul.mubr.f32.gmra.mrb[0].mxu0 %v7674
        %v7886 = vpop.f32.mrb[0].mxu0
        %v7887 = vadd.f32 0.0, %v7886
        %v7888 = vpop.f32.mrb[0].mxu0
        %7889 = vmatprep.mubr.f32.mxu0 0.0
        %7890 = vmatmul.mubr.f32.gmra.mrb[0].mxu0 %v7677
        %v7891 = vpop.f32.mrb[0].mxu0
        %v7892 = vadd.f32 0.0, %v7891
        %v7893 = vpop.f32.mrb[0].mxu0
        %7894 = vmatprep.mubr.f32.mxu0 0.0
        %7895 = vmatmul.mubr.f32.gmra.mrb[0].mxu0 %v7680
        %v7896 = vpop.f32.mrb[0].mxu0
        %v7897 = vadd.f32 0.0, %v7896
        %v7898 = vpop.f32.mrb[0].mxu0
        %7899 = vmatprep.mubr.f32.mxu0 0.0
        %7900 = vmatmul.mubr.f32.gmra.mrb[0].mxu0 %v7683
        %v7901 = vpop.f32.mrb[0].mxu0
        %v7902 = vadd.f32 0.0, %v7901
        %v7903 = vpop.f32.mrb[0].mxu0
        %7904 = vmatprep.mubr.f32.mxu0 0.0
        %7905 = vmatmul.mubr.f32.gmra.mrb[0].mxu0 %v7686
        %v7906 = vpop.f32.mrb[0].mxu0
        %v7907 = vadd.f32 0.0, %v7906
        %v7908 = vpop.f32.mrb[0].mxu0
        %7909 = vmatprep.mubr.f32.mxu0 0.0
        %7910 = vmatmul.mubr.f32.gmra.mrb[0].mxu0 %v7689
        %v7911 = vpop.f32.mrb[0].mxu0
        %v7912 = vadd.f32 0.0, %v7911
        %v7913 = vpop.f32.mrb[0].mxu0
        %7914 = vmatprep.mubr.f32.mxu0 0.0
        %7915 = vmatmul.mubr.f32.gmra.mrb[0].mxu0 %v7692
        %v7916 = vpop.f32.mrb[0].mxu0
        %v7917 = vadd.f32 0.0, %v7916
        %v7918 = vpop.f32.mrb[0].mxu0
        %7919 = vmatprep.mubr.f32.mxu0 0.0
        %7920 = vmatmul.mubr.f32.gmra.mrb[0].mxu0 %v7695
        %v7921 = vpop.f32.mrb[0].mxu0
        %v7922 = vadd.f32 0.0, %v7921
        %v7923 = vpop.f32.mrb[0].mxu0
        %7924 = vdwg.mxu0
        %v7925 = vadd.f32 %v7535, %v7767
        %v7926 = vadd.f32 %v7536, %v7772
        %v7927 = vadd.f32 %v7537, %v7777
        %v7928 = vadd.f32 %v7538, %v7782
        %v7929 = vadd.f32 %v7539, %v7787
        %v7930 = vadd.f32 %v7540, %v7792
        %v7931 = vadd.f32 %v7541, %v7797
        %v7932 = vadd.f32 %v7542, %v7802
        %v7933 = vadd.f32 %v7543, %v7807
        %v7934 = vadd.f32 %v7544, %v7812
        %v7935 = vadd.f32 %v7545, %v7817
        %v7936 = vadd.f32 %v7546, %v7822
        %v7937 = vadd.f32 %v7547, %v7827
        %v7938 = vadd.f32 %v7548, %v7832
        %v7939 = vadd.f32 %v7549, %v7837
        %v7940 = vadd.f32 %v7550, %v7842
        %v7941 = vadd.f32 %v7551, %v7847
        %v7942 = vadd.f32 %v7552, %v7852
        %v7943 = vadd.f32 %v7553, %v7857
        %v7944 = vadd.f32 %v7554, %v7862
        %v7945 = vadd.f32 %v7555, %v7867
        %v7946 = vadd.f32 %v7556, %v7872
        %v7947 = vadd.f32 %v7557, %v7877
        %v7948 = vadd.f32 %v7558, %v7882
        %v7949 = vadd.f32 %v7559, %v7887
        %v7950 = vadd.f32 %v7560, %v7892
        %v7951 = vadd.f32 %v7561, %v7897
        %v7952 = vadd.f32 %v7562, %v7902
        %v7953 = vadd.f32 %v7563, %v7907
        %v7954 = vadd.f32 %v7564, %v7912
        %v7955 = vadd.f32 %v7565, %v7917
        %v7956 = vadd.f32 %v7566, %v7922
        %v7957 = vld [vmem:[%s7176 + $0x4] sm:$0xff]
        %v7958 = vld [vmem:[%s7176 + $0x14] sm:$0xff]
        %v7959 = vld [vmem:[%s7176 + $0x24] sm:$0xff]
        %v7960 = vld [vmem:[%s7176 + $0x34] sm:$0xff]
        %v7961 = vld [vmem:[%s7176 + $0x44] sm:$0xff]
        %v7962 = vld [vmem:[%s7176 + $0x54] sm:$0xff]
        %v7963 = vld [vmem:[%s7176 + $0x64] sm:$0xff]
        %v7964 = vld [vmem:[%s7176 + $0x74] sm:$0xff]
        %v7965 = vld [vmem:[%s7176 + $0xc4] sm:$0xff]
        %v7966 = vld [vmem:[%s7176 + $0xd4] sm:$0xff]
        %v7967 = vld [vmem:[%s7176 + $0xe4] sm:$0xff]
        %v7968 = vld [vmem:[%s7176 + $0xf4] sm:$0xff]
        %v7969 = vld [vmem:[%s7176 + $0x104] sm:$0xff]
        %v7970 = vld [vmem:[%s7176 + $0x114] sm:$0xff]
        %v7971 = vld [vmem:[%s7176 + $0x124] sm:$0xff]
        %v7972 = vld [vmem:[%s7176 + $0x134] sm:$0xff]
        %v7973 = vld [vmem:[%s7176 + $0x184] sm:$0xff]
        %v7974 = vld [vmem:[%s7176 + $0x194] sm:$0xff]
        %v7975 = vld [vmem:[%s7176 + $0x1a4] sm:$0xff]
        %v7976 = vld [vmem:[%s7176 + $0x1b4] sm:$0xff]
        %v7977 = vld [vmem:[%s7176 + $0x1c4] sm:$0xff]
        %v7978 = vld [vmem:[%s7176 + $0x1d4] sm:$0xff]
        %v7979 = vld [vmem:[%s7176 + $0x1e4] sm:$0xff]
        %v7980 = vld [vmem:[%s7176 + $0x1f4] sm:$0xff]
        %v7981 = vld [vmem:[%s7176 + $0x244] sm:$0xff]
        %v7982 = vld [vmem:[%s7176 + $0x254] sm:$0xff]
        %v7983 = vld [vmem:[%s7176 + $0x264] sm:$0xff]
        %v7984 = vld [vmem:[%s7176 + $0x274] sm:$0xff]
        %v7985 = vld [vmem:[%s7176 + $0x284] sm:$0xff]
        %v7986 = vld [vmem:[%s7176 + $0x294] sm:$0xff]
        %v7987 = vld [vmem:[%s7176 + $0x2a4] sm:$0xff]
        %v7988 = vld [vmem:[%s7176 + $0x2b4] sm:$0xff]
        %s7989 = scalar_lea.vmem %s1, 80
        %v7990 = vld [vmem:[%s7989] sm:$0xf]
        %v7992 = vsel %vm273, %v7957, 0
        %v7995 = vsel %vm273, %v7958, 0
        %v7998 = vsel %vm273, %v7959, 0
        %v8001 = vsel %vm273, %v7960, 0
        %v8004 = vsel %vm273, %v7961, 0
        %v8007 = vsel %vm273, %v7962, 0
        %v8010 = vsel %vm273, %v7963, 0
        %v8013 = vsel %vm273, %v7964, 0
        %v8016 = vsel %vm273, %v7965, 0
        %v8019 = vsel %vm273, %v7966, 0
        %v8022 = vsel %vm273, %v7967, 0
        %v8025 = vsel %vm273, %v7968, 0
        %v8028 = vsel %vm273, %v7969, 0
        %v8031 = vsel %vm273, %v7970, 0
        %v8034 = vsel %vm273, %v7971, 0
        %v8037 = vsel %vm273, %v7972, 0
        %v8040 = vsel %vm273, %v7973, 0
        %v8043 = vsel %vm273, %v7974, 0
        %v8046 = vsel %vm273, %v7975, 0
        %v8049 = vsel %vm273, %v7976, 0
        %v8052 = vsel %vm273, %v7977, 0
        %v8055 = vsel %vm273, %v7978, 0
        %v8058 = vsel %vm273, %v7979, 0
        %v8061 = vsel %vm273, %v7980, 0
        %v8064 = vsel %vm273, %v7981, 0
        %v8067 = vsel %vm273, %v7982, 0
        %v8070 = vsel %vm273, %v7983, 0
        %v8073 = vsel %vm273, %v7984, 0
        %v8076 = vsel %vm273, %v7985, 0
        %v8079 = vsel %vm273, %v7986, 0
        %v8082 = vsel %vm273, %v7987, 0
        %v8085 = vsel %vm273, %v7988, 0
        %v8088 = vsel %vm370, %v7990, 0
        %8090 = vmatprep.subr.mxu0 0.0
        %8091 = vmatpush1.msra.mxu0 %v8088
        %8092 = vmatprep.subr.mxu0 0.0
        %8093 = vmatpush1.msra.mxu0 0.0
        %8094 = vmatprep.subr.mxu0 0.0
        %8095 = vmatpush1.msra.mxu0 0.0
        %8096 = vmatprep.subr.mxu0 0.0
        %8097 = vmatpush1.msra.mxu0 0.0
        %8098 = vmatprep.subr.mxu0 0.0
        %8099 = vmatpush1.msra.mxu0 0.0
        %8100 = vmatprep.subr.mxu0 0.0
        %8101 = vmatpush1.msra.mxu0 0.0
        %8102 = vmatprep.subr.mxu0 0.0
        %8103 = vmatpush1.msra.mxu0 0.0
        %8104 = vmatprep.subr.mxu0 0.0
        %8105 = vmatpush1.msra.mxu0 0.0
        %8106 = vmatprep.subr.mxu0 0.0
        %8107 = vmatpush1.msra.mxu0 0.0
        %8108 = vmatprep.subr.mxu0 0.0
        %8109 = vmatpush1.msra.mxu0 0.0
        %8110 = vmatprep.subr.mxu0 0.0
        %8111 = vmatpush1.msra.mxu0 0.0
        %8112 = vmatprep.subr.mxu0 0.0
        %8113 = vmatpush1.msra.mxu0 0.0
        %8114 = vmatprep.subr.mxu0 0.0
        %8115 = vmatpush1.msra.mxu0 0.0
        %8116 = vmatprep.subr.mxu0 0.0
        %8117 = vmatpush1.msra.mxu0 0.0
        %8118 = vmatprep.subr.mxu0 0.0
        %8119 = vmatpush1.msra.mxu0 0.0
        %8120 = vmatprep.subr.mxu0 0.0
        %8121 = vmatpush1.msra.mxu0 0.0
        %8122 = vmatprep.subr.mxu0 0.0
        %8123 = vmatpush1.msra.mxu0 0.0
        %8124 = vmatprep.subr.mxu0 0.0
        %8125 = vmatpush1.msra.mxu0 0.0
        %8126 = vmatprep.subr.mxu0 0.0
        %8127 = vmatpush1.msra.mxu0 0.0
        %8128 = vmatprep.subr.mxu0 0.0
        %8129 = vmatpush1.msra.mxu0 0.0
        %8130 = vmatprep.subr.mxu0 0.0
        %8131 = vmatpush1.msra.mxu0 0.0
        %8132 = vmatprep.subr.mxu0 0.0
        %8133 = vmatpush1.msra.mxu0 0.0
        %8134 = vmatprep.subr.mxu0 0.0
        %8135 = vmatpush1.msra.mxu0 0.0
        %8136 = vmatprep.subr.mxu0 0.0
        %8137 = vmatpush1.msra.mxu0 0.0
        %8138 = vmatprep.subr.mxu0 0.0
        %8139 = vmatpush1.msra.mxu0 0.0
        %8140 = vmatprep.subr.mxu0 0.0
        %8141 = vmatpush1.msra.mxu0 0.0
        %8142 = vmatprep.subr.mxu0 0.0
        %8143 = vmatpush1.msra.mxu0 0.0
        %8144 = vmatprep.subr.mxu0 0.0
        %8145 = vmatpush1.msra.mxu0 0.0
        %8146 = vmatprep.subr.mxu0 0.0
        %8147 = vmatpush1.msra.mxu0 0.0
        %8148 = vmatprep.subr.mxu0 0.0
        %8149 = vmatpush1.msra.mxu0 0.0
        %8150 = vmatprep.subr.mxu0 0.0
        %8151 = vmatpush1.msra.mxu0 0.0
        %8152 = vmatprep.subr.mxu0 0.0
        %8153 = vmatpush1.msra.mxu0 0.0
        %8154 = vmatprep.mubr.f32.mxu0 0.0
        %8155 = vmatmul.mubr.f32.gmra.mrb[0].mxu0 %v7992
        %v8156 = vpop.f32.mrb[0].mxu0
        %v8157 = vadd.f32 0.0, %v8156
        %v8158 = vpop.f32.mrb[0].mxu0
        %8159 = vmatprep.mubr.f32.mxu0 0.0
        %8160 = vmatmul.mubr.f32.gmra.mrb[0].mxu0 %v7995
        %v8161 = vpop.f32.mrb[0].mxu0
        %v8162 = vadd.f32 0.0, %v8161
        %v8163 = vpop.f32.mrb[0].mxu0
        %8164 = vmatprep.mubr.f32.mxu0 0.0
        %8165 = vmatmul.mubr.f32.gmra.mrb[0].mxu0 %v7998
        %v8166 = vpop.f32.mrb[0].mxu0
        %v8167 = vadd.f32 0.0, %v8166
        %v8168 = vpop.f32.mrb[0].mxu0
        %8169 = vmatprep.mubr.f32.mxu0 0.0
        %8170 = vmatmul.mubr.f32.gmra.mrb[0].mxu0 %v8001
        %v8171 = vpop.f32.mrb[0].mxu0
        %v8172 = vadd.f32 0.0, %v8171
        %v8173 = vpop.f32.mrb[0].mxu0
        %8174 = vmatprep.mubr.f32.mxu0 0.0
        %8175 = vmatmul.mubr.f32.gmra.mrb[0].mxu0 %v8004
        %v8176 = vpop.f32.mrb[0].mxu0
        %v8177 = vadd.f32 0.0, %v8176
        %v8178 = vpop.f32.mrb[0].mxu0
        %8179 = vmatprep.mubr.f32.mxu0 0.0
        %8180 = vmatmul.mubr.f32.gmra.mrb[0].mxu0 %v8007
        %v8181 = vpop.f32.mrb[0].mxu0
        %v8182 = vadd.f32 0.0, %v8181
        %v8183 = vpop.f32.mrb[0].mxu0
        %8184 = vmatprep.mubr.f32.mxu0 0.0
        %8185 = vmatmul.mubr.f32.gmra.mrb[0].mxu0 %v8010
        %v8186 = vpop.f32.mrb[0].mxu0
        %v8187 = vadd.f32 0.0, %v8186
        %v8188 = vpop.f32.mrb[0].mxu0
        %8189 = vmatprep.mubr.f32.mxu0 0.0
        %8190 = vmatmul.mubr.f32.gmra.mrb[0].mxu0 %v8013
        %v8191 = vpop.f32.mrb[0].mxu0
        %v8192 = vadd.f32 0.0, %v8191
        %v8193 = vpop.f32.mrb[0].mxu0
        %8194 = vmatprep.mubr.f32.mxu0 0.0
        %8195 = vmatmul.mubr.f32.gmra.mrb[0].mxu0 %v8016
        %v8196 = vpop.f32.mrb[0].mxu0
        %v8197 = vadd.f32 0.0, %v8196
        %v8198 = vpop.f32.mrb[0].mxu0
        %8199 = vmatprep.mubr.f32.mxu0 0.0
        %8200 = vmatmul.mubr.f32.gmra.mrb[0].mxu0 %v8019
        %v8201 = vpop.f32.mrb[0].mxu0
        %v8202 = vadd.f32 0.0, %v8201
        %v8203 = vpop.f32.mrb[0].mxu0
        %8204 = vmatprep.mubr.f32.mxu0 0.0
        %8205 = vmatmul.mubr.f32.gmra.mrb[0].mxu0 %v8022
        %v8206 = vpop.f32.mrb[0].mxu0
        %v8207 = vadd.f32 0.0, %v8206
        %v8208 = vpop.f32.mrb[0].mxu0
        %8209 = vmatprep.mubr.f32.mxu0 0.0
        %8210 = vmatmul.mubr.f32.gmra.mrb[0].mxu0 %v8025
        %v8211 = vpop.f32.mrb[0].mxu0
        %v8212 = vadd.f32 0.0, %v8211
        %v8213 = vpop.f32.mrb[0].mxu0
        %8214 = vmatprep.mubr.f32.mxu0 0.0
        %8215 = vmatmul.mubr.f32.gmra.mrb[0].mxu0 %v8028
        %v8216 = vpop.f32.mrb[0].mxu0
        %v8217 = vadd.f32 0.0, %v8216
        %v8218 = vpop.f32.mrb[0].mxu0
        %8219 = vmatprep.mubr.f32.mxu0 0.0
        %8220 = vmatmul.mubr.f32.gmra.mrb[0].mxu0 %v8031
        %v8221 = vpop.f32.mrb[0].mxu0
        %v8222 = vadd.f32 0.0, %v8221
        %v8223 = vpop.f32.mrb[0].mxu0
        %8224 = vmatprep.mubr.f32.mxu0 0.0
        %8225 = vmatmul.mubr.f32.gmra.mrb[0].mxu0 %v8034
        %v8226 = vpop.f32.mrb[0].mxu0
        %v8227 = vadd.f32 0.0, %v8226
        %v8228 = vpop.f32.mrb[0].mxu0
        %8229 = vmatprep.mubr.f32.mxu0 0.0
        %8230 = vmatmul.mubr.f32.gmra.mrb[0].mxu0 %v8037
        %v8231 = vpop.f32.mrb[0].mxu0
        %v8232 = vadd.f32 0.0, %v8231
        %v8233 = vpop.f32.mrb[0].mxu0
        %8234 = vmatprep.mubr.f32.mxu0 0.0
        %8235 = vmatmul.mubr.f32.gmra.mrb[0].mxu0 %v8040
        %v8236 = vpop.f32.mrb[0].mxu0
        %v8237 = vadd.f32 0.0, %v8236
        %v8238 = vpop.f32.mrb[0].mxu0
        %8239 = vmatprep.mubr.f32.mxu0 0.0
        %8240 = vmatmul.mubr.f32.gmra.mrb[0].mxu0 %v8043
        %v8241 = vpop.f32.mrb[0].mxu0
        %v8242 = vadd.f32 0.0, %v8241
        %v8243 = vpop.f32.mrb[0].mxu0
        %8244 = vmatprep.mubr.f32.mxu0 0.0
        %8245 = vmatmul.mubr.f32.gmra.mrb[0].mxu0 %v8046
        %v8246 = vpop.f32.mrb[0].mxu0
        %v8247 = vadd.f32 0.0, %v8246
        %v8248 = vpop.f32.mrb[0].mxu0
        %8249 = vmatprep.mubr.f32.mxu0 0.0
        %8250 = vmatmul.mubr.f32.gmra.mrb[0].mxu0 %v8049
        %v8251 = vpop.f32.mrb[0].mxu0
        %v8252 = vadd.f32 0.0, %v8251
        %v8253 = vpop.f32.mrb[0].mxu0
        %8254 = vmatprep.mubr.f32.mxu0 0.0
        %8255 = vmatmul.mubr.f32.gmra.mrb[0].mxu0 %v8052
        %v8256 = vpop.f32.mrb[0].mxu0
        %v8257 = vadd.f32 0.0, %v8256
        %v8258 = vpop.f32.mrb[0].mxu0
        %8259 = vmatprep.mubr.f32.mxu0 0.0
        %8260 = vmatmul.mubr.f32.gmra.mrb[0].mxu0 %v8055
        %v8261 = vpop.f32.mrb[0].mxu0
        %v8262 = vadd.f32 0.0, %v8261
        %v8263 = vpop.f32.mrb[0].mxu0
        %8264 = vmatprep.mubr.f32.mxu0 0.0
        %8265 = vmatmul.mubr.f32.gmra.mrb[0].mxu0 %v8058
        %v8266 = vpop.f32.mrb[0].mxu0
        %v8267 = vadd.f32 0.0, %v8266
        %v8268 = vpop.f32.mrb[0].mxu0
        %8269 = vmatprep.mubr.f32.mxu0 0.0
        %8270 = vmatmul.mubr.f32.gmra.mrb[0].mxu0 %v8061
        %v8271 = vpop.f32.mrb[0].mxu0
        %v8272 = vadd.f32 0.0, %v8271
        %v8273 = vpop.f32.mrb[0].mxu0
        %8274 = vmatprep.mubr.f32.mxu0 0.0
        %8275 = vmatmul.mubr.f32.gmra.mrb[0].mxu0 %v8064
        %v8276 = vpop.f32.mrb[0].mxu0
        %v8277 = vadd.f32 0.0, %v8276
        %v8278 = vpop.f32.mrb[0].mxu0
        %8279 = vmatprep.mubr.f32.mxu0 0.0
        %8280 = vmatmul.mubr.f32.gmra.mrb[0].mxu0 %v8067
        %v8281 = vpop.f32.mrb[0].mxu0
        %v8282 = vadd.f32 0.0, %v8281
        %v8283 = vpop.f32.mrb[0].mxu0
        %8284 = vmatprep.mubr.f32.mxu0 0.0
        %8285 = vmatmul.mubr.f32.gmra.mrb[0].mxu0 %v8070
        %v8286 = vpop.f32.mrb[0].mxu0
        %v8287 = vadd.f32 0.0, %v8286
        %v8288 = vpop.f32.mrb[0].mxu0
        %8289 = vmatprep.mubr.f32.mxu0 0.0
        %8290 = vmatmul.mubr.f32.gmra.mrb[0].mxu0 %v8073
        %v8291 = vpop.f32.mrb[0].mxu0
        %v8292 = vadd.f32 0.0, %v8291
        %v8293 = vpop.f32.mrb[0].mxu0
        %8294 = vmatprep.mubr.f32.mxu0 0.0
        %8295 = vmatmul.mubr.f32.gmra.mrb[0].mxu0 %v8076
        %v8296 = vpop.f32.mrb[0].mxu0
        %v8297 = vadd.f32 0.0, %v8296
        %v8298 = vpop.f32.mrb[0].mxu0
        %8299 = vmatprep.mubr.f32.mxu0 0.0
        %8300 = vmatmul.mubr.f32.gmra.mrb[0].mxu0 %v8079
        %v8301 = vpop.f32.mrb[0].mxu0
        %v8302 = vadd.f32 0.0, %v8301
        %v8303 = vpop.f32.mrb[0].mxu0
        %8304 = vmatprep.mubr.f32.mxu0 0.0
        %8305 = vmatmul.mubr.f32.gmra.mrb[0].mxu0 %v8082
        %v8306 = vpop.f32.mrb[0].mxu0
        %v8307 = vadd.f32 0.0, %v8306
        %v8308 = vpop.f32.mrb[0].mxu0
        %8309 = vmatprep.mubr.f32.mxu0 0.0
        %8310 = vmatmul.mubr.f32.gmra.mrb[0].mxu0 %v8085
        %v8311 = vpop.f32.mrb[0].mxu0
        %v8312 = vadd.f32 0.0, %v8311
        %v8313 = vpop.f32.mrb[0].mxu0
        %8314 = vdwg.mxu0
        %v8315 = vadd.f32 %v7925, %v8157
        %v8316 = vadd.f32 %v7926, %v8162
        %v8317 = vadd.f32 %v7927, %v8167
        %v8318 = vadd.f32 %v7928, %v8172
        %v8319 = vadd.f32 %v7929, %v8177
        %v8320 = vadd.f32 %v7930, %v8182
        %v8321 = vadd.f32 %v7931, %v8187
        %v8322 = vadd.f32 %v7932, %v8192
        %v8323 = vadd.f32 %v7933, %v8197
        %v8324 = vadd.f32 %v7934, %v8202
        %v8325 = vadd.f32 %v7935, %v8207
        %v8326 = vadd.f32 %v7936, %v8212
        %v8327 = vadd.f32 %v7937, %v8217
        %v8328 = vadd.f32 %v7938, %v8222
        %v8329 = vadd.f32 %v7939, %v8227
        %v8330 = vadd.f32 %v7940, %v8232
        %v8331 = vadd.f32 %v7941, %v8237
        %v8332 = vadd.f32 %v7942, %v8242
        %v8333 = vadd.f32 %v7943, %v8247
        %v8334 = vadd.f32 %v7944, %v8252
        %v8335 = vadd.f32 %v7945, %v8257
        %v8336 = vadd.f32 %v7946, %v8262
        %v8337 = vadd.f32 %v7947, %v8267
        %v8338 = vadd.f32 %v7948, %v8272
        %v8339 = vadd.f32 %v7949, %v8277
        %v8340 = vadd.f32 %v7950, %v8282
        %v8341 = vadd.f32 %v7951, %v8287
        %v8342 = vadd.f32 %v7952, %v8292
        %v8343 = vadd.f32 %v7953, %v8297
        %v8344 = vadd.f32 %v7954, %v8302
        %v8345 = vadd.f32 %v7955, %v8307
        %v8346 = vadd.f32 %v7956, %v8312
        %s8347 = sadd.s32 32, %s7175
        %s8348 = scalar_lea.vmem %s193, %s8347
        %v8349 = vld [vmem:[%s8348] sm:$0xff]
        %v8350 = vld [vmem:[%s8348 + $0x10] sm:$0xff]
        %v8351 = vld [vmem:[%s8348 + $0x20] sm:$0xff]
        %v8352 = vld [vmem:[%s8348 + $0x30] sm:$0xff]
        %v8353 = vld [vmem:[%s8348 + $0x40] sm:$0xff]
        %v8354 = vld [vmem:[%s8348 + $0x50] sm:$0xff]
        %v8355 = vld [vmem:[%s8348 + $0x60] sm:$0xff]
        %v8356 = vld [vmem:[%s8348 + $0x70] sm:$0xff]
        %v8357 = vld [vmem:[%s8348 + $0xc0] sm:$0xff]
        %v8358 = vld [vmem:[%s8348 + $0xd0] sm:$0xff]
        %v8359 = vld [vmem:[%s8348 + $0xe0] sm:$0xff]
        %v8360 = vld [vmem:[%s8348 + $0xf0] sm:$0xff]
        %v8361 = vld [vmem:[%s8348 + $0x100] sm:$0xff]
        %v8362 = vld [vmem:[%s8348 + $0x110] sm:$0xff]
        %v8363 = vld [vmem:[%s8348 + $0x120] sm:$0xff]
        %v8364 = vld [vmem:[%s8348 + $0x130] sm:$0xff]
        %v8365 = vld [vmem:[%s8348 + $0x180] sm:$0xff]
        %v8366 = vld [vmem:[%s8348 + $0x190] sm:$0xff]
        %v8367 = vld [vmem:[%s8348 + $0x1a0] sm:$0xff]
        %v8368 = vld [vmem:[%s8348 + $0x1b0] sm:$0xff]
        %v8369 = vld [vmem:[%s8348 + $0x1c0] sm:$0xff]
        %v8370 = vld [vmem:[%s8348 + $0x1d0] sm:$0xff]
        %v8371 = vld [vmem:[%s8348 + $0x1e0] sm:$0xff]
        %v8372 = vld [vmem:[%s8348 + $0x1f0] sm:$0xff]
        %v8373 = vld [vmem:[%s8348 + $0x240] sm:$0xff]
        %v8374 = vld [vmem:[%s8348 + $0x250] sm:$0xff]
        %v8375 = vld [vmem:[%s8348 + $0x260] sm:$0xff]
        %v8376 = vld [vmem:[%s8348 + $0x270] sm:$0xff]
        %v8377 = vld [vmem:[%s8348 + $0x280] sm:$0xff]
        %v8378 = vld [vmem:[%s8348 + $0x290] sm:$0xff]
        %v8379 = vld [vmem:[%s8348 + $0x2a0] sm:$0xff]
        %v8380 = vld [vmem:[%s8348 + $0x2b0] sm:$0xff]
        %s8381 = scalar_lea.vmem %s1, 84
        %v8382 = vld [vmem:[%s8381] sm:$0xf]
        %v8384 = vsel %vm273, %v8349, 0
        %v8387 = vsel %vm273, %v8350, 0
        %v8390 = vsel %vm273, %v8351, 0
        %v8393 = vsel %vm273, %v8352, 0
        %v8396 = vsel %vm273, %v8353, 0
        %v8399 = vsel %vm273, %v8354, 0
        %v8402 = vsel %vm273, %v8355, 0
        %v8405 = vsel %vm273, %v8356, 0
        %v8408 = vsel %vm273, %v8357, 0
        %v8411 = vsel %vm273, %v8358, 0
        %v8414 = vsel %vm273, %v8359, 0
        %v8417 = vsel %vm273, %v8360, 0
        %v8420 = vsel %vm273, %v8361, 0
        %v8423 = vsel %vm273, %v8362, 0
        %v8426 = vsel %vm273, %v8363, 0
        %v8429 = vsel %vm273, %v8364, 0
        %v8432 = vsel %vm273, %v8365, 0
        %v8435 = vsel %vm273, %v8366, 0
        %v8438 = vsel %vm273, %v8367, 0
        %v8441 = vsel %vm273, %v8368, 0
        %v8444 = vsel %vm273, %v8369, 0
        %v8447 = vsel %vm273, %v8370, 0
        %v8450 = vsel %vm273, %v8371, 0
        %v8453 = vsel %vm273, %v8372, 0
        %v8456 = vsel %vm273, %v8373, 0
        %v8459 = vsel %vm273, %v8374, 0
        %v8462 = vsel %vm273, %v8375, 0
        %v8465 = vsel %vm273, %v8376, 0
        %v8468 = vsel %vm273, %v8377, 0
        %v8471 = vsel %vm273, %v8378, 0
        %v8474 = vsel %vm273, %v8379, 0
        %v8477 = vsel %vm273, %v8380, 0
        %v8480 = vsel %vm370, %v8382, 0
        %8482 = vmatprep.subr.mxu0 0.0
        %8483 = vmatpush1.msra.mxu0 %v8480
        %8484 = vmatprep.subr.mxu0 0.0
        %8485 = vmatpush1.msra.mxu0 0.0
        %8486 = vmatprep.subr.mxu0 0.0
        %8487 = vmatpush1.msra.mxu0 0.0
        %8488 = vmatprep.subr.mxu0 0.0
        %8489 = vmatpush1.msra.mxu0 0.0
        %8490 = vmatprep.subr.mxu0 0.0
        %8491 = vmatpush1.msra.mxu0 0.0
        %8492 = vmatprep.subr.mxu0 0.0
        %8493 = vmatpush1.msra.mxu0 0.0
        %8494 = vmatprep.subr.mxu0 0.0
        %8495 = vmatpush1.msra.mxu0 0.0
        %8496 = vmatprep.subr.mxu0 0.0
        %8497 = vmatpush1.msra.mxu0 0.0
        %8498 = vmatprep.subr.mxu0 0.0
        %8499 = vmatpush1.msra.mxu0 0.0
        %8500 = vmatprep.subr.mxu0 0.0
        %8501 = vmatpush1.msra.mxu0 0.0
        %8502 = vmatprep.subr.mxu0 0.0
        %8503 = vmatpush1.msra.mxu0 0.0
        %8504 = vmatprep.subr.mxu0 0.0
        %8505 = vmatpush1.msra.mxu0 0.0
        %8506 = vmatprep.subr.mxu0 0.0
        %8507 = vmatpush1.msra.mxu0 0.0
        %8508 = vmatprep.subr.mxu0 0.0
        %8509 = vmatpush1.msra.mxu0 0.0
        %8510 = vmatprep.subr.mxu0 0.0
        %8511 = vmatpush1.msra.mxu0 0.0
        %8512 = vmatprep.subr.mxu0 0.0
        %8513 = vmatpush1.msra.mxu0 0.0
        %8514 = vmatprep.subr.mxu0 0.0
        %8515 = vmatpush1.msra.mxu0 0.0
        %8516 = vmatprep.subr.mxu0 0.0
        %8517 = vmatpush1.msra.mxu0 0.0
        %8518 = vmatprep.subr.mxu0 0.0
        %8519 = vmatpush1.msra.mxu0 0.0
        %8520 = vmatprep.subr.mxu0 0.0
        %8521 = vmatpush1.msra.mxu0 0.0
        %8522 = vmatprep.subr.mxu0 0.0
        %8523 = vmatpush1.msra.mxu0 0.0
        %8524 = vmatprep.subr.mxu0 0.0
        %8525 = vmatpush1.msra.mxu0 0.0
        %8526 = vmatprep.subr.mxu0 0.0
        %8527 = vmatpush1.msra.mxu0 0.0
        %8528 = vmatprep.subr.mxu0 0.0
        %8529 = vmatpush1.msra.mxu0 0.0
        %8530 = vmatprep.subr.mxu0 0.0
        %8531 = vmatpush1.msra.mxu0 0.0
        %8532 = vmatprep.subr.mxu0 0.0
        %8533 = vmatpush1.msra.mxu0 0.0
        %8534 = vmatprep.subr.mxu0 0.0
        %8535 = vmatpush1.msra.mxu0 0.0
        %8536 = vmatprep.subr.mxu0 0.0
        %8537 = vmatpush1.msra.mxu0 0.0
        %8538 = vmatprep.subr.mxu0 0.0
        %8539 = vmatpush1.msra.mxu0 0.0
        %8540 = vmatprep.subr.mxu0 0.0
        %8541 = vmatpush1.msra.mxu0 0.0
        %8542 = vmatprep.subr.mxu0 0.0
        %8543 = vmatpush1.msra.mxu0 0.0
        %8544 = vmatprep.subr.mxu0 0.0
        %8545 = vmatpush1.msra.mxu0 0.0
        %8546 = vmatprep.mubr.f32.mxu0 0.0
        %8547 = vmatmul.mubr.f32.gmra.mrb[0].mxu0 %v8384
        %v8548 = vpop.f32.mrb[0].mxu0
        %v8549 = vadd.f32 0.0, %v8548
        %v8550 = vpop.f32.mrb[0].mxu0
        %8551 = vmatprep.mubr.f32.mxu0 0.0
        %8552 = vmatmul.mubr.f32.gmra.mrb[0].mxu0 %v8387
        %v8553 = vpop.f32.mrb[0].mxu0
        %v8554 = vadd.f32 0.0, %v8553
        %v8555 = vpop.f32.mrb[0].mxu0
        %8556 = vmatprep.mubr.f32.mxu0 0.0
        %8557 = vmatmul.mubr.f32.gmra.mrb[0].mxu0 %v8390
        %v8558 = vpop.f32.mrb[0].mxu0
        %v8559 = vadd.f32 0.0, %v8558
        %v8560 = vpop.f32.mrb[0].mxu0
        %8561 = vmatprep.mubr.f32.mxu0 0.0
        %8562 = vmatmul.mubr.f32.gmra.mrb[0].mxu0 %v8393
        %v8563 = vpop.f32.mrb[0].mxu0
        %v8564 = vadd.f32 0.0, %v8563
        %v8565 = vpop.f32.mrb[0].mxu0
        %8566 = vmatprep.mubr.f32.mxu0 0.0
        %8567 = vmatmul.mubr.f32.gmra.mrb[0].mxu0 %v8396
        %v8568 = vpop.f32.mrb[0].mxu0
        %v8569 = vadd.f32 0.0, %v8568
        %v8570 = vpop.f32.mrb[0].mxu0
        %8571 = vmatprep.mubr.f32.mxu0 0.0
        %8572 = vmatmul.mubr.f32.gmra.mrb[0].mxu0 %v8399
        %v8573 = vpop.f32.mrb[0].mxu0
        %v8574 = vadd.f32 0.0, %v8573
        %v8575 = vpop.f32.mrb[0].mxu0
        %8576 = vmatprep.mubr.f32.mxu0 0.0
        %8577 = vmatmul.mubr.f32.gmra.mrb[0].mxu0 %v8402
        %v8578 = vpop.f32.mrb[0].mxu0
        %v8579 = vadd.f32 0.0, %v8578
        %v8580 = vpop.f32.mrb[0].mxu0
        %8581 = vmatprep.mubr.f32.mxu0 0.0
        %8582 = vmatmul.mubr.f32.gmra.mrb[0].mxu0 %v8405
        %v8583 = vpop.f32.mrb[0].mxu0
        %v8584 = vadd.f32 0.0, %v8583
        %v8585 = vpop.f32.mrb[0].mxu0
        %8586 = vmatprep.mubr.f32.mxu0 0.0
        %8587 = vmatmul.mubr.f32.gmra.mrb[0].mxu0 %v8408
        %v8588 = vpop.f32.mrb[0].mxu0
        %v8589 = vadd.f32 0.0, %v8588
        %v8590 = vpop.f32.mrb[0].mxu0
        %8591 = vmatprep.mubr.f32.mxu0 0.0
        %8592 = vmatmul.mubr.f32.gmra.mrb[0].mxu0 %v8411
        %v8593 = vpop.f32.mrb[0].mxu0
        %v8594 = vadd.f32 0.0, %v8593
        %v8595 = vpop.f32.mrb[0].mxu0
        %8596 = vmatprep.mubr.f32.mxu0 0.0
        %8597 = vmatmul.mubr.f32.gmra.mrb[0].mxu0 %v8414
        %v8598 = vpop.f32.mrb[0].mxu0
        %v8599 = vadd.f32 0.0, %v8598
        %v8600 = vpop.f32.mrb[0].mxu0
        %8601 = vmatprep.mubr.f32.mxu0 0.0
        %8602 = vmatmul.mubr.f32.gmra.mrb[0].mxu0 %v8417
        %v8603 = vpop.f32.mrb[0].mxu0
        %v8604 = vadd.f32 0.0, %v8603
        %v8605 = vpop.f32.mrb[0].mxu0
        %8606 = vmatprep.mubr.f32.mxu0 0.0
        %8607 = vmatmul.mubr.f32.gmra.mrb[0].mxu0 %v8420
        %v8608 = vpop.f32.mrb[0].mxu0
        %v8609 = vadd.f32 0.0, %v8608
        %v8610 = vpop.f32.mrb[0].mxu0
        %8611 = vmatprep.mubr.f32.mxu0 0.0
        %8612 = vmatmul.mubr.f32.gmra.mrb[0].mxu0 %v8423
        %v8613 = vpop.f32.mrb[0].mxu0
        %v8614 = vadd.f32 0.0, %v8613
        %v8615 = vpop.f32.mrb[0].mxu0
        %8616 = vmatprep.mubr.f32.mxu0 0.0
        %8617 = vmatmul.mubr.f32.gmra.mrb[0].mxu0 %v8426
        %v8618 = vpop.f32.mrb[0].mxu0
        %v8619 = vadd.f32 0.0, %v8618
        %v8620 = vpop.f32.mrb[0].mxu0
        %8621 = vmatprep.mubr.f32.mxu0 0.0
        %8622 = vmatmul.mubr.f32.gmra.mrb[0].mxu0 %v8429
        %v8623 = vpop.f32.mrb[0].mxu0
        %v8624 = vadd.f32 0.0, %v8623
        %v8625 = vpop.f32.mrb[0].mxu0
        %8626 = vmatprep.mubr.f32.mxu0 0.0
        %8627 = vmatmul.mubr.f32.gmra.mrb[0].mxu0 %v8432
        %v8628 = vpop.f32.mrb[0].mxu0
        %v8629 = vadd.f32 0.0, %v8628
        %v8630 = vpop.f32.mrb[0].mxu0
        %8631 = vmatprep.mubr.f32.mxu0 0.0
        %8632 = vmatmul.mubr.f32.gmra.mrb[0].mxu0 %v8435
        %v8633 = vpop.f32.mrb[0].mxu0
        %v8634 = vadd.f32 0.0, %v8633
        %v8635 = vpop.f32.mrb[0].mxu0
        %8636 = vmatprep.mubr.f32.mxu0 0.0
        %8637 = vmatmul.mubr.f32.gmra.mrb[0].mxu0 %v8438
        %v8638 = vpop.f32.mrb[0].mxu0
        %v8639 = vadd.f32 0.0, %v8638
        %v8640 = vpop.f32.mrb[0].mxu0
        %8641 = vmatprep.mubr.f32.mxu0 0.0
        %8642 = vmatmul.mubr.f32.gmra.mrb[0].mxu0 %v8441
        %v8643 = vpop.f32.mrb[0].mxu0
        %v8644 = vadd.f32 0.0, %v8643
        %v8645 = vpop.f32.mrb[0].mxu0
        %8646 = vmatprep.mubr.f32.mxu0 0.0
        %8647 = vmatmul.mubr.f32.gmra.mrb[0].mxu0 %v8444
        %v8648 = vpop.f32.mrb[0].mxu0
        %v8649 = vadd.f32 0.0, %v8648
        %v8650 = vpop.f32.mrb[0].mxu0
        %8651 = vmatprep.mubr.f32.mxu0 0.0
        %8652 = vmatmul.mubr.f32.gmra.mrb[0].mxu0 %v8447
        %v8653 = vpop.f32.mrb[0].mxu0
        %v8654 = vadd.f32 0.0, %v8653
        %v8655 = vpop.f32.mrb[0].mxu0
        %8656 = vmatprep.mubr.f32.mxu0 0.0
        %8657 = vmatmul.mubr.f32.gmra.mrb[0].mxu0 %v8450
        %v8658 = vpop.f32.mrb[0].mxu0
        %v8659 = vadd.f32 0.0, %v8658
        %v8660 = vpop.f32.mrb[0].mxu0
        %8661 = vmatprep.mubr.f32.mxu0 0.0
        %8662 = vmatmul.mubr.f32.gmra.mrb[0].mxu0 %v8453
        %v8663 = vpop.f32.mrb[0].mxu0
        %v8664 = vadd.f32 0.0, %v8663
        %v8665 = vpop.f32.mrb[0].mxu0
        %8666 = vmatprep.mubr.f32.mxu0 0.0
        %8667 = vmatmul.mubr.f32.gmra.mrb[0].mxu0 %v8456
        %v8668 = vpop.f32.mrb[0].mxu0
        %v8669 = vadd.f32 0.0, %v8668
        %v8670 = vpop.f32.mrb[0].mxu0
        %8671 = vmatprep.mubr.f32.mxu0 0.0
        %8672 = vmatmul.mubr.f32.gmra.mrb[0].mxu0 %v8459
        %v8673 = vpop.f32.mrb[0].mxu0
        %v8674 = vadd.f32 0.0, %v8673
        %v8675 = vpop.f32.mrb[0].mxu0
        %8676 = vmatprep.mubr.f32.mxu0 0.0
        %8677 = vmatmul.mubr.f32.gmra.mrb[0].mxu0 %v8462
        %v8678 = vpop.f32.mrb[0].mxu0
        %v8679 = vadd.f32 0.0, %v8678
        %v8680 = vpop.f32.mrb[0].mxu0
        %8681 = vmatprep.mubr.f32.mxu0 0.0
        %8682 = vmatmul.mubr.f32.gmra.mrb[0].mxu0 %v8465
        %v8683 = vpop.f32.mrb[0].mxu0
        %v8684 = vadd.f32 0.0, %v8683
        %v8685 = vpop.f32.mrb[0].mxu0
        %8686 = vmatprep.mubr.f32.mxu0 0.0
        %8687 = vmatmul.mubr.f32.gmra.mrb[0].mxu0 %v8468
        %v8688 = vpop.f32.mrb[0].mxu0
        %v8689 = vadd.f32 0.0, %v8688
        %v8690 = vpop.f32.mrb[0].mxu0
        %8691 = vmatprep.mubr.f32.mxu0 0.0
        %8692 = vmatmul.mubr.f32.gmra.mrb[0].mxu0 %v8471
        %v8693 = vpop.f32.mrb[0].mxu0
        %v8694 = vadd.f32 0.0, %v8693
        %v8695 = vpop.f32.mrb[0].mxu0
        %8696 = vmatprep.mubr.f32.mxu0 0.0
        %8697 = vmatmul.mubr.f32.gmra.mrb[0].mxu0 %v8474
        %v8698 = vpop.f32.mrb[0].mxu0
        %v8699 = vadd.f32 0.0, %v8698
        %v8700 = vpop.f32.mrb[0].mxu0
        %8701 = vmatprep.mubr.f32.mxu0 0.0
        %8702 = vmatmul.mubr.f32.gmra.mrb[0].mxu0 %v8477
        %v8703 = vpop.f32.mrb[0].mxu0
        %v8704 = vadd.f32 0.0, %v8703
        %v8705 = vpop.f32.mrb[0].mxu0
        %8706 = vdwg.mxu0
        %v8707 = vadd.f32 %v8315, %v8549
        %v8708 = vadd.f32 %v8316, %v8554
        %v8709 = vadd.f32 %v8317, %v8559
        %v8710 = vadd.f32 %v8318, %v8564
        %v8711 = vadd.f32 %v8319, %v8569
        %v8712 = vadd.f32 %v8320, %v8574
        %v8713 = vadd.f32 %v8321, %v8579
        %v8714 = vadd.f32 %v8322, %v8584
        %v8715 = vadd.f32 %v8323, %v8589
        %v8716 = vadd.f32 %v8324, %v8594
        %v8717 = vadd.f32 %v8325, %v8599
        %v8718 = vadd.f32 %v8326, %v8604
        %v8719 = vadd.f32 %v8327, %v8609
        %v8720 = vadd.f32 %v8328, %v8614
        %v8721 = vadd.f32 %v8329, %v8619
        %v8722 = vadd.f32 %v8330, %v8624
        %v8723 = vadd.f32 %v8331, %v8629
        %v8724 = vadd.f32 %v8332, %v8634
        %v8725 = vadd.f32 %v8333, %v8639
        %v8726 = vadd.f32 %v8334, %v8644
        %v8727 = vadd.f32 %v8335, %v8649
        %v8728 = vadd.f32 %v8336, %v8654
        %v8729 = vadd.f32 %v8337, %v8659
        %v8730 = vadd.f32 %v8338, %v8664
        %v8731 = vadd.f32 %v8339, %v8669
        %v8732 = vadd.f32 %v8340, %v8674
        %v8733 = vadd.f32 %v8341, %v8679
        %v8734 = vadd.f32 %v8342, %v8684
        %v8735 = vadd.f32 %v8343, %v8689
        %v8736 = vadd.f32 %v8344, %v8694
        %v8737 = vadd.f32 %v8345, %v8699
        %v8738 = vadd.f32 %v8346, %v8704
        %v8739 = vld [vmem:[%s8348 + $0x2] sm:$0xff]
        %v8740 = vld [vmem:[%s8348 + $0x12] sm:$0xff]
        %v8741 = vld [vmem:[%s8348 + $0x22] sm:$0xff]
        %v8742 = vld [vmem:[%s8348 + $0x32] sm:$0xff]
        %v8743 = vld [vmem:[%s8348 + $0x42] sm:$0xff]
        %v8744 = vld [vmem:[%s8348 + $0x52] sm:$0xff]
        %v8745 = vld [vmem:[%s8348 + $0x62] sm:$0xff]
        %v8746 = vld [vmem:[%s8348 + $0x72] sm:$0xff]
        %v8747 = vld [vmem:[%s8348 + $0xc2] sm:$0xff]
        %v8748 = vld [vmem:[%s8348 + $0xd2] sm:$0xff]
        %v8749 = vld [vmem:[%s8348 + $0xe2] sm:$0xff]
        %v8750 = vld [vmem:[%s8348 + $0xf2] sm:$0xff]
        %v8751 = vld [vmem:[%s8348 + $0x102] sm:$0xff]
        %v8752 = vld [vmem:[%s8348 + $0x112] sm:$0xff]
        %v8753 = vld [vmem:[%s8348 + $0x122] sm:$0xff]
        %v8754 = vld [vmem:[%s8348 + $0x132] sm:$0xff]
        %v8755 = vld [vmem:[%s8348 + $0x182] sm:$0xff]
        %v8756 = vld [vmem:[%s8348 + $0x192] sm:$0xff]
        %v8757 = vld [vmem:[%s8348 + $0x1a2] sm:$0xff]
        %v8758 = vld [vmem:[%s8348 + $0x1b2] sm:$0xff]
        %v8759 = vld [vmem:[%s8348 + $0x1c2] sm:$0xff]
        %v8760 = vld [vmem:[%s8348 + $0x1d2] sm:$0xff]
        %v8761 = vld [vmem:[%s8348 + $0x1e2] sm:$0xff]
        %v8762 = vld [vmem:[%s8348 + $0x1f2] sm:$0xff]
        %v8763 = vld [vmem:[%s8348 + $0x242] sm:$0xff]
        %v8764 = vld [vmem:[%s8348 + $0x252] sm:$0xff]
        %v8765 = vld [vmem:[%s8348 + $0x262] sm:$0xff]
        %v8766 = vld [vmem:[%s8348 + $0x272] sm:$0xff]
        %v8767 = vld [vmem:[%s8348 + $0x282] sm:$0xff]
        %v8768 = vld [vmem:[%s8348 + $0x292] sm:$0xff]
        %v8769 = vld [vmem:[%s8348 + $0x2a2] sm:$0xff]
        %v8770 = vld [vmem:[%s8348 + $0x2b2] sm:$0xff]
        %s8771 = scalar_lea.vmem %s1, 88
        %v8772 = vld [vmem:[%s8771] sm:$0xf]
        %v8774 = vsel %vm273, %v8739, 0
        %v8777 = vsel %vm273, %v8740, 0
        %v8780 = vsel %vm273, %v8741, 0
        %v8783 = vsel %vm273, %v8742, 0
        %v8786 = vsel %vm273, %v8743, 0
        %v8789 = vsel %vm273, %v8744, 0
        %v8792 = vsel %vm273, %v8745, 0
        %v8795 = vsel %vm273, %v8746, 0
        %v8798 = vsel %vm273, %v8747, 0
        %v8801 = vsel %vm273, %v8748, 0
        %v8804 = vsel %vm273, %v8749, 0
        %v8807 = vsel %vm273, %v8750, 0
        %v8810 = vsel %vm273, %v8751, 0
        %v8813 = vsel %vm273, %v8752, 0
        %v8816 = vsel %vm273, %v8753, 0
        %v8819 = vsel %vm273, %v8754, 0
        %v8822 = vsel %vm273, %v8755, 0
        %v8825 = vsel %vm273, %v8756, 0
        %v8828 = vsel %vm273, %v8757, 0
        %v8831 = vsel %vm273, %v8758, 0
        %v8834 = vsel %vm273, %v8759, 0
        %v8837 = vsel %vm273, %v8760, 0
        %v8840 = vsel %vm273, %v8761, 0
        %v8843 = vsel %vm273, %v8762, 0
        %v8846 = vsel %vm273, %v8763, 0
        %v8849 = vsel %vm273, %v8764, 0
        %v8852 = vsel %vm273, %v8765, 0
        %v8855 = vsel %vm273, %v8766, 0
        %v8858 = vsel %vm273, %v8767, 0
        %v8861 = vsel %vm273, %v8768, 0
        %v8864 = vsel %vm273, %v8769, 0
        %v8867 = vsel %vm273, %v8770, 0
        %v8870 = vsel %vm370, %v8772, 0
        %8872 = vmatprep.subr.mxu0 0.0
        %8873 = vmatpush1.msra.mxu0 %v8870
        %8874 = vmatprep.subr.mxu0 0.0
        %8875 = vmatpush1.msra.mxu0 0.0
        %8876 = vmatprep.subr.mxu0 0.0
        %8877 = vmatpush1.msra.mxu0 0.0
        %8878 = vmatprep.subr.mxu0 0.0
        %8879 = vmatpush1.msra.mxu0 0.0
        %8880 = vmatprep.subr.mxu0 0.0
        %8881 = vmatpush1.msra.mxu0 0.0
        %8882 = vmatprep.subr.mxu0 0.0
        %8883 = vmatpush1.msra.mxu0 0.0
        %8884 = vmatprep.subr.mxu0 0.0
        %8885 = vmatpush1.msra.mxu0 0.0
        %8886 = vmatprep.subr.mxu0 0.0
        %8887 = vmatpush1.msra.mxu0 0.0
        %8888 = vmatprep.subr.mxu0 0.0
        %8889 = vmatpush1.msra.mxu0 0.0
        %8890 = vmatprep.subr.mxu0 0.0
        %8891 = vmatpush1.msra.mxu0 0.0
        %8892 = vmatprep.subr.mxu0 0.0
        %8893 = vmatpush1.msra.mxu0 0.0
        %8894 = vmatprep.subr.mxu0 0.0
        %8895 = vmatpush1.msra.mxu0 0.0
        %8896 = vmatprep.subr.mxu0 0.0
        %8897 = vmatpush1.msra.mxu0 0.0
        %8898 = vmatprep.subr.mxu0 0.0
        %8899 = vmatpush1.msra.mxu0 0.0
        %8900 = vmatprep.subr.mxu0 0.0
        %8901 = vmatpush1.msra.mxu0 0.0
        %8902 = vmatprep.subr.mxu0 0.0
        %8903 = vmatpush1.msra.mxu0 0.0
        %8904 = vmatprep.subr.mxu0 0.0
        %8905 = vmatpush1.msra.mxu0 0.0
        %8906 = vmatprep.subr.mxu0 0.0
        %8907 = vmatpush1.msra.mxu0 0.0
        %8908 = vmatprep.subr.mxu0 0.0
        %8909 = vmatpush1.msra.mxu0 0.0
        %8910 = vmatprep.subr.mxu0 0.0
        %8911 = vmatpush1.msra.mxu0 0.0
        %8912 = vmatprep.subr.mxu0 0.0
        %8913 = vmatpush1.msra.mxu0 0.0
        %8914 = vmatprep.subr.mxu0 0.0
        %8915 = vmatpush1.msra.mxu0 0.0
        %8916 = vmatprep.subr.mxu0 0.0
        %8917 = vmatpush1.msra.mxu0 0.0
        %8918 = vmatprep.subr.mxu0 0.0
        %8919 = vmatpush1.msra.mxu0 0.0
        %8920 = vmatprep.subr.mxu0 0.0
        %8921 = vmatpush1.msra.mxu0 0.0
        %8922 = vmatprep.subr.mxu0 0.0
        %8923 = vmatpush1.msra.mxu0 0.0
        %8924 = vmatprep.subr.mxu0 0.0
        %8925 = vmatpush1.msra.mxu0 0.0
        %8926 = vmatprep.subr.mxu0 0.0
        %8927 = vmatpush1.msra.mxu0 0.0
        %8928 = vmatprep.subr.mxu0 0.0
        %8929 = vmatpush1.msra.mxu0 0.0
        %8930 = vmatprep.subr.mxu0 0.0
        %8931 = vmatpush1.msra.mxu0 0.0
        %8932 = vmatprep.subr.mxu0 0.0
        %8933 = vmatpush1.msra.mxu0 0.0
        %8934 = vmatprep.subr.mxu0 0.0
        %8935 = vmatpush1.msra.mxu0 0.0
        %8936 = vmatprep.mubr.f32.mxu0 0.0
        %8937 = vmatmul.mubr.f32.gmra.mrb[0].mxu0 %v8774
        %v8938 = vpop.f32.mrb[0].mxu0
        %v8939 = vadd.f32 0.0, %v8938
        %v8940 = vpop.f32.mrb[0].mxu0
        %8941 = vmatprep.mubr.f32.mxu0 0.0
        %8942 = vmatmul.mubr.f32.gmra.mrb[0].mxu0 %v8777
        %v8943 = vpop.f32.mrb[0].mxu0
        %v8944 = vadd.f32 0.0, %v8943
        %v8945 = vpop.f32.mrb[0].mxu0
        %8946 = vmatprep.mubr.f32.mxu0 0.0
        %8947 = vmatmul.mubr.f32.gmra.mrb[0].mxu0 %v8780
        %v8948 = vpop.f32.mrb[0].mxu0
        %v8949 = vadd.f32 0.0, %v8948
        %v8950 = vpop.f32.mrb[0].mxu0
        %8951 = vmatprep.mubr.f32.mxu0 0.0
        %8952 = vmatmul.mubr.f32.gmra.mrb[0].mxu0 %v8783
        %v8953 = vpop.f32.mrb[0].mxu0
        %v8954 = vadd.f32 0.0, %v8953
        %v8955 = vpop.f32.mrb[0].mxu0
        %8956 = vmatprep.mubr.f32.mxu0 0.0
        %8957 = vmatmul.mubr.f32.gmra.mrb[0].mxu0 %v8786
        %v8958 = vpop.f32.mrb[0].mxu0
        %v8959 = vadd.f32 0.0, %v8958
        %v8960 = vpop.f32.mrb[0].mxu0
        %8961 = vmatprep.mubr.f32.mxu0 0.0
        %8962 = vmatmul.mubr.f32.gmra.mrb[0].mxu0 %v8789
        %v8963 = vpop.f32.mrb[0].mxu0
        %v8964 = vadd.f32 0.0, %v8963
        %v8965 = vpop.f32.mrb[0].mxu0
        %8966 = vmatprep.mubr.f32.mxu0 0.0
        %8967 = vmatmul.mubr.f32.gmra.mrb[0].mxu0 %v8792
        %v8968 = vpop.f32.mrb[0].mxu0
        %v8969 = vadd.f32 0.0, %v8968
        %v8970 = vpop.f32.mrb[0].mxu0
        %8971 = vmatprep.mubr.f32.mxu0 0.0
        %8972 = vmatmul.mubr.f32.gmra.mrb[0].mxu0 %v8795
        %v8973 = vpop.f32.mrb[0].mxu0
        %v8974 = vadd.f32 0.0, %v8973
        %v8975 = vpop.f32.mrb[0].mxu0
        %8976 = vmatprep.mubr.f32.mxu0 0.0
        %8977 = vmatmul.mubr.f32.gmra.mrb[0].mxu0 %v8798
        %v8978 = vpop.f32.mrb[0].mxu0
        %v8979 = vadd.f32 0.0, %v8978
        %v8980 = vpop.f32.mrb[0].mxu0
        %8981 = vmatprep.mubr.f32.mxu0 0.0
        %8982 = vmatmul.mubr.f32.gmra.mrb[0].mxu0 %v8801
        %v8983 = vpop.f32.mrb[0].mxu0
        %v8984 = vadd.f32 0.0, %v8983
        %v8985 = vpop.f32.mrb[0].mxu0
        %8986 = vmatprep.mubr.f32.mxu0 0.0
        %8987 = vmatmul.mubr.f32.gmra.mrb[0].mxu0 %v8804
        %v8988 = vpop.f32.mrb[0].mxu0
        %v8989 = vadd.f32 0.0, %v8988
        %v8990 = vpop.f32.mrb[0].mxu0
        %8991 = vmatprep.mubr.f32.mxu0 0.0
        %8992 = vmatmul.mubr.f32.gmra.mrb[0].mxu0 %v8807
        %v8993 = vpop.f32.mrb[0].mxu0
        %v8994 = vadd.f32 0.0, %v8993
        %v8995 = vpop.f32.mrb[0].mxu0
        %8996 = vmatprep.mubr.f32.mxu0 0.0
        %8997 = vmatmul.mubr.f32.gmra.mrb[0].mxu0 %v8810
        %v8998 = vpop.f32.mrb[0].mxu0
        %v8999 = vadd.f32 0.0, %v8998
        %v9000 = vpop.f32.mrb[0].mxu0
        %9001 = vmatprep.mubr.f32.mxu0 0.0
        %9002 = vmatmul.mubr.f32.gmra.mrb[0].mxu0 %v8813
        %v9003 = vpop.f32.mrb[0].mxu0
        %v9004 = vadd.f32 0.0, %v9003
        %v9005 = vpop.f32.mrb[0].mxu0
        %9006 = vmatprep.mubr.f32.mxu0 0.0
        %9007 = vmatmul.mubr.f32.gmra.mrb[0].mxu0 %v8816
        %v9008 = vpop.f32.mrb[0].mxu0
        %v9009 = vadd.f32 0.0, %v9008
        %v9010 = vpop.f32.mrb[0].mxu0
        %9011 = vmatprep.mubr.f32.mxu0 0.0
        %9012 = vmatmul.mubr.f32.gmra.mrb[0].mxu0 %v8819
        %v9013 = vpop.f32.mrb[0].mxu0
        %v9014 = vadd.f32 0.0, %v9013
        %v9015 = vpop.f32.mrb[0].mxu0
        %9016 = vmatprep.mubr.f32.mxu0 0.0
        %9017 = vmatmul.mubr.f32.gmra.mrb[0].mxu0 %v8822
        %v9018 = vpop.f32.mrb[0].mxu0
        %v9019 = vadd.f32 0.0, %v9018
        %v9020 = vpop.f32.mrb[0].mxu0
        %9021 = vmatprep.mubr.f32.mxu0 0.0
        %9022 = vmatmul.mubr.f32.gmra.mrb[0].mxu0 %v8825
        %v9023 = vpop.f32.mrb[0].mxu0
        %v9024 = vadd.f32 0.0, %v9023
        %v9025 = vpop.f32.mrb[0].mxu0
        %9026 = vmatprep.mubr.f32.mxu0 0.0
        %9027 = vmatmul.mubr.f32.gmra.mrb[0].mxu0 %v8828
        %v9028 = vpop.f32.mrb[0].mxu0
        %v9029 = vadd.f32 0.0, %v9028
        %v9030 = vpop.f32.mrb[0].mxu0
        %9031 = vmatprep.mubr.f32.mxu0 0.0
        %9032 = vmatmul.mubr.f32.gmra.mrb[0].mxu0 %v8831
        %v9033 = vpop.f32.mrb[0].mxu0
        %v9034 = vadd.f32 0.0, %v9033
        %v9035 = vpop.f32.mrb[0].mxu0
        %9036 = vmatprep.mubr.f32.mxu0 0.0
        %9037 = vmatmul.mubr.f32.gmra.mrb[0].mxu0 %v8834
        %v9038 = vpop.f32.mrb[0].mxu0
        %v9039 = vadd.f32 0.0, %v9038
        %v9040 = vpop.f32.mrb[0].mxu0
        %9041 = vmatprep.mubr.f32.mxu0 0.0
        %9042 = vmatmul.mubr.f32.gmra.mrb[0].mxu0 %v8837
        %v9043 = vpop.f32.mrb[0].mxu0
        %v9044 = vadd.f32 0.0, %v9043
        %v9045 = vpop.f32.mrb[0].mxu0
        %9046 = vmatprep.mubr.f32.mxu0 0.0
        %9047 = vmatmul.mubr.f32.gmra.mrb[0].mxu0 %v8840
        %v9048 = vpop.f32.mrb[0].mxu0
        %v9049 = vadd.f32 0.0, %v9048
        %v9050 = vpop.f32.mrb[0].mxu0
        %9051 = vmatprep.mubr.f32.mxu0 0.0
        %9052 = vmatmul.mubr.f32.gmra.mrb[0].mxu0 %v8843
        %v9053 = vpop.f32.mrb[0].mxu0
        %v9054 = vadd.f32 0.0, %v9053
        %v9055 = vpop.f32.mrb[0].mxu0
        %9056 = vmatprep.mubr.f32.mxu0 0.0
        %9057 = vmatmul.mubr.f32.gmra.mrb[0].mxu0 %v8846
        %v9058 = vpop.f32.mrb[0].mxu0
        %v9059 = vadd.f32 0.0, %v9058
        %v9060 = vpop.f32.mrb[0].mxu0
        %9061 = vmatprep.mubr.f32.mxu0 0.0
        %9062 = vmatmul.mubr.f32.gmra.mrb[0].mxu0 %v8849
        %v9063 = vpop.f32.mrb[0].mxu0
        %v9064 = vadd.f32 0.0, %v9063
        %v9065 = vpop.f32.mrb[0].mxu0
        %9066 = vmatprep.mubr.f32.mxu0 0.0
        %9067 = vmatmul.mubr.f32.gmra.mrb[0].mxu0 %v8852
        %v9068 = vpop.f32.mrb[0].mxu0
        %v9069 = vadd.f32 0.0, %v9068
        %v9070 = vpop.f32.mrb[0].mxu0
        %9071 = vmatprep.mubr.f32.mxu0 0.0
        %9072 = vmatmul.mubr.f32.gmra.mrb[0].mxu0 %v8855
        %v9073 = vpop.f32.mrb[0].mxu0
        %v9074 = vadd.f32 0.0, %v9073
        %v9075 = vpop.f32.mrb[0].mxu0
        %9076 = vmatprep.mubr.f32.mxu0 0.0
        %9077 = vmatmul.mubr.f32.gmra.mrb[0].mxu0 %v8858
        %v9078 = vpop.f32.mrb[0].mxu0
        %v9079 = vadd.f32 0.0, %v9078
        %v9080 = vpop.f32.mrb[0].mxu0
        %9081 = vmatprep.mubr.f32.mxu0 0.0
        %9082 = vmatmul.mubr.f32.gmra.mrb[0].mxu0 %v8861
        %v9083 = vpop.f32.mrb[0].mxu0
        %v9084 = vadd.f32 0.0, %v9083
        %v9085 = vpop.f32.mrb[0].mxu0
        %9086 = vmatprep.mubr.f32.mxu0 0.0
        %9087 = vmatmul.mubr.f32.gmra.mrb[0].mxu0 %v8864
        %v9088 = vpop.f32.mrb[0].mxu0
        %v9089 = vadd.f32 0.0, %v9088
        %v9090 = vpop.f32.mrb[0].mxu0
        %9091 = vmatprep.mubr.f32.mxu0 0.0
        %9092 = vmatmul.mubr.f32.gmra.mrb[0].mxu0 %v8867
        %v9093 = vpop.f32.mrb[0].mxu0
        %v9094 = vadd.f32 0.0, %v9093
        %v9095 = vpop.f32.mrb[0].mxu0
        %9096 = vdwg.mxu0
        %v9097 = vadd.f32 %v8707, %v8939
        %v9098 = vadd.f32 %v8708, %v8944
        %v9099 = vadd.f32 %v8709, %v8949
        %v9100 = vadd.f32 %v8710, %v8954
        %v9101 = vadd.f32 %v8711, %v8959
        %v9102 = vadd.f32 %v8712, %v8964
        %v9103 = vadd.f32 %v8713, %v8969
        %v9104 = vadd.f32 %v8714, %v8974
        %v9105 = vadd.f32 %v8715, %v8979
        %v9106 = vadd.f32 %v8716, %v8984
        %v9107 = vadd.f32 %v8717, %v8989
        %v9108 = vadd.f32 %v8718, %v8994
        %v9109 = vadd.f32 %v8719, %v8999
        %v9110 = vadd.f32 %v8720, %v9004
        %v9111 = vadd.f32 %v8721, %v9009
        %v9112 = vadd.f32 %v8722, %v9014
        %v9113 = vadd.f32 %v8723, %v9019
        %v9114 = vadd.f32 %v8724, %v9024
        %v9115 = vadd.f32 %v8725, %v9029
        %v9116 = vadd.f32 %v8726, %v9034
        %v9117 = vadd.f32 %v8727, %v9039
        %v9118 = vadd.f32 %v8728, %v9044
        %v9119 = vadd.f32 %v8729, %v9049
        %v9120 = vadd.f32 %v8730, %v9054
        %v9121 = vadd.f32 %v8731, %v9059
        %v9122 = vadd.f32 %v8732, %v9064
        %v9123 = vadd.f32 %v8733, %v9069
        %v9124 = vadd.f32 %v8734, %v9074
        %v9125 = vadd.f32 %v8735, %v9079
        %v9126 = vadd.f32 %v8736, %v9084
        %v9127 = vadd.f32 %v8737, %v9089
        %v9128 = vadd.f32 %v8738, %v9094
        %v9129 = vld [vmem:[%s8348 + $0x4] sm:$0xff]
        %v9130 = vld [vmem:[%s8348 + $0x14] sm:$0xff]
        %v9131 = vld [vmem:[%s8348 + $0x24] sm:$0xff]
        %v9132 = vld [vmem:[%s8348 + $0x34] sm:$0xff]
        %v9133 = vld [vmem:[%s8348 + $0x44] sm:$0xff]
        %v9134 = vld [vmem:[%s8348 + $0x54] sm:$0xff]
        %v9135 = vld [vmem:[%s8348 + $0x64] sm:$0xff]
        %v9136 = vld [vmem:[%s8348 + $0x74] sm:$0xff]
        %v9137 = vld [vmem:[%s8348 + $0xc4] sm:$0xff]
        %v9138 = vld [vmem:[%s8348 + $0xd4] sm:$0xff]
        %v9139 = vld [vmem:[%s8348 + $0xe4] sm:$0xff]
        %v9140 = vld [vmem:[%s8348 + $0xf4] sm:$0xff]
        %v9141 = vld [vmem:[%s8348 + $0x104] sm:$0xff]
        %v9142 = vld [vmem:[%s8348 + $0x114] sm:$0xff]
        %v9143 = vld [vmem:[%s8348 + $0x124] sm:$0xff]
        %v9144 = vld [vmem:[%s8348 + $0x134] sm:$0xff]
        %v9145 = vld [vmem:[%s8348 + $0x184] sm:$0xff]
        %v9146 = vld [vmem:[%s8348 + $0x194] sm:$0xff]
        %v9147 = vld [vmem:[%s8348 + $0x1a4] sm:$0xff]
        %v9148 = vld [vmem:[%s8348 + $0x1b4] sm:$0xff]
        %v9149 = vld [vmem:[%s8348 + $0x1c4] sm:$0xff]
        %v9150 = vld [vmem:[%s8348 + $0x1d4] sm:$0xff]
        %v9151 = vld [vmem:[%s8348 + $0x1e4] sm:$0xff]
        %v9152 = vld [vmem:[%s8348 + $0x1f4] sm:$0xff]
        %v9153 = vld [vmem:[%s8348 + $0x244] sm:$0xff]
        %v9154 = vld [vmem:[%s8348 + $0x254] sm:$0xff]
        %v9155 = vld [vmem:[%s8348 + $0x264] sm:$0xff]
        %v9156 = vld [vmem:[%s8348 + $0x274] sm:$0xff]
        %v9157 = vld [vmem:[%s8348 + $0x284] sm:$0xff]
        %v9158 = vld [vmem:[%s8348 + $0x294] sm:$0xff]
        %v9159 = vld [vmem:[%s8348 + $0x2a4] sm:$0xff]
        %v9160 = vld [vmem:[%s8348 + $0x2b4] sm:$0xff]
        %s9161 = scalar_lea.vmem %s1, 92
        %v9162 = vld [vmem:[%s9161] sm:$0xf]
        %v9164 = vsel %vm273, %v9129, 0
        %v9167 = vsel %vm273, %v9130, 0
        %v9170 = vsel %vm273, %v9131, 0
        %v9173 = vsel %vm273, %v9132, 0
        %v9176 = vsel %vm273, %v9133, 0
        %v9179 = vsel %vm273, %v9134, 0
        %v9182 = vsel %vm273, %v9135, 0
        %v9185 = vsel %vm273, %v9136, 0
        %v9188 = vsel %vm273, %v9137, 0
        %v9191 = vsel %vm273, %v9138, 0
        %v9194 = vsel %vm273, %v9139, 0
        %v9197 = vsel %vm273, %v9140, 0
        %v9200 = vsel %vm273, %v9141, 0
        %v9203 = vsel %vm273, %v9142, 0
        %v9206 = vsel %vm273, %v9143, 0
        %v9209 = vsel %vm273, %v9144, 0
        %v9212 = vsel %vm273, %v9145, 0
        %v9215 = vsel %vm273, %v9146, 0
        %v9218 = vsel %vm273, %v9147, 0
        %v9221 = vsel %vm273, %v9148, 0
        %v9224 = vsel %vm273, %v9149, 0
        %v9227 = vsel %vm273, %v9150, 0
        %v9230 = vsel %vm273, %v9151, 0
        %v9233 = vsel %vm273, %v9152, 0
        %v9236 = vsel %vm273, %v9153, 0
        %v9239 = vsel %vm273, %v9154, 0
        %v9242 = vsel %vm273, %v9155, 0
        %v9245 = vsel %vm273, %v9156, 0
        %v9248 = vsel %vm273, %v9157, 0
        %v9251 = vsel %vm273, %v9158, 0
        %v9254 = vsel %vm273, %v9159, 0
        %v9257 = vsel %vm273, %v9160, 0
        %v9260 = vsel %vm370, %v9162, 0
        %9262 = vmatprep.subr.mxu0 0.0
        %9263 = vmatpush1.msra.mxu0 %v9260
        %9264 = vmatprep.subr.mxu0 0.0
        %9265 = vmatpush1.msra.mxu0 0.0
        %9266 = vmatprep.subr.mxu0 0.0
        %9267 = vmatpush1.msra.mxu0 0.0
        %9268 = vmatprep.subr.mxu0 0.0
        %9269 = vmatpush1.msra.mxu0 0.0
        %9270 = vmatprep.subr.mxu0 0.0
        %9271 = vmatpush1.msra.mxu0 0.0
        %9272 = vmatprep.subr.mxu0 0.0
        %9273 = vmatpush1.msra.mxu0 0.0
        %9274 = vmatprep.subr.mxu0 0.0
        %9275 = vmatpush1.msra.mxu0 0.0
        %9276 = vmatprep.subr.mxu0 0.0
        %9277 = vmatpush1.msra.mxu0 0.0
        %9278 = vmatprep.subr.mxu0 0.0
        %9279 = vmatpush1.msra.mxu0 0.0
        %9280 = vmatprep.subr.mxu0 0.0
        %9281 = vmatpush1.msra.mxu0 0.0
        %9282 = vmatprep.subr.mxu0 0.0
        %9283 = vmatpush1.msra.mxu0 0.0
        %9284 = vmatprep.subr.mxu0 0.0
        %9285 = vmatpush1.msra.mxu0 0.0
        %9286 = vmatprep.subr.mxu0 0.0
        %9287 = vmatpush1.msra.mxu0 0.0
        %9288 = vmatprep.subr.mxu0 0.0
        %9289 = vmatpush1.msra.mxu0 0.0
        %9290 = vmatprep.subr.mxu0 0.0
        %9291 = vmatpush1.msra.mxu0 0.0
        %9292 = vmatprep.subr.mxu0 0.0
        %9293 = vmatpush1.msra.mxu0 0.0
        %9294 = vmatprep.subr.mxu0 0.0
        %9295 = vmatpush1.msra.mxu0 0.0
        %9296 = vmatprep.subr.mxu0 0.0
        %9297 = vmatpush1.msra.mxu0 0.0
        %9298 = vmatprep.subr.mxu0 0.0
        %9299 = vmatpush1.msra.mxu0 0.0
        %9300 = vmatprep.subr.mxu0 0.0
        %9301 = vmatpush1.msra.mxu0 0.0
        %9302 = vmatprep.subr.mxu0 0.0
        %9303 = vmatpush1.msra.mxu0 0.0
        %9304 = vmatprep.subr.mxu0 0.0
        %9305 = vmatpush1.msra.mxu0 0.0
        %9306 = vmatprep.subr.mxu0 0.0
        %9307 = vmatpush1.msra.mxu0 0.0
        %9308 = vmatprep.subr.mxu0 0.0
        %9309 = vmatpush1.msra.mxu0 0.0
        %9310 = vmatprep.subr.mxu0 0.0
        %9311 = vmatpush1.msra.mxu0 0.0
        %9312 = vmatprep.subr.mxu0 0.0
        %9313 = vmatpush1.msra.mxu0 0.0
        %9314 = vmatprep.subr.mxu0 0.0
        %9315 = vmatpush1.msra.mxu0 0.0
        %9316 = vmatprep.subr.mxu0 0.0
        %9317 = vmatpush1.msra.mxu0 0.0
        %9318 = vmatprep.subr.mxu0 0.0
        %9319 = vmatpush1.msra.mxu0 0.0
        %9320 = vmatprep.subr.mxu0 0.0
        %9321 = vmatpush1.msra.mxu0 0.0
        %9322 = vmatprep.subr.mxu0 0.0
        %9323 = vmatpush1.msra.mxu0 0.0
        %9324 = vmatprep.subr.mxu0 0.0
        %9325 = vmatpush1.msra.mxu0 0.0
        %9326 = vmatprep.mubr.f32.mxu0 0.0
        %9327 = vmatmul.mubr.f32.gmra.mrb[0].mxu0 %v9164
        %v9328 = vpop.f32.mrb[0].mxu0
        %v9329 = vadd.f32 0.0, %v9328
        %v9330 = vpop.f32.mrb[0].mxu0
        %9331 = vmatprep.mubr.f32.mxu0 0.0
        %9332 = vmatmul.mubr.f32.gmra.mrb[0].mxu0 %v9167
        %v9333 = vpop.f32.mrb[0].mxu0
        %v9334 = vadd.f32 0.0, %v9333
        %v9335 = vpop.f32.mrb[0].mxu0
        %9336 = vmatprep.mubr.f32.mxu0 0.0
        %9337 = vmatmul.mubr.f32.gmra.mrb[0].mxu0 %v9170
        %v9338 = vpop.f32.mrb[0].mxu0
        %v9339 = vadd.f32 0.0, %v9338
        %v9340 = vpop.f32.mrb[0].mxu0
        %9341 = vmatprep.mubr.f32.mxu0 0.0
        %9342 = vmatmul.mubr.f32.gmra.mrb[0].mxu0 %v9173
        %v9343 = vpop.f32.mrb[0].mxu0
        %v9344 = vadd.f32 0.0, %v9343
        %v9345 = vpop.f32.mrb[0].mxu0
        %9346 = vmatprep.mubr.f32.mxu0 0.0
        %9347 = vmatmul.mubr.f32.gmra.mrb[0].mxu0 %v9176
        %v9348 = vpop.f32.mrb[0].mxu0
        %v9349 = vadd.f32 0.0, %v9348
        %v9350 = vpop.f32.mrb[0].mxu0
        %9351 = vmatprep.mubr.f32.mxu0 0.0
        %9352 = vmatmul.mubr.f32.gmra.mrb[0].mxu0 %v9179
        %v9353 = vpop.f32.mrb[0].mxu0
        %v9354 = vadd.f32 0.0, %v9353
        %v9355 = vpop.f32.mrb[0].mxu0
        %9356 = vmatprep.mubr.f32.mxu0 0.0
        %9357 = vmatmul.mubr.f32.gmra.mrb[0].mxu0 %v9182
        %v9358 = vpop.f32.mrb[0].mxu0
        %v9359 = vadd.f32 0.0, %v9358
        %v9360 = vpop.f32.mrb[0].mxu0
        %9361 = vmatprep.mubr.f32.mxu0 0.0
        %9362 = vmatmul.mubr.f32.gmra.mrb[0].mxu0 %v9185
        %v9363 = vpop.f32.mrb[0].mxu0
        %v9364 = vadd.f32 0.0, %v9363
        %v9365 = vpop.f32.mrb[0].mxu0
        %9366 = vmatprep.mubr.f32.mxu0 0.0
        %9367 = vmatmul.mubr.f32.gmra.mrb[0].mxu0 %v9188
        %v9368 = vpop.f32.mrb[0].mxu0
        %v9369 = vadd.f32 0.0, %v9368
        %v9370 = vpop.f32.mrb[0].mxu0
        %9371 = vmatprep.mubr.f32.mxu0 0.0
        %9372 = vmatmul.mubr.f32.gmra.mrb[0].mxu0 %v9191
        %v9373 = vpop.f32.mrb[0].mxu0
        %v9374 = vadd.f32 0.0, %v9373
        %v9375 = vpop.f32.mrb[0].mxu0
        %9376 = vmatprep.mubr.f32.mxu0 0.0
        %9377 = vmatmul.mubr.f32.gmra.mrb[0].mxu0 %v9194
        %v9378 = vpop.f32.mrb[0].mxu0
        %v9379 = vadd.f32 0.0, %v9378
        %v9380 = vpop.f32.mrb[0].mxu0
        %9381 = vmatprep.mubr.f32.mxu0 0.0
        %9382 = vmatmul.mubr.f32.gmra.mrb[0].mxu0 %v9197
        %v9383 = vpop.f32.mrb[0].mxu0
        %v9384 = vadd.f32 0.0, %v9383
        %v9385 = vpop.f32.mrb[0].mxu0
        %9386 = vmatprep.mubr.f32.mxu0 0.0
        %9387 = vmatmul.mubr.f32.gmra.mrb[0].mxu0 %v9200
        %v9388 = vpop.f32.mrb[0].mxu0
        %v9389 = vadd.f32 0.0, %v9388
        %v9390 = vpop.f32.mrb[0].mxu0
        %9391 = vmatprep.mubr.f32.mxu0 0.0
        %9392 = vmatmul.mubr.f32.gmra.mrb[0].mxu0 %v9203
        %v9393 = vpop.f32.mrb[0].mxu0
        %v9394 = vadd.f32 0.0, %v9393
        %v9395 = vpop.f32.mrb[0].mxu0
        %9396 = vmatprep.mubr.f32.mxu0 0.0
        %9397 = vmatmul.mubr.f32.gmra.mrb[0].mxu0 %v9206
        %v9398 = vpop.f32.mrb[0].mxu0
        %v9399 = vadd.f32 0.0, %v9398
        %v9400 = vpop.f32.mrb[0].mxu0
        %9401 = vmatprep.mubr.f32.mxu0 0.0
        %9402 = vmatmul.mubr.f32.gmra.mrb[0].mxu0 %v9209
        %v9403 = vpop.f32.mrb[0].mxu0
        %v9404 = vadd.f32 0.0, %v9403
        %v9405 = vpop.f32.mrb[0].mxu0
        %9406 = vmatprep.mubr.f32.mxu0 0.0
        %9407 = vmatmul.mubr.f32.gmra.mrb[0].mxu0 %v9212
        %v9408 = vpop.f32.mrb[0].mxu0
        %v9409 = vadd.f32 0.0, %v9408
        %v9410 = vpop.f32.mrb[0].mxu0
        %9411 = vmatprep.mubr.f32.mxu0 0.0
        %9412 = vmatmul.mubr.f32.gmra.mrb[0].mxu0 %v9215
        %v9413 = vpop.f32.mrb[0].mxu0
        %v9414 = vadd.f32 0.0, %v9413
        %v9415 = vpop.f32.mrb[0].mxu0
        %9416 = vmatprep.mubr.f32.mxu0 0.0
        %9417 = vmatmul.mubr.f32.gmra.mrb[0].mxu0 %v9218
        %v9418 = vpop.f32.mrb[0].mxu0
        %v9419 = vadd.f32 0.0, %v9418
        %v9420 = vpop.f32.mrb[0].mxu0
        %9421 = vmatprep.mubr.f32.mxu0 0.0
        %9422 = vmatmul.mubr.f32.gmra.mrb[0].mxu0 %v9221
        %v9423 = vpop.f32.mrb[0].mxu0
        %v9424 = vadd.f32 0.0, %v9423
        %v9425 = vpop.f32.mrb[0].mxu0
        %9426 = vmatprep.mubr.f32.mxu0 0.0
        %9427 = vmatmul.mubr.f32.gmra.mrb[0].mxu0 %v9224
        %v9428 = vpop.f32.mrb[0].mxu0
        %v9429 = vadd.f32 0.0, %v9428
        %v9430 = vpop.f32.mrb[0].mxu0
        %9431 = vmatprep.mubr.f32.mxu0 0.0
        %9432 = vmatmul.mubr.f32.gmra.mrb[0].mxu0 %v9227
        %v9433 = vpop.f32.mrb[0].mxu0
        %v9434 = vadd.f32 0.0, %v9433
        %v9435 = vpop.f32.mrb[0].mxu0
        %9436 = vmatprep.mubr.f32.mxu0 0.0
        %9437 = vmatmul.mubr.f32.gmra.mrb[0].mxu0 %v9230
        %v9438 = vpop.f32.mrb[0].mxu0
        %v9439 = vadd.f32 0.0, %v9438
        %v9440 = vpop.f32.mrb[0].mxu0
        %9441 = vmatprep.mubr.f32.mxu0 0.0
        %9442 = vmatmul.mubr.f32.gmra.mrb[0].mxu0 %v9233
        %v9443 = vpop.f32.mrb[0].mxu0
        %v9444 = vadd.f32 0.0, %v9443
        %v9445 = vpop.f32.mrb[0].mxu0
        %9446 = vmatprep.mubr.f32.mxu0 0.0
        %9447 = vmatmul.mubr.f32.gmra.mrb[0].mxu0 %v9236
        %v9448 = vpop.f32.mrb[0].mxu0
        %v9449 = vadd.f32 0.0, %v9448
        %v9450 = vpop.f32.mrb[0].mxu0
        %9451 = vmatprep.mubr.f32.mxu0 0.0
        %9452 = vmatmul.mubr.f32.gmra.mrb[0].mxu0 %v9239
        %v9453 = vpop.f32.mrb[0].mxu0
        %v9454 = vadd.f32 0.0, %v9453
        %v9455 = vpop.f32.mrb[0].mxu0
        %9456 = vmatprep.mubr.f32.mxu0 0.0
        %9457 = vmatmul.mubr.f32.gmra.mrb[0].mxu0 %v9242
        %v9458 = vpop.f32.mrb[0].mxu0
        %v9459 = vadd.f32 0.0, %v9458
        %v9460 = vpop.f32.mrb[0].mxu0
        %9461 = vmatprep.mubr.f32.mxu0 0.0
        %9462 = vmatmul.mubr.f32.gmra.mrb[0].mxu0 %v9245
        %v9463 = vpop.f32.mrb[0].mxu0
        %v9464 = vadd.f32 0.0, %v9463
        %v9465 = vpop.f32.mrb[0].mxu0
        %9466 = vmatprep.mubr.f32.mxu0 0.0
        %9467 = vmatmul.mubr.f32.gmra.mrb[0].mxu0 %v9248
        %v9468 = vpop.f32.mrb[0].mxu0
        %v9469 = vadd.f32 0.0, %v9468
        %v9470 = vpop.f32.mrb[0].mxu0
        %9471 = vmatprep.mubr.f32.mxu0 0.0
        %9472 = vmatmul.mubr.f32.gmra.mrb[0].mxu0 %v9251
        %v9473 = vpop.f32.mrb[0].mxu0
        %v9474 = vadd.f32 0.0, %v9473
        %v9475 = vpop.f32.mrb[0].mxu0
        %9476 = vmatprep.mubr.f32.mxu0 0.0
        %9477 = vmatmul.mubr.f32.gmra.mrb[0].mxu0 %v9254
        %v9478 = vpop.f32.mrb[0].mxu0
        %v9479 = vadd.f32 0.0, %v9478
        %v9480 = vpop.f32.mrb[0].mxu0
        %9481 = vmatprep.mubr.f32.mxu0 0.0
        %9482 = vmatmul.mubr.f32.gmra.mrb[0].mxu0 %v9257
        %v9483 = vpop.f32.mrb[0].mxu0
        %v9484 = vadd.f32 0.0, %v9483
        %v9485 = vpop.f32.mrb[0].mxu0
        %9486 = vdwg.mxu0
        %v9487 = vadd.f32 %v9097, %v9329
        %v9488 = vadd.f32 %v9098, %v9334
        %v9489 = vadd.f32 %v9099, %v9339
        %v9490 = vadd.f32 %v9100, %v9344
        %v9491 = vadd.f32 %v9101, %v9349
        %v9492 = vadd.f32 %v9102, %v9354
        %v9493 = vadd.f32 %v9103, %v9359
        %v9494 = vadd.f32 %v9104, %v9364
        %v9495 = vadd.f32 %v9105, %v9369
        %v9496 = vadd.f32 %v9106, %v9374
        %v9497 = vadd.f32 %v9107, %v9379
        %v9498 = vadd.f32 %v9108, %v9384
        %v9499 = vadd.f32 %v9109, %v9389
        %v9500 = vadd.f32 %v9110, %v9394
        %v9501 = vadd.f32 %v9111, %v9399
        %v9502 = vadd.f32 %v9112, %v9404
        %v9503 = vadd.f32 %v9113, %v9409
        %v9504 = vadd.f32 %v9114, %v9414
        %v9505 = vadd.f32 %v9115, %v9419
        %v9506 = vadd.f32 %v9116, %v9424
        %v9507 = vadd.f32 %v9117, %v9429
        %v9508 = vadd.f32 %v9118, %v9434
        %v9509 = vadd.f32 %v9119, %v9439
        %v9510 = vadd.f32 %v9120, %v9444
        %v9511 = vadd.f32 %v9121, %v9449
        %v9512 = vadd.f32 %v9122, %v9454
        %v9513 = vadd.f32 %v9123, %v9459
        %v9514 = vadd.f32 %v9124, %v9464
        %v9515 = vadd.f32 %v9125, %v9469
        %v9516 = vadd.f32 %v9126, %v9474
        %v9517 = vadd.f32 %v9127, %v9479
        %v9518 = vadd.f32 %v9128, %v9484
        %s9519 = sadd.s32 64, %s7175
        %s9520 = scalar_lea.vmem %s193, %s9519
        %v9521 = vld [vmem:[%s9520] sm:$0xff]
        %v9522 = vld [vmem:[%s9520 + $0x10] sm:$0xff]
        %v9523 = vld [vmem:[%s9520 + $0x20] sm:$0xff]
        %v9524 = vld [vmem:[%s9520 + $0x30] sm:$0xff]
        %v9525 = vld [vmem:[%s9520 + $0x40] sm:$0xff]
        %v9526 = vld [vmem:[%s9520 + $0x50] sm:$0xff]
        %v9527 = vld [vmem:[%s9520 + $0x60] sm:$0xff]
        %v9528 = vld [vmem:[%s9520 + $0x70] sm:$0xff]
        %v9529 = vld [vmem:[%s9520 + $0xc0] sm:$0xff]
        %v9530 = vld [vmem:[%s9520 + $0xd0] sm:$0xff]
        %v9531 = vld [vmem:[%s9520 + $0xe0] sm:$0xff]
        %v9532 = vld [vmem:[%s9520 + $0xf0] sm:$0xff]
        %v9533 = vld [vmem:[%s9520 + $0x100] sm:$0xff]
        %v9534 = vld [vmem:[%s9520 + $0x110] sm:$0xff]
        %v9535 = vld [vmem:[%s9520 + $0x120] sm:$0xff]
        %v9536 = vld [vmem:[%s9520 + $0x130] sm:$0xff]
        %v9537 = vld [vmem:[%s9520 + $0x180] sm:$0xff]
        %v9538 = vld [vmem:[%s9520 + $0x190] sm:$0xff]
        %v9539 = vld [vmem:[%s9520 + $0x1a0] sm:$0xff]
        %v9540 = vld [vmem:[%s9520 + $0x1b0] sm:$0xff]
        %v9541 = vld [vmem:[%s9520 + $0x1c0] sm:$0xff]
        %v9542 = vld [vmem:[%s9520 + $0x1d0] sm:$0xff]
        %v9543 = vld [vmem:[%s9520 + $0x1e0] sm:$0xff]
        %v9544 = vld [vmem:[%s9520 + $0x1f0] sm:$0xff]
        %v9545 = vld [vmem:[%s9520 + $0x240] sm:$0xff]
        %v9546 = vld [vmem:[%s9520 + $0x250] sm:$0xff]
        %v9547 = vld [vmem:[%s9520 + $0x260] sm:$0xff]
        %v9548 = vld [vmem:[%s9520 + $0x270] sm:$0xff]
        %v9549 = vld [vmem:[%s9520 + $0x280] sm:$0xff]
        %v9550 = vld [vmem:[%s9520 + $0x290] sm:$0xff]
        %v9551 = vld [vmem:[%s9520 + $0x2a0] sm:$0xff]
        %v9552 = vld [vmem:[%s9520 + $0x2b0] sm:$0xff]
        %s9553 = scalar_lea.vmem %s1, 96
        %v9554 = vld [vmem:[%s9553] sm:$0xf]
        %v9556 = vsel %vm273, %v9521, 0
        %v9559 = vsel %vm273, %v9522, 0
        %v9562 = vsel %vm273, %v9523, 0
        %v9565 = vsel %vm273, %v9524, 0
        %v9568 = vsel %vm273, %v9525, 0
        %v9571 = vsel %vm273, %v9526, 0
        %v9574 = vsel %vm273, %v9527, 0
        %v9577 = vsel %vm273, %v9528, 0
        %v9580 = vsel %vm273, %v9529, 0
        %v9583 = vsel %vm273, %v9530, 0
        %v9586 = vsel %vm273, %v9531, 0
        %v9589 = vsel %vm273, %v9532, 0
        %v9592 = vsel %vm273, %v9533, 0
        %v9595 = vsel %vm273, %v9534, 0
        %v9598 = vsel %vm273, %v9535, 0
        %v9601 = vsel %vm273, %v9536, 0
        %v9604 = vsel %vm273, %v9537, 0
        %v9607 = vsel %vm273, %v9538, 0
        %v9610 = vsel %vm273, %v9539, 0
        %v9613 = vsel %vm273, %v9540, 0
        %v9616 = vsel %vm273, %v9541, 0
        %v9619 = vsel %vm273, %v9542, 0
        %v9622 = vsel %vm273, %v9543, 0
        %v9625 = vsel %vm273, %v9544, 0
        %v9628 = vsel %vm273, %v9545, 0
        %v9631 = vsel %vm273, %v9546, 0
        %v9634 = vsel %vm273, %v9547, 0
        %v9637 = vsel %vm273, %v9548, 0
        %v9640 = vsel %vm273, %v9549, 0
        %v9643 = vsel %vm273, %v9550, 0
        %v9646 = vsel %vm273, %v9551, 0
        %v9649 = vsel %vm273, %v9552, 0
        %v9652 = vsel %vm370, %v9554, 0
        %9654 = vmatprep.subr.mxu0 0.0
        %9655 = vmatpush1.msra.mxu0 %v9652
        %9656 = vmatprep.subr.mxu0 0.0
        %9657 = vmatpush1.msra.mxu0 0.0
        %9658 = vmatprep.subr.mxu0 0.0
        %9659 = vmatpush1.msra.mxu0 0.0
        %9660 = vmatprep.subr.mxu0 0.0
        %9661 = vmatpush1.msra.mxu0 0.0
        %9662 = vmatprep.subr.mxu0 0.0
        %9663 = vmatpush1.msra.mxu0 0.0
        %9664 = vmatprep.subr.mxu0 0.0
        %9665 = vmatpush1.msra.mxu0 0.0
        %9666 = vmatprep.subr.mxu0 0.0
        %9667 = vmatpush1.msra.mxu0 0.0
        %9668 = vmatprep.subr.mxu0 0.0
        %9669 = vmatpush1.msra.mxu0 0.0
        %9670 = vmatprep.subr.mxu0 0.0
        %9671 = vmatpush1.msra.mxu0 0.0
        %9672 = vmatprep.subr.mxu0 0.0
        %9673 = vmatpush1.msra.mxu0 0.0
        %9674 = vmatprep.subr.mxu0 0.0
        %9675 = vmatpush1.msra.mxu0 0.0
        %9676 = vmatprep.subr.mxu0 0.0
        %9677 = vmatpush1.msra.mxu0 0.0
        %9678 = vmatprep.subr.mxu0 0.0
        %9679 = vmatpush1.msra.mxu0 0.0
        %9680 = vmatprep.subr.mxu0 0.0
        %9681 = vmatpush1.msra.mxu0 0.0
        %9682 = vmatprep.subr.mxu0 0.0
        %9683 = vmatpush1.msra.mxu0 0.0
        %9684 = vmatprep.subr.mxu0 0.0
        %9685 = vmatpush1.msra.mxu0 0.0
        %9686 = vmatprep.subr.mxu0 0.0
        %9687 = vmatpush1.msra.mxu0 0.0
        %9688 = vmatprep.subr.mxu0 0.0
        %9689 = vmatpush1.msra.mxu0 0.0
        %9690 = vmatprep.subr.mxu0 0.0
        %9691 = vmatpush1.msra.mxu0 0.0
        %9692 = vmatprep.subr.mxu0 0.0
        %9693 = vmatpush1.msra.mxu0 0.0
        %9694 = vmatprep.subr.mxu0 0.0
        %9695 = vmatpush1.msra.mxu0 0.0
        %9696 = vmatprep.subr.mxu0 0.0
        %9697 = vmatpush1.msra.mxu0 0.0
        %9698 = vmatprep.subr.mxu0 0.0
        %9699 = vmatpush1.msra.mxu0 0.0
        %9700 = vmatprep.subr.mxu0 0.0
        %9701 = vmatpush1.msra.mxu0 0.0
        %9702 = vmatprep.subr.mxu0 0.0
        %9703 = vmatpush1.msra.mxu0 0.0
        %9704 = vmatprep.subr.mxu0 0.0
        %9705 = vmatpush1.msra.mxu0 0.0
        %9706 = vmatprep.subr.mxu0 0.0
        %9707 = vmatpush1.msra.mxu0 0.0
        %9708 = vmatprep.subr.mxu0 0.0
        %9709 = vmatpush1.msra.mxu0 0.0
        %9710 = vmatprep.subr.mxu0 0.0
        %9711 = vmatpush1.msra.mxu0 0.0
        %9712 = vmatprep.subr.mxu0 0.0
        %9713 = vmatpush1.msra.mxu0 0.0
        %9714 = vmatprep.subr.mxu0 0.0
        %9715 = vmatpush1.msra.mxu0 0.0
        %9716 = vmatprep.subr.mxu0 0.0
        %9717 = vmatpush1.msra.mxu0 0.0
        %9718 = vmatprep.mubr.f32.mxu0 0.0
        %9719 = vmatmul.mubr.f32.gmra.mrb[0].mxu0 %v9556
        %v9720 = vpop.f32.mrb[0].mxu0
        %v9721 = vadd.f32 0.0, %v9720
        %v9722 = vpop.f32.mrb[0].mxu0
        %9723 = vmatprep.mubr.f32.mxu0 0.0
        %9724 = vmatmul.mubr.f32.gmra.mrb[0].mxu0 %v9559
        %v9725 = vpop.f32.mrb[0].mxu0
        %v9726 = vadd.f32 0.0, %v9725
        %v9727 = vpop.f32.mrb[0].mxu0
        %9728 = vmatprep.mubr.f32.mxu0 0.0
        %9729 = vmatmul.mubr.f32.gmra.mrb[0].mxu0 %v9562
        %v9730 = vpop.f32.mrb[0].mxu0
        %v9731 = vadd.f32 0.0, %v9730
        %v9732 = vpop.f32.mrb[0].mxu0
        %9733 = vmatprep.mubr.f32.mxu0 0.0
        %9734 = vmatmul.mubr.f32.gmra.mrb[0].mxu0 %v9565
        %v9735 = vpop.f32.mrb[0].mxu0
        %v9736 = vadd.f32 0.0, %v9735
        %v9737 = vpop.f32.mrb[0].mxu0
        %9738 = vmatprep.mubr.f32.mxu0 0.0
        %9739 = vmatmul.mubr.f32.gmra.mrb[0].mxu0 %v9568
        %v9740 = vpop.f32.mrb[0].mxu0
        %v9741 = vadd.f32 0.0, %v9740
        %v9742 = vpop.f32.mrb[0].mxu0
        %9743 = vmatprep.mubr.f32.mxu0 0.0
        %9744 = vmatmul.mubr.f32.gmra.mrb[0].mxu0 %v9571
        %v9745 = vpop.f32.mrb[0].mxu0
        %v9746 = vadd.f32 0.0, %v9745
        %v9747 = vpop.f32.mrb[0].mxu0
        %9748 = vmatprep.mubr.f32.mxu0 0.0
        %9749 = vmatmul.mubr.f32.gmra.mrb[0].mxu0 %v9574
        %v9750 = vpop.f32.mrb[0].mxu0
        %v9751 = vadd.f32 0.0, %v9750
        %v9752 = vpop.f32.mrb[0].mxu0
        %9753 = vmatprep.mubr.f32.mxu0 0.0
        %9754 = vmatmul.mubr.f32.gmra.mrb[0].mxu0 %v9577
        %v9755 = vpop.f32.mrb[0].mxu0
        %v9756 = vadd.f32 0.0, %v9755
        %v9757 = vpop.f32.mrb[0].mxu0
        %9758 = vmatprep.mubr.f32.mxu0 0.0
        %9759 = vmatmul.mubr.f32.gmra.mrb[0].mxu0 %v9580
        %v9760 = vpop.f32.mrb[0].mxu0
        %v9761 = vadd.f32 0.0, %v9760
        %v9762 = vpop.f32.mrb[0].mxu0
        %9763 = vmatprep.mubr.f32.mxu0 0.0
        %9764 = vmatmul.mubr.f32.gmra.mrb[0].mxu0 %v9583
        %v9765 = vpop.f32.mrb[0].mxu0
        %v9766 = vadd.f32 0.0, %v9765
        %v9767 = vpop.f32.mrb[0].mxu0
        %9768 = vmatprep.mubr.f32.mxu0 0.0
        %9769 = vmatmul.mubr.f32.gmra.mrb[0].mxu0 %v9586
        %v9770 = vpop.f32.mrb[0].mxu0
        %v9771 = vadd.f32 0.0, %v9770
        %v9772 = vpop.f32.mrb[0].mxu0
        %9773 = vmatprep.mubr.f32.mxu0 0.0
        %9774 = vmatmul.mubr.f32.gmra.mrb[0].mxu0 %v9589
        %v9775 = vpop.f32.mrb[0].mxu0
        %v9776 = vadd.f32 0.0, %v9775
        %v9777 = vpop.f32.mrb[0].mxu0
        %9778 = vmatprep.mubr.f32.mxu0 0.0
        %9779 = vmatmul.mubr.f32.gmra.mrb[0].mxu0 %v9592
        %v9780 = vpop.f32.mrb[0].mxu0
        %v9781 = vadd.f32 0.0, %v9780
        %v9782 = vpop.f32.mrb[0].mxu0
        %9783 = vmatprep.mubr.f32.mxu0 0.0
        %9784 = vmatmul.mubr.f32.gmra.mrb[0].mxu0 %v9595
        %v9785 = vpop.f32.mrb[0].mxu0
        %v9786 = vadd.f32 0.0, %v9785
        %v9787 = vpop.f32.mrb[0].mxu0
        %9788 = vmatprep.mubr.f32.mxu0 0.0
        %9789 = vmatmul.mubr.f32.gmra.mrb[0].mxu0 %v9598
        %v9790 = vpop.f32.mrb[0].mxu0
        %v9791 = vadd.f32 0.0, %v9790
        %v9792 = vpop.f32.mrb[0].mxu0
        %9793 = vmatprep.mubr.f32.mxu0 0.0
        %9794 = vmatmul.mubr.f32.gmra.mrb[0].mxu0 %v9601
        %v9795 = vpop.f32.mrb[0].mxu0
        %v9796 = vadd.f32 0.0, %v9795
        %v9797 = vpop.f32.mrb[0].mxu0
        %9798 = vmatprep.mubr.f32.mxu0 0.0
        %9799 = vmatmul.mubr.f32.gmra.mrb[0].mxu0 %v9604
        %v9800 = vpop.f32.mrb[0].mxu0
        %v9801 = vadd.f32 0.0, %v9800
        %v9802 = vpop.f32.mrb[0].mxu0
        %9803 = vmatprep.mubr.f32.mxu0 0.0
        %9804 = vmatmul.mubr.f32.gmra.mrb[0].mxu0 %v9607
        %v9805 = vpop.f32.mrb[0].mxu0
        %v9806 = vadd.f32 0.0, %v9805
        %v9807 = vpop.f32.mrb[0].mxu0
        %9808 = vmatprep.mubr.f32.mxu0 0.0
        %9809 = vmatmul.mubr.f32.gmra.mrb[0].mxu0 %v9610
        %v9810 = vpop.f32.mrb[0].mxu0
        %v9811 = vadd.f32 0.0, %v9810
        %v9812 = vpop.f32.mrb[0].mxu0
        %9813 = vmatprep.mubr.f32.mxu0 0.0
        %9814 = vmatmul.mubr.f32.gmra.mrb[0].mxu0 %v9613
        %v9815 = vpop.f32.mrb[0].mxu0
        %v9816 = vadd.f32 0.0, %v9815
        %v9817 = vpop.f32.mrb[0].mxu0
        %9818 = vmatprep.mubr.f32.mxu0 0.0
        %9819 = vmatmul.mubr.f32.gmra.mrb[0].mxu0 %v9616
        %v9820 = vpop.f32.mrb[0].mxu0
        %v9821 = vadd.f32 0.0, %v9820
        %v9822 = vpop.f32.mrb[0].mxu0
        %9823 = vmatprep.mubr.f32.mxu0 0.0
        %9824 = vmatmul.mubr.f32.gmra.mrb[0].mxu0 %v9619
        %v9825 = vpop.f32.mrb[0].mxu0
        %v9826 = vadd.f32 0.0, %v9825
        %v9827 = vpop.f32.mrb[0].mxu0
        %9828 = vmatprep.mubr.f32.mxu0 0.0
        %9829 = vmatmul.mubr.f32.gmra.mrb[0].mxu0 %v9622
        %v9830 = vpop.f32.mrb[0].mxu0
        %v9831 = vadd.f32 0.0, %v9830
        %v9832 = vpop.f32.mrb[0].mxu0
        %9833 = vmatprep.mubr.f32.mxu0 0.0
        %9834 = vmatmul.mubr.f32.gmra.mrb[0].mxu0 %v9625
        %v9835 = vpop.f32.mrb[0].mxu0
        %v9836 = vadd.f32 0.0, %v9835
        %v9837 = vpop.f32.mrb[0].mxu0
        %9838 = vmatprep.mubr.f32.mxu0 0.0
        %9839 = vmatmul.mubr.f32.gmra.mrb[0].mxu0 %v9628
        %v9840 = vpop.f32.mrb[0].mxu0
        %v9841 = vadd.f32 0.0, %v9840
        %v9842 = vpop.f32.mrb[0].mxu0
        %9843 = vmatprep.mubr.f32.mxu0 0.0
        %9844 = vmatmul.mubr.f32.gmra.mrb[0].mxu0 %v9631
        %v9845 = vpop.f32.mrb[0].mxu0
        %v9846 = vadd.f32 0.0, %v9845
        %v9847 = vpop.f32.mrb[0].mxu0
        %9848 = vmatprep.mubr.f32.mxu0 0.0
        %9849 = vmatmul.mubr.f32.gmra.mrb[0].mxu0 %v9634
        %v9850 = vpop.f32.mrb[0].mxu0
        %v9851 = vadd.f32 0.0, %v9850
        %v9852 = vpop.f32.mrb[0].mxu0
        %9853 = vmatprep.mubr.f32.mxu0 0.0
        %9854 = vmatmul.mubr.f32.gmra.mrb[0].mxu0 %v9637
        %v9855 = vpop.f32.mrb[0].mxu0
        %v9856 = vadd.f32 0.0, %v9855
        %v9857 = vpop.f32.mrb[0].mxu0
        %9858 = vmatprep.mubr.f32.mxu0 0.0
        %9859 = vmatmul.mubr.f32.gmra.mrb[0].mxu0 %v9640
        %v9860 = vpop.f32.mrb[0].mxu0
        %v9861 = vadd.f32 0.0, %v9860
        %v9862 = vpop.f32.mrb[0].mxu0
        %9863 = vmatprep.mubr.f32.mxu0 0.0
        %9864 = vmatmul.mubr.f32.gmra.mrb[0].mxu0 %v9643
        %v9865 = vpop.f32.mrb[0].mxu0
        %v9866 = vadd.f32 0.0, %v9865
        %v9867 = vpop.f32.mrb[0].mxu0
        %9868 = vmatprep.mubr.f32.mxu0 0.0
        %9869 = vmatmul.mubr.f32.gmra.mrb[0].mxu0 %v9646
        %v9870 = vpop.f32.mrb[0].mxu0
        %v9871 = vadd.f32 0.0, %v9870
        %v9872 = vpop.f32.mrb[0].mxu0
        %9873 = vmatprep.mubr.f32.mxu0 0.0
        %9874 = vmatmul.mubr.f32.gmra.mrb[0].mxu0 %v9649
        %v9875 = vpop.f32.mrb[0].mxu0
        %v9876 = vadd.f32 0.0, %v9875
        %v9877 = vpop.f32.mrb[0].mxu0
        %9878 = vdwg.mxu0
        %v9879 = vadd.f32 %v9487, %v9721
        %v9880 = vadd.f32 %v9488, %v9726
        %v9881 = vadd.f32 %v9489, %v9731
        %v9882 = vadd.f32 %v9490, %v9736
        %v9883 = vadd.f32 %v9491, %v9741
        %v9884 = vadd.f32 %v9492, %v9746
        %v9885 = vadd.f32 %v9493, %v9751
        %v9886 = vadd.f32 %v9494, %v9756
        %v9887 = vadd.f32 %v9495, %v9761
        %v9888 = vadd.f32 %v9496, %v9766
        %v9889 = vadd.f32 %v9497, %v9771
        %v9890 = vadd.f32 %v9498, %v9776
        %v9891 = vadd.f32 %v9499, %v9781
        %v9892 = vadd.f32 %v9500, %v9786
        %v9893 = vadd.f32 %v9501, %v9791
        %v9894 = vadd.f32 %v9502, %v9796
        %v9895 = vadd.f32 %v9503, %v9801
        %v9896 = vadd.f32 %v9504, %v9806
        %v9897 = vadd.f32 %v9505, %v9811
        %v9898 = vadd.f32 %v9506, %v9816
        %v9899 = vadd.f32 %v9507, %v9821
        %v9900 = vadd.f32 %v9508, %v9826
        %v9901 = vadd.f32 %v9509, %v9831
        %v9902 = vadd.f32 %v9510, %v9836
        %v9903 = vadd.f32 %v9511, %v9841
        %v9904 = vadd.f32 %v9512, %v9846
        %v9905 = vadd.f32 %v9513, %v9851
        %v9906 = vadd.f32 %v9514, %v9856
        %v9907 = vadd.f32 %v9515, %v9861
        %v9908 = vadd.f32 %v9516, %v9866
        %v9909 = vadd.f32 %v9517, %v9871
        %v9910 = vadd.f32 %v9518, %v9876
        %v9911 = vld [vmem:[%s9520 + $0x2] sm:$0xff]
        %v9912 = vld [vmem:[%s9520 + $0x12] sm:$0xff]
        %v9913 = vld [vmem:[%s9520 + $0x22] sm:$0xff]
        %v9914 = vld [vmem:[%s9520 + $0x32] sm:$0xff]
        %v9915 = vld [vmem:[%s9520 + $0x42] sm:$0xff]
        %v9916 = vld [vmem:[%s9520 + $0x52] sm:$0xff]
        %v9917 = vld [vmem:[%s9520 + $0x62] sm:$0xff]
        %v9918 = vld [vmem:[%s9520 + $0x72] sm:$0xff]
        %v9919 = vld [vmem:[%s9520 + $0xc2] sm:$0xff]
        %v9920 = vld [vmem:[%s9520 + $0xd2] sm:$0xff]
        %v9921 = vld [vmem:[%s9520 + $0xe2] sm:$0xff]
        %v9922 = vld [vmem:[%s9520 + $0xf2] sm:$0xff]
        %v9923 = vld [vmem:[%s9520 + $0x102] sm:$0xff]
        %v9924 = vld [vmem:[%s9520 + $0x112] sm:$0xff]
        %v9925 = vld [vmem:[%s9520 + $0x122] sm:$0xff]
        %v9926 = vld [vmem:[%s9520 + $0x132] sm:$0xff]
        %v9927 = vld [vmem:[%s9520 + $0x182] sm:$0xff]
        %v9928 = vld [vmem:[%s9520 + $0x192] sm:$0xff]
        %v9929 = vld [vmem:[%s9520 + $0x1a2] sm:$0xff]
        %v9930 = vld [vmem:[%s9520 + $0x1b2] sm:$0xff]
        %v9931 = vld [vmem:[%s9520 + $0x1c2] sm:$0xff]
        %v9932 = vld [vmem:[%s9520 + $0x1d2] sm:$0xff]
        %v9933 = vld [vmem:[%s9520 + $0x1e2] sm:$0xff]
        %v9934 = vld [vmem:[%s9520 + $0x1f2] sm:$0xff]
        %v9935 = vld [vmem:[%s9520 + $0x242] sm:$0xff]
        %v9936 = vld [vmem:[%s9520 + $0x252] sm:$0xff]
        %v9937 = vld [vmem:[%s9520 + $0x262] sm:$0xff]
        %v9938 = vld [vmem:[%s9520 + $0x272] sm:$0xff]
        %v9939 = vld [vmem:[%s9520 + $0x282] sm:$0xff]
        %v9940 = vld [vmem:[%s9520 + $0x292] sm:$0xff]
        %v9941 = vld [vmem:[%s9520 + $0x2a2] sm:$0xff]
        %v9942 = vld [vmem:[%s9520 + $0x2b2] sm:$0xff]
        %s9943 = scalar_lea.vmem %s1, 100
        %v9944 = vld [vmem:[%s9943] sm:$0xf]
        %v9946 = vsel %vm273, %v9911, 0
        %v9949 = vsel %vm273, %v9912, 0
        %v9952 = vsel %vm273, %v9913, 0
        %v9955 = vsel %vm273, %v9914, 0
        %v9958 = vsel %vm273, %v9915, 0
        %v9961 = vsel %vm273, %v9916, 0
        %v9964 = vsel %vm273, %v9917, 0
        %v9967 = vsel %vm273, %v9918, 0
        %v9970 = vsel %vm273, %v9919, 0
        %v9973 = vsel %vm273, %v9920, 0
        %v9976 = vsel %vm273, %v9921, 0
        %v9979 = vsel %vm273, %v9922, 0
        %v9982 = vsel %vm273, %v9923, 0
        %v9985 = vsel %vm273, %v9924, 0
        %v9988 = vsel %vm273, %v9925, 0
        %v9991 = vsel %vm273, %v9926, 0
        %v9994 = vsel %vm273, %v9927, 0
        %v9997 = vsel %vm273, %v9928, 0
        %v10000 = vsel %vm273, %v9929, 0
        %v10003 = vsel %vm273, %v9930, 0
        %v10006 = vsel %vm273, %v9931, 0
        %v10009 = vsel %vm273, %v9932, 0
        %v10012 = vsel %vm273, %v9933, 0
        %v10015 = vsel %vm273, %v9934, 0
        %v10018 = vsel %vm273, %v9935, 0
        %v10021 = vsel %vm273, %v9936, 0
        %v10024 = vsel %vm273, %v9937, 0
        %v10027 = vsel %vm273, %v9938, 0
        %v10030 = vsel %vm273, %v9939, 0
        %v10033 = vsel %vm273, %v9940, 0
        %v10036 = vsel %vm273, %v9941, 0
        %v10039 = vsel %vm273, %v9942, 0
        %v10042 = vsel %vm370, %v9944, 0
        %10044 = vmatprep.subr.mxu0 0.0
        %10045 = vmatpush1.msra.mxu0 %v10042
        %10046 = vmatprep.subr.mxu0 0.0
        %10047 = vmatpush1.msra.mxu0 0.0
        %10048 = vmatprep.subr.mxu0 0.0
        %10049 = vmatpush1.msra.mxu0 0.0
        %10050 = vmatprep.subr.mxu0 0.0
        %10051 = vmatpush1.msra.mxu0 0.0
        %10052 = vmatprep.subr.mxu0 0.0
        %10053 = vmatpush1.msra.mxu0 0.0
        %10054 = vmatprep.subr.mxu0 0.0
        %10055 = vmatpush1.msra.mxu0 0.0
        %10056 = vmatprep.subr.mxu0 0.0
        %10057 = vmatpush1.msra.mxu0 0.0
        %10058 = vmatprep.subr.mxu0 0.0
        %10059 = vmatpush1.msra.mxu0 0.0
        %10060 = vmatprep.subr.mxu0 0.0
        %10061 = vmatpush1.msra.mxu0 0.0
        %10062 = vmatprep.subr.mxu0 0.0
        %10063 = vmatpush1.msra.mxu0 0.0
        %10064 = vmatprep.subr.mxu0 0.0
        %10065 = vmatpush1.msra.mxu0 0.0
        %10066 = vmatprep.subr.mxu0 0.0
        %10067 = vmatpush1.msra.mxu0 0.0
        %10068 = vmatprep.subr.mxu0 0.0
        %10069 = vmatpush1.msra.mxu0 0.0
        %10070 = vmatprep.subr.mxu0 0.0
        %10071 = vmatpush1.msra.mxu0 0.0
        %10072 = vmatprep.subr.mxu0 0.0
        %10073 = vmatpush1.msra.mxu0 0.0
        %10074 = vmatprep.subr.mxu0 0.0
        %10075 = vmatpush1.msra.mxu0 0.0
        %10076 = vmatprep.subr.mxu0 0.0
        %10077 = vmatpush1.msra.mxu0 0.0
        %10078 = vmatprep.subr.mxu0 0.0
        %10079 = vmatpush1.msra.mxu0 0.0
        %10080 = vmatprep.subr.mxu0 0.0
        %10081 = vmatpush1.msra.mxu0 0.0
        %10082 = vmatprep.subr.mxu0 0.0
        %10083 = vmatpush1.msra.mxu0 0.0
        %10084 = vmatprep.subr.mxu0 0.0
        %10085 = vmatpush1.msra.mxu0 0.0
        %10086 = vmatprep.subr.mxu0 0.0
        %10087 = vmatpush1.msra.mxu0 0.0
        %10088 = vmatprep.subr.mxu0 0.0
        %10089 = vmatpush1.msra.mxu0 0.0
        %10090 = vmatprep.subr.mxu0 0.0
        %10091 = vmatpush1.msra.mxu0 0.0
        %10092 = vmatprep.subr.mxu0 0.0
        %10093 = vmatpush1.msra.mxu0 0.0
        %10094 = vmatprep.subr.mxu0 0.0
        %10095 = vmatpush1.msra.mxu0 0.0
        %10096 = vmatprep.subr.mxu0 0.0
        %10097 = vmatpush1.msra.mxu0 0.0
        %10098 = vmatprep.subr.mxu0 0.0
        %10099 = vmatpush1.msra.mxu0 0.0
        %10100 = vmatprep.subr.mxu0 0.0
        %10101 = vmatpush1.msra.mxu0 0.0
        %10102 = vmatprep.subr.mxu0 0.0
        %10103 = vmatpush1.msra.mxu0 0.0
        %10104 = vmatprep.subr.mxu0 0.0
        %10105 = vmatpush1.msra.mxu0 0.0
        %10106 = vmatprep.subr.mxu0 0.0
        %10107 = vmatpush1.msra.mxu0 0.0
        %10108 = vmatprep.mubr.f32.mxu0 0.0
        %10109 = vmatmul.mubr.f32.gmra.mrb[0].mxu0 %v9946
        %v10110 = vpop.f32.mrb[0].mxu0
        %v10111 = vadd.f32 0.0, %v10110
        %v10112 = vpop.f32.mrb[0].mxu0
        %10113 = vmatprep.mubr.f32.mxu0 0.0
        %10114 = vmatmul.mubr.f32.gmra.mrb[0].mxu0 %v9949
        %v10115 = vpop.f32.mrb[0].mxu0
        %v10116 = vadd.f32 0.0, %v10115
        %v10117 = vpop.f32.mrb[0].mxu0
        %10118 = vmatprep.mubr.f32.mxu0 0.0
        %10119 = vmatmul.mubr.f32.gmra.mrb[0].mxu0 %v9952
        %v10120 = vpop.f32.mrb[0].mxu0
        %v10121 = vadd.f32 0.0, %v10120
        %v10122 = vpop.f32.mrb[0].mxu0
        %10123 = vmatprep.mubr.f32.mxu0 0.0
        %10124 = vmatmul.mubr.f32.gmra.mrb[0].mxu0 %v9955
        %v10125 = vpop.f32.mrb[0].mxu0
        %v10126 = vadd.f32 0.0, %v10125
        %v10127 = vpop.f32.mrb[0].mxu0
        %10128 = vmatprep.mubr.f32.mxu0 0.0
        %10129 = vmatmul.mubr.f32.gmra.mrb[0].mxu0 %v9958
        %v10130 = vpop.f32.mrb[0].mxu0
        %v10131 = vadd.f32 0.0, %v10130
        %v10132 = vpop.f32.mrb[0].mxu0
        %10133 = vmatprep.mubr.f32.mxu0 0.0
        %10134 = vmatmul.mubr.f32.gmra.mrb[0].mxu0 %v9961
        %v10135 = vpop.f32.mrb[0].mxu0
        %v10136 = vadd.f32 0.0, %v10135
        %v10137 = vpop.f32.mrb[0].mxu0
        %10138 = vmatprep.mubr.f32.mxu0 0.0
        %10139 = vmatmul.mubr.f32.gmra.mrb[0].mxu0 %v9964
        %v10140 = vpop.f32.mrb[0].mxu0
        %v10141 = vadd.f32 0.0, %v10140
        %v10142 = vpop.f32.mrb[0].mxu0
        %10143 = vmatprep.mubr.f32.mxu0 0.0
        %10144 = vmatmul.mubr.f32.gmra.mrb[0].mxu0 %v9967
        %v10145 = vpop.f32.mrb[0].mxu0
        %v10146 = vadd.f32 0.0, %v10145
        %v10147 = vpop.f32.mrb[0].mxu0
        %10148 = vmatprep.mubr.f32.mxu0 0.0
        %10149 = vmatmul.mubr.f32.gmra.mrb[0].mxu0 %v9970
        %v10150 = vpop.f32.mrb[0].mxu0
        %v10151 = vadd.f32 0.0, %v10150
        %v10152 = vpop.f32.mrb[0].mxu0
        %10153 = vmatprep.mubr.f32.mxu0 0.0
        %10154 = vmatmul.mubr.f32.gmra.mrb[0].mxu0 %v9973
        %v10155 = vpop.f32.mrb[0].mxu0
        %v10156 = vadd.f32 0.0, %v10155
        %v10157 = vpop.f32.mrb[0].mxu0
        %10158 = vmatprep.mubr.f32.mxu0 0.0
        %10159 = vmatmul.mubr.f32.gmra.mrb[0].mxu0 %v9976
        %v10160 = vpop.f32.mrb[0].mxu0
        %v10161 = vadd.f32 0.0, %v10160
        %v10162 = vpop.f32.mrb[0].mxu0
        %10163 = vmatprep.mubr.f32.mxu0 0.0
        %10164 = vmatmul.mubr.f32.gmra.mrb[0].mxu0 %v9979
        %v10165 = vpop.f32.mrb[0].mxu0
        %v10166 = vadd.f32 0.0, %v10165
        %v10167 = vpop.f32.mrb[0].mxu0
        %10168 = vmatprep.mubr.f32.mxu0 0.0
        %10169 = vmatmul.mubr.f32.gmra.mrb[0].mxu0 %v9982
        %v10170 = vpop.f32.mrb[0].mxu0
        %v10171 = vadd.f32 0.0, %v10170
        %v10172 = vpop.f32.mrb[0].mxu0
        %10173 = vmatprep.mubr.f32.mxu0 0.0
        %10174 = vmatmul.mubr.f32.gmra.mrb[0].mxu0 %v9985
        %v10175 = vpop.f32.mrb[0].mxu0
        %v10176 = vadd.f32 0.0, %v10175
        %v10177 = vpop.f32.mrb[0].mxu0
        %10178 = vmatprep.mubr.f32.mxu0 0.0
        %10179 = vmatmul.mubr.f32.gmra.mrb[0].mxu0 %v9988
        %v10180 = vpop.f32.mrb[0].mxu0
        %v10181 = vadd.f32 0.0, %v10180
        %v10182 = vpop.f32.mrb[0].mxu0
        %10183 = vmatprep.mubr.f32.mxu0 0.0
        %10184 = vmatmul.mubr.f32.gmra.mrb[0].mxu0 %v9991
        %v10185 = vpop.f32.mrb[0].mxu0
        %v10186 = vadd.f32 0.0, %v10185
        %v10187 = vpop.f32.mrb[0].mxu0
        %10188 = vmatprep.mubr.f32.mxu0 0.0
        %10189 = vmatmul.mubr.f32.gmra.mrb[0].mxu0 %v9994
        %v10190 = vpop.f32.mrb[0].mxu0
        %v10191 = vadd.f32 0.0, %v10190
        %v10192 = vpop.f32.mrb[0].mxu0
        %10193 = vmatprep.mubr.f32.mxu0 0.0
        %10194 = vmatmul.mubr.f32.gmra.mrb[0].mxu0 %v9997
        %v10195 = vpop.f32.mrb[0].mxu0
        %v10196 = vadd.f32 0.0, %v10195
        %v10197 = vpop.f32.mrb[0].mxu0
        %10198 = vmatprep.mubr.f32.mxu0 0.0
        %10199 = vmatmul.mubr.f32.gmra.mrb[0].mxu0 %v10000
        %v10200 = vpop.f32.mrb[0].mxu0
        %v10201 = vadd.f32 0.0, %v10200
        %v10202 = vpop.f32.mrb[0].mxu0
        %10203 = vmatprep.mubr.f32.mxu0 0.0
        %10204 = vmatmul.mubr.f32.gmra.mrb[0].mxu0 %v10003
        %v10205 = vpop.f32.mrb[0].mxu0
        %v10206 = vadd.f32 0.0, %v10205
        %v10207 = vpop.f32.mrb[0].mxu0
        %10208 = vmatprep.mubr.f32.mxu0 0.0
        %10209 = vmatmul.mubr.f32.gmra.mrb[0].mxu0 %v10006
        %v10210 = vpop.f32.mrb[0].mxu0
        %v10211 = vadd.f32 0.0, %v10210
        %v10212 = vpop.f32.mrb[0].mxu0
        %10213 = vmatprep.mubr.f32.mxu0 0.0
        %10214 = vmatmul.mubr.f32.gmra.mrb[0].mxu0 %v10009
        %v10215 = vpop.f32.mrb[0].mxu0
        %v10216 = vadd.f32 0.0, %v10215
        %v10217 = vpop.f32.mrb[0].mxu0
        %10218 = vmatprep.mubr.f32.mxu0 0.0
        %10219 = vmatmul.mubr.f32.gmra.mrb[0].mxu0 %v10012
        %v10220 = vpop.f32.mrb[0].mxu0
        %v10221 = vadd.f32 0.0, %v10220
        %v10222 = vpop.f32.mrb[0].mxu0
        %10223 = vmatprep.mubr.f32.mxu0 0.0
        %10224 = vmatmul.mubr.f32.gmra.mrb[0].mxu0 %v10015
        %v10225 = vpop.f32.mrb[0].mxu0
        %v10226 = vadd.f32 0.0, %v10225
        %v10227 = vpop.f32.mrb[0].mxu0
        %10228 = vmatprep.mubr.f32.mxu0 0.0
        %10229 = vmatmul.mubr.f32.gmra.mrb[0].mxu0 %v10018
        %v10230 = vpop.f32.mrb[0].mxu0
        %v10231 = vadd.f32 0.0, %v10230
        %v10232 = vpop.f32.mrb[0].mxu0
        %10233 = vmatprep.mubr.f32.mxu0 0.0
        %10234 = vmatmul.mubr.f32.gmra.mrb[0].mxu0 %v10021
        %v10235 = vpop.f32.mrb[0].mxu0
        %v10236 = vadd.f32 0.0, %v10235
        %v10237 = vpop.f32.mrb[0].mxu0
        %10238 = vmatprep.mubr.f32.mxu0 0.0
        %10239 = vmatmul.mubr.f32.gmra.mrb[0].mxu0 %v10024
        %v10240 = vpop.f32.mrb[0].mxu0
        %v10241 = vadd.f32 0.0, %v10240
        %v10242 = vpop.f32.mrb[0].mxu0
        %10243 = vmatprep.mubr.f32.mxu0 0.0
        %10244 = vmatmul.mubr.f32.gmra.mrb[0].mxu0 %v10027
        %v10245 = vpop.f32.mrb[0].mxu0
        %v10246 = vadd.f32 0.0, %v10245
        %v10247 = vpop.f32.mrb[0].mxu0
        %10248 = vmatprep.mubr.f32.mxu0 0.0
        %10249 = vmatmul.mubr.f32.gmra.mrb[0].mxu0 %v10030
        %v10250 = vpop.f32.mrb[0].mxu0
        %v10251 = vadd.f32 0.0, %v10250
        %v10252 = vpop.f32.mrb[0].mxu0
        %10253 = vmatprep.mubr.f32.mxu0 0.0
        %10254 = vmatmul.mubr.f32.gmra.mrb[0].mxu0 %v10033
        %v10255 = vpop.f32.mrb[0].mxu0
        %v10256 = vadd.f32 0.0, %v10255
        %v10257 = vpop.f32.mrb[0].mxu0
        %10258 = vmatprep.mubr.f32.mxu0 0.0
        %10259 = vmatmul.mubr.f32.gmra.mrb[0].mxu0 %v10036
        %v10260 = vpop.f32.mrb[0].mxu0
        %v10261 = vadd.f32 0.0, %v10260
        %v10262 = vpop.f32.mrb[0].mxu0
        %10263 = vmatprep.mubr.f32.mxu0 0.0
        %10264 = vmatmul.mubr.f32.gmra.mrb[0].mxu0 %v10039
        %v10265 = vpop.f32.mrb[0].mxu0
        %v10266 = vadd.f32 0.0, %v10265
        %v10267 = vpop.f32.mrb[0].mxu0
        %10268 = vdwg.mxu0
        %v10269 = vadd.f32 %v9879, %v10111
        %v10270 = vadd.f32 %v9880, %v10116
        %v10271 = vadd.f32 %v9881, %v10121
        %v10272 = vadd.f32 %v9882, %v10126
        %v10273 = vadd.f32 %v9883, %v10131
        %v10274 = vadd.f32 %v9884, %v10136
        %v10275 = vadd.f32 %v9885, %v10141
        %v10276 = vadd.f32 %v9886, %v10146
        %v10277 = vadd.f32 %v9887, %v10151
        %v10278 = vadd.f32 %v9888, %v10156
        %v10279 = vadd.f32 %v9889, %v10161
        %v10280 = vadd.f32 %v9890, %v10166
        %v10281 = vadd.f32 %v9891, %v10171
        %v10282 = vadd.f32 %v9892, %v10176
        %v10283 = vadd.f32 %v9893, %v10181
        %v10284 = vadd.f32 %v9894, %v10186
        %v10285 = vadd.f32 %v9895, %v10191
        %v10286 = vadd.f32 %v9896, %v10196
        %v10287 = vadd.f32 %v9897, %v10201
        %v10288 = vadd.f32 %v9898, %v10206
        %v10289 = vadd.f32 %v9899, %v10211
        %v10290 = vadd.f32 %v9900, %v10216
        %v10291 = vadd.f32 %v9901, %v10221
        %v10292 = vadd.f32 %v9902, %v10226
        %v10293 = vadd.f32 %v9903, %v10231
        %v10294 = vadd.f32 %v9904, %v10236
        %v10295 = vadd.f32 %v9905, %v10241
        %v10296 = vadd.f32 %v9906, %v10246
        %v10297 = vadd.f32 %v9907, %v10251
        %v10298 = vadd.f32 %v9908, %v10256
        %v10299 = vadd.f32 %v9909, %v10261
        %v10300 = vadd.f32 %v9910, %v10266
        %v10301 = vld [vmem:[%s9520 + $0x4] sm:$0xff]
        %v10302 = vld [vmem:[%s9520 + $0x14] sm:$0xff]
        %v10303 = vld [vmem:[%s9520 + $0x24] sm:$0xff]
        %v10304 = vld [vmem:[%s9520 + $0x34] sm:$0xff]
        %v10305 = vld [vmem:[%s9520 + $0x44] sm:$0xff]
        %v10306 = vld [vmem:[%s9520 + $0x54] sm:$0xff]
        %v10307 = vld [vmem:[%s9520 + $0x64] sm:$0xff]
        %v10308 = vld [vmem:[%s9520 + $0x74] sm:$0xff]
        %v10309 = vld [vmem:[%s9520 + $0xc4] sm:$0xff]
        %v10310 = vld [vmem:[%s9520 + $0xd4] sm:$0xff]
        %v10311 = vld [vmem:[%s9520 + $0xe4] sm:$0xff]
        %v10312 = vld [vmem:[%s9520 + $0xf4] sm:$0xff]
        %v10313 = vld [vmem:[%s9520 + $0x104] sm:$0xff]
        %v10314 = vld [vmem:[%s9520 + $0x114] sm:$0xff]
        %v10315 = vld [vmem:[%s9520 + $0x124] sm:$0xff]
        %v10316 = vld [vmem:[%s9520 + $0x134] sm:$0xff]
        %v10317 = vld [vmem:[%s9520 + $0x184] sm:$0xff]
        %v10318 = vld [vmem:[%s9520 + $0x194] sm:$0xff]
        %v10319 = vld [vmem:[%s9520 + $0x1a4] sm:$0xff]
        %v10320 = vld [vmem:[%s9520 + $0x1b4] sm:$0xff]
        %v10321 = vld [vmem:[%s9520 + $0x1c4] sm:$0xff]
        %v10322 = vld [vmem:[%s9520 + $0x1d4] sm:$0xff]
        %v10323 = vld [vmem:[%s9520 + $0x1e4] sm:$0xff]
        %v10324 = vld [vmem:[%s9520 + $0x1f4] sm:$0xff]
        %v10325 = vld [vmem:[%s9520 + $0x244] sm:$0xff]
        %v10326 = vld [vmem:[%s9520 + $0x254] sm:$0xff]
        %v10327 = vld [vmem:[%s9520 + $0x264] sm:$0xff]
        %v10328 = vld [vmem:[%s9520 + $0x274] sm:$0xff]
        %v10329 = vld [vmem:[%s9520 + $0x284] sm:$0xff]
        %v10330 = vld [vmem:[%s9520 + $0x294] sm:$0xff]
        %v10331 = vld [vmem:[%s9520 + $0x2a4] sm:$0xff]
        %v10332 = vld [vmem:[%s9520 + $0x2b4] sm:$0xff]
        %s10333 = scalar_lea.vmem %s1, 104
        %v10334 = vld [vmem:[%s10333] sm:$0xf]
        %v10336 = vsel %vm273, %v10301, 0
        %v10339 = vsel %vm273, %v10302, 0
        %v10342 = vsel %vm273, %v10303, 0
        %v10345 = vsel %vm273, %v10304, 0
        %v10348 = vsel %vm273, %v10305, 0
        %v10351 = vsel %vm273, %v10306, 0
        %v10354 = vsel %vm273, %v10307, 0
        %v10357 = vsel %vm273, %v10308, 0
        %v10360 = vsel %vm273, %v10309, 0
        %v10363 = vsel %vm273, %v10310, 0
        %v10366 = vsel %vm273, %v10311, 0
        %v10369 = vsel %vm273, %v10312, 0
        %v10372 = vsel %vm273, %v10313, 0
        %v10375 = vsel %vm273, %v10314, 0
        %v10378 = vsel %vm273, %v10315, 0
        %v10381 = vsel %vm273, %v10316, 0
        %v10384 = vsel %vm273, %v10317, 0
        %v10387 = vsel %vm273, %v10318, 0
        %v10390 = vsel %vm273, %v10319, 0
        %v10393 = vsel %vm273, %v10320, 0
        %v10396 = vsel %vm273, %v10321, 0
        %v10399 = vsel %vm273, %v10322, 0
        %v10402 = vsel %vm273, %v10323, 0
        %v10405 = vsel %vm273, %v10324, 0
        %v10408 = vsel %vm273, %v10325, 0
        %v10411 = vsel %vm273, %v10326, 0
        %v10414 = vsel %vm273, %v10327, 0
        %v10417 = vsel %vm273, %v10328, 0
        %v10420 = vsel %vm273, %v10329, 0
        %v10423 = vsel %vm273, %v10330, 0
        %v10426 = vsel %vm273, %v10331, 0
        %v10429 = vsel %vm273, %v10332, 0
        %v10432 = vsel %vm370, %v10334, 0
        %10434 = vmatprep.subr.mxu0 0.0
        %10435 = vmatpush1.msra.mxu0 %v10432
        %10436 = vmatprep.subr.mxu0 0.0
        %10437 = vmatpush1.msra.mxu0 0.0
        %10438 = vmatprep.subr.mxu0 0.0
        %10439 = vmatpush1.msra.mxu0 0.0
        %10440 = vmatprep.subr.mxu0 0.0
        %10441 = vmatpush1.msra.mxu0 0.0
        %10442 = vmatprep.subr.mxu0 0.0
        %10443 = vmatpush1.msra.mxu0 0.0
        %10444 = vmatprep.subr.mxu0 0.0
        %10445 = vmatpush1.msra.mxu0 0.0
        %10446 = vmatprep.subr.mxu0 0.0
        %10447 = vmatpush1.msra.mxu0 0.0
        %10448 = vmatprep.subr.mxu0 0.0
        %10449 = vmatpush1.msra.mxu0 0.0
        %10450 = vmatprep.subr.mxu0 0.0
        %10451 = vmatpush1.msra.mxu0 0.0
        %10452 = vmatprep.subr.mxu0 0.0
        %10453 = vmatpush1.msra.mxu0 0.0
        %10454 = vmatprep.subr.mxu0 0.0
        %10455 = vmatpush1.msra.mxu0 0.0
        %10456 = vmatprep.subr.mxu0 0.0
        %10457 = vmatpush1.msra.mxu0 0.0
        %10458 = vmatprep.subr.mxu0 0.0
        %10459 = vmatpush1.msra.mxu0 0.0
        %10460 = vmatprep.subr.mxu0 0.0
        %10461 = vmatpush1.msra.mxu0 0.0
        %10462 = vmatprep.subr.mxu0 0.0
        %10463 = vmatpush1.msra.mxu0 0.0
        %10464 = vmatprep.subr.mxu0 0.0
        %10465 = vmatpush1.msra.mxu0 0.0
        %10466 = vmatprep.subr.mxu0 0.0
        %10467 = vmatpush1.msra.mxu0 0.0
        %10468 = vmatprep.subr.mxu0 0.0
        %10469 = vmatpush1.msra.mxu0 0.0
        %10470 = vmatprep.subr.mxu0 0.0
        %10471 = vmatpush1.msra.mxu0 0.0
        %10472 = vmatprep.subr.mxu0 0.0
        %10473 = vmatpush1.msra.mxu0 0.0
        %10474 = vmatprep.subr.mxu0 0.0
        %10475 = vmatpush1.msra.mxu0 0.0
        %10476 = vmatprep.subr.mxu0 0.0
        %10477 = vmatpush1.msra.mxu0 0.0
        %10478 = vmatprep.subr.mxu0 0.0
        %10479 = vmatpush1.msra.mxu0 0.0
        %10480 = vmatprep.subr.mxu0 0.0
        %10481 = vmatpush1.msra.mxu0 0.0
        %10482 = vmatprep.subr.mxu0 0.0
        %10483 = vmatpush1.msra.mxu0 0.0
        %10484 = vmatprep.subr.mxu0 0.0
        %10485 = vmatpush1.msra.mxu0 0.0
        %10486 = vmatprep.subr.mxu0 0.0
        %10487 = vmatpush1.msra.mxu0 0.0
        %10488 = vmatprep.subr.mxu0 0.0
        %10489 = vmatpush1.msra.mxu0 0.0
        %10490 = vmatprep.subr.mxu0 0.0
        %10491 = vmatpush1.msra.mxu0 0.0
        %10492 = vmatprep.subr.mxu0 0.0
        %10493 = vmatpush1.msra.mxu0 0.0
        %10494 = vmatprep.subr.mxu0 0.0
        %10495 = vmatpush1.msra.mxu0 0.0
        %10496 = vmatprep.subr.mxu0 0.0
        %10497 = vmatpush1.msra.mxu0 0.0
        %10498 = vmatprep.mubr.f32.mxu0 0.0
        %10499 = vmatmul.mubr.f32.gmra.mrb[0].mxu0 %v10336
        %v10500 = vpop.f32.mrb[0].mxu0
        %v10501 = vadd.f32 0.0, %v10500
        %v10502 = vpop.f32.mrb[0].mxu0
        %10503 = vmatprep.mubr.f32.mxu0 0.0
        %10504 = vmatmul.mubr.f32.gmra.mrb[0].mxu0 %v10339
        %v10505 = vpop.f32.mrb[0].mxu0
        %v10506 = vadd.f32 0.0, %v10505
        %v10507 = vpop.f32.mrb[0].mxu0
        %10508 = vmatprep.mubr.f32.mxu0 0.0
        %10509 = vmatmul.mubr.f32.gmra.mrb[0].mxu0 %v10342
        %v10510 = vpop.f32.mrb[0].mxu0
        %v10511 = vadd.f32 0.0, %v10510
        %v10512 = vpop.f32.mrb[0].mxu0
        %10513 = vmatprep.mubr.f32.mxu0 0.0
        %10514 = vmatmul.mubr.f32.gmra.mrb[0].mxu0 %v10345
        %v10515 = vpop.f32.mrb[0].mxu0
        %v10516 = vadd.f32 0.0, %v10515
        %v10517 = vpop.f32.mrb[0].mxu0
        %10518 = vmatprep.mubr.f32.mxu0 0.0
        %10519 = vmatmul.mubr.f32.gmra.mrb[0].mxu0 %v10348
        %v10520 = vpop.f32.mrb[0].mxu0
        %v10521 = vadd.f32 0.0, %v10520
        %v10522 = vpop.f32.mrb[0].mxu0
        %10523 = vmatprep.mubr.f32.mxu0 0.0
        %10524 = vmatmul.mubr.f32.gmra.mrb[0].mxu0 %v10351
        %v10525 = vpop.f32.mrb[0].mxu0
        %v10526 = vadd.f32 0.0, %v10525
        %v10527 = vpop.f32.mrb[0].mxu0
        %10528 = vmatprep.mubr.f32.mxu0 0.0
        %10529 = vmatmul.mubr.f32.gmra.mrb[0].mxu0 %v10354
        %v10530 = vpop.f32.mrb[0].mxu0
        %v10531 = vadd.f32 0.0, %v10530
        %v10532 = vpop.f32.mrb[0].mxu0
        %10533 = vmatprep.mubr.f32.mxu0 0.0
        %10534 = vmatmul.mubr.f32.gmra.mrb[0].mxu0 %v10357
        %v10535 = vpop.f32.mrb[0].mxu0
        %v10536 = vadd.f32 0.0, %v10535
        %v10537 = vpop.f32.mrb[0].mxu0
        %10538 = vmatprep.mubr.f32.mxu0 0.0
        %10539 = vmatmul.mubr.f32.gmra.mrb[0].mxu0 %v10360
        %v10540 = vpop.f32.mrb[0].mxu0
        %v10541 = vadd.f32 0.0, %v10540
        %v10542 = vpop.f32.mrb[0].mxu0
        %10543 = vmatprep.mubr.f32.mxu0 0.0
        %10544 = vmatmul.mubr.f32.gmra.mrb[0].mxu0 %v10363
        %v10545 = vpop.f32.mrb[0].mxu0
        %v10546 = vadd.f32 0.0, %v10545
        %v10547 = vpop.f32.mrb[0].mxu0
        %10548 = vmatprep.mubr.f32.mxu0 0.0
        %10549 = vmatmul.mubr.f32.gmra.mrb[0].mxu0 %v10366
        %v10550 = vpop.f32.mrb[0].mxu0
        %v10551 = vadd.f32 0.0, %v10550
        %v10552 = vpop.f32.mrb[0].mxu0
        %10553 = vmatprep.mubr.f32.mxu0 0.0
        %10554 = vmatmul.mubr.f32.gmra.mrb[0].mxu0 %v10369
        %v10555 = vpop.f32.mrb[0].mxu0
        %v10556 = vadd.f32 0.0, %v10555
        %v10557 = vpop.f32.mrb[0].mxu0
        %10558 = vmatprep.mubr.f32.mxu0 0.0
        %10559 = vmatmul.mubr.f32.gmra.mrb[0].mxu0 %v10372
        %v10560 = vpop.f32.mrb[0].mxu0
        %v10561 = vadd.f32 0.0, %v10560
        %v10562 = vpop.f32.mrb[0].mxu0
        %10563 = vmatprep.mubr.f32.mxu0 0.0
        %10564 = vmatmul.mubr.f32.gmra.mrb[0].mxu0 %v10375
        %v10565 = vpop.f32.mrb[0].mxu0
        %v10566 = vadd.f32 0.0, %v10565
        %v10567 = vpop.f32.mrb[0].mxu0
        %10568 = vmatprep.mubr.f32.mxu0 0.0
        %10569 = vmatmul.mubr.f32.gmra.mrb[0].mxu0 %v10378
        %v10570 = vpop.f32.mrb[0].mxu0
        %v10571 = vadd.f32 0.0, %v10570
        %v10572 = vpop.f32.mrb[0].mxu0
        %10573 = vmatprep.mubr.f32.mxu0 0.0
        %10574 = vmatmul.mubr.f32.gmra.mrb[0].mxu0 %v10381
        %v10575 = vpop.f32.mrb[0].mxu0
        %v10576 = vadd.f32 0.0, %v10575
        %v10577 = vpop.f32.mrb[0].mxu0
        %10578 = vmatprep.mubr.f32.mxu0 0.0
        %10579 = vmatmul.mubr.f32.gmra.mrb[0].mxu0 %v10384
        %v10580 = vpop.f32.mrb[0].mxu0
        %v10581 = vadd.f32 0.0, %v10580
        %v10582 = vpop.f32.mrb[0].mxu0
        %10583 = vmatprep.mubr.f32.mxu0 0.0
        %10584 = vmatmul.mubr.f32.gmra.mrb[0].mxu0 %v10387
        %v10585 = vpop.f32.mrb[0].mxu0
        %v10586 = vadd.f32 0.0, %v10585
        %v10587 = vpop.f32.mrb[0].mxu0
        %10588 = vmatprep.mubr.f32.mxu0 0.0
        %10589 = vmatmul.mubr.f32.gmra.mrb[0].mxu0 %v10390
        %v10590 = vpop.f32.mrb[0].mxu0
        %v10591 = vadd.f32 0.0, %v10590
        %v10592 = vpop.f32.mrb[0].mxu0
        %10593 = vmatprep.mubr.f32.mxu0 0.0
        %10594 = vmatmul.mubr.f32.gmra.mrb[0].mxu0 %v10393
        %v10595 = vpop.f32.mrb[0].mxu0
        %v10596 = vadd.f32 0.0, %v10595
        %v10597 = vpop.f32.mrb[0].mxu0
        %10598 = vmatprep.mubr.f32.mxu0 0.0
        %10599 = vmatmul.mubr.f32.gmra.mrb[0].mxu0 %v10396
        %v10600 = vpop.f32.mrb[0].mxu0
        %v10601 = vadd.f32 0.0, %v10600
        %v10602 = vpop.f32.mrb[0].mxu0
        %10603 = vmatprep.mubr.f32.mxu0 0.0
        %10604 = vmatmul.mubr.f32.gmra.mrb[0].mxu0 %v10399
        %v10605 = vpop.f32.mrb[0].mxu0
        %v10606 = vadd.f32 0.0, %v10605
        %v10607 = vpop.f32.mrb[0].mxu0
        %10608 = vmatprep.mubr.f32.mxu0 0.0
        %10609 = vmatmul.mubr.f32.gmra.mrb[0].mxu0 %v10402
        %v10610 = vpop.f32.mrb[0].mxu0
        %v10611 = vadd.f32 0.0, %v10610
        %v10612 = vpop.f32.mrb[0].mxu0
        %10613 = vmatprep.mubr.f32.mxu0 0.0
        %10614 = vmatmul.mubr.f32.gmra.mrb[0].mxu0 %v10405
        %v10615 = vpop.f32.mrb[0].mxu0
        %v10616 = vadd.f32 0.0, %v10615
        %v10617 = vpop.f32.mrb[0].mxu0
        %10618 = vmatprep.mubr.f32.mxu0 0.0
        %10619 = vmatmul.mubr.f32.gmra.mrb[0].mxu0 %v10408
        %v10620 = vpop.f32.mrb[0].mxu0
        %v10621 = vadd.f32 0.0, %v10620
        %v10622 = vpop.f32.mrb[0].mxu0
        %10623 = vmatprep.mubr.f32.mxu0 0.0
        %10624 = vmatmul.mubr.f32.gmra.mrb[0].mxu0 %v10411
        %v10625 = vpop.f32.mrb[0].mxu0
        %v10626 = vadd.f32 0.0, %v10625
        %v10627 = vpop.f32.mrb[0].mxu0
        %10628 = vmatprep.mubr.f32.mxu0 0.0
        %10629 = vmatmul.mubr.f32.gmra.mrb[0].mxu0 %v10414
        %v10630 = vpop.f32.mrb[0].mxu0
        %v10631 = vadd.f32 0.0, %v10630
        %v10632 = vpop.f32.mrb[0].mxu0
        %10633 = vmatprep.mubr.f32.mxu0 0.0
        %10634 = vmatmul.mubr.f32.gmra.mrb[0].mxu0 %v10417
        %v10635 = vpop.f32.mrb[0].mxu0
        %v10636 = vadd.f32 0.0, %v10635
        %v10637 = vpop.f32.mrb[0].mxu0
        %10638 = vmatprep.mubr.f32.mxu0 0.0
        %10639 = vmatmul.mubr.f32.gmra.mrb[0].mxu0 %v10420
        %v10640 = vpop.f32.mrb[0].mxu0
        %v10641 = vadd.f32 0.0, %v10640
        %v10642 = vpop.f32.mrb[0].mxu0
        %10643 = vmatprep.mubr.f32.mxu0 0.0
        %10644 = vmatmul.mubr.f32.gmra.mrb[0].mxu0 %v10423
        %v10645 = vpop.f32.mrb[0].mxu0
        %v10646 = vadd.f32 0.0, %v10645
        %v10647 = vpop.f32.mrb[0].mxu0
        %10648 = vmatprep.mubr.f32.mxu0 0.0
        %10649 = vmatmul.mubr.f32.gmra.mrb[0].mxu0 %v10426
        %v10650 = vpop.f32.mrb[0].mxu0
        %v10651 = vadd.f32 0.0, %v10650
        %v10652 = vpop.f32.mrb[0].mxu0
        %10653 = vmatprep.mubr.f32.mxu0 0.0
        %10654 = vmatmul.mubr.f32.gmra.mrb[0].mxu0 %v10429
        %v10655 = vpop.f32.mrb[0].mxu0
        %v10656 = vadd.f32 0.0, %v10655
        %v10657 = vpop.f32.mrb[0].mxu0
        %10658 = vdwg.mxu0
        %v10659 = vadd.f32 %v10269, %v10501
        %v10660 = vadd.f32 %v10270, %v10506
        %v10661 = vadd.f32 %v10271, %v10511
        %v10662 = vadd.f32 %v10272, %v10516
        %v10663 = vadd.f32 %v10273, %v10521
        %v10664 = vadd.f32 %v10274, %v10526
        %v10665 = vadd.f32 %v10275, %v10531
        %v10666 = vadd.f32 %v10276, %v10536
        %v10667 = vadd.f32 %v10277, %v10541
        %v10668 = vadd.f32 %v10278, %v10546
        %v10669 = vadd.f32 %v10279, %v10551
        %v10670 = vadd.f32 %v10280, %v10556
        %v10671 = vadd.f32 %v10281, %v10561
        %v10672 = vadd.f32 %v10282, %v10566
        %v10673 = vadd.f32 %v10283, %v10571
        %v10674 = vadd.f32 %v10284, %v10576
        %v10675 = vadd.f32 %v10285, %v10581
        %v10676 = vadd.f32 %v10286, %v10586
        %v10677 = vadd.f32 %v10287, %v10591
        %v10678 = vadd.f32 %v10288, %v10596
        %v10679 = vadd.f32 %v10289, %v10601
        %v10680 = vadd.f32 %v10290, %v10606
        %v10681 = vadd.f32 %v10291, %v10611
        %v10682 = vadd.f32 %v10292, %v10616
        %v10683 = vadd.f32 %v10293, %v10621
        %v10684 = vadd.f32 %v10294, %v10626
        %v10685 = vadd.f32 %v10295, %v10631
        %v10686 = vadd.f32 %v10296, %v10636
        %v10687 = vadd.f32 %v10297, %v10641
        %v10688 = vadd.f32 %v10298, %v10646
        %v10689 = vadd.f32 %v10299, %v10651
        %v10690 = vadd.f32 %v10300, %v10656
        %vm10691 = vcmask 64512
        %10692 = vst.msk [vmem:[%s199] sm:$0xff] %vm10691, %v10659
        %10693 = vst.msk [vmem:[%s199 + $0x8] sm:$0xff] %vm10691, %v10660
        %10694 = vst.msk [vmem:[%s199 + $0x10] sm:$0xff] %vm10691, %v10661
        %10695 = vst.msk [vmem:[%s199 + $0x18] sm:$0xff] %vm10691, %v10662
        %10696 = vst.msk [vmem:[%s199 + $0x20] sm:$0xff] %vm10691, %v10663
        %10697 = vst.msk [vmem:[%s199 + $0x28] sm:$0xff] %vm10691, %v10664
        %10698 = vst.msk [vmem:[%s199 + $0x30] sm:$0xff] %vm10691, %v10665
        %10699 = vst.msk [vmem:[%s199 + $0x38] sm:$0xff] %vm10691, %v10666
        %10700 = vst.msk [vmem:[%s199 + $0x40] sm:$0xff] %vm10691, %v10667
        %10701 = vst.msk [vmem:[%s199 + $0x48] sm:$0xff] %vm10691, %v10668
        %10702 = vst.msk [vmem:[%s199 + $0x50] sm:$0xff] %vm10691, %v10669
        %10703 = vst.msk [vmem:[%s199 + $0x58] sm:$0xff] %vm10691, %v10670
        %10704 = vst.msk [vmem:[%s199 + $0x60] sm:$0xff] %vm10691, %v10671
        %10705 = vst.msk [vmem:[%s199 + $0x68] sm:$0xff] %vm10691, %v10672
        %10706 = vst.msk [vmem:[%s199 + $0x70] sm:$0xff] %vm10691, %v10673
        %10707 = vst.msk [vmem:[%s199 + $0x78] sm:$0xff] %vm10691, %v10674
        %10708 = vst.msk [vmem:[%s199 + $0x80] sm:$0xff] %vm10691, %v10675
        %10709 = vst.msk [vmem:[%s199 + $0x88] sm:$0xff] %vm10691, %v10676
        %10710 = vst.msk [vmem:[%s199 + $0x90] sm:$0xff] %vm10691, %v10677
        %10711 = vst.msk [vmem:[%s199 + $0x98] sm:$0xff] %vm10691, %v10678
        %10712 = vst.msk [vmem:[%s199 + $0xa0] sm:$0xff] %vm10691, %v10679
        %10713 = vst.msk [vmem:[%s199 + $0xa8] sm:$0xff] %vm10691, %v10680
        %10714 = vst.msk [vmem:[%s199 + $0xb0] sm:$0xff] %vm10691, %v10681
        %10715 = vst.msk [vmem:[%s199 + $0xb8] sm:$0xff] %vm10691, %v10682
        %10716 = vst.msk [vmem:[%s199 + $0xc0] sm:$0xff] %vm10691, %v10683
        %10717 = vst.msk [vmem:[%s199 + $0xc8] sm:$0xff] %vm10691, %v10684
        %10718 = vst.msk [vmem:[%s199 + $0xd0] sm:$0xff] %vm10691, %v10685
        %10719 = vst.msk [vmem:[%s199 + $0xd8] sm:$0xff] %vm10691, %v10686
        %10720 = vst.msk [vmem:[%s199 + $0xe0] sm:$0xff] %vm10691, %v10687
        %10721 = vst.msk [vmem:[%s199 + $0xe8] sm:$0xff] %vm10691, %v10688
        %10722 = vst.msk [vmem:[%s199 + $0xf0] sm:$0xff] %vm10691, %v10689
        %10723 = vst.msk [vmem:[%s199 + $0xf8] sm:$0xff] %vm10691, %v10690
        %v10724 = vsel %vm10691, %v10659, 0.0
        %v10725 = vsel %vm10691, %v10660, 0.0
        %v10726 = vadd.f32 %v10724, %v10725
        %v10727 = vsel %vm10691, %v10661, 0.0
        %v10728 = vadd.f32 %v10726, %v10727
        %v10729 = vsel %vm10691, %v10662, 0.0
        %v10730 = vadd.f32 %v10728, %v10729
        %v10731 = vsel %vm10691, %v10663, 0.0
        %v10732 = vadd.f32 %v10730, %v10731
        %v10733 = vsel %vm10691, %v10664, 0.0
        %v10734 = vadd.f32 %v10732, %v10733
        %v10735 = vsel %vm10691, %v10665, 0.0
        %v10736 = vadd.f32 %v10734, %v10735
        %v10737 = vsel %vm10691, %v10666, 0.0
        %v10738 = vadd.f32 %v10736, %v10737
        %v10739 = vsel %vm10691, %v10667, 0.0
        %v10740 = vadd.f32 %v10738, %v10739
        %v10741 = vsel %vm10691, %v10668, 0.0
        %v10742 = vadd.f32 %v10740, %v10741
        %v10743 = vsel %vm10691, %v10669, 0.0
        %v10744 = vadd.f32 %v10742, %v10743
        %v10745 = vsel %vm10691, %v10670, 0.0
        %v10746 = vadd.f32 %v10744, %v10745
        %v10747 = vsel %vm10691, %v10671, 0.0
        %v10748 = vadd.f32 %v10746, %v10747
        %v10749 = vsel %vm10691, %v10672, 0.0
        %v10750 = vadd.f32 %v10748, %v10749
        %v10751 = vsel %vm10691, %v10673, 0.0
        %v10752 = vadd.f32 %v10750, %v10751
        %v10753 = vsel %vm10691, %v10674, 0.0
        %v10754 = vadd.f32 %v10752, %v10753
        %v10755 = vsel %vm10691, %v10675, 0.0
        %v10756 = vadd.f32 %v10754, %v10755
        %v10757 = vsel %vm10691, %v10676, 0.0
        %v10758 = vadd.f32 %v10756, %v10757
        %v10759 = vsel %vm10691, %v10677, 0.0
        %v10760 = vadd.f32 %v10758, %v10759
        %v10761 = vsel %vm10691, %v10678, 0.0
        %v10762 = vadd.f32 %v10760, %v10761
        %v10763 = vsel %vm10691, %v10679, 0.0
        %v10764 = vadd.f32 %v10762, %v10763
        %v10765 = vsel %vm10691, %v10680, 0.0
        %v10766 = vadd.f32 %v10764, %v10765
        %v10767 = vsel %vm10691, %v10681, 0.0
        %v10768 = vadd.f32 %v10766, %v10767
        %v10769 = vsel %vm10691, %v10682, 0.0
        %v10770 = vadd.f32 %v10768, %v10769
        %v10771 = vsel %vm10691, %v10683, 0.0
        %v10772 = vadd.f32 %v10770, %v10771
        %v10773 = vsel %vm10691, %v10684, 0.0
        %v10774 = vadd.f32 %v10772, %v10773
        %v10775 = vsel %vm10691, %v10685, 0.0
        %v10776 = vadd.f32 %v10774, %v10775
        %v10777 = vsel %vm10691, %v10686, 0.0
        %v10778 = vadd.f32 %v10776, %v10777
        %v10779 = vsel %vm10691, %v10687, 0.0
        %v10780 = vadd.f32 %v10778, %v10779
        %v10781 = vsel %vm10691, %v10688, 0.0
        %v10782 = vadd.f32 %v10780, %v10781
        %v10783 = vsel %vm10691, %v10689, 0.0
        %v10784 = vadd.f32 %v10782, %v10783
        %v10785 = vsel %vm10691, %v10690, 0.0
        %v10786 = vadd.f32 %v10784, %v10785
        %v10787 = vrot.slane %v10786, 4
        %v10788 = vadd.f32 %v10786, %v10787
        %v10789 = vrot.slane %v10788, 2
        %v10790 = vadd.f32 %v10788, %v10789
        %v10791 = vrot.slane %v10790, 1
        %v10792 = vadd.f32 %v10790, %v10791
        %v10793 = vmul.f32 %v10659, %v10659
        %v10794 = vmul.f32 %v10660, %v10660
        %v10795 = vmul.f32 %v10661, %v10661
        %v10796 = vmul.f32 %v10662, %v10662
        %v10797 = vmul.f32 %v10663, %v10663
        %v10798 = vmul.f32 %v10664, %v10664
        %v10799 = vmul.f32 %v10665, %v10665
        %v10800 = vmul.f32 %v10666, %v10666
        %v10801 = vmul.f32 %v10667, %v10667
        %v10802 = vmul.f32 %v10668, %v10668
        %v10803 = vmul.f32 %v10669, %v10669
        %v10804 = vmul.f32 %v10670, %v10670
        %v10805 = vmul.f32 %v10671, %v10671
        %v10806 = vmul.f32 %v10672, %v10672
        %v10807 = vmul.f32 %v10673, %v10673
        %v10808 = vmul.f32 %v10674, %v10674
        %v10809 = vmul.f32 %v10675, %v10675
        %v10810 = vmul.f32 %v10676, %v10676
        %v10811 = vmul.f32 %v10677, %v10677
        %v10812 = vmul.f32 %v10678, %v10678
        %v10813 = vmul.f32 %v10679, %v10679
        %v10814 = vmul.f32 %v10680, %v10680
        %v10815 = vmul.f32 %v10681, %v10681
        %v10816 = vmul.f32 %v10682, %v10682
        %v10817 = vmul.f32 %v10683, %v10683
        %v10818 = vmul.f32 %v10684, %v10684
        %v10819 = vmul.f32 %v10685, %v10685
        %v10820 = vmul.f32 %v10686, %v10686
        %v10821 = vmul.f32 %v10687, %v10687
        %v10822 = vmul.f32 %v10688, %v10688
        %v10823 = vmul.f32 %v10689, %v10689
        %v10824 = vmul.f32 %v10690, %v10690
        %v10825 = vsel %vm10691, %v10793, 0.0
        %v10826 = vsel %vm10691, %v10794, 0.0
        %v10827 = vadd.f32 %v10825, %v10826
        %v10828 = vsel %vm10691, %v10795, 0.0
        %v10829 = vadd.f32 %v10827, %v10828
        %v10830 = vsel %vm10691, %v10796, 0.0
        %v10831 = vadd.f32 %v10829, %v10830
        %v10832 = vsel %vm10691, %v10797, 0.0
        %v10833 = vadd.f32 %v10831, %v10832
        %v10834 = vsel %vm10691, %v10798, 0.0
        %v10835 = vadd.f32 %v10833, %v10834
        %v10836 = vsel %vm10691, %v10799, 0.0
        %v10837 = vadd.f32 %v10835, %v10836
        %v10838 = vsel %vm10691, %v10800, 0.0
        %v10839 = vadd.f32 %v10837, %v10838
        %v10840 = vsel %vm10691, %v10801, 0.0
        %v10841 = vadd.f32 %v10839, %v10840
        %v10842 = vsel %vm10691, %v10802, 0.0
        %v10843 = vadd.f32 %v10841, %v10842
        %v10844 = vsel %vm10691, %v10803, 0.0
        %v10845 = vadd.f32 %v10843, %v10844
        %v10846 = vsel %vm10691, %v10804, 0.0
        %v10847 = vadd.f32 %v10845, %v10846
        %v10848 = vsel %vm10691, %v10805, 0.0
        %v10849 = vadd.f32 %v10847, %v10848
        %v10850 = vsel %vm10691, %v10806, 0.0
        %v10851 = vadd.f32 %v10849, %v10850
        %v10852 = vsel %vm10691, %v10807, 0.0
        %v10853 = vadd.f32 %v10851, %v10852
        %v10854 = vsel %vm10691, %v10808, 0.0
        %v10855 = vadd.f32 %v10853, %v10854
        %v10856 = vsel %vm10691, %v10809, 0.0
        %v10857 = vadd.f32 %v10855, %v10856
        %v10858 = vsel %vm10691, %v10810, 0.0
        %v10859 = vadd.f32 %v10857, %v10858
        %v10860 = vsel %vm10691, %v10811, 0.0
        %v10861 = vadd.f32 %v10859, %v10860
        %v10862 = vsel %vm10691, %v10812, 0.0
        %v10863 = vadd.f32 %v10861, %v10862
        %v10864 = vsel %vm10691, %v10813, 0.0
        %v10865 = vadd.f32 %v10863, %v10864
        %v10866 = vsel %vm10691, %v10814, 0.0
        %v10867 = vadd.f32 %v10865, %v10866
        %v10868 = vsel %vm10691, %v10815, 0.0
        %v10869 = vadd.f32 %v10867, %v10868
        %v10870 = vsel %vm10691, %v10816, 0.0
        %v10871 = vadd.f32 %v10869, %v10870
        %v10872 = vsel %vm10691, %v10817, 0.0
        %v10873 = vadd.f32 %v10871, %v10872
        %v10874 = vsel %vm10691, %v10818, 0.0
        %v10875 = vadd.f32 %v10873, %v10874
        %v10876 = vsel %vm10691, %v10819, 0.0
        %v10877 = vadd.f32 %v10875, %v10876
        %v10878 = vsel %vm10691, %v10820, 0.0
        %v10879 = vadd.f32 %v10877, %v10878
        %v10880 = vsel %vm10691, %v10821, 0.0
        %v10881 = vadd.f32 %v10879, %v10880
        %v10882 = vsel %vm10691, %v10822, 0.0
        %v10883 = vadd.f32 %v10881, %v10882
        %v10884 = vsel %vm10691, %v10823, 0.0
        %v10885 = vadd.f32 %v10883, %v10884
        %v10886 = vsel %vm10691, %v10824, 0.0
        %v10887 = vadd.f32 %v10885, %v10886
        %v10888 = vrot.slane %v10887, 4
        %v10889 = vadd.f32 %v10887, %v10888
        %v10890 = vrot.slane %v10889, 2
        %v10891 = vadd.f32 %v10889, %v10890
        %v10892 = vrot.slane %v10891, 1
        %v10893 = vadd.f32 %v10891, %v10892
        %vm10894 = vcmask 1040384
        %v10895 = vsel %vm10894, %v10792, %v10893
        %vm10896 = vcmask 58368
        %10897 = vst.msk [vmem:[%s188] sm:$0x3] %vm10896, %v10895
        %s10898 = sadd.s32 %s22, %s23
        %s10899 = smul.u32 32, %s10898
        %p10900 = scmp.lt.s32.totalorder %s10899, 63
        %s10901 = scalar_select %p10900, %s10899, 63
        %s10902 = smul.addr %s10901, 8
        %s10903 = scalar_lea.vmem %s2, %s10902
        %s10904 = sand.u32 %s115, 1
        %s10905 = scalar_lea.sflag [#allocation3], %s10904
        %s10906 = sand.u32 %s115, 1
        %s10907 = smul.addr %s10906, 2
        %s10908 = scalar_lea.vmem [#allocation2], %s10907
        // Predicated region
        $region29: #{tpu_custom_call.1} parent=27 // pred_check
          %p10909 = pneg %p97
        $region30: #{tpu_custom_call.1} parent=27 // pred_check_branch
          %10911 = sbr.rel (%p10909) target = $region32
        $region31: #{tpu_custom_call.1} parent=27 // pred_region
          %s10912 = sadd.s32 %s22, %s23
          %s10913 = smul.u32 32, %s10912
        $region32: #{tpu_custom_call.1} parent=27 // pred_fallthru
          _
        // Predicated region
        $region33: #{tpu_custom_call.1} parent=27 // pred_check
          %p10914 = pneg %p125
        $region34: #{tpu_custom_call.1} parent=27 // pred_check_branch
          %10916 = sbr.rel (%p10914) target = $region36
        $region35: #{tpu_custom_call.1} parent=27 // pred_region
          %s10917 = sadd.s32 %s22, %s23
          %s10919 = ssub.s32 32, 32
          %10920 = vsyncadd %s10905, %s10919
          %s10921 = smul.addr %s10917, 32
          %s10922 = scalar_lea.hbm %s3, %s10921
          %s10924 = sshll.u32 %s10908, 4
          %s10925 = int_to_ptr.vmem [resolvable:$true] %s10924
          %10927 = dma.vmem_to_hbm [thread:$0]  %s10925, 32, %s10922, %s10905
        $region36: #{tpu_custom_call.1} parent=27 // pred_fallthru
          _
      $region28: #{tpu_custom_call.1} parent=5 // pred_fallthru
        _
      %p10928 = scmp.le.s32.totalorder 2, %s13
      // Predicated region
      $region37: #{tpu_custom_call.1} parent=5 // pred_check
        %p10929 = pneg %p10928
      $region38: #{tpu_custom_call.1} parent=5 // pred_check_branch
        %10931 = sbr.rel (%p10929) target = $region40
      $region39: #{tpu_custom_call.1} parent=5 // pred_region
        %s10932 = ssub.s32 %s13, 2
        // Predicated region
        $region41: #{tpu_custom_call.1} parent=39 // pred_check
          %p10933 = pneg %p103
        $region42: #{tpu_custom_call.1} parent=39 // pred_check_branch
          %10935 = sbr.rel (%p10933) target = $region44
        $region43: #{tpu_custom_call.1} parent=39 // pred_region
          %s10936 = sadd.s32 %s24, %s25
          %s10937 = smul.u32 32, %s10936
          %p10938 = scmp.lt.s32.totalorder %s10937, 63
          %s10939 = scalar_select %p10938, %s10937, 63
          %s10940 = smul.addr %s10939, 8
          %s10941 = scalar_lea.vmem %s2, %s10940
        $region44: #{tpu_custom_call.1} parent=39 // pred_fallthru
          _
        // Predicated region
        $region45: #{tpu_custom_call.1} parent=39 // pred_check
          %p10942 = pneg %p131
        $region46: #{tpu_custom_call.1} parent=39 // pred_check_branch
          %10944 = sbr.rel (%p10942) target = $region48
        $region47: #{tpu_custom_call.1} parent=39 // pred_region
          %s10945 = sand.u32 %s116, 1
          %s10946 = scalar_lea.sflag [#allocation3], %s10945
          %s10947 = sand.u32 %s116, 1
          %s10948 = smul.addr %s10947, 2
          %s10949 = scalar_lea.vmem [#allocation2], %s10948
          %10950 = dma.done %s10946, 32
        $region48: #{tpu_custom_call.1} parent=39 // pred_fallthru
          _
      $region40: #{tpu_custom_call.1} parent=5 // pred_fallthru
        _
    $region6: #{tpu_custom_call.1} parent=1 // loop_footer
      %s17 = sadd.s32 1, %s13
    $region7: #{tpu_custom_call.1} parent=1 // loop_footer_branch
      %12 = sbr.rel target = $region3
    $region8: #{tpu_custom_call.1} parent=1 // loop_exit
      _
    %10951 = vsyncpa [#allocation3], 1
    %s10952 = scalar_lea.sflag [#allocation3], 1
    %10953 = vsyncpa %s10952, 1

</llo_original>
